<compile_context>
chip_gen: v6e
topology: v6e:2x2x1
jax: 0.10.0
libtpu: 0.0.40
codegen_flags: <defaults>
</compile_context>

<pallas_src>
import functools

import jax
import jax.numpy as jnp
from jax.experimental import pallas as pl
from jax.experimental.pallas import tpu as pltpu


_VMEM_LIMIT = 48 * 1024 * 1024  # < v7x 64 MiB physical; ample headroom on v5e/v6e.


# ----------------------------------------------------------------------------
# Pallas kernels
# ----------------------------------------------------------------------------
def _conv3x3_kernel(x_ref, scale_ref, shift_ref, w_ref, y_ref, stats_ref,
                    xp_ref, col_ref, *, input_act, th):
    # x_ref    : (1, H, W, C)      whole input image (resident across H-strips)
    # scale_ref: (1, C) f32        folded BN scale of the input (iff input_act)
    # shift_ref: (1, C) f32
    # w_ref    : (9*C, C) bf16     tap-major weight slab, rows = (kh, kw, cin)
    # y_ref    : (1, TH, W, C)     conv-output strip (pre-BN), bf16
    # stats_ref: (1, 1, 2, C) f32  per-strip [sum, sum_sq] of the f32 accumulator
    # xp_ref   : VMEM (TH+2, W+2, C) bf16  zero-halo, activated input strip
    # col_ref  : VMEM (TH*W, 9*C)  bf16    im2col slab (single K=9*C matmul)
    _, H, W, C = x_ref.shape
    TH = th
    hb = pl.program_id(1)
    nh = pl.num_programs(1)
    row0 = pl.multiple_of(hb * TH, TH)          # first image row of this strip

    def act(v):
        v = v.astype(jnp.float32)
        if input_act:                           # fused bn1 + ReLU, never hits HBM
            v = jnp.maximum(v * scale_ref[...] + shift_ref[...], 0.0)
        return v.astype(xp_ref.dtype)

    # ---- zero only the halo (interior is written exactly once) -------------
    xp_ref[:, 0:1, :] = jnp.zeros((TH + 2, 1, C), xp_ref.dtype)          # left
    xp_ref[:, W + 1:W + 2, :] = jnp.zeros((TH + 2, 1, C), xp_ref.dtype)  # right

    # interior rows of this strip (fused input activation)
    xp_ref[1:TH + 1, 1:W + 1, :] = act(x_ref[0, pl.ds(row0, TH), :, :])

    @pl.when(hb == 0)
    def _():                                    # top image border -> zeros
        xp_ref[0:1, 1:W + 1, :] = jnp.zeros((1, W, C), xp_ref.dtype)

    @pl.when(hb > 0)
    def _():                                    # top halo row from prev strip
        xp_ref[0:1, 1:W + 1, :] = act(x_ref[0, pl.ds(row0 - 1, 1), :, :])

    @pl.when(hb == nh - 1)
    def _():                                    # bottom image border -> zeros
        xp_ref[TH + 1:TH + 2, 1:W + 1, :] = jnp.zeros((1, W, C), xp_ref.dtype)

    @pl.when(hb < nh - 1)
    def _():                                    # bottom halo row from next strip
        xp_ref[TH + 1:TH + 2, 1:W + 1, :] = act(
            x_ref[0, pl.ds(row0 + TH, 1), :, :])

    # ---- im2col: pack the 9 taps into one (TH*W, 9*C) bf16 slab ------------
    for t in range(9):
        dh, dw = t // 3, t % 3
        col_ref[:, t * C:(t + 1) * C] = (
            xp_ref[dh:dh + TH, dw:dw + W, :].reshape(TH * W, C))

    # ---- single MXU matmul, K = 9*C, f32 accumulation -----------------------
    acc = jnp.dot(col_ref[...], w_ref[...], preferred_element_type=jnp.float32)

    y_ref[0] = acc.reshape(TH, W, C).astype(y_ref.dtype)
    # Fused BN-statistics partials (f32, from the exact accumulator).
    stats_ref[0, 0, 0:1, :] = jnp.sum(acc, axis=0, keepdims=True)
    stats_ref[0, 0, 1:2, :] = jnp.sum(acc * acc, axis=0, keepdims=True)


def _bn_add_relu_kernel(y_ref, scale_ref, shift_ref, x_ref, o_ref):
    # out = relu(x + bn2(y)) with bn2 folded to per-channel (scale, shift).
    y = y_ref[0].astype(jnp.float32)
    x = x_ref[0].astype(jnp.float32)
    o_ref[0] = jnp.maximum(x + y * scale_ref[...] + shift_ref[...],
                           0.0).astype(o_ref.dtype)


# ----------------------------------------------------------------------------
# Wrappers
# ----------------------------------------------------------------------------
def _pick_th(H):
    # 8-row strips: M = TH*W = 128 rows per matmul at W=16, and enough grid
    # steps for the pipeline; fall back to the whole image if H not divisible.
    return 8 if H % 8 == 0 else H


def conv3x3_bn_stats(x_nhwc, w_slab, scale=None, shift=None, *, input_act=False):
    """3x3 'same' conv (+ optional fused input BN+ReLU) + per-strip BN stats."""
    N, H, W, C = x_nhwc.shape
    TH = _pick_th(H)
    NH = H // TH
    if scale is None:
        scale = jnp.ones((1, C), jnp.float32)
        shift = jnp.zeros((1, C), jnp.float32)

    flops = 2 * 9 * N * H * W * C * C
    bytes_accessed = int(x_nhwc.size * x_nhwc.dtype.itemsize
                         + w_slab.size * w_slab.dtype.itemsize
                         + N * H * W * C * 2          # bf16 conv output
                         + N * NH * 2 * C * 4)        # f32 stats

    kernel = functools.partial(_conv3x3_kernel, input_act=input_act, th=TH)
    y, stats = pl.pallas_call(
        kernel,
        out_shape=(
            jax.ShapeDtypeStruct((N, H, W, C), jnp.bfloat16),
            jax.ShapeDtypeStruct((N, NH, 2, C), jnp.float32),
        ),
        grid=(N, NH),
        in_specs=[
            # whole image, resident across the H-strips of this n
            pl.BlockSpec((1, H, W, C), lambda n, h: (n, 0, 0, 0)),
            pl.BlockSpec((1, C), lambda n, h: (0, 0)),
            pl.BlockSpec((1, C), lambda n, h: (0, 0)),
            # constant index_map -> weight slab DMA'd once, stays resident
            pl.BlockSpec((9 * C, C), lambda n, h: (0, 0)),
        ],
        out_specs=(
            pl.BlockSpec((1, TH, W, C), lambda n, h: (n, h, 0, 0)),
            pl.BlockSpec((1, 1, 2, C), lambda n, h: (n, h, 0, 0)),
        ),
        scratch_shapes=[
            pltpu.VMEM((TH + 2, W + 2, C), jnp.bfloat16),  # padded activated strip
            pltpu.VMEM((TH * W, 9 * C), jnp.bfloat16),     # im2col slab
        ],
        compiler_params=pltpu.CompilerParams(
            dimension_semantics=("parallel", "arbitrary"),
            vmem_limit_bytes=_VMEM_LIMIT),
        cost_estimate=pl.CostEstimate(flops=flops, transcendentals=0,
                                      bytes_accessed=bytes_accessed),
    )(x_nhwc, scale, shift, w_slab)
    return y, stats


def bn_add_relu(y_nhwc, scale, shift, x_nhwc):
    # Mem-bound elementwise kernel -> whole-image blocks (not tiny strips).
    N, H, W, C = y_nhwc.shape
    return pl.pallas_call(
        _bn_add_relu_kernel,
        out_shape=jax.ShapeDtypeStruct((N, H, W, C), jnp.float32),
        grid=(N,),
        in_specs=[
            pl.BlockSpec((1, H, W, C), lambda n: (n, 0, 0, 0)),
            pl.BlockSpec((1, C), lambda n: (0, 0)),
            pl.BlockSpec((1, C), lambda n: (0, 0)),
            pl.BlockSpec((1, H, W, C), lambda n: (n, 0, 0, 0)),
        ],
        out_specs=pl.BlockSpec((1, H, W, C), lambda n: (n, 0, 0, 0)),
        input_output_aliases={3: 0},   # write result in place of x (dead after)
        compiler_params=pltpu.CompilerParams(
            dimension_semantics=("parallel",),
            vmem_limit_bytes=_VMEM_LIMIT),
    )(y_nhwc, scale, shift, x_nhwc)


def _fold_bn(stats, count, gamma, beta, eps=1e-5):
    # stats: (N, NH, 2, C) per-strip [sum, sum_sq] partials from the conv kernel.
    total = stats.sum(axis=(0, 1))                            # (2, C), f32
    mean = total[0] / count
    var = jnp.maximum(total[1] / count - mean * mean, 0.0)    # biased (ddof=0)
    scale = gamma / jnp.sqrt(var + eps)
    shift = beta - mean * scale
    return scale.reshape(1, -1).astype(jnp.float32), \
           shift.reshape(1, -1).astype(jnp.float32)


def resblock_forward_nhwc(x_nhwc, w1_slab, gamma1, beta1, w2_slab, gamma2, beta2):
    """NHWC end-to-end path (no layout transposes)."""
    N, H, W, _ = x_nhwc.shape
    count = N * H * W

    # conv1 (+ fused bn1 statistics)
    y1, st1 = conv3x3_bn_stats(x_nhwc, w1_slab)
    s1, b1 = _fold_bn(st1, count, gamma1, beta1)

    # bn1 + relu fused into conv2's input path (+ fused bn2 statistics)
    y2, st2 = conv3x3_bn_stats(y1, w2_slab, s1, b1, input_act=True)
    s2, b2 = _fold_bn(st2, count, gamma2, beta2)

    # bn2 + residual add + relu
    return bn_add_relu(y2, s2, b2, x_nhwc)


def _prep_weight(w_oihw):
    # OIHW -> tap-major (9*Cin, Cout) bf16 slab matching the im2col column order.
    C = w_oihw.shape[0]
    return jnp.transpose(w_oihw, (2, 3, 1, 0)).reshape(9 * C, C).astype(jnp.bfloat16)


@jax.jit
def resblock_forward(x_nchw, w1_oihw, gamma1, beta1, w2_oihw, gamma2, beta2):
    # NCHW<->NHWC transposes exist only in this PyTorch-layout compatibility
    # wrapper; an NHWC model should call resblock_forward_nhwc directly.
    x = jnp.transpose(x_nchw, (0, 2, 3, 1))
    out = resblock_forward_nhwc(x, _prep_weight(w1_oihw), gamma1, beta1,
                                _prep_weight(w2_oihw), gamma2, beta2)
    return jnp.transpose(out, (0, 3, 1, 2))


# ----------------------------------------------------------------------------
# Pure-JAX reference (sanity check)
# ----------------------------------------------------------------------------
def resblock_reference(x_nchw, w1, g1, b1, w2, g2, b2, eps=1e-5):
    def conv(x, w):
        return jax.lax.conv_general_dilated(
            x, w, window_strides=(1, 1), padding="SAME",
            dimension_numbers=("NCHW", "OIHW", "NCHW"))

    def bn(y, g, b):
        mean = jnp.mean(y, axis=(0, 2, 3), keepdims=True)
        var = jnp.var(y, axis=(0, 2, 3), keepdims=True)
        return (y - mean) / jnp.sqrt(var + eps) * g.reshape(1, -1, 1, 1) \
               + b.reshape(1, -1, 1, 1)

    y = jax.nn.relu(bn(conv(x_nchw, w1), g1, b1))
    y = bn(conv(y, w2), g2, b2)
    return jax.nn.relu(x_nchw + y)


# ----------------------------------------------------------------------------
if __name__ == "__main__":
    # ch=128 (module default) maps channels exactly onto the 128 TPU lanes.
    N, C, H, W = 2, 128, 16, 16

    key = jax.random.PRNGKey(0)
    kx, kw1, kw2 = jax.random.split(key, 3)

    x = jax.random.normal(kx, (N, C, H, W), dtype=jnp.float32)

    # Conv2d(ch, ch, 3, padding=1, bias=False): weight (C, C, 3, 3),
    # kaiming-uniform-like deterministic init.
    fan_in = C * 3 * 3
    bound = (6.0 / fan_in) ** 0.5
    w1 = jax.random.uniform(kw1, (C, C, 3, 3), jnp.float32, -bound, bound)
    w2 = jax.random.uniform(kw2, (C, C, 3, 3), jnp.float32, -bound, bound)

    # BatchNorm2d default affine init: gamma=1, beta=0.
    gamma1 = jnp.ones((C,), jnp.float32)
    beta1 = jnp.zeros((C,), jnp.float32)
    gamma2 = jnp.ones((C,), jnp.float32)
    beta2 = jnp.zeros((C,), jnp.float32)

    out = resblock_forward(x, w1, gamma1, beta1, w2, gamma2, beta2)
    out = jax.block_until_ready(out)

    ref = resblock_reference(x, w1, gamma1, beta1, w2, gamma2, beta2)
    assert out.shape == (N, C, H, W)
    # bf16 MXU operands / bf16 y1,y2 intermediates (per perf review) relax the
    # all-f32 bitwise-tight tolerance; a real indexing/halo bug would blow far
    # past this bound.
    max_err = float(jnp.max(jnp.abs(out - ref)))
    assert jnp.allclose(out, ref, atol=1e-1, rtol=2e-2), f"max_err={max_err}"

    print("KERNEL_OK")
</pallas_src>

<mosaic_0001>
module attributes {stable_mosaic.version = 11 : i64} {
  func.func @_conv3x3_kernel(%arg0: i32, %arg1: i32, %arg2: memref<1x16x16x128xf32, #tpu.memory_space<vmem>>, %arg3: memref<1x128xf32, #tpu.memory_space<vmem>>, %arg4: memref<1x128xf32, #tpu.memory_space<vmem>>, %arg5: memref<1152x128xbf16, #tpu.memory_space<vmem>>, %arg6: memref<1x8x16x128xbf16, #tpu.memory_space<vmem>>, %arg7: memref<1x1x2x128xf32, #tpu.memory_space<vmem>>, %arg8: memref<10x18x128xbf16, #tpu.memory_space<vmem>>, %arg9: memref<128x1152xbf16, #tpu.memory_space<vmem>>) attributes {dimension_semantics = [#tpu.dimension_semantics<parallel>, #tpu.dimension_semantics<arbitrary>], iteration_bounds = array<i64: 2, 2>, scalar_prefetch = 0 : i64, scratch_operands = 2 : i64, tpu.core_type = #tpu.core_type<tc>, window_params = [{transform_indices = @transform_0, window_bounds = array<i64: 1, 16, 16, 128>}, {pipeline_mode = #tpu.pipeline_mode<synchronous>, transform_indices = @transform_1, window_bounds = array<i64: 1, 128>}, {pipeline_mode = #tpu.pipeline_mode<synchronous>, transform_indices = @transform_2, window_bounds = array<i64: 1, 128>}, {pipeline_mode = #tpu.pipeline_mode<synchronous>, transform_indices = @transform_3, window_bounds = array<i64: 1152, 128>}, {transform_indices = @transform_4, window_bounds = array<i64: 1, 8, 16, 128>}, {transform_indices = @transform_5, window_bounds = array<i64: 1, 1, 2, 128>}]} {
    %c8_i32 = arith.constant 8 : i32
    %0 = arith.muli %arg1, %c8_i32 : i32
    %1 = tpu.assume_multiple %0, 8 : i32
    %cst = arith.constant 0.000000e+00 : bf16
    %2 = vector.broadcast %cst : bf16 to vector<10x1x128xbf16>
    %c0 = arith.constant 0 : index
    %c0_0 = arith.constant 0 : index
    %c0_1 = arith.constant 0 : index
    %3 = vector.load %arg8[%c0, %c0_0, %c0_1] : memref<10x18x128xbf16, #tpu.memory_space<vmem>>, vector<10x1x128xbf16>
    tpu.vector_store %arg8[%c0, %c0_0, %c0_1], %2 {strides = array<i32>} : memref<10x18x128xbf16, #tpu.memory_space<vmem>>, vector<10x1x128xbf16>,
    %cst_2 = arith.constant 0.000000e+00 : bf16
    %4 = vector.broadcast %cst_2 : bf16 to vector<10x1x128xbf16>
    %c0_3 = arith.constant 0 : index
    %c17 = arith.constant 17 : index
    %c0_4 = arith.constant 0 : index
    %5 = vector.load %arg8[%c0_3, %c17, %c0_4] : memref<10x18x128xbf16, #tpu.memory_space<vmem>>, vector<10x1x128xbf16>
    tpu.vector_store %arg8[%c0_3, %c17, %c0_4], %4 {strides = array<i32>} : memref<10x18x128xbf16, #tpu.memory_space<vmem>>, vector<10x1x128xbf16>,
    %c0_5 = arith.constant 0 : index
    %6 = arith.index_cast %1 : i32 to index
    %c0_6 = arith.constant 0 : index
    %c0_7 = arith.constant 0 : index
    %7 = vector.load %arg2[%c0_5, %6, %c0_6, %c0_7] : memref<1x16x16x128xf32, #tpu.memory_space<vmem>>, vector<1x8x16x128xf32>
    %8 = vector.shape_cast %7 : vector<1x8x16x128xf32> to vector<8x16x128xf32>
    %9 = arith.truncf %8 : vector<8x16x128xf32> to vector<8x16x128xbf16>
    %c1 = arith.constant 1 : index
    %c1_8 = arith.constant 1 : index
    %c0_9 = arith.constant 0 : index
    %10 = vector.load %arg8[%c1, %c1_8, %c0_9] : memref<10x18x128xbf16, #tpu.memory_space<vmem>>, vector<8x16x128xbf16>
    tpu.vector_store %arg8[%c1, %c1_8, %c0_9], %9 {strides = array<i32>} : memref<10x18x128xbf16, #tpu.memory_space<vmem>>, vector<8x16x128xbf16>,
    %c0_i32 = arith.constant 0 : i32
    %11 = arith.cmpi eq, %arg1, %c0_i32 : i32
    %12 = arith.extui %11 : i1 to i32
    %c0_i32_10 = arith.constant 0 : i32
    %13 = arith.cmpi ne, %12, %c0_i32_10 : i32
    scf.if %13 {
      %cst_71 = arith.constant 0.000000e+00 : bf16
      %69 = vector.broadcast %cst_71 : bf16 to vector<1x16x128xbf16>
      %c0_72 = arith.constant 0 : index
      %c1_73 = arith.constant 1 : index
      %c0_74 = arith.constant 0 : index
      %70 = vector.load %arg8[%c0_72, %c1_73, %c0_74] : memref<10x18x128xbf16, #tpu.memory_space<vmem>>, vector<1x16x128xbf16>
      tpu.vector_store %arg8[%c0_72, %c1_73, %c0_74], %69 {strides = array<i32>} : memref<10x18x128xbf16, #tpu.memory_space<vmem>>, vector<1x16x128xbf16>,
    } else {
    }
    %c0_i32_11 = arith.constant 0 : i32
    %14 = arith.cmpi sgt, %arg1, %c0_i32_11 : i32
    %15 = arith.extui %14 : i1 to i32
    %c0_i32_12 = arith.constant 0 : i32
    %16 = arith.cmpi ne, %15, %c0_i32_12 : i32
    scf.if %16 {
      %c1_i32_71 = arith.constant 1 : i32
      %69 = arith.subi %1, %c1_i32_71 : i32
      %c0_72 = arith.constant 0 : index
      %70 = arith.index_cast %69 : i32 to index
      %c0_73 = arith.constant 0 : index
      %c0_74 = arith.constant 0 : index
      %71 = vector.load %arg2[%c0_72, %70, %c0_73, %c0_74] : memref<1x16x16x128xf32, #tpu.memory_space<vmem>>, vector<1x1x16x128xf32>
      %72 = vector.shape_cast %71 : vector<1x1x16x128xf32> to vector<1x16x128xf32>
      %73 = arith.truncf %72 : vector<1x16x128xf32> to vector<1x16x128xbf16>
      %c0_75 = arith.constant 0 : index
      %c1_76 = arith.constant 1 : index
      %c0_77 = arith.constant 0 : index
      %74 = vector.load %arg8[%c0_75, %c1_76, %c0_77] : memref<10x18x128xbf16, #tpu.memory_space<vmem>>, vector<1x16x128xbf16>
      tpu.vector_store %arg8[%c0_75, %c1_76, %c0_77], %73 {strides = array<i32>} : memref<10x18x128xbf16, #tpu.memory_space<vmem>>, vector<1x16x128xbf16>,
    } else {
    }
    %c1_i32 = arith.constant 1 : i32
    %17 = arith.cmpi eq, %arg1, %c1_i32 : i32
    %18 = arith.extui %17 : i1 to i32
    %c0_i32_13 = arith.constant 0 : i32
    %19 = arith.cmpi ne, %18, %c0_i32_13 : i32
    scf.if %19 {
      %cst_71 = arith.constant 0.000000e+00 : bf16
      %69 = vector.broadcast %cst_71 : bf16 to vector<1x16x128xbf16>
      %c9 = arith.constant 9 : index
      %c1_72 = arith.constant 1 : index
      %c0_73 = arith.constant 0 : index
      %70 = vector.load %arg8[%c9, %c1_72, %c0_73] : memref<10x18x128xbf16, #tpu.memory_space<vmem>>, vector<1x16x128xbf16>
      tpu.vector_store %arg8[%c9, %c1_72, %c0_73], %69 {strides = array<i32>} : memref<10x18x128xbf16, #tpu.memory_space<vmem>>, vector<1x16x128xbf16>,
    } else {
    }
    %c1_i32_14 = arith.constant 1 : i32
    %20 = arith.cmpi slt, %arg1, %c1_i32_14 : i32
    %21 = arith.extui %20 : i1 to i32
    %c0_i32_15 = arith.constant 0 : i32
    %22 = arith.cmpi ne, %21, %c0_i32_15 : i32
    scf.if %22 {
      %c8_i32_71 = arith.constant 8 : i32
      %69 = arith.addi %1, %c8_i32_71 : i32
      %c0_72 = arith.constant 0 : index
      %70 = arith.index_cast %69 : i32 to index
      %c0_73 = arith.constant 0 : index
      %c0_74 = arith.constant 0 : index
      %71 = vector.load %arg2[%c0_72, %70, %c0_73, %c0_74] : memref<1x16x16x128xf32, #tpu.memory_space<vmem>>, vector<1x1x16x128xf32>
      %72 = vector.shape_cast %71 : vector<1x1x16x128xf32> to vector<1x16x128xf32>
      %73 = arith.truncf %72 : vector<1x16x128xf32> to vector<1x16x128xbf16>
      %c9 = arith.constant 9 : index
      %c1_75 = arith.constant 1 : index
      %c0_76 = arith.constant 0 : index
      %74 = vector.load %arg8[%c9, %c1_75, %c0_76] : memref<10x18x128xbf16, #tpu.memory_space<vmem>>, vector<1x16x128xbf16>
      tpu.vector_store %arg8[%c9, %c1_75, %c0_76], %73 {strides = array<i32>} : memref<10x18x128xbf16, #tpu.memory_space<vmem>>, vector<1x16x128xbf16>,
    } else {
    }
    %c0_16 = arith.constant 0 : index
    %c0_17 = arith.constant 0 : index
    %c0_18 = arith.constant 0 : index
    %23 = vector.load %arg8[%c0_16, %c0_17, %c0_18] : memref<10x18x128xbf16, #tpu.memory_space<vmem>>, vector<8x16x128xbf16>
    %24 = vector.shape_cast %23 : vector<8x16x128xbf16> to vector<128x128xbf16>
    %c0_19 = arith.constant 0 : index
    %c0_20 = arith.constant 0 : index
    %25 = vector.load %arg9[%c0_19, %c0_20] : memref<128x1152xbf16, #tpu.memory_space<vmem>>, vector<128x128xbf16>
    tpu.vector_store %arg9[%c0_19, %c0_20], %24 {strides = array<i32>} : memref<128x1152xbf16, #tpu.memory_space<vmem>>, vector<128x128xbf16>,
    %c0_21 = arith.constant 0 : index
    %c1_22 = arith.constant 1 : index
    %c0_23 = arith.constant 0 : index
    %26 = vector.load %arg8[%c0_21, %c1_22, %c0_23] : memref<10x18x128xbf16, #tpu.memory_space<vmem>>, vector<8x16x128xbf16>
    %27 = vector.shape_cast %26 : vector<8x16x128xbf16> to vector<128x128xbf16>
    %c0_24 = arith.constant 0 : index
    %c128 = arith.constant 128 : index
    %28 = vector.load %arg9[%c0_24, %c128] : memref<128x1152xbf16, #tpu.memory_space<vmem>>, vector<128x128xbf16>
    tpu.vector_store %arg9[%c0_24, %c128], %27 {strides = array<i32>} : memref<128x1152xbf16, #tpu.memory_space<vmem>>, vector<128x128xbf16>,
    %c0_25 = arith.constant 0 : index
    %c2 = arith.constant 2 : index
    %c0_26 = arith.constant 0 : index
    %29 = vector.load %arg8[%c0_25, %c2, %c0_26] : memref<10x18x128xbf16, #tpu.memory_space<vmem>>, vector<8x16x128xbf16>
    %30 = vector.shape_cast %29 : vector<8x16x128xbf16> to vector<128x128xbf16>
    %c0_27 = arith.constant 0 : index
    %c256 = arith.constant 256 : index
    %31 = vector.load %arg9[%c0_27, %c256] : memref<128x1152xbf16, #tpu.memory_space<vmem>>, vector<128x128xbf16>
    tpu.vector_store %arg9[%c0_27, %c256], %30 {strides = array<i32>} : memref<128x1152xbf16, #tpu.memory_space<vmem>>, vector<128x128xbf16>,
    %c1_28 = arith.constant 1 : index
    %c0_29 = arith.constant 0 : index
    %c0_30 = arith.constant 0 : index
    %32 = vector.load %arg8[%c1_28, %c0_29, %c0_30] : memref<10x18x128xbf16, #tpu.memory_space<vmem>>, vector<8x16x128xbf16>
    %33 = vector.shape_cast %32 : vector<8x16x128xbf16> to vector<128x128xbf16>
    %c0_31 = arith.constant 0 : index
    %c384 = arith.constant 384 : index
    %34 = vector.load %arg9[%c0_31, %c384] : memref<128x1152xbf16, #tpu.memory_space<vmem>>, vector<128x128xbf16>
    tpu.vector_store %arg9[%c0_31, %c384], %33 {strides = array<i32>} : memref<128x1152xbf16, #tpu.memory_space<vmem>>, vector<128x128xbf16>,
    %c1_32 = arith.constant 1 : index
    %c1_33 = arith.constant 1 : index
    %c0_34 = arith.constant 0 : index
    %35 = vector.load %arg8[%c1_32, %c1_33, %c0_34] : memref<10x18x128xbf16, #tpu.memory_space<vmem>>, vector<8x16x128xbf16>
    %36 = vector.shape_cast %35 : vector<8x16x128xbf16> to vector<128x128xbf16>
    %c0_35 = arith.constant 0 : index
    %c512 = arith.constant 512 : index
    %37 = vector.load %arg9[%c0_35, %c512] : memref<128x1152xbf16, #tpu.memory_space<vmem>>, vector<128x128xbf16>
    tpu.vector_store %arg9[%c0_35, %c512], %36 {strides = array<i32>} : memref<128x1152xbf16, #tpu.memory_space<vmem>>, vector<128x128xbf16>,
    %c1_36 = arith.constant 1 : index
    %c2_37 = arith.constant 2 : index
    %c0_38 = arith.constant 0 : index
    %38 = vector.load %arg8[%c1_36, %c2_37, %c0_38] : memref<10x18x128xbf16, #tpu.memory_space<vmem>>, vector<8x16x128xbf16>
    %39 = vector.shape_cast %38 : vector<8x16x128xbf16> to vector<128x128xbf16>
    %c0_39 = arith.constant 0 : index
    %c640 = arith.constant 640 : index
    %40 = vector.load %arg9[%c0_39, %c640] : memref<128x1152xbf16, #tpu.memory_space<vmem>>, vector<128x128xbf16>
    tpu.vector_store %arg9[%c0_39, %c640], %39 {strides = array<i32>} : memref<128x1152xbf16, #tpu.memory_space<vmem>>, vector<128x128xbf16>,
    %c2_40 = arith.constant 2 : index
    %c0_41 = arith.constant 0 : index
    %c0_42 = arith.constant 0 : index
    %41 = vector.load %arg8[%c2_40, %c0_41, %c0_42] : memref<10x18x128xbf16, #tpu.memory_space<vmem>>, vector<8x16x128xbf16>
    %42 = vector.shape_cast %41 : vector<8x16x128xbf16> to vector<128x128xbf16>
    %c0_43 = arith.constant 0 : index
    %c768 = arith.constant 768 : index
    %43 = vector.load %arg9[%c0_43, %c768] : memref<128x1152xbf16, #tpu.memory_space<vmem>>, vector<128x128xbf16>
    tpu.vector_store %arg9[%c0_43, %c768], %42 {strides = array<i32>} : memref<128x1152xbf16, #tpu.memory_space<vmem>>, vector<128x128xbf16>,
    %c2_44 = arith.constant 2 : index
    %c1_45 = arith.constant 1 : index
    %c0_46 = arith.constant 0 : index
    %44 = vector.load %arg8[%c2_44, %c1_45, %c0_46] : memref<10x18x128xbf16, #tpu.memory_space<vmem>>, vector<8x16x128xbf16>
    %45 = vector.shape_cast %44 : vector<8x16x128xbf16> to vector<128x128xbf16>
    %c0_47 = arith.constant 0 : index
    %c896 = arith.constant 896 : index
    %46 = vector.load %arg9[%c0_47, %c896] : memref<128x1152xbf16, #tpu.memory_space<vmem>>, vector<128x128xbf16>
    tpu.vector_store %arg9[%c0_47, %c896], %45 {strides = array<i32>} : memref<128x1152xbf16, #tpu.memory_space<vmem>>, vector<128x128xbf16>,
    %c2_48 = arith.constant 2 : index
    %c2_49 = arith.constant 2 : index
    %c0_50 = arith.constant 0 : index
    %47 = vector.load %arg8[%c2_48, %c2_49, %c0_50] : memref<10x18x128xbf16, #tpu.memory_space<vmem>>, vector<8x16x128xbf16>
    %48 = vector.shape_cast %47 : vector<8x16x128xbf16> to vector<128x128xbf16>
    %c0_51 = arith.constant 0 : index
    %c1024 = arith.constant 1024 : index
    %49 = vector.load %arg9[%c0_51, %c1024] : memref<128x1152xbf16, #tpu.memory_space<vmem>>, vector<128x128xbf16>
    tpu.vector_store %arg9[%c0_51, %c1024], %48 {strides = array<i32>} : memref<128x1152xbf16, #tpu.memory_space<vmem>>, vector<128x128xbf16>,
    %c0_52 = arith.constant 0 : index
    %c0_53 = arith.constant 0 : index
    %50 = vector.load %arg9[%c0_52, %c0_53] : memref<128x1152xbf16, #tpu.memory_space<vmem>>, vector<128x1152xbf16>
    %c0_54 = arith.constant 0 : index
    %c0_55 = arith.constant 0 : index
    %51 = vector.load %arg5[%c0_54, %c0_55] : memref<1152x128xbf16, #tpu.memory_space<vmem>>, vector<1152x128xbf16>
    %cst_56 = arith.constant dense<0.000000e+00> : vector<128x128xf32>
    %52 = tpu.matmul %50, %51, %cst_56 {dimension_numbers = #tpu.dot_dimension_numbers<[1], [0], [0], [1], [0, 0, 1, 1], [], []>} : vector<128x1152xbf16>, vector<1152x128xbf16>, vector<128x128xf32> -> vector<128x128xf32>
    %53 = vector.shape_cast %52 : vector<128x128xf32> to vector<8x16x128xf32>
    %54 = arith.truncf %53 : vector<8x16x128xf32> to vector<8x16x128xbf16>
    %c0_57 = arith.constant 0 : index
    %c0_58 = arith.constant 0 : index
    %c0_59 = arith.constant 0 : index
    %c0_60 = arith.constant 0 : index
    %55 = vector.load %arg6[%c0_57, %c0_58, %c0_59, %c0_60] : memref<1x8x16x128xbf16, #tpu.memory_space<vmem>>, vector<1x8x16x128xbf16>
    %56 = vector.shape_cast %55 : vector<1x8x16x128xbf16> to vector<8x16x128xbf16>
    %57 = vector.shape_cast %54 : vector<8x16x128xbf16> to vector<1x8x16x128xbf16>
    tpu.vector_store %arg6[%c0_57, %c0_58, %c0_59, %c0_60], %57 {strides = array<i32>} : memref<1x8x16x128xbf16, #tpu.memory_space<vmem>>, vector<1x8x16x128xbf16>,
    %cst_61 = arith.constant dense<0.000000e+00> : vector<128xf32>
    %58 = vector.multi_reduction <add>, %52, %cst_61 [0] : vector<128x128xf32> to vector<128xf32>
    %59 = vector.shape_cast %58 : vector<128xf32> to vector<1x128xf32>
    %c0_62 = arith.constant 0 : index
    %c0_63 = arith.constant 0 : index
    %c0_64 = arith.constant 0 : index
    %c0_65 = arith.constant 0 : index
    %60 = vector.load %arg7[%c0_62, %c0_63, %c0_64, %c0_65] : memref<1x1x2x128xf32, #tpu.memory_space<vmem>>, vector<1x1x1x128xf32>
    %61 = vector.shape_cast %60 : vector<1x1x1x128xf32> to vector<1x128xf32>
    %62 = vector.shape_cast %59 : vector<1x128xf32> to vector<1x1x1x128xf32>
    tpu.vector_store %arg7[%c0_62, %c0_63, %c0_64, %c0_65], %62 {strides = array<i32>} : memref<1x1x2x128xf32, #tpu.memory_space<vmem>>, vector<1x1x1x128xf32>,
    %63 = arith.mulf %52, %52 : vector<128x128xf32>
    %cst_66 = arith.constant dense<0.000000e+00> : vector<128xf32>
    %64 = vector.multi_reduction <add>, %63, %cst_66 [0] : vector<128x128xf32> to vector<128xf32>
    %65 = vector.shape_cast %64 : vector<128xf32> to vector<1x128xf32>
    %c0_67 = arith.constant 0 : index
    %c0_68 = arith.constant 0 : index
    %c1_69 = arith.constant 1 : index
    %c0_70 = arith.constant 0 : index
    %66 = vector.load %arg7[%c0_67, %c0_68, %c1_69, %c0_70] : memref<1x1x2x128xf32, #tpu.memory_space<vmem>>, vector<1x1x1x128xf32>
    %67 = vector.shape_cast %66 : vector<1x1x1x128xf32> to vector<1x128xf32>
    %68 = vector.shape_cast %65 : vector<1x128xf32> to vector<1x1x1x128xf32>
    tpu.vector_store %arg7[%c0_67, %c0_68, %c1_69, %c0_70], %68 {strides = array<i32>} : memref<1x1x2x128xf32, #tpu.memory_space<vmem>>, vector<1x1x1x128xf32>,
    return
  }
  func.func @transform_0(%arg0: i32, %arg1: i32) -> (i32, i32, i32, i32) {
    %c0_i32 = arith.constant 0 : i32
    %c0_i32_0 = arith.constant 0 : i32
    %c0_i32_1 = arith.constant 0 : i32
    %c0_i32_2 = arith.constant 0 : i32
    return %arg0, %c0_i32, %c0_i32_0, %c0_i32_1 : i32, i32, i32, i32
  }
  func.func @transform_1(%arg0: i32, %arg1: i32) -> (i32, i32) {
    %c0_i32 = arith.constant 0 : i32
    %c0_i32_0 = arith.constant 0 : i32
    %c0_i32_1 = arith.constant 0 : i32
    return %c0_i32, %c0_i32_0 : i32, i32
  }
  func.func @transform_2(%arg0: i32, %arg1: i32) -> (i32, i32) {
    %c0_i32 = arith.constant 0 : i32
    %c0_i32_0 = arith.constant 0 : i32
    %c0_i32_1 = arith.constant 0 : i32
    return %c0_i32, %c0_i32_0 : i32, i32
  }
  func.func @transform_3(%arg0: i32, %arg1: i32) -> (i32, i32) {
    %c0_i32 = arith.constant 0 : i32
    %c0_i32_0 = arith.constant 0 : i32
    %c0_i32_1 = arith.constant 0 : i32
    return %c0_i32, %c0_i32_0 : i32, i32
  }
  func.func @transform_4(%arg0: i32, %arg1: i32) -> (i32, i32, i32, i32) {
    %c0_i32 = arith.constant 0 : i32
    %c0_i32_0 = arith.constant 0 : i32
    %c0_i32_1 = arith.constant 0 : i32
    return %arg0, %arg1, %c0_i32, %c0_i32_0 : i32, i32, i32, i32
  }
  func.func @transform_5(%arg0: i32, %arg1: i32) -> (i32, i32, i32, i32) {
    %c0_i32 = arith.constant 0 : i32
    %c0_i32_0 = arith.constant 0 : i32
    %c0_i32_1 = arith.constant 0 : i32
    return %arg0, %arg1, %c0_i32, %c0_i32_0 : i32, i32, i32, i32
  }
}

module attributes {stable_mosaic.version = 11 : i64} {
  func.func @_conv3x3_kernel(%arg0: i32, %arg1: i32, %arg2: memref<1x16x16x128xbf16, #tpu.memory_space<vmem>>, %arg3: memref<1x128xf32, #tpu.memory_space<vmem>>, %arg4: memref<1x128xf32, #tpu.memory_space<vmem>>, %arg5: memref<1152x128xbf16, #tpu.memory_space<vmem>>, %arg6: memref<1x8x16x128xbf16, #tpu.memory_space<vmem>>, %arg7: memref<1x1x2x128xf32, #tpu.memory_space<vmem>>, %arg8: memref<10x18x128xbf16, #tpu.memory_space<vmem>>, %arg9: memref<128x1152xbf16, #tpu.memory_space<vmem>>) attributes {dimension_semantics = [#tpu.dimension_semantics<parallel>, #tpu.dimension_semantics<arbitrary>], iteration_bounds = array<i64: 2, 2>, scalar_prefetch = 0 : i64, scratch_operands = 2 : i64, tpu.core_type = #tpu.core_type<tc>, window_params = [{transform_indices = @transform_0, window_bounds = array<i64: 1, 16, 16, 128>}, {pipeline_mode = #tpu.pipeline_mode<synchronous>, transform_indices = @transform_1, window_bounds = array<i64: 1, 128>}, {pipeline_mode = #tpu.pipeline_mode<synchronous>, transform_indices = @transform_2, window_bounds = array<i64: 1, 128>}, {pipeline_mode = #tpu.pipeline_mode<synchronous>, transform_indices = @transform_3, window_bounds = array<i64: 1152, 128>}, {transform_indices = @transform_4, window_bounds = array<i64: 1, 8, 16, 128>}, {transform_indices = @transform_5, window_bounds = array<i64: 1, 1, 2, 128>}]} {
    %c8_i32 = arith.constant 8 : i32
    %0 = arith.muli %arg1, %c8_i32 : i32
    %1 = tpu.assume_multiple %0, 8 : i32
    %cst = arith.constant 0.000000e+00 : bf16
    %2 = vector.broadcast %cst : bf16 to vector<10x1x128xbf16>
    %c0 = arith.constant 0 : index
    %c0_0 = arith.constant 0 : index
    %c0_1 = arith.constant 0 : index
    %3 = vector.load %arg8[%c0, %c0_0, %c0_1] : memref<10x18x128xbf16, #tpu.memory_space<vmem>>, vector<10x1x128xbf16>
    tpu.vector_store %arg8[%c0, %c0_0, %c0_1], %2 {strides = array<i32>} : memref<10x18x128xbf16, #tpu.memory_space<vmem>>, vector<10x1x128xbf16>,
    %cst_2 = arith.constant 0.000000e+00 : bf16
    %4 = vector.broadcast %cst_2 : bf16 to vector<10x1x128xbf16>
    %c0_3 = arith.constant 0 : index
    %c17 = arith.constant 17 : index
    %c0_4 = arith.constant 0 : index
    %5 = vector.load %arg8[%c0_3, %c17, %c0_4] : memref<10x18x128xbf16, #tpu.memory_space<vmem>>, vector<10x1x128xbf16>
    tpu.vector_store %arg8[%c0_3, %c17, %c0_4], %4 {strides = array<i32>} : memref<10x18x128xbf16, #tpu.memory_space<vmem>>, vector<10x1x128xbf16>,
    %c0_5 = arith.constant 0 : index
    %6 = arith.index_cast %1 : i32 to index
    %c0_6 = arith.constant 0 : index
    %c0_7 = arith.constant 0 : index
    %7 = vector.load %arg2[%c0_5, %6, %c0_6, %c0_7] : memref<1x16x16x128xbf16, #tpu.memory_space<vmem>>, vector<1x8x16x128xbf16>
    %8 = vector.shape_cast %7 : vector<1x8x16x128xbf16> to vector<8x16x128xbf16>
    %9 = arith.extf %8 : vector<8x16x128xbf16> to vector<8x16x128xf32>
    %c0_8 = arith.constant 0 : index
    %c0_9 = arith.constant 0 : index
    %10 = vector.load %arg3[%c0_8, %c0_9] : memref<1x128xf32, #tpu.memory_space<vmem>>, vector<1x128xf32>
    %11 = vector.shape_cast %10 : vector<1x128xf32> to vector<1x1x128xf32>
    %12 = vector.broadcast %11 : vector<1x1x128xf32> to vector<8x16x128xf32>
    %13 = arith.mulf %9, %12 : vector<8x16x128xf32>
    %c0_10 = arith.constant 0 : index
    %c0_11 = arith.constant 0 : index
    %14 = vector.load %arg4[%c0_10, %c0_11] : memref<1x128xf32, #tpu.memory_space<vmem>>, vector<1x128xf32>
    %15 = vector.shape_cast %14 : vector<1x128xf32> to vector<1x1x128xf32>
    %16 = vector.broadcast %15 : vector<1x1x128xf32> to vector<8x16x128xf32>
    %17 = arith.addf %13, %16 : vector<8x16x128xf32>
    %cst_12 = arith.constant 0.000000e+00 : f32
    %18 = vector.broadcast %cst_12 : f32 to vector<8x16x128xf32>
    %19 = arith.maximumf %17, %18 : vector<8x16x128xf32>
    %20 = arith.truncf %19 : vector<8x16x128xf32> to vector<8x16x128xbf16>
    %c1 = arith.constant 1 : index
    %c1_13 = arith.constant 1 : index
    %c0_14 = arith.constant 0 : index
    %21 = vector.load %arg8[%c1, %c1_13, %c0_14] : memref<10x18x128xbf16, #tpu.memory_space<vmem>>, vector<8x16x128xbf16>
    tpu.vector_store %arg8[%c1, %c1_13, %c0_14], %20 {strides = array<i32>} : memref<10x18x128xbf16, #tpu.memory_space<vmem>>, vector<8x16x128xbf16>,
    %c0_i32 = arith.constant 0 : i32
    %22 = arith.cmpi eq, %arg1, %c0_i32 : i32
    %23 = arith.extui %22 : i1 to i32
    %c0_i32_15 = arith.constant 0 : i32
    %24 = arith.cmpi ne, %23, %c0_i32_15 : i32
    scf.if %24 {
      %cst_76 = arith.constant 0.000000e+00 : bf16
      %80 = vector.broadcast %cst_76 : bf16 to vector<1x16x128xbf16>
      %c0_77 = arith.constant 0 : index
      %c1_78 = arith.constant 1 : index
      %c0_79 = arith.constant 0 : index
      %81 = vector.load %arg8[%c0_77, %c1_78, %c0_79] : memref<10x18x128xbf16, #tpu.memory_space<vmem>>, vector<1x16x128xbf16>
      tpu.vector_store %arg8[%c0_77, %c1_78, %c0_79], %80 {strides = array<i32>} : memref<10x18x128xbf16, #tpu.memory_space<vmem>>, vector<1x16x128xbf16>,
    } else {
    }
    %c0_i32_16 = arith.constant 0 : i32
    %25 = arith.cmpi sgt, %arg1, %c0_i32_16 : i32
    %26 = arith.extui %25 : i1 to i32
    %c0_i32_17 = arith.constant 0 : i32
    %27 = arith.cmpi ne, %26, %c0_i32_17 : i32
    scf.if %27 {
      %c1_i32_76 = arith.constant 1 : i32
      %80 = arith.subi %1, %c1_i32_76 : i32
      %c0_77 = arith.constant 0 : index
      %81 = arith.index_cast %80 : i32 to index
      %c0_78 = arith.constant 0 : index
      %c0_79 = arith.constant 0 : index
      %82 = vector.load %arg2[%c0_77, %81, %c0_78, %c0_79] : memref<1x16x16x128xbf16, #tpu.memory_space<vmem>>, vector<1x1x16x128xbf16>
      %83 = vector.shape_cast %82 : vector<1x1x16x128xbf16> to vector<1x16x128xbf16>
      %84 = arith.extf %83 : vector<1x16x128xbf16> to vector<1x16x128xf32>
      %c0_80 = arith.constant 0 : index
      %c0_81 = arith.constant 0 : index
      %85 = vector.load %arg3[%c0_80, %c0_81] : memref<1x128xf32, #tpu.memory_space<vmem>>, vector<1x128xf32>
      %86 = vector.shape_cast %85 : vector<1x128xf32> to vector<1x1x128xf32>
      %87 = vector.broadcast %86 : vector<1x1x128xf32> to vector<1x16x128xf32>
      %88 = arith.mulf %84, %87 : vector<1x16x128xf32>
      %c0_82 = arith.constant 0 : index
      %c0_83 = arith.constant 0 : index
      %89 = vector.load %arg4[%c0_82, %c0_83] : memref<1x128xf32, #tpu.memory_space<vmem>>, vector<1x128xf32>
      %90 = vector.shape_cast %89 : vector<1x128xf32> to vector<1x1x128xf32>
      %91 = vector.broadcast %90 : vector<1x1x128xf32> to vector<1x16x128xf32>
      %92 = arith.addf %88, %91 : vector<1x16x128xf32>
      %cst_84 = arith.constant 0.000000e+00 : f32
      %93 = vector.broadcast %cst_84 : f32 to vector<1x16x128xf32>
      %94 = arith.maximumf %92, %93 : vector<1x16x128xf32>
      %95 = arith.truncf %94 : vector<1x16x128xf32> to vector<1x16x128xbf16>
      %c0_85 = arith.constant 0 : index
      %c1_86 = arith.constant 1 : index
      %c0_87 = arith.constant 0 : index
      %96 = vector.load %arg8[%c0_85, %c1_86, %c0_87] : memref<10x18x128xbf16, #tpu.memory_space<vmem>>, vector<1x16x128xbf16>
      tpu.vector_store %arg8[%c0_85, %c1_86, %c0_87], %95 {strides = array<i32>} : memref<10x18x128xbf16, #tpu.memory_space<vmem>>, vector<1x16x128xbf16>,
    } else {
    }
    %c1_i32 = arith.constant 1 : i32
    %28 = arith.cmpi eq, %arg1, %c1_i32 : i32
    %29 = arith.extui %28 : i1 to i32
    %c0_i32_18 = arith.constant 0 : i32
    %30 = arith.cmpi ne, %29, %c0_i32_18 : i32
    scf.if %30 {
      %cst_76 = arith.constant 0.000000e+00 : bf16
      %80 = vector.broadcast %cst_76 : bf16 to vector<1x16x128xbf16>
      %c9 = arith.constant 9 : index
      %c1_77 = arith.constant 1 : index
      %c0_78 = arith.constant 0 : index
      %81 = vector.load %arg8[%c9, %c1_77, %c0_78] : memref<10x18x128xbf16, #tpu.memory_space<vmem>>, vector<1x16x128xbf16>
      tpu.vector_store %arg8[%c9, %c1_77, %c0_78], %80 {strides = array<i32>} : memref<10x18x128xbf16, #tpu.memory_space<vmem>>, vector<1x16x128xbf16>,
    } else {
    }
    %c1_i32_19 = arith.constant 1 : i32
    %31 = arith.cmpi slt, %arg1, %c1_i32_19 : i32
    %32 = arith.extui %31 : i1 to i32
    %c0_i32_20 = arith.constant 0 : i32
    %33 = arith.cmpi ne, %32, %c0_i32_20 : i32
    scf.if %33 {
      %c8_i32_76 = arith.constant 8 : i32
      %80 = arith.addi %1, %c8_i32_76 : i32
      %c0_77 = arith.constant 0 : index
      %81 = arith.index_cast %80 : i32 to index
      %c0_78 = arith.constant 0 : index
      %c0_79 = arith.constant 0 : index
      %82 = vector.load %arg2[%c0_77, %81, %c0_78, %c0_79] : memref<1x16x16x128xbf16, #tpu.memory_space<vmem>>, vector<1x1x16x128xbf16>
      %83 = vector.shape_cast %82 : vector<1x1x16x128xbf16> to vector<1x16x128xbf16>
      %84 = arith.extf %83 : vector<1x16x128xbf16> to vector<1x16x128xf32>
      %c0_80 = arith.constant 0 : index
      %c0_81 = arith.constant 0 : index
      %85 = vector.load %arg3[%c0_80, %c0_81] : memref<1x128xf32, #tpu.memory_space<vmem>>, vector<1x128xf32>
      %86 = vector.shape_cast %85 : vector<1x128xf32> to vector<1x1x128xf32>
      %87 = vector.broadcast %86 : vector<1x1x128xf32> to vector<1x16x128xf32>
      %88 = arith.mulf %84, %87 : vector<1x16x128xf32>
      %c0_82 = arith.constant 0 : index
      %c0_83 = arith.constant 0 : index
      %89 = vector.load %arg4[%c0_82, %c0_83] : memref<1x128xf32, #tpu.memory_space<vmem>>, vector<1x128xf32>
      %90 = vector.shape_cast %89 : vector<1x128xf32> to vector<1x1x128xf32>
      %91 = vector.broadcast %90 : vector<1x1x128xf32> to vector<1x16x128xf32>
      %92 = arith.addf %88, %91 : vector<1x16x128xf32>
      %cst_84 = arith.constant 0.000000e+00 : f32
      %93 = vector.broadcast %cst_84 : f32 to vector<1x16x128xf32>
      %94 = arith.maximumf %92, %93 : vector<1x16x128xf32>
      %95 = arith.truncf %94 : vector<1x16x128xf32> to vector<1x16x128xbf16>
      %c9 = arith.constant 9 : index
      %c1_85 = arith.constant 1 : index
      %c0_86 = arith.constant 0 : index
      %96 = vector.load %arg8[%c9, %c1_85, %c0_86] : memref<10x18x128xbf16, #tpu.memory_space<vmem>>, vector<1x16x128xbf16>
      tpu.vector_store %arg8[%c9, %c1_85, %c0_86], %95 {strides = array<i32>} : memref<10x18x128xbf16, #tpu.memory_space<vmem>>, vector<1x16x128xbf16>,
    } else {
    }
    %c0_21 = arith.constant 0 : index
    %c0_22 = arith.constant 0 : index
    %c0_23 = arith.constant 0 : index
    %34 = vector.load %arg8[%c0_21, %c0_22, %c0_23] : memref<10x18x128xbf16, #tpu.memory_space<vmem>>, vector<8x16x128xbf16>
    %35 = vector.shape_cast %34 : vector<8x16x128xbf16> to vector<128x128xbf16>
    %c0_24 = arith.constant 0 : index
    %c0_25 = arith.constant 0 : index
    %36 = vector.load %arg9[%c0_24, %c0_25] : memref<128x1152xbf16, #tpu.memory_space<vmem>>, vector<128x128xbf16>
    tpu.vector_store %arg9[%c0_24, %c0_25], %35 {strides = array<i32>} : memref<128x1152xbf16, #tpu.memory_space<vmem>>, vector<128x128xbf16>,
    %c0_26 = arith.constant 0 : index
    %c1_27 = arith.constant 1 : index
    %c0_28 = arith.constant 0 : index
    %37 = vector.load %arg8[%c0_26, %c1_27, %c0_28] : memref<10x18x128xbf16, #tpu.memory_space<vmem>>, vector<8x16x128xbf16>
    %38 = vector.shape_cast %37 : vector<8x16x128xbf16> to vector<128x128xbf16>
    %c0_29 = arith.constant 0 : index
    %c128 = arith.constant 128 : index
    %39 = vector.load %arg9[%c0_29, %c128] : memref<128x1152xbf16, #tpu.memory_space<vmem>>, vector<128x128xbf16>
    tpu.vector_store %arg9[%c0_29, %c128], %38 {strides = array<i32>} : memref<128x1152xbf16, #tpu.memory_space<vmem>>, vector<128x128xbf16>,
    %c0_30 = arith.constant 0 : index
    %c2 = arith.constant 2 : index
    %c0_31 = arith.constant 0 : index
    %40 = vector.load %arg8[%c0_30, %c2, %c0_31] : memref<10x18x128xbf16, #tpu.memory_space<vmem>>, vector<8x16x128xbf16>
    %41 = vector.shape_cast %40 : vector<8x16x128xbf16> to vector<128x128xbf16>
    %c0_32 = arith.constant 0 : index
    %c256 = arith.constant 256 : index
    %42 = vector.load %arg9[%c0_32, %c256] : memref<128x1152xbf16, #tpu.memory_space<vmem>>, vector<128x128xbf16>
    tpu.vector_store %arg9[%c0_32, %c256], %41 {strides = array<i32>} : memref<128x1152xbf16, #tpu.memory_space<vmem>>, vector<128x128xbf16>,
    %c1_33 = arith.constant 1 : index
    %c0_34 = arith.constant 0 : index
    %c0_35 = arith.constant 0 : index
    %43 = vector.load %arg8[%c1_33, %c0_34, %c0_35] : memref<10x18x128xbf16, #tpu.memory_space<vmem>>, vector<8x16x128xbf16>
    %44 = vector.shape_cast %43 : vector<8x16x128xbf16> to vector<128x128xbf16>
    %c0_36 = arith.constant 0 : index
    %c384 = arith.constant 384 : index
    %45 = vector.load %arg9[%c0_36, %c384] : memref<128x1152xbf16, #tpu.memory_space<vmem>>, vector<128x128xbf16>
    tpu.vector_store %arg9[%c0_36, %c384], %44 {strides = array<i32>} : memref<128x1152xbf16, #tpu.memory_space<vmem>>, vector<128x128xbf16>,
    %c1_37 = arith.constant 1 : index
    %c1_38 = arith.constant 1 : index
    %c0_39 = arith.constant 0 : index
    %46 = vector.load %arg8[%c1_37, %c1_38, %c0_39] : memref<10x18x128xbf16, #tpu.memory_space<vmem>>, vector<8x16x128xbf16>
    %47 = vector.shape_cast %46 : vector<8x16x128xbf16> to vector<128x128xbf16>
    %c0_40 = arith.constant 0 : index
    %c512 = arith.constant 512 : index
    %48 = vector.load %arg9[%c0_40, %c512] : memref<128x1152xbf16, #tpu.memory_space<vmem>>, vector<128x128xbf16>
    tpu.vector_store %arg9[%c0_40, %c512], %47 {strides = array<i32>} : memref<128x1152xbf16, #tpu.memory_space<vmem>>, vector<128x128xbf16>,
    %c1_41 = arith.constant 1 : index
    %c2_42 = arith.constant 2 : index
    %c0_43 = arith.constant 0 : index
    %49 = vector.load %arg8[%c1_41, %c2_42, %c0_43] : memref<10x18x128xbf16, #tpu.memory_space<vmem>>, vector<8x16x128xbf16>
    %50 = vector.shape_cast %49 : vector<8x16x128xbf16> to vector<128x128xbf16>
    %c0_44 = arith.constant 0 : index
    %c640 = arith.constant 640 : index
    %51 = vector.load %arg9[%c0_44, %c640] : memref<128x1152xbf16, #tpu.memory_space<vmem>>, vector<128x128xbf16>
    tpu.vector_store %arg9[%c0_44, %c640], %50 {strides = array<i32>} : memref<128x1152xbf16, #tpu.memory_space<vmem>>, vector<128x128xbf16>,
    %c2_45 = arith.constant 2 : index
    %c0_46 = arith.constant 0 : index
    %c0_47 = arith.constant 0 : index
    %52 = vector.load %arg8[%c2_45, %c0_46, %c0_47] : memref<10x18x128xbf16, #tpu.memory_space<vmem>>, vector<8x16x128xbf16>
    %53 = vector.shape_cast %52 : vector<8x16x128xbf16> to vector<128x128xbf16>
    %c0_48 = arith.constant 0 : index
    %c768 = arith.constant 768 : index
    %54 = vector.load %arg9[%c0_48, %c768] : memref<128x1152xbf16, #tpu.memory_space<vmem>>, vector<128x128xbf16>
    tpu.vector_store %arg9[%c0_48, %c768], %53 {strides = array<i32>} : memref<128x1152xbf16, #tpu.memory_space<vmem>>, vector<128x128xbf16>,
    %c2_49 = arith.constant 2 : index
    %c1_50 = arith.constant 1 : index
    %c0_51 = arith.constant 0 : index
    %55 = vector.load %arg8[%c2_49, %c1_50, %c0_51] : memref<10x18x128xbf16, #tpu.memory_space<vmem>>, vector<8x16x128xbf16>
    %56 = vector.shape_cast %55 : vector<8x16x128xbf16> to vector<128x128xbf16>
    %c0_52 = arith.constant 0 : index
    %c896 = arith.constant 896 : index
    %57 = vector.load %arg9[%c0_52, %c896] : memref<128x1152xbf16, #tpu.memory_space<vmem>>, vector<128x128xbf16>
    tpu.vector_store %arg9[%c0_52, %c896], %56 {strides = array<i32>} : memref<128x1152xbf16, #tpu.memory_space<vmem>>, vector<128x128xbf16>,
    %c2_53 = arith.constant 2 : index
    %c2_54 = arith.constant 2 : index
    %c0_55 = arith.constant 0 : index
    %58 = vector.load %arg8[%c2_53, %c2_54, %c0_55] : memref<10x18x128xbf16, #tpu.memory_space<vmem>>, vector<8x16x128xbf16>
    %59 = vector.shape_cast %58 : vector<8x16x128xbf16> to vector<128x128xbf16>
    %c0_56 = arith.constant 0 : index
    %c1024 = arith.constant 1024 : index
    %60 = vector.load %arg9[%c0_56, %c1024] : memref<128x1152xbf16, #tpu.memory_space<vmem>>, vector<128x128xbf16>
    tpu.vector_store %arg9[%c0_56, %c1024], %59 {strides = array<i32>} : memref<128x1152xbf16, #tpu.memory_space<vmem>>, vector<128x128xbf16>,
    %c0_57 = arith.constant 0 : index
    %c0_58 = arith.constant 0 : index
    %61 = vector.load %arg9[%c0_57, %c0_58] : memref<128x1152xbf16, #tpu.memory_space<vmem>>, vector<128x1152xbf16>
    %c0_59 = arith.constant 0 : index
    %c0_60 = arith.constant 0 : index
    %62 = vector.load %arg5[%c0_59, %c0_60] : memref<1152x128xbf16, #tpu.memory_space<vmem>>, vector<1152x128xbf16>
    %cst_61 = arith.constant dense<0.000000e+00> : vector<128x128xf32>
    %63 = tpu.matmul %61, %62, %cst_61 {dimension_numbers = #tpu.dot_dimension_numbers<[1], [0], [0], [1], [0, 0, 1, 1], [], []>} : vector<128x1152xbf16>, vector<1152x128xbf16>, vector<128x128xf32> -> vector<128x128xf32>
    %64 = vector.shape_cast %63 : vector<128x128xf32> to vector<8x16x128xf32>
    %65 = arith.truncf %64 : vector<8x16x128xf32> to vector<8x16x128xbf16>
    %c0_62 = arith.constant 0 : index
    %c0_63 = arith.constant 0 : index
    %c0_64 = arith.constant 0 : index
    %c0_65 = arith.constant 0 : index
    %66 = vector.load %arg6[%c0_62, %c0_63, %c0_64, %c0_65] : memref<1x8x16x128xbf16, #tpu.memory_space<vmem>>, vector<1x8x16x128xbf16>
    %67 = vector.shape_cast %66 : vector<1x8x16x128xbf16> to vector<8x16x128xbf16>
    %68 = vector.shape_cast %65 : vector<8x16x128xbf16> to vector<1x8x16x128xbf16>
    tpu.vector_store %arg6[%c0_62, %c0_63, %c0_64, %c0_65], %68 {strides = array<i32>} : memref<1x8x16x128xbf16, #tpu.memory_space<vmem>>, vector<1x8x16x128xbf16>,
    %cst_66 = arith.constant dense<0.000000e+00> : vector<128xf32>
    %69 = vector.multi_reduction <add>, %63, %cst_66 [0] : vector<128x128xf32> to vector<128xf32>
    %70 = vector.shape_cast %69 : vector<128xf32> to vector<1x128xf32>
    %c0_67 = arith.constant 0 : index
    %c0_68 = arith.constant 0 : index
    %c0_69 = arith.constant 0 : index
    %c0_70 = arith.constant 0 : index
    %71 = vector.load %arg7[%c0_67, %c0_68, %c0_69, %c0_70] : memref<1x1x2x128xf32, #tpu.memory_space<vmem>>, vector<1x1x1x128xf32>
    %72 = vector.shape_cast %71 : vector<1x1x1x128xf32> to vector<1x128xf32>
    %73 = vector.shape_cast %70 : vector<1x128xf32> to vector<1x1x1x128xf32>
    tpu.vector_store %arg7[%c0_67, %c0_68, %c0_69, %c0_70], %73 {strides = array<i32>} : memref<1x1x2x128xf32, #tpu.memory_space<vmem>>, vector<1x1x1x128xf32>,
    %74 = arith.mulf %63, %63 : vector<128x128xf32>
    %cst_71 = arith.constant dense<0.000000e+00> : vector<128xf32>
    %75 = vector.multi_reduction <add>, %74, %cst_71 [0] : vector<128x128xf32> to vector<128xf32>
    %76 = vector.shape_cast %75 : vector<128xf32> to vector<1x128xf32>
    %c0_72 = arith.constant 0 : index
    %c0_73 = arith.constant 0 : index
    %c1_74 = arith.constant 1 : index
    %c0_75 = arith.constant 0 : index
    %77 = vector.load %arg7[%c0_72, %c0_73, %c1_74, %c0_75] : memref<1x1x2x128xf32, #tpu.memory_space<vmem>>, vector<1x1x1x128xf32>
    %78 = vector.shape_cast %77 : vector<1x1x1x128xf32> to vector<1x128xf32>
    %79 = vector.shape_cast %76 : vector<1x128xf32> to vector<1x1x1x128xf32>
    tpu.vector_store %arg7[%c0_72, %c0_73, %c1_74, %c0_75], %79 {strides = array<i32>} : memref<1x1x2x128xf32, #tpu.memory_space<vmem>>, vector<1x1x1x128xf32>,
    return
  }
  func.func @transform_0(%arg0: i32, %arg1: i32) -> (i32, i32, i32, i32) {
    %c0_i32 = arith.constant 0 : i32
    %c0_i32_0 = arith.constant 0 : i32
    %c0_i32_1 = arith.constant 0 : i32
    %c0_i32_2 = arith.constant 0 : i32
    return %arg0, %c0_i32, %c0_i32_0, %c0_i32_1 : i32, i32, i32, i32
  }
  func.func @transform_1(%arg0: i32, %arg1: i32) -> (i32, i32) {
    %c0_i32 = arith.constant 0 : i32
    %c0_i32_0 = arith.constant 0 : i32
    %c0_i32_1 = arith.constant 0 : i32
    return %c0_i32, %c0_i32_0 : i32, i32
  }
  func.func @transform_2(%arg0: i32, %arg1: i32) -> (i32, i32) {
    %c0_i32 = arith.constant 0 : i32
    %c0_i32_0 = arith.constant 0 : i32
    %c0_i32_1 = arith.constant 0 : i32
    return %c0_i32, %c0_i32_0 : i32, i32
  }
  func.func @transform_3(%arg0: i32, %arg1: i32) -> (i32, i32) {
    %c0_i32 = arith.constant 0 : i32
    %c0_i32_0 = arith.constant 0 : i32
    %c0_i32_1 = arith.constant 0 : i32
    return %c0_i32, %c0_i32_0 : i32, i32
  }
  func.func @transform_4(%arg0: i32, %arg1: i32) -> (i32, i32, i32, i32) {
    %c0_i32 = arith.constant 0 : i32
    %c0_i32_0 = arith.constant 0 : i32
    %c0_i32_1 = arith.constant 0 : i32
    return %arg0, %arg1, %c0_i32, %c0_i32_0 : i32, i32, i32, i32
  }
  func.func @transform_5(%arg0: i32, %arg1: i32) -> (i32, i32, i32, i32) {
    %c0_i32 = arith.constant 0 : i32
    %c0_i32_0 = arith.constant 0 : i32
    %c0_i32_1 = arith.constant 0 : i32
    return %arg0, %arg1, %c0_i32, %c0_i32_0 : i32, i32, i32, i32
  }
}

module attributes {stable_mosaic.version = 11 : i64} {
  func.func @_bn_add_relu_kernel(%arg0: i32, %arg1: memref<1x16x16x128xbf16, #tpu.memory_space<vmem>>, %arg2: memref<1x128xf32, #tpu.memory_space<vmem>>, %arg3: memref<1x128xf32, #tpu.memory_space<vmem>>, %arg4: memref<1x16x16x128xf32, #tpu.memory_space<vmem>>, %arg5: memref<1x16x16x128xf32, #tpu.memory_space<vmem>>) attributes {dimension_semantics = [#tpu.dimension_semantics<parallel>], iteration_bounds = array<i64: 2>, scalar_prefetch = 0 : i64, scratch_operands = 0 : i64, tpu.core_type = #tpu.core_type<tc>, window_params = [{transform_indices = @transform_0, window_bounds = array<i64: 1, 16, 16, 128>}, {pipeline_mode = #tpu.pipeline_mode<synchronous>, transform_indices = @transform_1, window_bounds = array<i64: 1, 128>}, {pipeline_mode = #tpu.pipeline_mode<synchronous>, transform_indices = @transform_2, window_bounds = array<i64: 1, 128>}, {transform_indices = @transform_3, window_bounds = array<i64: 1, 16, 16, 128>}, {transform_indices = @transform_4, window_bounds = array<i64: 1, 16, 16, 128>}]} {
    %c0 = arith.constant 0 : index
    %c0_0 = arith.constant 0 : index
    %c0_1 = arith.constant 0 : index
    %c0_2 = arith.constant 0 : index
    %0 = vector.load %arg1[%c0, %c0_0, %c0_1, %c0_2] : memref<1x16x16x128xbf16, #tpu.memory_space<vmem>>, vector<1x16x16x128xbf16>
    %1 = vector.shape_cast %0 : vector<1x16x16x128xbf16> to vector<16x16x128xbf16>
    %2 = arith.extf %1 : vector<16x16x128xbf16> to vector<16x16x128xf32>
    %c0_3 = arith.constant 0 : index
    %c0_4 = arith.constant 0 : index
    %c0_5 = arith.constant 0 : index
    %c0_6 = arith.constant 0 : index
    %3 = vector.load %arg4[%c0_3, %c0_4, %c0_5, %c0_6] : memref<1x16x16x128xf32, #tpu.memory_space<vmem>>, vector<1x16x16x128xf32>
    %4 = vector.shape_cast %3 : vector<1x16x16x128xf32> to vector<16x16x128xf32>
    %c0_7 = arith.constant 0 : index
    %c0_8 = arith.constant 0 : index
    %5 = vector.load %arg2[%c0_7, %c0_8] : memref<1x128xf32, #tpu.memory_space<vmem>>, vector<1x128xf32>
    %6 = vector.shape_cast %5 : vector<1x128xf32> to vector<1x1x128xf32>
    %7 = vector.broadcast %6 : vector<1x1x128xf32> to vector<16x16x128xf32>
    %8 = arith.mulf %2, %7 : vector<16x16x128xf32>
    %9 = arith.addf %4, %8 : vector<16x16x128xf32>
    %c0_9 = arith.constant 0 : index
    %c0_10 = arith.constant 0 : index
    %10 = vector.load %arg3[%c0_9, %c0_10] : memref<1x128xf32, #tpu.memory_space<vmem>>, vector<1x128xf32>
    %11 = vector.shape_cast %10 : vector<1x128xf32> to vector<1x1x128xf32>
    %12 = vector.broadcast %11 : vector<1x1x128xf32> to vector<16x16x128xf32>
    %13 = arith.addf %9, %12 : vector<16x16x128xf32>
    %cst = arith.constant 0.000000e+00 : f32
    %14 = vector.broadcast %cst : f32 to vector<16x16x128xf32>
    %15 = arith.maximumf %13, %14 : vector<16x16x128xf32>
    %c0_11 = arith.constant 0 : index
    %c0_12 = arith.constant 0 : index
    %c0_13 = arith.constant 0 : index
    %c0_14 = arith.constant 0 : index
    %16 = vector.load %arg5[%c0_11, %c0_12, %c0_13, %c0_14] : memref<1x16x16x128xf32, #tpu.memory_space<vmem>>, vector<1x16x16x128xf32>
    %17 = vector.shape_cast %16 : vector<1x16x16x128xf32> to vector<16x16x128xf32>
    %18 = vector.shape_cast %15 : vector<16x16x128xf32> to vector<1x16x16x128xf32>
    tpu.vector_store %arg5[%c0_11, %c0_12, %c0_13, %c0_14], %18 {strides = array<i32>} : memref<1x16x16x128xf32, #tpu.memory_space<vmem>>, vector<1x16x16x128xf32>,
    return
  }
  func.func @transform_0(%arg0: i32) -> (i32, i32, i32, i32) {
    %c0_i32 = arith.constant 0 : i32
    %c0_i32_0 = arith.constant 0 : i32
    %c0_i32_1 = arith.constant 0 : i32
    %c0_i32_2 = arith.constant 0 : i32
    return %arg0, %c0_i32, %c0_i32_0, %c0_i32_1 : i32, i32, i32, i32
  }
  func.func @transform_1(%arg0: i32) -> (i32, i32) {
    %c0_i32 = arith.constant 0 : i32
    %c0_i32_0 = arith.constant 0 : i32
    %c0_i32_1 = arith.constant 0 : i32
    return %c0_i32, %c0_i32_0 : i32, i32
  }
  func.func @transform_2(%arg0: i32) -> (i32, i32) {
    %c0_i32 = arith.constant 0 : i32
    %c0_i32_0 = arith.constant 0 : i32
    %c0_i32_1 = arith.constant 0 : i32
    return %c0_i32, %c0_i32_0 : i32, i32
  }
  func.func @transform_3(%arg0: i32) -> (i32, i32, i32, i32) {
    %c0_i32 = arith.constant 0 : i32
    %c0_i32_0 = arith.constant 0 : i32
    %c0_i32_1 = arith.constant 0 : i32
    %c0_i32_2 = arith.constant 0 : i32
    return %arg0, %c0_i32, %c0_i32_0, %c0_i32_1 : i32, i32, i32, i32
  }
  func.func @transform_4(%arg0: i32) -> (i32, i32, i32, i32) {
    %c0_i32 = arith.constant 0 : i32
    %c0_i32_0 = arith.constant 0 : i32
    %c0_i32_1 = arith.constant 0 : i32
    %c0_i32_2 = arith.constant 0 : i32
    return %arg0, %c0_i32, %c0_i32_0, %c0_i32_1 : i32, i32, i32, i32
  }
}

</mosaic_0001>

<llo_original>
// kernel: resblock_forward.5
$region0: #{resblock_forward.5}
  #allocation0 [shape = 'u32[]', space=smem, size = 0x4, offset = 0x4, fixed_abs, tag = 'smem constant byte address 0x4 - core index']
  #allocation1 [shape = 'u32[144,128]{1,0:T(1,128)}', space=vmem, size = 0x12000, scoped, tag = 'internal scratch']
  %s0 = inlined_call_operand.vmem [shape: bf16[2,16,16,128], index: 0, kind: input, shape index: {}]
  %s1 = inlined_call_operand.vmem [shape: f32[1,128], index: 1, kind: input, shape index: {}]
  %s2 = inlined_call_operand.vmem [shape: f32[1,128], index: 2, kind: input, shape index: {}]
  %s3 = inlined_call_operand.vmem [shape: f32[2,16,16,128], index: 3, kind: input, shape index: {}, may-alias: {3,4}]
  %s4 = inlined_call_operand.vmem [shape: f32[2,16,16,128], index: 4, kind: output, shape index: {}, may-alias: {3,4}]
  %s5 = sld [smem:[#allocation0]]
  $region49: #{resblock_forward.5} parent=0
    _
  %s7 = ssub.s32 1, %s5
  %s8 = scalar_select 0, %s7, %s5
  loop: start=0, step=1, limit=4
  $region2: #{resblock_forward.5} parent=0 // loop_pre_header
    _
  $region3: #{resblock_forward.5} parent=0 // loop_header
    %s10 = sphi 0, %s14
    %p11 = scmp.ge.s32.totalorder %s10, 4
    %s20 = sphi 0, %s22
    %s23 = sphi 0, %s20
    %s24 = sphi 0, %s23
    %s40 = sphi 0, %s24
    %s44 = sphi 0, %s44
    %s46 = sphi 0, %s44
    %s47 = sphi 0, %s46
    %s61 = sphi 0, %s47
    %s65 = sphi 0, %s65
    %s67 = sphi 0, %s65
    %s68 = sphi 0, %s67
    %s82 = sphi 0, %s68
    %s88 = sphi 0, %s90
    %s91 = sphi 0, %s88
    %s92 = sphi 0, %s91
    %s108 = sphi 0, %s92
    %s114 = sphi 0, %s116
    %s117 = sphi 0, %s114
    %s118 = sphi 0, %s117
    %s134 = sphi 0, %s118
  $region4: #{resblock_forward.5} parent=0 // loop_header_branch
    %13 = sbr.rel (%p11) target = $region8
  $region5: #{resblock_forward.5} parent=0 // loop_body
    %s15 = ssub.s32 %s10, 1
    %s16 = ssub.s32 %s10, 2
    %s17 = sadd.s32 %s10, 1
    %s18 = ssub.s32 %s10, %s17
    %p19 = scmp.eq.s32.totalorder %s18, 0
    %s21 = sadd.s32 %s20, 1
    %s22 = scalar_select %p19, %s20, %s21
    %p25 = pneg %p19
    %p26 = scmp.eq.s32.totalorder %s10, 1
    %p27 = por %p25, %p26
    %p28 = scmp.ne.s32.totalorder %s20, %s23
    %p29 = scmp.eq.s32.totalorder %s10, 0
    %p30 = por %p28, %p29
    %p31 = scmp.ne.s32.totalorder %s20, %s23
    %p32 = scmp.eq.s32.totalorder %s15, 1
    %p33 = por %p31, %p32
    %p34 = scmp.ne.s32.totalorder %s23, %s24
    %p35 = scmp.eq.s32.totalorder %s15, 0
    %p36 = por %p34, %p35
    %p37 = scmp.ne.s32.totalorder %s23, %s24
    %p38 = scmp.eq.s32.totalorder %s16, 1
    %p39 = por %p37, %p38
    %p41 = scmp.ne.s32.totalorder %s24, %s40
    %p42 = scmp.eq.s32.totalorder %s16, 0
    %p43 = por %p41, %p42
    %s45 = sadd.s32 %s44, 1
    %p48 = scmp.eq.s32.totalorder %s10, 1
    %p49 = scmp.ne.s32.totalorder %s44, %s46
    %p50 = scmp.eq.s32.totalorder %s10, 0
    %p51 = por %p49, %p50
    %p52 = scmp.ne.s32.totalorder %s44, %s46
    %p53 = scmp.eq.s32.totalorder %s15, 1
    %p54 = por %p52, %p53
    %p55 = scmp.ne.s32.totalorder %s46, %s47
    %p56 = scmp.eq.s32.totalorder %s15, 0
    %p57 = por %p55, %p56
    %p58 = scmp.ne.s32.totalorder %s46, %s47
    %p59 = scmp.eq.s32.totalorder %s16, 1
    %p60 = por %p58, %p59
    %p62 = scmp.ne.s32.totalorder %s47, %s61
    %p63 = scmp.eq.s32.totalorder %s16, 0
    %p64 = por %p62, %p63
    %s66 = sadd.s32 %s65, 1
    %p69 = scmp.eq.s32.totalorder %s10, 1
    %p70 = scmp.ne.s32.totalorder %s65, %s67
    %p71 = scmp.eq.s32.totalorder %s10, 0
    %p72 = por %p70, %p71
    %p73 = scmp.ne.s32.totalorder %s65, %s67
    %p74 = scmp.eq.s32.totalorder %s15, 1
    %p75 = por %p73, %p74
    %p76 = scmp.ne.s32.totalorder %s67, %s68
    %p77 = scmp.eq.s32.totalorder %s15, 0
    %p78 = por %p76, %p77
    %p79 = scmp.ne.s32.totalorder %s67, %s68
    %p80 = scmp.eq.s32.totalorder %s16, 1
    %p81 = por %p79, %p80
    %p83 = scmp.ne.s32.totalorder %s68, %s82
    %p84 = scmp.eq.s32.totalorder %s16, 0
    %p85 = por %p83, %p84
    %s86 = ssub.s32 %s10, %s17
    %p87 = scmp.eq.s32.totalorder %s86, 0
    %s89 = sadd.s32 %s88, 1
    %s90 = scalar_select %p87, %s88, %s89
    %p93 = pneg %p87
    %p94 = scmp.eq.s32.totalorder %s10, 1
    %p95 = por %p93, %p94
    %p96 = scmp.ne.s32.totalorder %s88, %s91
    %p97 = scmp.eq.s32.totalorder %s10, 0
    %p98 = por %p96, %p97
    %p99 = scmp.ne.s32.totalorder %s88, %s91
    %p100 = scmp.eq.s32.totalorder %s15, 1
    %p101 = por %p99, %p100
    %p102 = scmp.ne.s32.totalorder %s91, %s92
    %p103 = scmp.eq.s32.totalorder %s15, 0
    %p104 = por %p102, %p103
    %p105 = scmp.ne.s32.totalorder %s91, %s92
    %p106 = scmp.eq.s32.totalorder %s16, 1
    %p107 = por %p105, %p106
    %p109 = scmp.ne.s32.totalorder %s92, %s108
    %p110 = scmp.eq.s32.totalorder %s16, 0
    %p111 = por %p109, %p110
    %s112 = ssub.s32 %s10, %s17
    %p113 = scmp.eq.s32.totalorder %s112, 0
    %s115 = sadd.s32 %s114, 1
    %s116 = scalar_select %p113, %s114, %s115
    %p119 = pneg %p113
    %p120 = scmp.eq.s32.totalorder %s10, 1
    %p121 = por %p119, %p120
    %p122 = scmp.ne.s32.totalorder %s114, %s117
    %p123 = scmp.eq.s32.totalorder %s10, 0
    %p124 = por %p122, %p123
    %p125 = scmp.ne.s32.totalorder %s114, %s117
    %p126 = scmp.eq.s32.totalorder %s15, 1
    %p127 = por %p125, %p126
    %p128 = scmp.ne.s32.totalorder %s117, %s118
    %p129 = scmp.eq.s32.totalorder %s15, 0
    %p130 = por %p128, %p129
    %p131 = scmp.ne.s32.totalorder %s117, %s118
    %p132 = scmp.eq.s32.totalorder %s16, 1
    %p133 = por %p131, %p132
    %p135 = scmp.ne.s32.totalorder %s118, %s134
    %p136 = scmp.eq.s32.totalorder %s16, 0
    %p137 = por %p135, %p136
    %p138 = scmp.le.s32.totalorder 1, %s10
    %p139 = scmp.lt.s32.totalorder %s10, 3
    %p140 = pnand %p138, %p139
    %p141 = pneg %p140
    // Predicated region
    $region9: #{resblock_forward.5} parent=5 // pred_check
      _
    $region10: #{resblock_forward.5} parent=5 // pred_check_branch
      %143 = sbr.rel (%p140) target = $region12
    $region11: #{resblock_forward.5} parent=5 // pred_region
      %s144 = ssub.s32 %s10, 1
      // Predicated region
      $region13: #{resblock_forward.5} parent=11 // pred_check
        %p145 = pneg %p57
      $region14: #{resblock_forward.5} parent=11 // pred_check_branch
        %147 = sbr.rel (%p145) target = $region16
      $region15: #{resblock_forward.5} parent=11 // pred_region
        _
      $region16: #{resblock_forward.5} parent=11 // pred_fallthru
        _
      // Predicated region
      $region17: #{resblock_forward.5} parent=11 // pred_check
        %p148 = pneg %p78
      $region18: #{resblock_forward.5} parent=11 // pred_check_branch
        %150 = sbr.rel (%p148) target = $region20
      $region19: #{resblock_forward.5} parent=11 // pred_region
        _
      $region20: #{resblock_forward.5} parent=11 // pred_fallthru
        _
    $region12: #{resblock_forward.5} parent=5 // pred_fallthru
      _
    %p151 = scmp.lt.s32.totalorder %s10, 2
    // Predicated region
    $region21: #{resblock_forward.5} parent=5 // pred_check
      %p152 = pneg %p151
    $region22: #{resblock_forward.5} parent=5 // pred_check_branch
      %154 = sbr.rel (%p152) target = $region24
    $region23: #{resblock_forward.5} parent=5 // pred_region
      // Predicated region
      $region25: #{resblock_forward.5} parent=23 // pred_check
        %p155 = pneg %p30
      $region26: #{resblock_forward.5} parent=23 // pred_check_branch
        %157 = sbr.rel (%p155) target = $region28
      $region27: #{resblock_forward.5} parent=23 // pred_region
        %p158 = scmp.lt.s32.totalorder %s10, 1
        %s159 = scalar_select %p158, %s10, 1
        %s160 = smul.addr %s159, 32
        %s161 = smul.addr %s160, 4
        %s162 = scalar_lea.vmem %s0, %s161
      $region28: #{resblock_forward.5} parent=23 // pred_fallthru
        _
      // Predicated region
      $region29: #{resblock_forward.5} parent=23 // pred_check
        %p163 = pneg %p98
      $region30: #{resblock_forward.5} parent=23 // pred_check_branch
        %165 = sbr.rel (%p163) target = $region32
      $region31: #{resblock_forward.5} parent=23 // pred_region
        %p166 = scmp.lt.s32.totalorder %s10, 1
        %s167 = scalar_select %p166, %s10, 1
        %s168 = smul.addr %s167, 32
        %s169 = smul.addr %s168, 8
        %s170 = scalar_lea.vmem %s3, %s169
      $region32: #{resblock_forward.5} parent=23 // pred_fallthru
        _
    $region24: #{resblock_forward.5} parent=5 // pred_fallthru
      _
    %p171 = scmp.le.s32.totalorder 1, %s10
    %p172 = scmp.lt.s32.totalorder %s10, 3
    %p173 = pnand %p171, %p172
    %p174 = pneg %p173
    // Predicated region
    $region33: #{resblock_forward.5} parent=5 // pred_check
      _
    $region34: #{resblock_forward.5} parent=5 // pred_check_branch
      %176 = sbr.rel (%p173) target = $region36
    $region35: #{resblock_forward.5} parent=5 // pred_region
      %s177 = ssub.s32 %s10, 1
      %p178 = scmp.lt.s32.totalorder %s15, 1
      %s179 = scalar_select %p178, %s15, 1
      %s180 = smul.addr %s179, 32
      %s181 = smul.addr %s180, 4
      %s182 = scalar_lea.vmem %s0, %s181
      %p183 = pneg %p36
      %p184 = pneg %p33
      %p185 = pneg %p57
      %p186 = pneg %p54
      %p187 = pneg %p78
      %p188 = pneg %p75
      %p189 = scmp.lt.s32.totalorder %s15, 1
      %s190 = scalar_select %p189, %s15, 1
      %s191 = smul.addr %s190, 32
      %s192 = smul.addr %s191, 8
      %s193 = scalar_lea.vmem %s3, %s192
      %p194 = pneg %p104
      %p195 = pneg %p101
      %p196 = pneg %p130
      %p197 = pneg %p127
      %p198 = scmp.lt.s32.totalorder %s15, 1
      %s199 = scalar_select %p198, %s15, 1
      %s200 = smul.addr %s199, 32
      %s201 = smul.addr %s200, 8
      %s202 = scalar_lea.vmem %s4, %s201
      %p203 = scmp.lt.s32.totalorder %s15, 1
      %s204 = scalar_select %p203, %s15, 1
      %s205 = smul.addr %s204, 32
      %s206 = smul.addr %s205, 4
      %s207 = scalar_lea.vmem %s0, %s206
      %p208 = scmp.lt.s32.totalorder %s15, 1
      %s209 = scalar_select %p208, %s15, 1
      %s210 = smul.addr %s209, 32
      %s211 = smul.addr %s210, 8
      %s212 = scalar_lea.vmem %s3, %s211
      %p213 = scmp.lt.s32.totalorder %s15, 1
      %s214 = scalar_select %p213, %s15, 1
      %s215 = smul.addr %s214, 32
      %s216 = smul.addr %s215, 8
      %s217 = scalar_lea.vmem %s4, %s216
      %v218 = vld [vmem:[%s207] sm:$0xf]
      %v219 = vld [vmem:[%s207 + $0x4] sm:$0xf]
      %v220 = vld [vmem:[%s207 + $0x8] sm:$0xf]
      %v221 = vld [vmem:[%s207 + $0xc] sm:$0xf]
      %v222 = vld [vmem:[%s207 + $0x10] sm:$0xf]
      %v223 = vld [vmem:[%s207 + $0x14] sm:$0xf]
      %v224 = vld [vmem:[%s207 + $0x18] sm:$0xf]
      %v225 = vld [vmem:[%s207 + $0x1c] sm:$0xf]
      %v226 = vld [vmem:[%s207 + $0x20] sm:$0xf]
      %v227 = vld [vmem:[%s207 + $0x24] sm:$0xf]
      %v228 = vld [vmem:[%s207 + $0x28] sm:$0xf]
      %v229 = vld [vmem:[%s207 + $0x2c] sm:$0xf]
      %v230 = vld [vmem:[%s207 + $0x30] sm:$0xf]
      %v231 = vld [vmem:[%s207 + $0x34] sm:$0xf]
      %v232 = vld [vmem:[%s207 + $0x38] sm:$0xf]
      %v233 = vld [vmem:[%s207 + $0x3c] sm:$0xf]
      %v234 = vld [vmem:[%s207 + $0x40] sm:$0xf]
      %v235 = vld [vmem:[%s207 + $0x44] sm:$0xf]
      %v236 = vld [vmem:[%s207 + $0x48] sm:$0xf]
      %v237 = vld [vmem:[%s207 + $0x4c] sm:$0xf]
      %v238 = vld [vmem:[%s207 + $0x50] sm:$0xf]
      %v239 = vld [vmem:[%s207 + $0x54] sm:$0xf]
      %v240 = vld [vmem:[%s207 + $0x58] sm:$0xf]
      %v241 = vld [vmem:[%s207 + $0x5c] sm:$0xf]
      %v242 = vld [vmem:[%s207 + $0x60] sm:$0xf]
      %v243 = vld [vmem:[%s207 + $0x64] sm:$0xf]
      %v244 = vld [vmem:[%s207 + $0x68] sm:$0xf]
      %v245 = vld [vmem:[%s207 + $0x6c] sm:$0xf]
      %v246 = vld [vmem:[%s207 + $0x70] sm:$0xf]
      %v247 = vld [vmem:[%s207 + $0x74] sm:$0xf]
      %v248 = vld [vmem:[%s207 + $0x78] sm:$0xf]
      %v249 = vld [vmem:[%s207 + $0x7c] sm:$0xf]
      %v250 = vunpack.c.l.bf16 %v218
      %v251 = vunpack.c.l.bf16 %v219
      %v252 = vunpack.c.l.bf16 %v220
      %v253 = vunpack.c.l.bf16 %v221
      %v254 = vunpack.c.l.bf16 %v222
      %v255 = vunpack.c.l.bf16 %v223
      %v256 = vunpack.c.l.bf16 %v224
      %v257 = vunpack.c.l.bf16 %v225
      %v258 = vunpack.c.l.bf16 %v226
      %v259 = vunpack.c.l.bf16 %v227
      %v260 = vunpack.c.l.bf16 %v228
      %v261 = vunpack.c.l.bf16 %v229
      %v262 = vunpack.c.l.bf16 %v230
      %v263 = vunpack.c.l.bf16 %v231
      %v264 = vunpack.c.l.bf16 %v232
      %v265 = vunpack.c.l.bf16 %v233
      %v266 = vunpack.c.l.bf16 %v234
      %v267 = vunpack.c.l.bf16 %v235
      %v268 = vunpack.c.l.bf16 %v236
      %v269 = vunpack.c.l.bf16 %v237
      %v270 = vunpack.c.l.bf16 %v238
      %v271 = vunpack.c.l.bf16 %v239
      %v272 = vunpack.c.l.bf16 %v240
      %v273 = vunpack.c.l.bf16 %v241
      %v274 = vunpack.c.l.bf16 %v242
      %v275 = vunpack.c.l.bf16 %v243
      %v276 = vunpack.c.l.bf16 %v244
      %v277 = vunpack.c.l.bf16 %v245
      %v278 = vunpack.c.l.bf16 %v246
      %v279 = vunpack.c.l.bf16 %v247
      %v280 = vunpack.c.l.bf16 %v248
      %v281 = vunpack.c.l.bf16 %v249
      %v282 = vld [vmem:[%s212] sm:$0xff]
      %v283 = vld [vmem:[%s212 + $0x8] sm:$0xff]
      %v284 = vld [vmem:[%s212 + $0x10] sm:$0xff]
      %v285 = vld [vmem:[%s212 + $0x18] sm:$0xff]
      %v286 = vld [vmem:[%s212 + $0x20] sm:$0xff]
      %v287 = vld [vmem:[%s212 + $0x28] sm:$0xff]
      %v288 = vld [vmem:[%s212 + $0x30] sm:$0xff]
      %v289 = vld [vmem:[%s212 + $0x38] sm:$0xff]
      %v290 = vld [vmem:[%s212 + $0x40] sm:$0xff]
      %v291 = vld [vmem:[%s212 + $0x48] sm:$0xff]
      %v292 = vld [vmem:[%s212 + $0x50] sm:$0xff]
      %v293 = vld [vmem:[%s212 + $0x58] sm:$0xff]
      %v294 = vld [vmem:[%s212 + $0x60] sm:$0xff]
      %v295 = vld [vmem:[%s212 + $0x68] sm:$0xff]
      %v296 = vld [vmem:[%s212 + $0x70] sm:$0xff]
      %v297 = vld [vmem:[%s212 + $0x78] sm:$0xff]
      %v298 = vld [vmem:[%s212 + $0x80] sm:$0xff]
      %v299 = vld [vmem:[%s212 + $0x88] sm:$0xff]
      %v300 = vld [vmem:[%s212 + $0x90] sm:$0xff]
      %v301 = vld [vmem:[%s212 + $0x98] sm:$0xff]
      %v302 = vld [vmem:[%s212 + $0xa0] sm:$0xff]
      %v303 = vld [vmem:[%s212 + $0xa8] sm:$0xff]
      %v304 = vld [vmem:[%s212 + $0xb0] sm:$0xff]
      %v305 = vld [vmem:[%s212 + $0xb8] sm:$0xff]
      %v306 = vld [vmem:[%s212 + $0xc0] sm:$0xff]
      %v307 = vld [vmem:[%s212 + $0xc8] sm:$0xff]
      %v308 = vld [vmem:[%s212 + $0xd0] sm:$0xff]
      %v309 = vld [vmem:[%s212 + $0xd8] sm:$0xff]
      %v310 = vld [vmem:[%s212 + $0xe0] sm:$0xff]
      %v311 = vld [vmem:[%s212 + $0xe8] sm:$0xff]
      %v312 = vld [vmem:[%s212 + $0xf0] sm:$0xff]
      %v313 = vld [vmem:[%s212 + $0xf8] sm:$0xff]
      %v314 = vld [vmem:[%s1] sm:$0x1]
      %v316 = vlaneseq
      %v317 = vshrl.u32 %v316, 7
      %v318 = vsub.s32 0, %v317
      %v319 = vrot.slane %v314, %v318
      %v321 = vmul.f32 %v250, %v319
      %v322 = vmul.f32 %v251, %v319
      %v323 = vmul.f32 %v252, %v319
      %v324 = vmul.f32 %v253, %v319
      %v325 = vmul.f32 %v254, %v319
      %v326 = vmul.f32 %v255, %v319
      %v327 = vmul.f32 %v256, %v319
      %v328 = vmul.f32 %v257, %v319
      %v329 = vmul.f32 %v258, %v319
      %v330 = vmul.f32 %v259, %v319
      %v331 = vmul.f32 %v260, %v319
      %v332 = vmul.f32 %v261, %v319
      %v333 = vmul.f32 %v262, %v319
      %v334 = vmul.f32 %v263, %v319
      %v335 = vmul.f32 %v264, %v319
      %v336 = vmul.f32 %v265, %v319
      %v337 = vmul.f32 %v266, %v319
      %v338 = vmul.f32 %v267, %v319
      %v339 = vmul.f32 %v268, %v319
      %v340 = vmul.f32 %v269, %v319
      %v341 = vmul.f32 %v270, %v319
      %v342 = vmul.f32 %v271, %v319
      %v343 = vmul.f32 %v272, %v319
      %v344 = vmul.f32 %v273, %v319
      %v345 = vmul.f32 %v274, %v319
      %v346 = vmul.f32 %v275, %v319
      %v347 = vmul.f32 %v276, %v319
      %v348 = vmul.f32 %v277, %v319
      %v349 = vmul.f32 %v278, %v319
      %v350 = vmul.f32 %v279, %v319
      %v351 = vmul.f32 %v280, %v319
      %v352 = vmul.f32 %v281, %v319
      %v353 = vadd.f32 %v282, %v321
      %v354 = vadd.f32 %v283, %v322
      %v355 = vadd.f32 %v284, %v323
      %v356 = vadd.f32 %v285, %v324
      %v357 = vadd.f32 %v286, %v325
      %v358 = vadd.f32 %v287, %v326
      %v359 = vadd.f32 %v288, %v327
      %v360 = vadd.f32 %v289, %v328
      %v361 = vadd.f32 %v290, %v329
      %v362 = vadd.f32 %v291, %v330
      %v363 = vadd.f32 %v292, %v331
      %v364 = vadd.f32 %v293, %v332
      %v365 = vadd.f32 %v294, %v333
      %v366 = vadd.f32 %v295, %v334
      %v367 = vadd.f32 %v296, %v335
      %v368 = vadd.f32 %v297, %v336
      %v369 = vadd.f32 %v298, %v337
      %v370 = vadd.f32 %v299, %v338
      %v371 = vadd.f32 %v300, %v339
      %v372 = vadd.f32 %v301, %v340
      %v373 = vadd.f32 %v302, %v341
      %v374 = vadd.f32 %v303, %v342
      %v375 = vadd.f32 %v304, %v343
      %v376 = vadd.f32 %v305, %v344
      %v377 = vadd.f32 %v306, %v345
      %v378 = vadd.f32 %v307, %v346
      %v379 = vadd.f32 %v308, %v347
      %v380 = vadd.f32 %v309, %v348
      %v381 = vadd.f32 %v310, %v349
      %v382 = vadd.f32 %v311, %v350
      %v383 = vadd.f32 %v312, %v351
      %v384 = vadd.f32 %v313, %v352
      %v385 = vld [vmem:[%s2] sm:$0x1]
      %v387 = vlaneseq
      %v388 = vshrl.u32 %v387, 7
      %v389 = vsub.s32 0, %v388
      %v390 = vrot.slane %v385, %v389
      %v392 = vadd.f32 %v353, %v390
      %v393 = vadd.f32 %v354, %v390
      %v394 = vadd.f32 %v355, %v390
      %v395 = vadd.f32 %v356, %v390
      %v396 = vadd.f32 %v357, %v390
      %v397 = vadd.f32 %v358, %v390
      %v398 = vadd.f32 %v359, %v390
      %v399 = vadd.f32 %v360, %v390
      %v400 = vadd.f32 %v361, %v390
      %v401 = vadd.f32 %v362, %v390
      %v402 = vadd.f32 %v363, %v390
      %v403 = vadd.f32 %v364, %v390
      %v404 = vadd.f32 %v365, %v390
      %v405 = vadd.f32 %v366, %v390
      %v406 = vadd.f32 %v367, %v390
      %v407 = vadd.f32 %v368, %v390
      %v408 = vadd.f32 %v369, %v390
      %v409 = vadd.f32 %v370, %v390
      %v410 = vadd.f32 %v371, %v390
      %v411 = vadd.f32 %v372, %v390
      %v412 = vadd.f32 %v373, %v390
      %v413 = vadd.f32 %v374, %v390
      %v414 = vadd.f32 %v375, %v390
      %v415 = vadd.f32 %v376, %v390
      %v416 = vadd.f32 %v377, %v390
      %v417 = vadd.f32 %v378, %v390
      %v418 = vadd.f32 %v379, %v390
      %v419 = vadd.f32 %v380, %v390
      %v420 = vadd.f32 %v381, %v390
      %v421 = vadd.f32 %v382, %v390
      %v422 = vadd.f32 %v383, %v390
      %v423 = vadd.f32 %v384, %v390
      %v424 = vmax.f32 %v392, 0.0
      %v425 = vmax.f32 %v393, 0.0
      %v426 = vmax.f32 %v394, 0.0
      %v427 = vmax.f32 %v395, 0.0
      %v428 = vmax.f32 %v396, 0.0
      %v429 = vmax.f32 %v397, 0.0
      %v430 = vmax.f32 %v398, 0.0
      %v431 = vmax.f32 %v399, 0.0
      %v432 = vmax.f32 %v400, 0.0
      %v433 = vmax.f32 %v401, 0.0
      %v434 = vmax.f32 %v402, 0.0
      %v435 = vmax.f32 %v403, 0.0
      %v436 = vmax.f32 %v404, 0.0
      %v437 = vmax.f32 %v405, 0.0
      %v438 = vmax.f32 %v406, 0.0
      %v439 = vmax.f32 %v407, 0.0
      %v440 = vmax.f32 %v408, 0.0
      %v441 = vmax.f32 %v409, 0.0
      %v442 = vmax.f32 %v410, 0.0
      %v443 = vmax.f32 %v411, 0.0
      %v444 = vmax.f32 %v412, 0.0
      %v445 = vmax.f32 %v413, 0.0
      %v446 = vmax.f32 %v414, 0.0
      %v447 = vmax.f32 %v415, 0.0
      %v448 = vmax.f32 %v416, 0.0
      %v449 = vmax.f32 %v417, 0.0
      %v450 = vmax.f32 %v418, 0.0
      %v451 = vmax.f32 %v419, 0.0
      %v452 = vmax.f32 %v420, 0.0
      %v453 = vmax.f32 %v421, 0.0
      %v454 = vmax.f32 %v422, 0.0
      %v455 = vmax.f32 %v423, 0.0
      %456 = vst [vmem:[%s217] sm:$0xff] %v424
      %457 = vst [vmem:[%s217 + $0x8] sm:$0xff] %v425
      %458 = vst [vmem:[%s217 + $0x10] sm:$0xff] %v426
      %459 = vst [vmem:[%s217 + $0x18] sm:$0xff] %v427
      %460 = vst [vmem:[%s217 + $0x20] sm:$0xff] %v428
      %461 = vst [vmem:[%s217 + $0x28] sm:$0xff] %v429
      %462 = vst [vmem:[%s217 + $0x30] sm:$0xff] %v430
      %463 = vst [vmem:[%s217 + $0x38] sm:$0xff] %v431
      %464 = vst [vmem:[%s217 + $0x40] sm:$0xff] %v432
      %465 = vst [vmem:[%s217 + $0x48] sm:$0xff] %v433
      %466 = vst [vmem:[%s217 + $0x50] sm:$0xff] %v434
      %467 = vst [vmem:[%s217 + $0x58] sm:$0xff] %v435
      %468 = vst [vmem:[%s217 + $0x60] sm:$0xff] %v436
      %469 = vst [vmem:[%s217 + $0x68] sm:$0xff] %v437
      %470 = vst [vmem:[%s217 + $0x70] sm:$0xff] %v438
      %471 = vst [vmem:[%s217 + $0x78] sm:$0xff] %v439
      %472 = vst [vmem:[%s217 + $0x80] sm:$0xff] %v440
      %473 = vst [vmem:[%s217 + $0x88] sm:$0xff] %v441
      %474 = vst [vmem:[%s217 + $0x90] sm:$0xff] %v442
      %475 = vst [vmem:[%s217 + $0x98] sm:$0xff] %v443
      %476 = vst [vmem:[%s217 + $0xa0] sm:$0xff] %v444
      %477 = vst [vmem:[%s217 + $0xa8] sm:$0xff] %v445
      %478 = vst [vmem:[%s217 + $0xb0] sm:$0xff] %v446
      %479 = vst [vmem:[%s217 + $0xb8] sm:$0xff] %v447
      %480 = vst [vmem:[%s217 + $0xc0] sm:$0xff] %v448
      %481 = vst [vmem:[%s217 + $0xc8] sm:$0xff] %v449
      %482 = vst [vmem:[%s217 + $0xd0] sm:$0xff] %v450
      %483 = vst [vmem:[%s217 + $0xd8] sm:$0xff] %v451
      %484 = vst [vmem:[%s217 + $0xe0] sm:$0xff] %v452
      %485 = vst [vmem:[%s217 + $0xe8] sm:$0xff] %v453
      %486 = vst [vmem:[%s217 + $0xf0] sm:$0xff] %v454
      %487 = vst [vmem:[%s217 + $0xf8] sm:$0xff] %v455
      %p488 = scmp.lt.s32.totalorder %s15, 1
      %s489 = scalar_select %p488, %s15, 1
      %s490 = smul.addr %s489, 32
      %s491 = smul.addr %s490, 8
      %s492 = scalar_lea.vmem %s4, %s491
      // Predicated region
      $region37: #{resblock_forward.5} parent=35 // pred_check
        %p493 = pneg %p127
      $region38: #{resblock_forward.5} parent=35 // pred_check_branch
        %495 = sbr.rel (%p493) target = $region40
      $region39: #{resblock_forward.5} parent=35 // pred_region
        _
      $region40: #{resblock_forward.5} parent=35 // pred_fallthru
        _
    $region36: #{resblock_forward.5} parent=5 // pred_fallthru
      _
    %p496 = scmp.le.s32.totalorder 2, %s10
    // Predicated region
    $region41: #{resblock_forward.5} parent=5 // pred_check
      %p497 = pneg %p496
    $region42: #{resblock_forward.5} parent=5 // pred_check_branch
      %499 = sbr.rel (%p497) target = $region44
    $region43: #{resblock_forward.5} parent=5 // pred_region
      %s500 = ssub.s32 %s10, 2
      // Predicated region
      $region45: #{resblock_forward.5} parent=43 // pred_check
        %p501 = pneg %p133
      $region46: #{resblock_forward.5} parent=43 // pred_check_branch
        %503 = sbr.rel (%p501) target = $region48
      $region47: #{resblock_forward.5} parent=43 // pred_region
        %p504 = scmp.lt.s32.totalorder %s16, 1
        %s505 = scalar_select %p504, %s16, 1
        %s506 = smul.addr %s505, 32
        %s507 = smul.addr %s506, 8
        %s508 = scalar_lea.vmem %s4, %s507
      $region48: #{resblock_forward.5} parent=43 // pred_fallthru
        _
    $region44: #{resblock_forward.5} parent=5 // pred_fallthru
      _
  $region6: #{resblock_forward.5} parent=0 // loop_footer
    %s14 = sadd.s32 1, %s10
  $region7: #{resblock_forward.5} parent=0 // loop_footer_branch
    %9 = sbr.rel target = $region3
  $region8: #{resblock_forward.5} parent=0 // loop_exit
    _

// kernel: resblock_forward.3
$region0: #{resblock_forward.3}
  #allocation0 [shape = 'u32[]', space=smem, size = 0x4, offset = 0x4, fixed_abs, tag = 'smem constant byte address 0x4 - core index']
  #allocation1 [shape = 'u32[144,128]{1,0:T(1,128)}', space=vmem, size = 0x12000, scoped, tag = 'internal scratch']
  #allocation2 [shape = 'bf16[10,18,128]{2,1,0:T(8,128)(2,1)}', space=vmem, size = 0xf000, scoped, tag = 'scratch operand']
  #allocation3 [shape = 'bf16[128,1152]{1,0:T(8,128)(2,1)}', space=vmem, size = 0x48000, scoped, tag = 'scratch operand']
  %s0 = inlined_call_operand.vmem [shape: f32[2,16,16,128], index: 0, kind: input, shape index: {}]
  %s1 = inlined_call_operand.vmem [shape: f32[1,128], index: 1, kind: input, shape index: {}]
  %s2 = inlined_call_operand.vmem [shape: f32[1,128], index: 2, kind: input, shape index: {}]
  %s3 = inlined_call_operand.vmem [shape: bf16[1152,128], index: 3, kind: input, shape index: {}]
  %s4 = inlined_call_operand.vmem [shape: bf16[2,16,16,128], index: 4, kind: output, shape index: {0}]
  %s5 = inlined_call_operand.vmem [shape: f32[2,2,2,128], index: 5, kind: output, shape index: {1}]
  %6 = xla_tuple %s4, %s5
  %s7 = sld [smem:[#allocation0]]
  $region73: #{resblock_forward.3} parent=0
    _
  %s9 = ssub.s32 1, %s7
  %s10 = scalar_select 0, %s9, %s7
  loop: start=0, step=1, limit=6
  $region2: #{resblock_forward.3} parent=0 // loop_pre_header
    _
  $region3: #{resblock_forward.3} parent=0 // loop_header
    %s12 = sphi 0, %s16
    %p13 = scmp.ge.s32.totalorder %s12, 6
    %s19 = sphi 0, %s31
    %s20 = sphi 0, %s27
    %s21 = sphi 0, %s19
    %s22 = sphi 0, %s20
    %s23 = sphi 0, %s21
    %s24 = sphi 0, %s22
    %s34 = sphi 0, %s36
    %s37 = sphi 0, %s34
    %s38 = sphi 0, %s37
    %s54 = sphi 0, %s38
    %s58 = sphi 0, %s58
    %s60 = sphi 0, %s58
    %s61 = sphi 0, %s60
    %s75 = sphi 0, %s61
    %s79 = sphi 0, %s79
    %s81 = sphi 0, %s79
    %s82 = sphi 0, %s81
    %s96 = sphi 0, %s82
    %s100 = sphi 0, %s100
    %s102 = sphi 0, %s100
    %s103 = sphi 0, %s102
    %s117 = sphi 0, %s103
    %s125 = sphi 0, %s127
    %s128 = sphi 0, %s125
    %s129 = sphi 0, %s128
    %s145 = sphi 0, %s129
    %s153 = sphi 0, %s155
    %s156 = sphi 0, %s153
    %s157 = sphi 0, %s156
    %s173 = sphi 0, %s157
  $region4: #{resblock_forward.3} parent=0 // loop_header_branch
    %15 = sbr.rel (%p13) target = $region8
  $region5: #{resblock_forward.3} parent=0 // loop_body
    %s17 = ssub.s32 %s12, 1
    %s18 = ssub.s32 %s12, 2
    %s25 = sadd.s32 1, %s20
    %p26 = scmp.ge.s32.totalorder %s25, 2
    %s27 = scalar_select %p26, 0, %s25
    %s28 = sadd.s32 1, %s19
    %s29 = scalar_select %p26, %s28, %s19
    %p30 = scmp.ge.s32.totalorder %s29, 2
    %s31 = scalar_select %p30, 0, %s29
    %s32 = ssub.s32 %s19, %s31
    %p33 = scmp.eq.s32.totalorder %s32, 0
    %s35 = sadd.s32 %s34, 1
    %s36 = scalar_select %p33, %s34, %s35
    %p39 = pneg %p33
    %p40 = scmp.eq.s32.totalorder %s12, 3
    %p41 = por %p39, %p40
    %p42 = scmp.ne.s32.totalorder %s34, %s37
    %p43 = scmp.eq.s32.totalorder %s12, 0
    %p44 = por %p42, %p43
    %p45 = scmp.ne.s32.totalorder %s34, %s37
    %p46 = scmp.eq.s32.totalorder %s17, 3
    %p47 = por %p45, %p46
    %p48 = scmp.ne.s32.totalorder %s37, %s38
    %p49 = scmp.eq.s32.totalorder %s17, 0
    %p50 = por %p48, %p49
    %p51 = scmp.ne.s32.totalorder %s37, %s38
    %p52 = scmp.eq.s32.totalorder %s18, 3
    %p53 = por %p51, %p52
    %p55 = scmp.ne.s32.totalorder %s38, %s54
    %p56 = scmp.eq.s32.totalorder %s18, 0
    %p57 = por %p55, %p56
    %s59 = sadd.s32 %s58, 1
    %p62 = scmp.eq.s32.totalorder %s12, 3
    %p63 = scmp.ne.s32.totalorder %s58, %s60
    %p64 = scmp.eq.s32.totalorder %s12, 0
    %p65 = por %p63, %p64
    %p66 = scmp.ne.s32.totalorder %s58, %s60
    %p67 = scmp.eq.s32.totalorder %s17, 3
    %p68 = por %p66, %p67
    %p69 = scmp.ne.s32.totalorder %s60, %s61
    %p70 = scmp.eq.s32.totalorder %s17, 0
    %p71 = por %p69, %p70
    %p72 = scmp.ne.s32.totalorder %s60, %s61
    %p73 = scmp.eq.s32.totalorder %s18, 3
    %p74 = por %p72, %p73
    %p76 = scmp.ne.s32.totalorder %s61, %s75
    %p77 = scmp.eq.s32.totalorder %s18, 0
    %p78 = por %p76, %p77
    %s80 = sadd.s32 %s79, 1
    %p83 = scmp.eq.s32.totalorder %s12, 3
    %p84 = scmp.ne.s32.totalorder %s79, %s81
    %p85 = scmp.eq.s32.totalorder %s12, 0
    %p86 = por %p84, %p85
    %p87 = scmp.ne.s32.totalorder %s79, %s81
    %p88 = scmp.eq.s32.totalorder %s17, 3
    %p89 = por %p87, %p88
    %p90 = scmp.ne.s32.totalorder %s81, %s82
    %p91 = scmp.eq.s32.totalorder %s17, 0
    %p92 = por %p90, %p91
    %p93 = scmp.ne.s32.totalorder %s81, %s82
    %p94 = scmp.eq.s32.totalorder %s18, 3
    %p95 = por %p93, %p94
    %p97 = scmp.ne.s32.totalorder %s82, %s96
    %p98 = scmp.eq.s32.totalorder %s18, 0
    %p99 = por %p97, %p98
    %s101 = sadd.s32 %s100, 1
    %p104 = scmp.eq.s32.totalorder %s12, 3
    %p105 = scmp.ne.s32.totalorder %s100, %s102
    %p106 = scmp.eq.s32.totalorder %s12, 0
    %p107 = por %p105, %p106
    %p108 = scmp.ne.s32.totalorder %s100, %s102
    %p109 = scmp.eq.s32.totalorder %s17, 3
    %p110 = por %p108, %p109
    %p111 = scmp.ne.s32.totalorder %s102, %s103
    %p112 = scmp.eq.s32.totalorder %s17, 0
    %p113 = por %p111, %p112
    %p114 = scmp.ne.s32.totalorder %s102, %s103
    %p115 = scmp.eq.s32.totalorder %s18, 3
    %p116 = por %p114, %p115
    %p118 = scmp.ne.s32.totalorder %s103, %s117
    %p119 = scmp.eq.s32.totalorder %s18, 0
    %p120 = por %p118, %p119
    %s121 = ssub.s32 %s19, %s31
    %s122 = ssub.s32 %s20, %s27
    %s123 = sor.u32 %s121, %s122
    %p124 = scmp.eq.s32.totalorder %s123, 0
    %s126 = sadd.s32 %s125, 1
    %s127 = scalar_select %p124, %s125, %s126
    %p130 = pneg %p124
    %p131 = scmp.eq.s32.totalorder %s12, 3
    %p132 = por %p130, %p131
    %p133 = scmp.ne.s32.totalorder %s125, %s128
    %p134 = scmp.eq.s32.totalorder %s12, 0
    %p135 = por %p133, %p134
    %p136 = scmp.ne.s32.totalorder %s125, %s128
    %p137 = scmp.eq.s32.totalorder %s17, 3
    %p138 = por %p136, %p137
    %p139 = scmp.ne.s32.totalorder %s128, %s129
    %p140 = scmp.eq.s32.totalorder %s17, 0
    %p141 = por %p139, %p140
    %p142 = scmp.ne.s32.totalorder %s128, %s129
    %p143 = scmp.eq.s32.totalorder %s18, 3
    %p144 = por %p142, %p143
    %p146 = scmp.ne.s32.totalorder %s129, %s145
    %p147 = scmp.eq.s32.totalorder %s18, 0
    %p148 = por %p146, %p147
    %s149 = ssub.s32 %s19, %s31
    %s150 = ssub.s32 %s20, %s27
    %s151 = sor.u32 %s149, %s150
    %p152 = scmp.eq.s32.totalorder %s151, 0
    %s154 = sadd.s32 %s153, 1
    %s155 = scalar_select %p152, %s153, %s154
    %p158 = pneg %p152
    %p159 = scmp.eq.s32.totalorder %s12, 3
    %p160 = por %p158, %p159
    %p161 = scmp.ne.s32.totalorder %s153, %s156
    %p162 = scmp.eq.s32.totalorder %s12, 0
    %p163 = por %p161, %p162
    %p164 = scmp.ne.s32.totalorder %s153, %s156
    %p165 = scmp.eq.s32.totalorder %s17, 3
    %p166 = por %p164, %p165
    %p167 = scmp.ne.s32.totalorder %s156, %s157
    %p168 = scmp.eq.s32.totalorder %s17, 0
    %p169 = por %p167, %p168
    %p170 = scmp.ne.s32.totalorder %s156, %s157
    %p171 = scmp.eq.s32.totalorder %s18, 3
    %p172 = por %p170, %p171
    %p174 = scmp.ne.s32.totalorder %s157, %s173
    %p175 = scmp.eq.s32.totalorder %s18, 0
    %p176 = por %p174, %p175
    %p177 = scmp.le.s32.totalorder 1, %s12
    %p178 = scmp.lt.s32.totalorder %s12, 5
    %p179 = pnand %p177, %p178
    %p180 = pneg %p179
    // Predicated region
    $region9: #{resblock_forward.3} parent=5 // pred_check
      _
    $region10: #{resblock_forward.3} parent=5 // pred_check_branch
      %182 = sbr.rel (%p179) target = $region12
    $region11: #{resblock_forward.3} parent=5 // pred_region
      %s183 = ssub.s32 %s12, 1
      // Predicated region
      $region13: #{resblock_forward.3} parent=11 // pred_check
        %p184 = pneg %p71
      $region14: #{resblock_forward.3} parent=11 // pred_check_branch
        %186 = sbr.rel (%p184) target = $region16
      $region15: #{resblock_forward.3} parent=11 // pred_region
        _
      $region16: #{resblock_forward.3} parent=11 // pred_fallthru
        _
      // Predicated region
      $region17: #{resblock_forward.3} parent=11 // pred_check
        %p187 = pneg %p92
      $region18: #{resblock_forward.3} parent=11 // pred_check_branch
        %189 = sbr.rel (%p187) target = $region20
      $region19: #{resblock_forward.3} parent=11 // pred_region
        _
      $region20: #{resblock_forward.3} parent=11 // pred_fallthru
        _
      // Predicated region
      $region21: #{resblock_forward.3} parent=11 // pred_check
        %p190 = pneg %p113
      $region22: #{resblock_forward.3} parent=11 // pred_check_branch
        %192 = sbr.rel (%p190) target = $region24
      $region23: #{resblock_forward.3} parent=11 // pred_region
        _
      $region24: #{resblock_forward.3} parent=11 // pred_fallthru
        _
    $region12: #{resblock_forward.3} parent=5 // pred_fallthru
      _
    %p193 = scmp.lt.s32.totalorder %s12, 4
    // Predicated region
    $region25: #{resblock_forward.3} parent=5 // pred_check
      %p194 = pneg %p193
    $region26: #{resblock_forward.3} parent=5 // pred_check_branch
      %196 = sbr.rel (%p194) target = $region28
    $region27: #{resblock_forward.3} parent=5 // pred_region
      // Predicated region
      $region29: #{resblock_forward.3} parent=27 // pred_check
        %p197 = pneg %p44
      $region30: #{resblock_forward.3} parent=27 // pred_check_branch
        %199 = sbr.rel (%p197) target = $region32
      $region31: #{resblock_forward.3} parent=27 // pred_region
        %p200 = scmp.lt.s32.totalorder %s19, 1
        %s201 = scalar_select %p200, %s19, 1
        %s202 = smul.addr %s201, 32
        %s203 = smul.addr %s202, 8
        %s204 = scalar_lea.vmem %s0, %s203
      $region32: #{resblock_forward.3} parent=27 // pred_fallthru
        _
    $region28: #{resblock_forward.3} parent=5 // pred_fallthru
      _
    %p205 = scmp.le.s32.totalorder 1, %s12
    %p206 = scmp.lt.s32.totalorder %s12, 5
    %p207 = pnand %p205, %p206
    %p208 = pneg %p207
    // Predicated region
    $region33: #{resblock_forward.3} parent=5 // pred_check
      _
    $region34: #{resblock_forward.3} parent=5 // pred_check_branch
      %210 = sbr.rel (%p207) target = $region36
    $region35: #{resblock_forward.3} parent=5 // pred_region
      %s211 = ssub.s32 %s12, 1
      %p212 = scmp.lt.s32.totalorder %s21, 1
      %s213 = scalar_select %p212, %s21, 1
      %s214 = smul.addr %s213, 32
      %s215 = smul.addr %s214, 8
      %s216 = scalar_lea.vmem %s0, %s215
      %p217 = pneg %p50
      %p218 = pneg %p47
      %p219 = pneg %p71
      %p220 = pneg %p68
      %p221 = pneg %p92
      %p222 = pneg %p89
      %p223 = pneg %p113
      %p224 = pneg %p110
      %p225 = pneg %p141
      %p226 = pneg %p138
      %s227 = smul.u32 8, %s22
      %p228 = scmp.lt.s32.totalorder %s21, 1
      %s229 = scalar_select %p228, %s21, 1
      %p230 = scmp.lt.s32.totalorder %s227, 15
      %s231 = scalar_select %p230, %s227, 15
      %s232 = smul.addr %s231, 2
      %s233 = smul.addr %s229, 32
      %s234 = sadd.s32 %s232, %s233
      %s235 = smul.addr %s234, 4
      %s236 = scalar_lea.vmem %s4, %s235
      %p237 = pneg %p169
      %p238 = pneg %p166
      %p239 = scmp.lt.s32.totalorder %s21, 1
      %s240 = scalar_select %p239, %s21, 1
      %p241 = scmp.lt.s32.totalorder %s22, 1
      %s242 = scalar_select %p241, %s22, 1
      %s243 = smul.addr %s240, 2
      %s244 = sadd.s32 %s242, %s243
      %s245 = smul.addr %s244, 2
      %s246 = scalar_lea.vmem %s5, %s245
      %p247 = scmp.lt.s32.totalorder %s21, 1
      %s248 = scalar_select %p247, %s21, 1
      %s249 = smul.addr %s248, 32
      %s250 = smul.addr %s249, 8
      %s251 = scalar_lea.vmem %s0, %s250
      %s252 = smul.u32 8, %s22
      %p253 = scmp.lt.s32.totalorder %s21, 1
      %s254 = scalar_select %p253, %s21, 1
      %p255 = scmp.lt.s32.totalorder %s252, 15
      %s256 = scalar_select %p255, %s252, 15
      %s257 = smul.addr %s256, 2
      %s258 = smul.addr %s254, 32
      %s259 = sadd.s32 %s257, %s258
      %s260 = smul.addr %s259, 4
      %s261 = scalar_lea.vmem %s4, %s260
      %s262 = smul.u32 8, %s22
      %p263 = scmp.lt.s32.totalorder %s21, 1
      %s264 = scalar_select %p263, %s21, 1
      %p265 = scmp.lt.s32.totalorder %s22, 1
      %s266 = scalar_select %p265, %s22, 1
      %s267 = smul.addr %s264, 2
      %s268 = sadd.s32 %s266, %s267
      %s269 = smul.addr %s268, 2
      %s270 = scalar_lea.vmem %s5, %s269
      %s272 = smul.u32 %s22, 8
      %vm273 = vcmask 1040384
      %vm274 = vsmask.f32 256
      %vm275 = vmand %vm273, %vm274
      %v276 = vld [vmem:[#allocation2] sm:$0x1]
      %v277 = vsel %vm275, 0, %v276
      %278 = vst [vmem:[#allocation2] sm:$0x1] %v277
      %v279 = vld [vmem:[#allocation2 + $0xc] sm:$0x1]
      %v280 = vsel %vm275, 0, %v279
      %281 = vst [vmem:[#allocation2 + $0xc] sm:$0x1] %v280
      %v282 = vld [vmem:[#allocation2 + $0x18] sm:$0x1]
      %v283 = vsel %vm275, 0, %v282
      %284 = vst [vmem:[#allocation2 + $0x18] sm:$0x1] %v283
      %v285 = vld [vmem:[#allocation2 + $0x24] sm:$0x1]
      %v286 = vsel %vm275, 0, %v285
      %287 = vst [vmem:[#allocation2 + $0x24] sm:$0x1] %v286
      %v288 = vld [vmem:[#allocation2 + $0x30] sm:$0x1]
      %v289 = vsel %vm275, 0, %v288
      %290 = vst [vmem:[#allocation2 + $0x30] sm:$0x1] %v289
      %v291 = vld [vmem:[#allocation2 + $0x3c] sm:$0x1]
      %v292 = vsel %vm275, 0, %v291
      %293 = vst [vmem:[#allocation2 + $0x3c] sm:$0x1] %v292
      %v294 = vld [vmem:[#allocation2 + $0x48] sm:$0x1]
      %v295 = vsel %vm275, 0, %v294
      %296 = vst [vmem:[#allocation2 + $0x48] sm:$0x1] %v295
      %v297 = vld [vmem:[#allocation2 + $0x54] sm:$0x1]
      %v298 = vsel %vm275, 0, %v297
      %299 = vst [vmem:[#allocation2 + $0x54] sm:$0x1] %v298
      %v300 = vld [vmem:[#allocation2 + $0x60] sm:$0x1]
      %v301 = vsel %vm275, 0, %v300
      %302 = vst [vmem:[#allocation2 + $0x60] sm:$0x1] %v301
      %v303 = vld [vmem:[#allocation2 + $0x6c] sm:$0x1]
      %v304 = vsel %vm275, 0, %v303
      %305 = vst [vmem:[#allocation2 + $0x6c] sm:$0x1] %v304
      %vm306 = vsmask.f32 7938
      %vm307 = vmand %vm273, %vm306
      %v308 = vld [vmem:[#allocation2 + $0x8] sm:$0x1]
      %v309 = vsel %vm307, 0, %v308
      %310 = vst [vmem:[#allocation2 + $0x8] sm:$0x1] %v309
      %v311 = vld [vmem:[#allocation2 + $0x14] sm:$0x1]
      %v312 = vsel %vm307, 0, %v311
      %313 = vst [vmem:[#allocation2 + $0x14] sm:$0x1] %v312
      %v314 = vld [vmem:[#allocation2 + $0x20] sm:$0x1]
      %v315 = vsel %vm307, 0, %v314
      %316 = vst [vmem:[#allocation2 + $0x20] sm:$0x1] %v315
      %v317 = vld [vmem:[#allocation2 + $0x2c] sm:$0x1]
      %v318 = vsel %vm307, 0, %v317
      %319 = vst [vmem:[#allocation2 + $0x2c] sm:$0x1] %v318
      %v320 = vld [vmem:[#allocation2 + $0x38] sm:$0x1]
      %v321 = vsel %vm307, 0, %v320
      %322 = vst [vmem:[#allocation2 + $0x38] sm:$0x1] %v321
      %v323 = vld [vmem:[#allocation2 + $0x44] sm:$0x1]
      %v324 = vsel %vm307, 0, %v323
      %325 = vst [vmem:[#allocation2 + $0x44] sm:$0x1] %v324
      %v326 = vld [vmem:[#allocation2 + $0x50] sm:$0x1]
      %v327 = vsel %vm307, 0, %v326
      %328 = vst [vmem:[#allocation2 + $0x50] sm:$0x1] %v327
      %v329 = vld [vmem:[#allocation2 + $0x5c] sm:$0x1]
      %v330 = vsel %vm307, 0, %v329
      %331 = vst [vmem:[#allocation2 + $0x5c] sm:$0x1] %v330
      %v332 = vld [vmem:[#allocation2 + $0x68] sm:$0x1]
      %v333 = vsel %vm307, 0, %v332
      %334 = vst [vmem:[#allocation2 + $0x68] sm:$0x1] %v333
      %v335 = vld [vmem:[#allocation2 + $0x74] sm:$0x1]
      %v336 = vsel %vm307, 0, %v335
      %337 = vst [vmem:[#allocation2 + $0x74] sm:$0x1] %v336
      %s338 = smul.u32 %s272, 16
      %s339 = scalar_lea.vmem %s251, %s338
      %v340 = vld [vmem:[%s339] sm:$0xff]
      %v341 = vld [vmem:[%s339 + $0x8] sm:$0xff]
      %v342 = vld [vmem:[%s339 + $0x10] sm:$0xff]
      %v343 = vld [vmem:[%s339 + $0x18] sm:$0xff]
      %v344 = vld [vmem:[%s339 + $0x20] sm:$0xff]
      %v345 = vld [vmem:[%s339 + $0x28] sm:$0xff]
      %v346 = vld [vmem:[%s339 + $0x30] sm:$0xff]
      %v347 = vld [vmem:[%s339 + $0x38] sm:$0xff]
      %v348 = vld [vmem:[%s339 + $0x40] sm:$0xff]
      %v349 = vld [vmem:[%s339 + $0x48] sm:$0xff]
      %v350 = vld [vmem:[%s339 + $0x50] sm:$0xff]
      %v351 = vld [vmem:[%s339 + $0x58] sm:$0xff]
      %v352 = vld [vmem:[%s339 + $0x60] sm:$0xff]
      %v353 = vld [vmem:[%s339 + $0x68] sm:$0xff]
      %v354 = vld [vmem:[%s339 + $0x70] sm:$0xff]
      %v355 = vld [vmem:[%s339 + $0x78] sm:$0xff]
      %v356 = vpack.c.bf16 %v341, %v340
      %v357 = vpack.c.bf16 %v343, %v342
      %v358 = vpack.c.bf16 %v345, %v344
      %v359 = vpack.c.bf16 %v347, %v346
      %v360 = vpack.c.bf16 %v349, %v348
      %v361 = vpack.c.bf16 %v351, %v350
      %v362 = vpack.c.bf16 %v353, %v352
      %v363 = vpack.c.bf16 %v355, %v354
      %v372 = vunpack.c.l.b16 %v356
      %v373 = vunpack.c.h.b16 %v356
      %v374 = vunpack.c.l.b16 %v357
      %v375 = vunpack.c.h.b16 %v357
      %v376 = vunpack.c.l.b16 %v358
      %v377 = vunpack.c.h.b16 %v358
      %v378 = vunpack.c.l.b16 %v359
      %v379 = vunpack.c.h.b16 %v359
      %v380 = vunpack.c.l.b16 %v360
      %v381 = vunpack.c.h.b16 %v360
      %v382 = vunpack.c.l.b16 %v361
      %v383 = vunpack.c.h.b16 %v361
      %v384 = vunpack.c.l.b16 %v362
      %v385 = vunpack.c.h.b16 %v362
      %v386 = vunpack.c.l.b16 %v363
      %v387 = vunpack.c.h.b16 %v363
      %v388 = vpack.c.b16 %v372, %v372
      %v389 = vpack.c.b16 %v373, %v373
      %v390 = vpack.c.b16 %v374, %v374
      %v391 = vpack.c.b16 %v375, %v375
      %v392 = vpack.c.b16 %v376, %v376
      %v393 = vpack.c.b16 %v377, %v377
      %v394 = vpack.c.b16 %v378, %v378
      %v395 = vpack.c.b16 %v379, %v379
      %v396 = vpack.c.b16 %v380, %v380
      %v397 = vpack.c.b16 %v381, %v381
      %v398 = vpack.c.b16 %v382, %v382
      %v399 = vpack.c.b16 %v383, %v383
      %v400 = vpack.c.b16 %v384, %v384
      %v401 = vpack.c.b16 %v385, %v385
      %v402 = vpack.c.b16 %v386, %v386
      %v403 = vpack.c.b16 %v387, %v387
      %vm404 = vsmask.f32 4368
      %vm405 = vmor %vm274, %vm404
      %v407 = vshrl.u32 %v388, 16
      %v409 = vrot.slane %v407, 7
      %v410 = vshll.u32 %v388, 16
      %v412 = vor.u32 %v409, %v410
      %v413 = vrot.slane %v409, 4
      %v415 = vshrl.u32 %v389, 16
      %v417 = vrot.slane %v415, 7
      %v418 = vshll.u32 %v389, 16
      %v420 = vor.u32 %v417, %v418
      %v421 = vsel %vm405, %v413, %v420
      %v422 = vrot.slane %v417, 4
      %v424 = vshrl.u32 %v390, 16
      %v426 = vrot.slane %v424, 7
      %v427 = vshll.u32 %v390, 16
      %v429 = vor.u32 %v426, %v427
      %v430 = vrot.slane %v426, 4
      %v432 = vshrl.u32 %v391, 16
      %v434 = vrot.slane %v432, 7
      %v435 = vshll.u32 %v391, 16
      %v437 = vor.u32 %v434, %v435
      %v438 = vsel %vm405, %v430, %v437
      %v439 = vrot.slane %v434, 4
      %v441 = vshrl.u32 %v392, 16
      %v443 = vrot.slane %v441, 7
      %v444 = vshll.u32 %v392, 16
      %v446 = vor.u32 %v443, %v444
      %v447 = vrot.slane %v443, 4
      %v449 = vshrl.u32 %v393, 16
      %v451 = vrot.slane %v449, 7
      %v452 = vshll.u32 %v393, 16
      %v454 = vor.u32 %v451, %v452
      %v455 = vsel %vm405, %v447, %v454
      %v456 = vrot.slane %v451, 4
      %v458 = vshrl.u32 %v394, 16
      %v460 = vrot.slane %v458, 7
      %v461 = vshll.u32 %v394, 16
      %v463 = vor.u32 %v460, %v461
      %v464 = vrot.slane %v460, 4
      %v466 = vshrl.u32 %v395, 16
      %v468 = vrot.slane %v466, 7
      %v469 = vshll.u32 %v395, 16
      %v471 = vor.u32 %v468, %v469
      %v472 = vsel %vm405, %v464, %v471
      %v473 = vrot.slane %v468, 4
      %v475 = vshrl.u32 %v396, 16
      %v477 = vrot.slane %v475, 7
      %v478 = vshll.u32 %v396, 16
      %v480 = vor.u32 %v477, %v478
      %v481 = vrot.slane %v477, 4
      %v483 = vshrl.u32 %v397, 16
      %v485 = vrot.slane %v483, 7
      %v486 = vshll.u32 %v397, 16
      %v488 = vor.u32 %v485, %v486
      %v489 = vsel %vm405, %v481, %v488
      %v490 = vrot.slane %v485, 4
      %v492 = vshrl.u32 %v398, 16
      %v494 = vrot.slane %v492, 7
      %v495 = vshll.u32 %v398, 16
      %v497 = vor.u32 %v494, %v495
      %v498 = vrot.slane %v494, 4
      %v500 = vshrl.u32 %v399, 16
      %v502 = vrot.slane %v500, 7
      %v503 = vshll.u32 %v399, 16
      %v505 = vor.u32 %v502, %v503
      %v506 = vsel %vm405, %v498, %v505
      %v507 = vrot.slane %v502, 4
      %v509 = vshrl.u32 %v400, 16
      %v511 = vrot.slane %v509, 7
      %v512 = vshll.u32 %v400, 16
      %v514 = vor.u32 %v511, %v512
      %v515 = vrot.slane %v511, 4
      %v517 = vshrl.u32 %v401, 16
      %v519 = vrot.slane %v517, 7
      %v520 = vshll.u32 %v401, 16
      %v522 = vor.u32 %v519, %v520
      %v523 = vsel %vm405, %v515, %v522
      %v524 = vrot.slane %v519, 4
      %v526 = vshrl.u32 %v402, 16
      %v528 = vrot.slane %v526, 7
      %v529 = vshll.u32 %v402, 16
      %v531 = vor.u32 %v528, %v529
      %v532 = vrot.slane %v528, 4
      %v534 = vshrl.u32 %v403, 16
      %v536 = vrot.slane %v534, 7
      %v537 = vshll.u32 %v403, 16
      %v539 = vor.u32 %v536, %v537
      %v540 = vsel %vm405, %v532, %v539
      %v541 = vrot.slane %v536, 4
      %s566 = scalar_lea.vmem [#allocation2], 12
      %vm567 = vcmask 1043456
      %vm568 = vmand %vm567, %vm306
      %v569 = vld [vmem:[%s566] sm:$0xf]
      %v570 = vsel %vm568, %v412, %v569
      %571 = vst [vmem:[%s566] sm:$0xf] %v570
      %572 = vst [vmem:[%s566 + $0x4] sm:$0xf] %v421
      %v573 = vld [vmem:[%s566 + $0x8] sm:$0x1]
      %v574 = vsel %vm275, %v422, %v573
      %575 = vst [vmem:[%s566 + $0x8] sm:$0x1] %v574
      %v576 = vld [vmem:[%s566 + $0xc] sm:$0xf]
      %v577 = vsel %vm568, %v429, %v576
      %578 = vst [vmem:[%s566 + $0xc] sm:$0xf] %v577
      %579 = vst [vmem:[%s566 + $0x10] sm:$0xf] %v438
      %v580 = vld [vmem:[%s566 + $0x14] sm:$0x1]
      %v581 = vsel %vm275, %v439, %v580
      %582 = vst [vmem:[%s566 + $0x14] sm:$0x1] %v581
      %v583 = vld [vmem:[%s566 + $0x18] sm:$0xf]
      %v584 = vsel %vm568, %v446, %v583
      %585 = vst [vmem:[%s566 + $0x18] sm:$0xf] %v584
      %586 = vst [vmem:[%s566 + $0x1c] sm:$0xf] %v455
      %v587 = vld [vmem:[%s566 + $0x20] sm:$0x1]
      %v588 = vsel %vm275, %v456, %v587
      %589 = vst [vmem:[%s566 + $0x20] sm:$0x1] %v588
      %v590 = vld [vmem:[%s566 + $0x24] sm:$0xf]
      %v591 = vsel %vm568, %v463, %v590
      %592 = vst [vmem:[%s566 + $0x24] sm:$0xf] %v591
      %593 = vst [vmem:[%s566 + $0x28] sm:$0xf] %v472
      %v594 = vld [vmem:[%s566 + $0x2c] sm:$0x1]
      %v595 = vsel %vm275, %v473, %v594
      %596 = vst [vmem:[%s566 + $0x2c] sm:$0x1] %v595
      %v597 = vld [vmem:[%s566 + $0x30] sm:$0xf]
      %v598 = vsel %vm568, %v480, %v597
      %599 = vst [vmem:[%s566 + $0x30] sm:$0xf] %v598
      %600 = vst [vmem:[%s566 + $0x34] sm:$0xf] %v489
      %v601 = vld [vmem:[%s566 + $0x38] sm:$0x1]
      %v602 = vsel %vm275, %v490, %v601
      %603 = vst [vmem:[%s566 + $0x38] sm:$0x1] %v602
      %v604 = vld [vmem:[%s566 + $0x3c] sm:$0xf]
      %v605 = vsel %vm568, %v497, %v604
      %606 = vst [vmem:[%s566 + $0x3c] sm:$0xf] %v605
      %607 = vst [vmem:[%s566 + $0x40] sm:$0xf] %v506
      %v608 = vld [vmem:[%s566 + $0x44] sm:$0x1]
      %v609 = vsel %vm275, %v507, %v608
      %610 = vst [vmem:[%s566 + $0x44] sm:$0x1] %v609
      %v611 = vld [vmem:[%s566 + $0x48] sm:$0xf]
      %v612 = vsel %vm568, %v514, %v611
      %613 = vst [vmem:[%s566 + $0x48] sm:$0xf] %v612
      %614 = vst [vmem:[%s566 + $0x4c] sm:$0xf] %v523
      %v615 = vld [vmem:[%s566 + $0x50] sm:$0x1]
      %v616 = vsel %vm275, %v524, %v615
      %617 = vst [vmem:[%s566 + $0x50] sm:$0x1] %v616
      %v618 = vld [vmem:[%s566 + $0x54] sm:$0xf]
      %v619 = vsel %vm568, %v531, %v618
      %620 = vst [vmem:[%s566 + $0x54] sm:$0xf] %v619
      %621 = vst [vmem:[%s566 + $0x58] sm:$0xf] %v540
      %v622 = vld [vmem:[%s566 + $0x5c] sm:$0x1]
      %v623 = vsel %vm275, %v541, %v622
      %624 = vst [vmem:[%s566 + $0x5c] sm:$0x1] %v623
      %p625 = scmp.eq.s32.totalorder %s22, 0
      // Predicated region
      $region37: #{resblock_forward.3} parent=35 // pred_check
        %p626 = pneg %p625
      $region38: #{resblock_forward.3} parent=35 // pred_check_branch
        %628 = sbr.rel (%p626) target = $region40
      $region39: #{resblock_forward.3} parent=35 // pred_region
        %v629 = vld [vmem:[#allocation2] sm:$0xf]
        %v630 = vsel %vm568, 0, %v629
        %631 = vst [vmem:[#allocation2] sm:$0xf] %v630
        %632 = vst [vmem:[#allocation2 + $0x4] sm:$0xf] 0
        %v633 = vld [vmem:[#allocation2 + $0x8] sm:$0x1]
        %v634 = vsel %vm275, 0, %v633
        %635 = vst [vmem:[#allocation2 + $0x8] sm:$0x1] %v634
      $region40: #{resblock_forward.3} parent=35 // pred_fallthru
        _
      %p636 = scmp.gt.s32.totalorder %s22, 0
      // Predicated region
      $region41: #{resblock_forward.3} parent=35 // pred_check
        %p637 = pneg %p636
      $region42: #{resblock_forward.3} parent=35 // pred_check_branch
        %639 = sbr.rel (%p637) target = $region44
      $region43: #{resblock_forward.3} parent=35 // pred_region
        %s640 = ssub.s32 %s272, 1
        %s641 = smul.u32 %s640, 16
        %s642 = scalar_lea.vmem %s251, %s641
        %v643 = vld [vmem:[%s642] sm:$0xff]
        %v644 = vld [vmem:[%s642 + $0x8] sm:$0xff]
        %v645 = vpack.c.bf16 %v644, %v643
        %v647 = vunpack.c.l.b16 %v645
        %v648 = vunpack.c.h.b16 %v645
        %v649 = vpack.c.b16 %v647, %v647
        %v650 = vpack.c.b16 %v648, %v648
        %v652 = vshrl.u32 %v649, 16
        %v654 = vrot.slane %v652, 7
        %v655 = vshll.u32 %v649, 16
        %v657 = vor.u32 %v654, %v655
        %v658 = vrot.slane %v654, 4
        %v660 = vshrl.u32 %v650, 16
        %v662 = vrot.slane %v660, 7
        %v663 = vshll.u32 %v650, 16
        %v665 = vor.u32 %v662, %v663
        %v666 = vsel %vm405, %v658, %v665
        %v667 = vrot.slane %v662, 4
        %v671 = vld [vmem:[#allocation2] sm:$0xf]
        %v672 = vsel %vm568, %v657, %v671
        %673 = vst [vmem:[#allocation2] sm:$0xf] %v672
        %674 = vst [vmem:[#allocation2 + $0x4] sm:$0xf] %v666
        %v675 = vld [vmem:[#allocation2 + $0x8] sm:$0x1]
        %v676 = vsel %vm275, %v667, %v675
        %677 = vst [vmem:[#allocation2 + $0x8] sm:$0x1] %v676
      $region44: #{resblock_forward.3} parent=35 // pred_fallthru
        _
      %p678 = scmp.eq.s32.totalorder %s22, 1
      // Predicated region
      $region45: #{resblock_forward.3} parent=35 // pred_check
        %p679 = pneg %p678
      $region46: #{resblock_forward.3} parent=35 // pred_check_branch
        %681 = sbr.rel (%p679) target = $region48
      $region47: #{resblock_forward.3} parent=35 // pred_region
        %s682 = scalar_lea.vmem [#allocation2], 108
        %v683 = vld [vmem:[%s682] sm:$0xf]
        %v684 = vsel %vm568, 0, %v683
        %685 = vst [vmem:[%s682] sm:$0xf] %v684
        %686 = vst [vmem:[%s682 + $0x4] sm:$0xf] 0
        %v687 = vld [vmem:[%s682 + $0x8] sm:$0x1]
        %v688 = vsel %vm275, 0, %v687
        %689 = vst [vmem:[%s682 + $0x8] sm:$0x1] %v688
      $region48: #{resblock_forward.3} parent=35 // pred_fallthru
        _
      %p690 = scmp.lt.s32.totalorder %s22, 1
      // Predicated region
      $region49: #{resblock_forward.3} parent=35 // pred_check
        %p691 = pneg %p690
      $region50: #{resblock_forward.3} parent=35 // pred_check_branch
        %693 = sbr.rel (%p691) target = $region52
      $region51: #{resblock_forward.3} parent=35 // pred_region
        %s694 = sadd.s32 %s272, 8
        %s695 = smul.u32 %s694, 16
        %s696 = scalar_lea.vmem %s251, %s695
        %v697 = vld [vmem:[%s696] sm:$0xff]
        %v698 = vld [vmem:[%s696 + $0x8] sm:$0xff]
        %v699 = vpack.c.bf16 %v698, %v697
        %v701 = vunpack.c.l.b16 %v699
        %v702 = vunpack.c.h.b16 %v699
        %v703 = vpack.c.b16 %v701, %v701
        %v704 = vpack.c.b16 %v702, %v702
        %v706 = vshrl.u32 %v703, 16
        %v708 = vrot.slane %v706, 7
        %v709 = vshll.u32 %v703, 16
        %v711 = vor.u32 %v708, %v709
        %v712 = vrot.slane %v708, 4
        %v714 = vshrl.u32 %v704, 16
        %v716 = vrot.slane %v714, 7
        %v717 = vshll.u32 %v704, 16
        %v719 = vor.u32 %v716, %v717
        %v720 = vsel %vm405, %v712, %v719
        %v721 = vrot.slane %v716, 4
        %s725 = scalar_lea.vmem [#allocation2], 108
        %v726 = vld [vmem:[%s725] sm:$0xf]
        %v727 = vsel %vm568, %v711, %v726
        %728 = vst [vmem:[%s725] sm:$0xf] %v727
        %729 = vst [vmem:[%s725 + $0x4] sm:$0xf] %v720
        %v730 = vld [vmem:[%s725 + $0x8] sm:$0x1]
        %v731 = vsel %vm275, %v721, %v730
        %732 = vst [vmem:[%s725 + $0x8] sm:$0x1] %v731
      $region52: #{resblock_forward.3} parent=35 // pred_fallthru
        _
      %v733 = vld [vmem:[#allocation2] sm:$0xf]
      %v734 = vld [vmem:[#allocation2 + $0x4] sm:$0xf]
      %v735 = vld [vmem:[#allocation2 + $0xc] sm:$0xf]
      %v736 = vld [vmem:[#allocation2 + $0x10] sm:$0xf]
      %v737 = vld [vmem:[#allocation2 + $0x18] sm:$0xf]
      %v738 = vld [vmem:[#allocation2 + $0x1c] sm:$0xf]
      %v739 = vld [vmem:[#allocation2 + $0x24] sm:$0xf]
      %v740 = vld [vmem:[#allocation2 + $0x28] sm:$0xf]
      %v741 = vld [vmem:[#allocation2 + $0x30] sm:$0xf]
      %v742 = vld [vmem:[#allocation2 + $0x34] sm:$0xf]
      %v743 = vld [vmem:[#allocation2 + $0x3c] sm:$0xf]
      %v744 = vld [vmem:[#allocation2 + $0x40] sm:$0xf]
      %v745 = vld [vmem:[#allocation2 + $0x48] sm:$0xf]
      %v746 = vld [vmem:[#allocation2 + $0x4c] sm:$0xf]
      %v747 = vld [vmem:[#allocation2 + $0x54] sm:$0xf]
      %v748 = vld [vmem:[#allocation2 + $0x58] sm:$0xf]
      %749 = vst [vmem:[#allocation3] sm:$0xf] %v733
      %750 = vst [vmem:[#allocation3 + $0x24] sm:$0xf] %v734
      %751 = vst [vmem:[#allocation3 + $0x48] sm:$0xf] %v735
      %752 = vst [vmem:[#allocation3 + $0x6c] sm:$0xf] %v736
      %753 = vst [vmem:[#allocation3 + $0x90] sm:$0xf] %v737
      %754 = vst [vmem:[#allocation3 + $0xb4] sm:$0xf] %v738
      %755 = vst [vmem:[#allocation3 + $0xd8] sm:$0xf] %v739
      %756 = vst [vmem:[#allocation3 + $0xfc] sm:$0xf] %v740
      %757 = vst [vmem:[#allocation3 + $0x120] sm:$0xf] %v741
      %758 = vst [vmem:[#allocation3 + $0x144] sm:$0xf] %v742
      %759 = vst [vmem:[#allocation3 + $0x168] sm:$0xf] %v743
      %760 = vst [vmem:[#allocation3 + $0x18c] sm:$0xf] %v744
      %761 = vst [vmem:[#allocation3 + $0x1b0] sm:$0xf] %v745
      %762 = vst [vmem:[#allocation3 + $0x1d4] sm:$0xf] %v746
      %763 = vst [vmem:[#allocation3 + $0x1f8] sm:$0xf] %v747
      %764 = vst [vmem:[#allocation3 + $0x21c] sm:$0xf] %v748
      %v765 = vld [vmem:[#allocation2] sm:$0xf]
      %v766 = vld [vmem:[#allocation2 + $0x4] sm:$0xf]
      %v767 = vld [vmem:[#allocation2 + $0x8] sm:$0x1]
      %v768 = vld [vmem:[#allocation2 + $0xc] sm:$0xf]
      %v769 = vld [vmem:[#allocation2 + $0x10] sm:$0xf]
      %v770 = vld [vmem:[#allocation2 + $0x14] sm:$0x1]
      %v771 = vld [vmem:[#allocation2 + $0x18] sm:$0xf]
      %v772 = vld [vmem:[#allocation2 + $0x1c] sm:$0xf]
      %v773 = vld [vmem:[#allocation2 + $0x20] sm:$0x1]
      %v774 = vld [vmem:[#allocation2 + $0x24] sm:$0xf]
      %v775 = vld [vmem:[#allocation2 + $0x28] sm:$0xf]
      %v776 = vld [vmem:[#allocation2 + $0x2c] sm:$0x1]
      %v777 = vld [vmem:[#allocation2 + $0x30] sm:$0xf]
      %v778 = vld [vmem:[#allocation2 + $0x34] sm:$0xf]
      %v779 = vld [vmem:[#allocation2 + $0x38] sm:$0x1]
      %v780 = vld [vmem:[#allocation2 + $0x3c] sm:$0xf]
      %v781 = vld [vmem:[#allocation2 + $0x40] sm:$0xf]
      %v782 = vld [vmem:[#allocation2 + $0x44] sm:$0x1]
      %v783 = vld [vmem:[#allocation2 + $0x48] sm:$0xf]
      %v784 = vld [vmem:[#allocation2 + $0x4c] sm:$0xf]
      %v785 = vld [vmem:[#allocation2 + $0x50] sm:$0x1]
      %v786 = vld [vmem:[#allocation2 + $0x54] sm:$0xf]
      %v787 = vld [vmem:[#allocation2 + $0x58] sm:$0xf]
      %v788 = vld [vmem:[#allocation2 + $0x5c] sm:$0x1]
      %vm789 = vsmask.f32 3328
      %vm790 = vsmask.f32 7440
      %vm791 = vmor %vm789, %vm790
      %v793 = vshrl.u32 %v765, 16
      %v795 = vrot.slane %v793, 4
      %v796 = vshll.u32 %v765, 16
      %v798 = vrot.slane %v796, 5
      %v799 = vor.u32 %v795, %v798
      %v800 = vrot.slane %v799, 4
      %v802 = vshll.u32 %v766, 16
      %v804 = vrot.slane %v802, 5
      %v805 = vsel %vm791, %v800, %v804
      %v806 = vshrl.u32 %v766, 16
      %v808 = vrot.slane %v806, 4
      %v809 = vor.u32 %v808, %v804
      %v810 = vrot.slane %v809, 4
      %v812 = vshll.u32 %v767, 16
      %v814 = vrot.slane %v812, 5
      %v815 = vsel %vm791, %v810, %v814
      %v817 = vshrl.u32 %v768, 16
      %v819 = vrot.slane %v817, 4
      %v820 = vshll.u32 %v768, 16
      %v822 = vrot.slane %v820, 5
      %v823 = vor.u32 %v819, %v822
      %v824 = vrot.slane %v823, 4
      %v826 = vshll.u32 %v769, 16
      %v828 = vrot.slane %v826, 5
      %v829 = vsel %vm791, %v824, %v828
      %v830 = vshrl.u32 %v769, 16
      %v832 = vrot.slane %v830, 4
      %v833 = vor.u32 %v832, %v828
      %v834 = vrot.slane %v833, 4
      %v836 = vshll.u32 %v770, 16
      %v838 = vrot.slane %v836, 5
      %v839 = vsel %vm791, %v834, %v838
      %v841 = vshrl.u32 %v771, 16
      %v843 = vrot.slane %v841, 4
      %v844 = vshll.u32 %v771, 16
      %v846 = vrot.slane %v844, 5
      %v847 = vor.u32 %v843, %v846
      %v848 = vrot.slane %v847, 4
      %v850 = vshll.u32 %v772, 16
      %v852 = vrot.slane %v850, 5
      %v853 = vsel %vm791, %v848, %v852
      %v854 = vshrl.u32 %v772, 16
      %v856 = vrot.slane %v854, 4
      %v857 = vor.u32 %v856, %v852
      %v858 = vrot.slane %v857, 4
      %v860 = vshll.u32 %v773, 16
      %v862 = vrot.slane %v860, 5
      %v863 = vsel %vm791, %v858, %v862
      %v865 = vshrl.u32 %v774, 16
      %v867 = vrot.slane %v865, 4
      %v868 = vshll.u32 %v774, 16
      %v870 = vrot.slane %v868, 5
      %v871 = vor.u32 %v867, %v870
      %v872 = vrot.slane %v871, 4
      %v874 = vshll.u32 %v775, 16
      %v876 = vrot.slane %v874, 5
      %v877 = vsel %vm791, %v872, %v876
      %v878 = vshrl.u32 %v775, 16
      %v880 = vrot.slane %v878, 4
      %v881 = vor.u32 %v880, %v876
      %v882 = vrot.slane %v881, 4
      %v884 = vshll.u32 %v776, 16
      %v886 = vrot.slane %v884, 5
      %v887 = vsel %vm791, %v882, %v886
      %v889 = vshrl.u32 %v777, 16
      %v891 = vrot.slane %v889, 4
      %v892 = vshll.u32 %v777, 16
      %v894 = vrot.slane %v892, 5
      %v895 = vor.u32 %v891, %v894
      %v896 = vrot.slane %v895, 4
      %v898 = vshll.u32 %v778, 16
      %v900 = vrot.slane %v898, 5
      %v901 = vsel %vm791, %v896, %v900
      %v902 = vshrl.u32 %v778, 16
      %v904 = vrot.slane %v902, 4
      %v905 = vor.u32 %v904, %v900
      %v906 = vrot.slane %v905, 4
      %v908 = vshll.u32 %v779, 16
      %v910 = vrot.slane %v908, 5
      %v911 = vsel %vm791, %v906, %v910
      %v913 = vshrl.u32 %v780, 16
      %v915 = vrot.slane %v913, 4
      %v916 = vshll.u32 %v780, 16
      %v918 = vrot.slane %v916, 5
      %v919 = vor.u32 %v915, %v918
      %v920 = vrot.slane %v919, 4
      %v922 = vshll.u32 %v781, 16
      %v924 = vrot.slane %v922, 5
      %v925 = vsel %vm791, %v920, %v924
      %v926 = vshrl.u32 %v781, 16
      %v928 = vrot.slane %v926, 4
      %v929 = vor.u32 %v928, %v924
      %v930 = vrot.slane %v929, 4
      %v932 = vshll.u32 %v782, 16
      %v934 = vrot.slane %v932, 5
      %v935 = vsel %vm791, %v930, %v934
      %v937 = vshrl.u32 %v783, 16
      %v939 = vrot.slane %v937, 4
      %v940 = vshll.u32 %v783, 16
      %v942 = vrot.slane %v940, 5
      %v943 = vor.u32 %v939, %v942
      %v944 = vrot.slane %v943, 4
      %v946 = vshll.u32 %v784, 16
      %v948 = vrot.slane %v946, 5
      %v949 = vsel %vm791, %v944, %v948
      %v950 = vshrl.u32 %v784, 16
      %v952 = vrot.slane %v950, 4
      %v953 = vor.u32 %v952, %v948
      %v954 = vrot.slane %v953, 4
      %v956 = vshll.u32 %v785, 16
      %v958 = vrot.slane %v956, 5
      %v959 = vsel %vm791, %v954, %v958
      %v961 = vshrl.u32 %v786, 16
      %v963 = vrot.slane %v961, 4
      %v964 = vshll.u32 %v786, 16
      %v966 = vrot.slane %v964, 5
      %v967 = vor.u32 %v963, %v966
      %v968 = vrot.slane %v967, 4
      %v970 = vshll.u32 %v787, 16
      %v972 = vrot.slane %v970, 5
      %v973 = vsel %vm791, %v968, %v972
      %v974 = vshrl.u32 %v787, 16
      %v976 = vrot.slane %v974, 4
      %v977 = vor.u32 %v976, %v972
      %v978 = vrot.slane %v977, 4
      %v980 = vshll.u32 %v788, 16
      %v982 = vrot.slane %v980, 5
      %v983 = vsel %vm791, %v978, %v982
      %1000 = vst [vmem:[#allocation3 + $0x4] sm:$0xf] %v805
      %1001 = vst [vmem:[#allocation3 + $0x28] sm:$0xf] %v815
      %1002 = vst [vmem:[#allocation3 + $0x4c] sm:$0xf] %v829
      %1003 = vst [vmem:[#allocation3 + $0x70] sm:$0xf] %v839
      %1004 = vst [vmem:[#allocation3 + $0x94] sm:$0xf] %v853
      %1005 = vst [vmem:[#allocation3 + $0xb8] sm:$0xf] %v863
      %1006 = vst [vmem:[#allocation3 + $0xdc] sm:$0xf] %v877
      %1007 = vst [vmem:[#allocation3 + $0x100] sm:$0xf] %v887
      %1008 = vst [vmem:[#allocation3 + $0x124] sm:$0xf] %v901
      %1009 = vst [vmem:[#allocation3 + $0x148] sm:$0xf] %v911
      %1010 = vst [vmem:[#allocation3 + $0x16c] sm:$0xf] %v925
      %1011 = vst [vmem:[#allocation3 + $0x190] sm:$0xf] %v935
      %1012 = vst [vmem:[#allocation3 + $0x1b4] sm:$0xf] %v949
      %1013 = vst [vmem:[#allocation3 + $0x1d8] sm:$0xf] %v959
      %1014 = vst [vmem:[#allocation3 + $0x1fc] sm:$0xf] %v973
      %1015 = vst [vmem:[#allocation3 + $0x220] sm:$0xf] %v983
      %v1016 = vld [vmem:[#allocation2] sm:$0xe]
      %v1017 = vld [vmem:[#allocation2 + $0x4] sm:$0xf]
      %v1018 = vld [vmem:[#allocation2 + $0x8] sm:$0x1]
      %v1019 = vld [vmem:[#allocation2 + $0xc] sm:$0xe]
      %v1020 = vld [vmem:[#allocation2 + $0x10] sm:$0xf]
      %v1021 = vld [vmem:[#allocation2 + $0x14] sm:$0x1]
      %v1022 = vld [vmem:[#allocation2 + $0x18] sm:$0xe]
      %v1023 = vld [vmem:[#allocation2 + $0x1c] sm:$0xf]
      %v1024 = vld [vmem:[#allocation2 + $0x20] sm:$0x1]
      %v1025 = vld [vmem:[#allocation2 + $0x24] sm:$0xe]
      %v1026 = vld [vmem:[#allocation2 + $0x28] sm:$0xf]
      %v1027 = vld [vmem:[#allocation2 + $0x2c] sm:$0x1]
      %v1028 = vld [vmem:[#allocation2 + $0x30] sm:$0xe]
      %v1029 = vld [vmem:[#allocation2 + $0x34] sm:$0xf]
      %v1030 = vld [vmem:[#allocation2 + $0x38] sm:$0x1]
      %v1031 = vld [vmem:[#allocation2 + $0x3c] sm:$0xe]
      %v1032 = vld [vmem:[#allocation2 + $0x40] sm:$0xf]
      %v1033 = vld [vmem:[#allocation2 + $0x44] sm:$0x1]
      %v1034 = vld [vmem:[#allocation2 + $0x48] sm:$0xe]
      %v1035 = vld [vmem:[#allocation2 + $0x4c] sm:$0xf]
      %v1036 = vld [vmem:[#allocation2 + $0x50] sm:$0x1]
      %v1037 = vld [vmem:[#allocation2 + $0x54] sm:$0xe]
      %v1038 = vld [vmem:[#allocation2 + $0x58] sm:$0xf]
      %v1039 = vld [vmem:[#allocation2 + $0x5c] sm:$0x1]
      %vm1064 = vcmask 1042432
      %vm1065 = vcmask 1046532
      %vm1066 = vmor %vm1064, %vm1065
      %v1067 = vrot.slane %v1016, 5
      %v1068 = vrot.slane %v1067, 4
      %v1069 = vrot.slane %v1017, 5
      %v1070 = vsel %vm1066, %v1068, %v1069
      %v1071 = vrot.slane %v1069, 4
      %v1072 = vrot.slane %v1018, 5
      %v1073 = vsel %vm1066, %v1071, %v1072
      %v1074 = vrot.slane %v1019, 5
      %v1075 = vrot.slane %v1074, 4
      %v1076 = vrot.slane %v1020, 5
      %v1077 = vsel %vm1066, %v1075, %v1076
      %v1078 = vrot.slane %v1076, 4
      %v1079 = vrot.slane %v1021, 5
      %v1080 = vsel %vm1066, %v1078, %v1079
      %v1081 = vrot.slane %v1022, 5
      %v1082 = vrot.slane %v1081, 4
      %v1083 = vrot.slane %v1023, 5
      %v1084 = vsel %vm1066, %v1082, %v1083
      %v1085 = vrot.slane %v1083, 4
      %v1086 = vrot.slane %v1024, 5
      %v1087 = vsel %vm1066, %v1085, %v1086
      %v1088 = vrot.slane %v1025, 5
      %v1089 = vrot.slane %v1088, 4
      %v1090 = vrot.slane %v1026, 5
      %v1091 = vsel %vm1066, %v1089, %v1090
      %v1092 = vrot.slane %v1090, 4
      %v1093 = vrot.slane %v1027, 5
      %v1094 = vsel %vm1066, %v1092, %v1093
      %v1095 = vrot.slane %v1028, 5
      %v1096 = vrot.slane %v1095, 4
      %v1097 = vrot.slane %v1029, 5
      %v1098 = vsel %vm1066, %v1096, %v1097
      %v1099 = vrot.slane %v1097, 4
      %v1100 = vrot.slane %v1030, 5
      %v1101 = vsel %vm1066, %v1099, %v1100
      %v1102 = vrot.slane %v1031, 5
      %v1103 = vrot.slane %v1102, 4
      %v1104 = vrot.slane %v1032, 5
      %v1105 = vsel %vm1066, %v1103, %v1104
      %v1106 = vrot.slane %v1104, 4
      %v1107 = vrot.slane %v1033, 5
      %v1108 = vsel %vm1066, %v1106, %v1107
      %v1109 = vrot.slane %v1034, 5
      %v1110 = vrot.slane %v1109, 4
      %v1111 = vrot.slane %v1035, 5
      %v1112 = vsel %vm1066, %v1110, %v1111
      %v1113 = vrot.slane %v1111, 4
      %v1114 = vrot.slane %v1036, 5
      %v1115 = vsel %vm1066, %v1113, %v1114
      %v1116 = vrot.slane %v1037, 5
      %v1117 = vrot.slane %v1116, 4
      %v1118 = vrot.slane %v1038, 5
      %v1119 = vsel %vm1066, %v1117, %v1118
      %v1120 = vrot.slane %v1118, 4
      %v1121 = vrot.slane %v1039, 5
      %v1122 = vsel %vm1066, %v1120, %v1121
      %1139 = vst [vmem:[#allocation3 + $0x8] sm:$0xf] %v1070
      %1140 = vst [vmem:[#allocation3 + $0x2c] sm:$0xf] %v1073
      %1141 = vst [vmem:[#allocation3 + $0x50] sm:$0xf] %v1077
      %1142 = vst [vmem:[#allocation3 + $0x74] sm:$0xf] %v1080
      %1143 = vst [vmem:[#allocation3 + $0x98] sm:$0xf] %v1084
      %1144 = vst [vmem:[#allocation3 + $0xbc] sm:$0xf] %v1087
      %1145 = vst [vmem:[#allocation3 + $0xe0] sm:$0xf] %v1091
      %1146 = vst [vmem:[#allocation3 + $0x104] sm:$0xf] %v1094
      %1147 = vst [vmem:[#allocation3 + $0x128] sm:$0xf] %v1098
      %1148 = vst [vmem:[#allocation3 + $0x14c] sm:$0xf] %v1101
      %1149 = vst [vmem:[#allocation3 + $0x170] sm:$0xf] %v1105
      %1150 = vst [vmem:[#allocation3 + $0x194] sm:$0xf] %v1108
      %1151 = vst [vmem:[#allocation3 + $0x1b8] sm:$0xf] %v1112
      %1152 = vst [vmem:[#allocation3 + $0x1dc] sm:$0xf] %v1115
      %1153 = vst [vmem:[#allocation3 + $0x200] sm:$0xf] %v1119
      %1154 = vst [vmem:[#allocation3 + $0x224] sm:$0xf] %v1122
      %v1155 = vld [vmem:[%s566] sm:$0xf]
      %v1156 = vld [vmem:[%s566 + $0x4] sm:$0xf]
      %v1157 = vld [vmem:[%s566 + $0xc] sm:$0xf]
      %v1158 = vld [vmem:[%s566 + $0x10] sm:$0xf]
      %v1159 = vld [vmem:[%s566 + $0x18] sm:$0xf]
      %v1160 = vld [vmem:[%s566 + $0x1c] sm:$0xf]
      %v1161 = vld [vmem:[%s566 + $0x24] sm:$0xf]
      %v1162 = vld [vmem:[%s566 + $0x28] sm:$0xf]
      %v1163 = vld [vmem:[%s566 + $0x30] sm:$0xf]
      %v1164 = vld [vmem:[%s566 + $0x34] sm:$0xf]
      %v1165 = vld [vmem:[%s566 + $0x3c] sm:$0xf]
      %v1166 = vld [vmem:[%s566 + $0x40] sm:$0xf]
      %v1167 = vld [vmem:[%s566 + $0x48] sm:$0xf]
      %v1168 = vld [vmem:[%s566 + $0x4c] sm:$0xf]
      %v1169 = vld [vmem:[%s566 + $0x54] sm:$0xf]
      %v1170 = vld [vmem:[%s566 + $0x58] sm:$0xf]
      %1171 = vst [vmem:[#allocation3 + $0xc] sm:$0xf] %v1155
      %1172 = vst [vmem:[#allocation3 + $0x30] sm:$0xf] %v1156
      %1173 = vst [vmem:[#allocation3 + $0x54] sm:$0xf] %v1157
      %1174 = vst [vmem:[#allocation3 + $0x78] sm:$0xf] %v1158
      %1175 = vst [vmem:[#allocation3 + $0x9c] sm:$0xf] %v1159
      %1176 = vst [vmem:[#allocation3 + $0xc0] sm:$0xf] %v1160
      %1177 = vst [vmem:[#allocation3 + $0xe4] sm:$0xf] %v1161
      %1178 = vst [vmem:[#allocation3 + $0x108] sm:$0xf] %v1162
      %1179 = vst [vmem:[#allocation3 + $0x12c] sm:$0xf] %v1163
      %1180 = vst [vmem:[#allocation3 + $0x150] sm:$0xf] %v1164
      %1181 = vst [vmem:[#allocation3 + $0x174] sm:$0xf] %v1165
      %1182 = vst [vmem:[#allocation3 + $0x198] sm:$0xf] %v1166
      %1183 = vst [vmem:[#allocation3 + $0x1bc] sm:$0xf] %v1167
      %1184 = vst [vmem:[#allocation3 + $0x1e0] sm:$0xf] %v1168
      %1185 = vst [vmem:[#allocation3 + $0x204] sm:$0xf] %v1169
      %1186 = vst [vmem:[#allocation3 + $0x228] sm:$0xf] %v1170
      %v1187 = vld [vmem:[%s566] sm:$0xf]
      %v1188 = vld [vmem:[%s566 + $0x4] sm:$0xf]
      %v1189 = vld [vmem:[%s566 + $0x8] sm:$0x1]
      %v1190 = vld [vmem:[%s566 + $0xc] sm:$0xf]
      %v1191 = vld [vmem:[%s566 + $0x10] sm:$0xf]
      %v1192 = vld [vmem:[%s566 + $0x14] sm:$0x1]
      %v1193 = vld [vmem:[%s566 + $0x18] sm:$0xf]
      %v1194 = vld [vmem:[%s566 + $0x1c] sm:$0xf]
      %v1195 = vld [vmem:[%s566 + $0x20] sm:$0x1]
      %v1196 = vld [vmem:[%s566 + $0x24] sm:$0xf]
      %v1197 = vld [vmem:[%s566 + $0x28] sm:$0xf]
      %v1198 = vld [vmem:[%s566 + $0x2c] sm:$0x1]
      %v1199 = vld [vmem:[%s566 + $0x30] sm:$0xf]
      %v1200 = vld [vmem:[%s566 + $0x34] sm:$0xf]
      %v1201 = vld [vmem:[%s566 + $0x38] sm:$0x1]
      %v1202 = vld [vmem:[%s566 + $0x3c] sm:$0xf]
      %v1203 = vld [vmem:[%s566 + $0x40] sm:$0xf]
      %v1204 = vld [vmem:[%s566 + $0x44] sm:$0x1]
      %v1205 = vld [vmem:[%s566 + $0x48] sm:$0xf]
      %v1206 = vld [vmem:[%s566 + $0x4c] sm:$0xf]
      %v1207 = vld [vmem:[%s566 + $0x50] sm:$0x1]
      %v1208 = vld [vmem:[%s566 + $0x54] sm:$0xf]
      %v1209 = vld [vmem:[%s566 + $0x58] sm:$0xf]
      %v1210 = vld [vmem:[%s566 + $0x5c] sm:$0x1]
      %v1212 = vshrl.u32 %v1187, 16
      %v1214 = vrot.slane %v1212, 4
      %v1215 = vshll.u32 %v1187, 16
      %v1217 = vrot.slane %v1215, 5
      %v1218 = vor.u32 %v1214, %v1217
      %v1219 = vrot.slane %v1218, 4
      %v1221 = vshll.u32 %v1188, 16
      %v1223 = vrot.slane %v1221, 5
      %v1224 = vsel %vm791, %v1219, %v1223
      %v1225 = vshrl.u32 %v1188, 16
      %v1227 = vrot.slane %v1225, 4
      %v1228 = vor.u32 %v1227, %v1223
      %v1229 = vrot.slane %v1228, 4
      %v1231 = vshll.u32 %v1189, 16
      %v1233 = vrot.slane %v1231, 5
      %v1234 = vsel %vm791, %v1229, %v1233
      %v1236 = vshrl.u32 %v1190, 16
      %v1238 = vrot.slane %v1236, 4
      %v1239 = vshll.u32 %v1190, 16
      %v1241 = vrot.slane %v1239, 5
      %v1242 = vor.u32 %v1238, %v1241
      %v1243 = vrot.slane %v1242, 4
      %v1245 = vshll.u32 %v1191, 16
      %v1247 = vrot.slane %v1245, 5
      %v1248 = vsel %vm791, %v1243, %v1247
      %v1249 = vshrl.u32 %v1191, 16
      %v1251 = vrot.slane %v1249, 4
      %v1252 = vor.u32 %v1251, %v1247
      %v1253 = vrot.slane %v1252, 4
      %v1255 = vshll.u32 %v1192, 16
      %v1257 = vrot.slane %v1255, 5
      %v1258 = vsel %vm791, %v1253, %v1257
      %v1260 = vshrl.u32 %v1193, 16
      %v1262 = vrot.slane %v1260, 4
      %v1263 = vshll.u32 %v1193, 16
      %v1265 = vrot.slane %v1263, 5
      %v1266 = vor.u32 %v1262, %v1265
      %v1267 = vrot.slane %v1266, 4
      %v1269 = vshll.u32 %v1194, 16
      %v1271 = vrot.slane %v1269, 5
      %v1272 = vsel %vm791, %v1267, %v1271
      %v1273 = vshrl.u32 %v1194, 16
      %v1275 = vrot.slane %v1273, 4
      %v1276 = vor.u32 %v1275, %v1271
      %v1277 = vrot.slane %v1276, 4
      %v1279 = vshll.u32 %v1195, 16
      %v1281 = vrot.slane %v1279, 5
      %v1282 = vsel %vm791, %v1277, %v1281
      %v1284 = vshrl.u32 %v1196, 16
      %v1286 = vrot.slane %v1284, 4
      %v1287 = vshll.u32 %v1196, 16
      %v1289 = vrot.slane %v1287, 5
      %v1290 = vor.u32 %v1286, %v1289
      %v1291 = vrot.slane %v1290, 4
      %v1293 = vshll.u32 %v1197, 16
      %v1295 = vrot.slane %v1293, 5
      %v1296 = vsel %vm791, %v1291, %v1295
      %v1297 = vshrl.u32 %v1197, 16
      %v1299 = vrot.slane %v1297, 4
      %v1300 = vor.u32 %v1299, %v1295
      %v1301 = vrot.slane %v1300, 4
      %v1303 = vshll.u32 %v1198, 16
      %v1305 = vrot.slane %v1303, 5
      %v1306 = vsel %vm791, %v1301, %v1305
      %v1308 = vshrl.u32 %v1199, 16
      %v1310 = vrot.slane %v1308, 4
      %v1311 = vshll.u32 %v1199, 16
      %v1313 = vrot.slane %v1311, 5
      %v1314 = vor.u32 %v1310, %v1313
      %v1315 = vrot.slane %v1314, 4
      %v1317 = vshll.u32 %v1200, 16
      %v1319 = vrot.slane %v1317, 5
      %v1320 = vsel %vm791, %v1315, %v1319
      %v1321 = vshrl.u32 %v1200, 16
      %v1323 = vrot.slane %v1321, 4
      %v1324 = vor.u32 %v1323, %v1319
      %v1325 = vrot.slane %v1324, 4
      %v1327 = vshll.u32 %v1201, 16
      %v1329 = vrot.slane %v1327, 5
      %v1330 = vsel %vm791, %v1325, %v1329
      %v1332 = vshrl.u32 %v1202, 16
      %v1334 = vrot.slane %v1332, 4
      %v1335 = vshll.u32 %v1202, 16
      %v1337 = vrot.slane %v1335, 5
      %v1338 = vor.u32 %v1334, %v1337
      %v1339 = vrot.slane %v1338, 4
      %v1341 = vshll.u32 %v1203, 16
      %v1343 = vrot.slane %v1341, 5
      %v1344 = vsel %vm791, %v1339, %v1343
      %v1345 = vshrl.u32 %v1203, 16
      %v1347 = vrot.slane %v1345, 4
      %v1348 = vor.u32 %v1347, %v1343
      %v1349 = vrot.slane %v1348, 4
      %v1351 = vshll.u32 %v1204, 16
      %v1353 = vrot.slane %v1351, 5
      %v1354 = vsel %vm791, %v1349, %v1353
      %v1356 = vshrl.u32 %v1205, 16
      %v1358 = vrot.slane %v1356, 4
      %v1359 = vshll.u32 %v1205, 16
      %v1361 = vrot.slane %v1359, 5
      %v1362 = vor.u32 %v1358, %v1361
      %v1363 = vrot.slane %v1362, 4
      %v1365 = vshll.u32 %v1206, 16
      %v1367 = vrot.slane %v1365, 5
      %v1368 = vsel %vm791, %v1363, %v1367
      %v1369 = vshrl.u32 %v1206, 16
      %v1371 = vrot.slane %v1369, 4
      %v1372 = vor.u32 %v1371, %v1367
      %v1373 = vrot.slane %v1372, 4
      %v1375 = vshll.u32 %v1207, 16
      %v1377 = vrot.slane %v1375, 5
      %v1378 = vsel %vm791, %v1373, %v1377
      %v1380 = vshrl.u32 %v1208, 16
      %v1382 = vrot.slane %v1380, 4
      %v1383 = vshll.u32 %v1208, 16
      %v1385 = vrot.slane %v1383, 5
      %v1386 = vor.u32 %v1382, %v1385
      %v1387 = vrot.slane %v1386, 4
      %v1389 = vshll.u32 %v1209, 16
      %v1391 = vrot.slane %v1389, 5
      %v1392 = vsel %vm791, %v1387, %v1391
      %v1393 = vshrl.u32 %v1209, 16
      %v1395 = vrot.slane %v1393, 4
      %v1396 = vor.u32 %v1395, %v1391
      %v1397 = vrot.slane %v1396, 4
      %v1399 = vshll.u32 %v1210, 16
      %v1401 = vrot.slane %v1399, 5
      %v1402 = vsel %vm791, %v1397, %v1401
      %1419 = vst [vmem:[#allocation3 + $0x10] sm:$0xf] %v1224
      %1420 = vst [vmem:[#allocation3 + $0x34] sm:$0xf] %v1234
      %1421 = vst [vmem:[#allocation3 + $0x58] sm:$0xf] %v1248
      %1422 = vst [vmem:[#allocation3 + $0x7c] sm:$0xf] %v1258
      %1423 = vst [vmem:[#allocation3 + $0xa0] sm:$0xf] %v1272
      %1424 = vst [vmem:[#allocation3 + $0xc4] sm:$0xf] %v1282
      %1425 = vst [vmem:[#allocation3 + $0xe8] sm:$0xf] %v1296
      %1426 = vst [vmem:[#allocation3 + $0x10c] sm:$0xf] %v1306
      %1427 = vst [vmem:[#allocation3 + $0x130] sm:$0xf] %v1320
      %1428 = vst [vmem:[#allocation3 + $0x154] sm:$0xf] %v1330
      %1429 = vst [vmem:[#allocation3 + $0x178] sm:$0xf] %v1344
      %1430 = vst [vmem:[#allocation3 + $0x19c] sm:$0xf] %v1354
      %1431 = vst [vmem:[#allocation3 + $0x1c0] sm:$0xf] %v1368
      %1432 = vst [vmem:[#allocation3 + $0x1e4] sm:$0xf] %v1378
      %1433 = vst [vmem:[#allocation3 + $0x208] sm:$0xf] %v1392
      %1434 = vst [vmem:[#allocation3 + $0x22c] sm:$0xf] %v1402
      %v1435 = vld [vmem:[%s566] sm:$0xe]
      %v1436 = vld [vmem:[%s566 + $0x4] sm:$0xf]
      %v1437 = vld [vmem:[%s566 + $0x8] sm:$0x1]
      %v1438 = vld [vmem:[%s566 + $0xc] sm:$0xe]
      %v1439 = vld [vmem:[%s566 + $0x10] sm:$0xf]
      %v1440 = vld [vmem:[%s566 + $0x14] sm:$0x1]
      %v1441 = vld [vmem:[%s566 + $0x18] sm:$0xe]
      %v1442 = vld [vmem:[%s566 + $0x1c] sm:$0xf]
      %v1443 = vld [vmem:[%s566 + $0x20] sm:$0x1]
      %v1444 = vld [vmem:[%s566 + $0x24] sm:$0xe]
      %v1445 = vld [vmem:[%s566 + $0x28] sm:$0xf]
      %v1446 = vld [vmem:[%s566 + $0x2c] sm:$0x1]
      %v1447 = vld [vmem:[%s566 + $0x30] sm:$0xe]
      %v1448 = vld [vmem:[%s566 + $0x34] sm:$0xf]
      %v1449 = vld [vmem:[%s566 + $0x38] sm:$0x1]
      %v1450 = vld [vmem:[%s566 + $0x3c] sm:$0xe]
      %v1451 = vld [vmem:[%s566 + $0x40] sm:$0xf]
      %v1452 = vld [vmem:[%s566 + $0x44] sm:$0x1]
      %v1453 = vld [vmem:[%s566 + $0x48] sm:$0xe]
      %v1454 = vld [vmem:[%s566 + $0x4c] sm:$0xf]
      %v1455 = vld [vmem:[%s566 + $0x50] sm:$0x1]
      %v1456 = vld [vmem:[%s566 + $0x54] sm:$0xe]
      %v1457 = vld [vmem:[%s566 + $0x58] sm:$0xf]
      %v1458 = vld [vmem:[%s566 + $0x5c] sm:$0x1]
      %v1483 = vrot.slane %v1435, 5
      %v1484 = vrot.slane %v1483, 4
      %v1485 = vrot.slane %v1436, 5
      %v1486 = vsel %vm1066, %v1484, %v1485
      %v1487 = vrot.slane %v1485, 4
      %v1488 = vrot.slane %v1437, 5
      %v1489 = vsel %vm1066, %v1487, %v1488
      %v1490 = vrot.slane %v1438, 5
      %v1491 = vrot.slane %v1490, 4
      %v1492 = vrot.slane %v1439, 5
      %v1493 = vsel %vm1066, %v1491, %v1492
      %v1494 = vrot.slane %v1492, 4
      %v1495 = vrot.slane %v1440, 5
      %v1496 = vsel %vm1066, %v1494, %v1495
      %v1497 = vrot.slane %v1441, 5
      %v1498 = vrot.slane %v1497, 4
      %v1499 = vrot.slane %v1442, 5
      %v1500 = vsel %vm1066, %v1498, %v1499
      %v1501 = vrot.slane %v1499, 4
      %v1502 = vrot.slane %v1443, 5
      %v1503 = vsel %vm1066, %v1501, %v1502
      %v1504 = vrot.slane %v1444, 5
      %v1505 = vrot.slane %v1504, 4
      %v1506 = vrot.slane %v1445, 5
      %v1507 = vsel %vm1066, %v1505, %v1506
      %v1508 = vrot.slane %v1506, 4
      %v1509 = vrot.slane %v1446, 5
      %v1510 = vsel %vm1066, %v1508, %v1509
      %v1511 = vrot.slane %v1447, 5
      %v1512 = vrot.slane %v1511, 4
      %v1513 = vrot.slane %v1448, 5
      %v1514 = vsel %vm1066, %v1512, %v1513
      %v1515 = vrot.slane %v1513, 4
      %v1516 = vrot.slane %v1449, 5
      %v1517 = vsel %vm1066, %v1515, %v1516
      %v1518 = vrot.slane %v1450, 5
      %v1519 = vrot.slane %v1518, 4
      %v1520 = vrot.slane %v1451, 5
      %v1521 = vsel %vm1066, %v1519, %v1520
      %v1522 = vrot.slane %v1520, 4
      %v1523 = vrot.slane %v1452, 5
      %v1524 = vsel %vm1066, %v1522, %v1523
      %v1525 = vrot.slane %v1453, 5
      %v1526 = vrot.slane %v1525, 4
      %v1527 = vrot.slane %v1454, 5
      %v1528 = vsel %vm1066, %v1526, %v1527
      %v1529 = vrot.slane %v1527, 4
      %v1530 = vrot.slane %v1455, 5
      %v1531 = vsel %vm1066, %v1529, %v1530
      %v1532 = vrot.slane %v1456, 5
      %v1533 = vrot.slane %v1532, 4
      %v1534 = vrot.slane %v1457, 5
      %v1535 = vsel %vm1066, %v1533, %v1534
      %v1536 = vrot.slane %v1534, 4
      %v1537 = vrot.slane %v1458, 5
      %v1538 = vsel %vm1066, %v1536, %v1537
      %1555 = vst [vmem:[#allocation3 + $0x14] sm:$0xf] %v1486
      %1556 = vst [vmem:[#allocation3 + $0x38] sm:$0xf] %v1489
      %1557 = vst [vmem:[#allocation3 + $0x5c] sm:$0xf] %v1493
      %1558 = vst [vmem:[#allocation3 + $0x80] sm:$0xf] %v1496
      %1559 = vst [vmem:[#allocation3 + $0xa4] sm:$0xf] %v1500
      %1560 = vst [vmem:[#allocation3 + $0xc8] sm:$0xf] %v1503
      %1561 = vst [vmem:[#allocation3 + $0xec] sm:$0xf] %v1507
      %1562 = vst [vmem:[#allocation3 + $0x110] sm:$0xf] %v1510
      %1563 = vst [vmem:[#allocation3 + $0x134] sm:$0xf] %v1514
      %1564 = vst [vmem:[#allocation3 + $0x158] sm:$0xf] %v1517
      %1565 = vst [vmem:[#allocation3 + $0x17c] sm:$0xf] %v1521
      %1566 = vst [vmem:[#allocation3 + $0x1a0] sm:$0xf] %v1524
      %1567 = vst [vmem:[#allocation3 + $0x1c4] sm:$0xf] %v1528
      %1568 = vst [vmem:[#allocation3 + $0x1e8] sm:$0xf] %v1531
      %1569 = vst [vmem:[#allocation3 + $0x20c] sm:$0xf] %v1535
      %1570 = vst [vmem:[#allocation3 + $0x230] sm:$0xf] %v1538
      %s1571 = scalar_lea.vmem [#allocation2], 24
      %v1572 = vld [vmem:[%s1571] sm:$0xf]
      %v1573 = vld [vmem:[%s1571 + $0x4] sm:$0xf]
      %v1574 = vld [vmem:[%s1571 + $0xc] sm:$0xf]
      %v1575 = vld [vmem:[%s1571 + $0x10] sm:$0xf]
      %v1576 = vld [vmem:[%s1571 + $0x18] sm:$0xf]
      %v1577 = vld [vmem:[%s1571 + $0x1c] sm:$0xf]
      %v1578 = vld [vmem:[%s1571 + $0x24] sm:$0xf]
      %v1579 = vld [vmem:[%s1571 + $0x28] sm:$0xf]
      %v1580 = vld [vmem:[%s1571 + $0x30] sm:$0xf]
      %v1581 = vld [vmem:[%s1571 + $0x34] sm:$0xf]
      %v1582 = vld [vmem:[%s1571 + $0x3c] sm:$0xf]
      %v1583 = vld [vmem:[%s1571 + $0x40] sm:$0xf]
      %v1584 = vld [vmem:[%s1571 + $0x48] sm:$0xf]
      %v1585 = vld [vmem:[%s1571 + $0x4c] sm:$0xf]
      %v1586 = vld [vmem:[%s1571 + $0x54] sm:$0xf]
      %v1587 = vld [vmem:[%s1571 + $0x58] sm:$0xf]
      %1588 = vst [vmem:[#allocation3 + $0x18] sm:$0xf] %v1572
      %1589 = vst [vmem:[#allocation3 + $0x3c] sm:$0xf] %v1573
      %1590 = vst [vmem:[#allocation3 + $0x60] sm:$0xf] %v1574
      %1591 = vst [vmem:[#allocation3 + $0x84] sm:$0xf] %v1575
      %1592 = vst [vmem:[#allocation3 + $0xa8] sm:$0xf] %v1576
      %1593 = vst [vmem:[#allocation3 + $0xcc] sm:$0xf] %v1577
      %1594 = vst [vmem:[#allocation3 + $0xf0] sm:$0xf] %v1578
      %1595 = vst [vmem:[#allocation3 + $0x114] sm:$0xf] %v1579
      %1596 = vst [vmem:[#allocation3 + $0x138] sm:$0xf] %v1580
      %1597 = vst [vmem:[#allocation3 + $0x15c] sm:$0xf] %v1581
      %1598 = vst [vmem:[#allocation3 + $0x180] sm:$0xf] %v1582
      %1599 = vst [vmem:[#allocation3 + $0x1a4] sm:$0xf] %v1583
      %1600 = vst [vmem:[#allocation3 + $0x1c8] sm:$0xf] %v1584
      %1601 = vst [vmem:[#allocation3 + $0x1ec] sm:$0xf] %v1585
      %1602 = vst [vmem:[#allocation3 + $0x210] sm:$0xf] %v1586
      %1603 = vst [vmem:[#allocation3 + $0x234] sm:$0xf] %v1587
      %v1604 = vld [vmem:[%s1571] sm:$0xf]
      %v1605 = vld [vmem:[%s1571 + $0x4] sm:$0xf]
      %v1606 = vld [vmem:[%s1571 + $0x8] sm:$0x1]
      %v1607 = vld [vmem:[%s1571 + $0xc] sm:$0xf]
      %v1608 = vld [vmem:[%s1571 + $0x10] sm:$0xf]
      %v1609 = vld [vmem:[%s1571 + $0x14] sm:$0x1]
      %v1610 = vld [vmem:[%s1571 + $0x18] sm:$0xf]
      %v1611 = vld [vmem:[%s1571 + $0x1c] sm:$0xf]
      %v1612 = vld [vmem:[%s1571 + $0x20] sm:$0x1]
      %v1613 = vld [vmem:[%s1571 + $0x24] sm:$0xf]
      %v1614 = vld [vmem:[%s1571 + $0x28] sm:$0xf]
      %v1615 = vld [vmem:[%s1571 + $0x2c] sm:$0x1]
      %v1616 = vld [vmem:[%s1571 + $0x30] sm:$0xf]
      %v1617 = vld [vmem:[%s1571 + $0x34] sm:$0xf]
      %v1618 = vld [vmem:[%s1571 + $0x38] sm:$0x1]
      %v1619 = vld [vmem:[%s1571 + $0x3c] sm:$0xf]
      %v1620 = vld [vmem:[%s1571 + $0x40] sm:$0xf]
      %v1621 = vld [vmem:[%s1571 + $0x44] sm:$0x1]
      %v1622 = vld [vmem:[%s1571 + $0x48] sm:$0xf]
      %v1623 = vld [vmem:[%s1571 + $0x4c] sm:$0xf]
      %v1624 = vld [vmem:[%s1571 + $0x50] sm:$0x1]
      %v1625 = vld [vmem:[%s1571 + $0x54] sm:$0xf]
      %v1626 = vld [vmem:[%s1571 + $0x58] sm:$0xf]
      %v1627 = vld [vmem:[%s1571 + $0x5c] sm:$0x1]
      %v1629 = vshrl.u32 %v1604, 16
      %v1631 = vrot.slane %v1629, 4
      %v1632 = vshll.u32 %v1604, 16
      %v1634 = vrot.slane %v1632, 5
      %v1635 = vor.u32 %v1631, %v1634
      %v1636 = vrot.slane %v1635, 4
      %v1638 = vshll.u32 %v1605, 16
      %v1640 = vrot.slane %v1638, 5
      %v1641 = vsel %vm791, %v1636, %v1640
      %v1642 = vshrl.u32 %v1605, 16
      %v1644 = vrot.slane %v1642, 4
      %v1645 = vor.u32 %v1644, %v1640
      %v1646 = vrot.slane %v1645, 4
      %v1648 = vshll.u32 %v1606, 16
      %v1650 = vrot.slane %v1648, 5
      %v1651 = vsel %vm791, %v1646, %v1650
      %v1653 = vshrl.u32 %v1607, 16
      %v1655 = vrot.slane %v1653, 4
      %v1656 = vshll.u32 %v1607, 16
      %v1658 = vrot.slane %v1656, 5
      %v1659 = vor.u32 %v1655, %v1658
      %v1660 = vrot.slane %v1659, 4
      %v1662 = vshll.u32 %v1608, 16
      %v1664 = vrot.slane %v1662, 5
      %v1665 = vsel %vm791, %v1660, %v1664
      %v1666 = vshrl.u32 %v1608, 16
      %v1668 = vrot.slane %v1666, 4
      %v1669 = vor.u32 %v1668, %v1664
      %v1670 = vrot.slane %v1669, 4
      %v1672 = vshll.u32 %v1609, 16
      %v1674 = vrot.slane %v1672, 5
      %v1675 = vsel %vm791, %v1670, %v1674
      %v1677 = vshrl.u32 %v1610, 16
      %v1679 = vrot.slane %v1677, 4
      %v1680 = vshll.u32 %v1610, 16
      %v1682 = vrot.slane %v1680, 5
      %v1683 = vor.u32 %v1679, %v1682
      %v1684 = vrot.slane %v1683, 4
      %v1686 = vshll.u32 %v1611, 16
      %v1688 = vrot.slane %v1686, 5
      %v1689 = vsel %vm791, %v1684, %v1688
      %v1690 = vshrl.u32 %v1611, 16
      %v1692 = vrot.slane %v1690, 4
      %v1693 = vor.u32 %v1692, %v1688
      %v1694 = vrot.slane %v1693, 4
      %v1696 = vshll.u32 %v1612, 16
      %v1698 = vrot.slane %v1696, 5
      %v1699 = vsel %vm791, %v1694, %v1698
      %v1701 = vshrl.u32 %v1613, 16
      %v1703 = vrot.slane %v1701, 4
      %v1704 = vshll.u32 %v1613, 16
      %v1706 = vrot.slane %v1704, 5
      %v1707 = vor.u32 %v1703, %v1706
      %v1708 = vrot.slane %v1707, 4
      %v1710 = vshll.u32 %v1614, 16
      %v1712 = vrot.slane %v1710, 5
      %v1713 = vsel %vm791, %v1708, %v1712
      %v1714 = vshrl.u32 %v1614, 16
      %v1716 = vrot.slane %v1714, 4
      %v1717 = vor.u32 %v1716, %v1712
      %v1718 = vrot.slane %v1717, 4
      %v1720 = vshll.u32 %v1615, 16
      %v1722 = vrot.slane %v1720, 5
      %v1723 = vsel %vm791, %v1718, %v1722
      %v1725 = vshrl.u32 %v1616, 16
      %v1727 = vrot.slane %v1725, 4
      %v1728 = vshll.u32 %v1616, 16
      %v1730 = vrot.slane %v1728, 5
      %v1731 = vor.u32 %v1727, %v1730
      %v1732 = vrot.slane %v1731, 4
      %v1734 = vshll.u32 %v1617, 16
      %v1736 = vrot.slane %v1734, 5
      %v1737 = vsel %vm791, %v1732, %v1736
      %v1738 = vshrl.u32 %v1617, 16
      %v1740 = vrot.slane %v1738, 4
      %v1741 = vor.u32 %v1740, %v1736
      %v1742 = vrot.slane %v1741, 4
      %v1744 = vshll.u32 %v1618, 16
      %v1746 = vrot.slane %v1744, 5
      %v1747 = vsel %vm791, %v1742, %v1746
      %v1749 = vshrl.u32 %v1619, 16
      %v1751 = vrot.slane %v1749, 4
      %v1752 = vshll.u32 %v1619, 16
      %v1754 = vrot.slane %v1752, 5
      %v1755 = vor.u32 %v1751, %v1754
      %v1756 = vrot.slane %v1755, 4
      %v1758 = vshll.u32 %v1620, 16
      %v1760 = vrot.slane %v1758, 5
      %v1761 = vsel %vm791, %v1756, %v1760
      %v1762 = vshrl.u32 %v1620, 16
      %v1764 = vrot.slane %v1762, 4
      %v1765 = vor.u32 %v1764, %v1760
      %v1766 = vrot.slane %v1765, 4
      %v1768 = vshll.u32 %v1621, 16
      %v1770 = vrot.slane %v1768, 5
      %v1771 = vsel %vm791, %v1766, %v1770
      %v1773 = vshrl.u32 %v1622, 16
      %v1775 = vrot.slane %v1773, 4
      %v1776 = vshll.u32 %v1622, 16
      %v1778 = vrot.slane %v1776, 5
      %v1779 = vor.u32 %v1775, %v1778
      %v1780 = vrot.slane %v1779, 4
      %v1782 = vshll.u32 %v1623, 16
      %v1784 = vrot.slane %v1782, 5
      %v1785 = vsel %vm791, %v1780, %v1784
      %v1786 = vshrl.u32 %v1623, 16
      %v1788 = vrot.slane %v1786, 4
      %v1789 = vor.u32 %v1788, %v1784
      %v1790 = vrot.slane %v1789, 4
      %v1792 = vshll.u32 %v1624, 16
      %v1794 = vrot.slane %v1792, 5
      %v1795 = vsel %vm791, %v1790, %v1794
      %v1797 = vshrl.u32 %v1625, 16
      %v1799 = vrot.slane %v1797, 4
      %v1800 = vshll.u32 %v1625, 16
      %v1802 = vrot.slane %v1800, 5
      %v1803 = vor.u32 %v1799, %v1802
      %v1804 = vrot.slane %v1803, 4
      %v1806 = vshll.u32 %v1626, 16
      %v1808 = vrot.slane %v1806, 5
      %v1809 = vsel %vm791, %v1804, %v1808
      %v1810 = vshrl.u32 %v1626, 16
      %v1812 = vrot.slane %v1810, 4
      %v1813 = vor.u32 %v1812, %v1808
      %v1814 = vrot.slane %v1813, 4
      %v1816 = vshll.u32 %v1627, 16
      %v1818 = vrot.slane %v1816, 5
      %v1819 = vsel %vm791, %v1814, %v1818
      %1836 = vst [vmem:[#allocation3 + $0x1c] sm:$0xf] %v1641
      %1837 = vst [vmem:[#allocation3 + $0x40] sm:$0xf] %v1651
      %1838 = vst [vmem:[#allocation3 + $0x64] sm:$0xf] %v1665
      %1839 = vst [vmem:[#allocation3 + $0x88] sm:$0xf] %v1675
      %1840 = vst [vmem:[#allocation3 + $0xac] sm:$0xf] %v1689
      %1841 = vst [vmem:[#allocation3 + $0xd0] sm:$0xf] %v1699
      %1842 = vst [vmem:[#allocation3 + $0xf4] sm:$0xf] %v1713
      %1843 = vst [vmem:[#allocation3 + $0x118] sm:$0xf] %v1723
      %1844 = vst [vmem:[#allocation3 + $0x13c] sm:$0xf] %v1737
      %1845 = vst [vmem:[#allocation3 + $0x160] sm:$0xf] %v1747
      %1846 = vst [vmem:[#allocation3 + $0x184] sm:$0xf] %v1761
      %1847 = vst [vmem:[#allocation3 + $0x1a8] sm:$0xf] %v1771
      %1848 = vst [vmem:[#allocation3 + $0x1cc] sm:$0xf] %v1785
      %1849 = vst [vmem:[#allocation3 + $0x1f0] sm:$0xf] %v1795
      %1850 = vst [vmem:[#allocation3 + $0x214] sm:$0xf] %v1809
      %1851 = vst [vmem:[#allocation3 + $0x238] sm:$0xf] %v1819
      %v1852 = vld [vmem:[%s1571] sm:$0xe]
      %v1853 = vld [vmem:[%s1571 + $0x4] sm:$0xf]
      %v1854 = vld [vmem:[%s1571 + $0x8] sm:$0x1]
      %v1855 = vld [vmem:[%s1571 + $0xc] sm:$0xe]
      %v1856 = vld [vmem:[%s1571 + $0x10] sm:$0xf]
      %v1857 = vld [vmem:[%s1571 + $0x14] sm:$0x1]
      %v1858 = vld [vmem:[%s1571 + $0x18] sm:$0xe]
      %v1859 = vld [vmem:[%s1571 + $0x1c] sm:$0xf]
      %v1860 = vld [vmem:[%s1571 + $0x20] sm:$0x1]
      %v1861 = vld [vmem:[%s1571 + $0x24] sm:$0xe]
      %v1862 = vld [vmem:[%s1571 + $0x28] sm:$0xf]
      %v1863 = vld [vmem:[%s1571 + $0x2c] sm:$0x1]
      %v1864 = vld [vmem:[%s1571 + $0x30] sm:$0xe]
      %v1865 = vld [vmem:[%s1571 + $0x34] sm:$0xf]
      %v1866 = vld [vmem:[%s1571 + $0x38] sm:$0x1]
      %v1867 = vld [vmem:[%s1571 + $0x3c] sm:$0xe]
      %v1868 = vld [vmem:[%s1571 + $0x40] sm:$0xf]
      %v1869 = vld [vmem:[%s1571 + $0x44] sm:$0x1]
      %v1870 = vld [vmem:[%s1571 + $0x48] sm:$0xe]
      %v1871 = vld [vmem:[%s1571 + $0x4c] sm:$0xf]
      %v1872 = vld [vmem:[%s1571 + $0x50] sm:$0x1]
      %v1873 = vld [vmem:[%s1571 + $0x54] sm:$0xe]
      %v1874 = vld [vmem:[%s1571 + $0x58] sm:$0xf]
      %v1875 = vld [vmem:[%s1571 + $0x5c] sm:$0x1]
      %v1900 = vrot.slane %v1852, 5
      %v1901 = vrot.slane %v1900, 4
      %v1902 = vrot.slane %v1853, 5
      %v1903 = vsel %vm1066, %v1901, %v1902
      %v1904 = vrot.slane %v1902, 4
      %v1905 = vrot.slane %v1854, 5
      %v1906 = vsel %vm1066, %v1904, %v1905
      %v1907 = vrot.slane %v1855, 5
      %v1908 = vrot.slane %v1907, 4
      %v1909 = vrot.slane %v1856, 5
      %v1910 = vsel %vm1066, %v1908, %v1909
      %v1911 = vrot.slane %v1909, 4
      %v1912 = vrot.slane %v1857, 5
      %v1913 = vsel %vm1066, %v1911, %v1912
      %v1914 = vrot.slane %v1858, 5
      %v1915 = vrot.slane %v1914, 4
      %v1916 = vrot.slane %v1859, 5
      %v1917 = vsel %vm1066, %v1915, %v1916
      %v1918 = vrot.slane %v1916, 4
      %v1919 = vrot.slane %v1860, 5
      %v1920 = vsel %vm1066, %v1918, %v1919
      %v1921 = vrot.slane %v1861, 5
      %v1922 = vrot.slane %v1921, 4
      %v1923 = vrot.slane %v1862, 5
      %v1924 = vsel %vm1066, %v1922, %v1923
      %v1925 = vrot.slane %v1923, 4
      %v1926 = vrot.slane %v1863, 5
      %v1927 = vsel %vm1066, %v1925, %v1926
      %v1928 = vrot.slane %v1864, 5
      %v1929 = vrot.slane %v1928, 4
      %v1930 = vrot.slane %v1865, 5
      %v1931 = vsel %vm1066, %v1929, %v1930
      %v1932 = vrot.slane %v1930, 4
      %v1933 = vrot.slane %v1866, 5
      %v1934 = vsel %vm1066, %v1932, %v1933
      %v1935 = vrot.slane %v1867, 5
      %v1936 = vrot.slane %v1935, 4
      %v1937 = vrot.slane %v1868, 5
      %v1938 = vsel %vm1066, %v1936, %v1937
      %v1939 = vrot.slane %v1937, 4
      %v1940 = vrot.slane %v1869, 5
      %v1941 = vsel %vm1066, %v1939, %v1940
      %v1942 = vrot.slane %v1870, 5
      %v1943 = vrot.slane %v1942, 4
      %v1944 = vrot.slane %v1871, 5
      %v1945 = vsel %vm1066, %v1943, %v1944
      %v1946 = vrot.slane %v1944, 4
      %v1947 = vrot.slane %v1872, 5
      %v1948 = vsel %vm1066, %v1946, %v1947
      %v1949 = vrot.slane %v1873, 5
      %v1950 = vrot.slane %v1949, 4
      %v1951 = vrot.slane %v1874, 5
      %v1952 = vsel %vm1066, %v1950, %v1951
      %v1953 = vrot.slane %v1951, 4
      %v1954 = vrot.slane %v1875, 5
      %v1955 = vsel %vm1066, %v1953, %v1954
      %1972 = vst [vmem:[#allocation3 + $0x20] sm:$0xf] %v1903
      %1973 = vst [vmem:[#allocation3 + $0x44] sm:$0xf] %v1906
      %1974 = vst [vmem:[#allocation3 + $0x68] sm:$0xf] %v1910
      %1975 = vst [vmem:[#allocation3 + $0x8c] sm:$0xf] %v1913
      %1976 = vst [vmem:[#allocation3 + $0xb0] sm:$0xf] %v1917
      %1977 = vst [vmem:[#allocation3 + $0xd4] sm:$0xf] %v1920
      %1978 = vst [vmem:[#allocation3 + $0xf8] sm:$0xf] %v1924
      %1979 = vst [vmem:[#allocation3 + $0x11c] sm:$0xf] %v1927
      %1980 = vst [vmem:[#allocation3 + $0x140] sm:$0xf] %v1931
      %1981 = vst [vmem:[#allocation3 + $0x164] sm:$0xf] %v1934
      %1982 = vst [vmem:[#allocation3 + $0x188] sm:$0xf] %v1938
      %1983 = vst [vmem:[#allocation3 + $0x1ac] sm:$0xf] %v1941
      %1984 = vst [vmem:[#allocation3 + $0x1d0] sm:$0xf] %v1945
      %1985 = vst [vmem:[#allocation3 + $0x1f4] sm:$0xf] %v1948
      %1986 = vst [vmem:[#allocation3 + $0x218] sm:$0xf] %v1952
      %1987 = vst [vmem:[#allocation3 + $0x23c] sm:$0xf] %v1955
      %v1988 = vld [vmem:[#allocation3] sm:$0xff]
      %v1989 = vld [vmem:[#allocation3 + $0x8] sm:$0xff]
      %v1990 = vld [vmem:[#allocation3 + $0x10] sm:$0xff]
      %v1991 = vld [vmem:[#allocation3 + $0x18] sm:$0xff]
      %v1992 = vld [vmem:[#allocation3 + $0x20] sm:$0xf]
      %v1993 = vld [vmem:[#allocation3 + $0x24] sm:$0xff]
      %v1994 = vld [vmem:[#allocation3 + $0x2c] sm:$0xff]
      %v1995 = vld [vmem:[#allocation3 + $0x34] sm:$0xff]
      %v1996 = vld [vmem:[#allocation3 + $0x3c] sm:$0xff]
      %v1997 = vld [vmem:[#allocation3 + $0x44] sm:$0xf]
      %v1998 = vld [vmem:[#allocation3 + $0x48] sm:$0xff]
      %v1999 = vld [vmem:[#allocation3 + $0x50] sm:$0xff]
      %v2000 = vld [vmem:[#allocation3 + $0x58] sm:$0xff]
      %v2001 = vld [vmem:[#allocation3 + $0x60] sm:$0xff]
      %v2002 = vld [vmem:[#allocation3 + $0x68] sm:$0xf]
      %v2003 = vld [vmem:[#allocation3 + $0x6c] sm:$0xff]
      %v2004 = vld [vmem:[#allocation3 + $0x74] sm:$0xff]
      %v2005 = vld [vmem:[#allocation3 + $0x7c] sm:$0xff]
      %v2006 = vld [vmem:[#allocation3 + $0x84] sm:$0xff]
      %v2007 = vld [vmem:[#allocation3 + $0x8c] sm:$0xf]
      %v2008 = vld [vmem:[#allocation3 + $0x90] sm:$0xff]
      %v2009 = vld [vmem:[#allocation3 + $0x98] sm:$0xff]
      %v2010 = vld [vmem:[#allocation3 + $0xa0] sm:$0xff]
      %v2011 = vld [vmem:[#allocation3 + $0xa8] sm:$0xff]
      %v2012 = vld [vmem:[#allocation3 + $0xb0] sm:$0xf]
      %v2013 = vld [vmem:[#allocation3 + $0xb4] sm:$0xff]
      %v2014 = vld [vmem:[#allocation3 + $0xbc] sm:$0xff]
      %v2015 = vld [vmem:[#allocation3 + $0xc4] sm:$0xff]
      %v2016 = vld [vmem:[#allocation3 + $0xcc] sm:$0xff]
      %v2017 = vld [vmem:[#allocation3 + $0xd4] sm:$0xf]
      %v2018 = vld [vmem:[#allocation3 + $0xd8] sm:$0xff]
      %v2019 = vld [vmem:[#allocation3 + $0xe0] sm:$0xff]
      %v2020 = vld [vmem:[#allocation3 + $0xe8] sm:$0xff]
      %v2021 = vld [vmem:[#allocation3 + $0xf0] sm:$0xff]
      %v2022 = vld [vmem:[#allocation3 + $0xf8] sm:$0xf]
      %v2023 = vld [vmem:[#allocation3 + $0xfc] sm:$0xff]
      %v2024 = vld [vmem:[#allocation3 + $0x104] sm:$0xff]
      %v2025 = vld [vmem:[#allocation3 + $0x10c] sm:$0xff]
      %v2026 = vld [vmem:[#allocation3 + $0x114] sm:$0xff]
      %v2027 = vld [vmem:[#allocation3 + $0x11c] sm:$0xf]
      %v2028 = vld [vmem:[#allocation3 + $0x120] sm:$0xff]
      %v2029 = vld [vmem:[#allocation3 + $0x128] sm:$0xff]
      %v2030 = vld [vmem:[#allocation3 + $0x130] sm:$0xff]
      %v2031 = vld [vmem:[#allocation3 + $0x138] sm:$0xff]
      %v2032 = vld [vmem:[#allocation3 + $0x140] sm:$0xf]
      %v2033 = vld [vmem:[#allocation3 + $0x144] sm:$0xff]
      %v2034 = vld [vmem:[#allocation3 + $0x14c] sm:$0xff]
      %v2035 = vld [vmem:[#allocation3 + $0x154] sm:$0xff]
      %v2036 = vld [vmem:[#allocation3 + $0x15c] sm:$0xff]
      %v2037 = vld [vmem:[#allocation3 + $0x164] sm:$0xf]
      %v2038 = vld [vmem:[#allocation3 + $0x168] sm:$0xff]
      %v2039 = vld [vmem:[#allocation3 + $0x170] sm:$0xff]
      %v2040 = vld [vmem:[#allocation3 + $0x178] sm:$0xff]
      %v2041 = vld [vmem:[#allocation3 + $0x180] sm:$0xff]
      %v2042 = vld [vmem:[#allocation3 + $0x188] sm:$0xf]
      %v2043 = vld [vmem:[#allocation3 + $0x18c] sm:$0xff]
      %v2044 = vld [vmem:[#allocation3 + $0x194] sm:$0xff]
      %v2045 = vld [vmem:[#allocation3 + $0x19c] sm:$0xff]
      %v2046 = vld [vmem:[#allocation3 + $0x1a4] sm:$0xff]
      %v2047 = vld [vmem:[#allocation3 + $0x1ac] sm:$0xf]
      %v2048 = vld [vmem:[#allocation3 + $0x1b0] sm:$0xff]
      %v2049 = vld [vmem:[#allocation3 + $0x1b8] sm:$0xff]
      %v2050 = vld [vmem:[#allocation3 + $0x1c0] sm:$0xff]
      %v2051 = vld [vmem:[#allocation3 + $0x1c8] sm:$0xff]
      %v2052 = vld [vmem:[#allocation3 + $0x1d0] sm:$0xf]
      %v2053 = vld [vmem:[#allocation3 + $0x1d4] sm:$0xff]
      %v2054 = vld [vmem:[#allocation3 + $0x1dc] sm:$0xff]
      %v2055 = vld [vmem:[#allocation3 + $0x1e4] sm:$0xff]
      %v2056 = vld [vmem:[#allocation3 + $0x1ec] sm:$0xff]
      %v2057 = vld [vmem:[#allocation3 + $0x1f4] sm:$0xf]
      %v2058 = vld [vmem:[#allocation3 + $0x1f8] sm:$0xff]
      %v2059 = vld [vmem:[#allocation3 + $0x200] sm:$0xff]
      %v2060 = vld [vmem:[#allocation3 + $0x208] sm:$0xff]
      %v2061 = vld [vmem:[#allocation3 + $0x210] sm:$0xff]
      %v2062 = vld [vmem:[#allocation3 + $0x218] sm:$0xf]
      %v2063 = vld [vmem:[#allocation3 + $0x21c] sm:$0xff]
      %v2064 = vld [vmem:[#allocation3 + $0x224] sm:$0xff]
      %v2065 = vld [vmem:[#allocation3 + $0x22c] sm:$0xff]
      %v2066 = vld [vmem:[#allocation3 + $0x234] sm:$0xff]
      %v2067 = vld [vmem:[#allocation3 + $0x23c] sm:$0xf]
      %v2068 = vld [vmem:[%s3] sm:$0xf]
      %v2069 = vld [vmem:[%s3 + $0x4] sm:$0xf]
      %v2070 = vld [vmem:[%s3 + $0x8] sm:$0xf]
      %v2071 = vld [vmem:[%s3 + $0xc] sm:$0xf]
      %v2072 = vld [vmem:[%s3 + $0x10] sm:$0xf]
      %v2073 = vld [vmem:[%s3 + $0x14] sm:$0xf]
      %v2074 = vld [vmem:[%s3 + $0x18] sm:$0xf]
      %v2075 = vld [vmem:[%s3 + $0x1c] sm:$0xf]
      %v2076 = vld [vmem:[%s3 + $0x20] sm:$0xf]
      %v2077 = vld [vmem:[%s3 + $0x24] sm:$0xf]
      %v2078 = vld [vmem:[%s3 + $0x28] sm:$0xf]
      %v2079 = vld [vmem:[%s3 + $0x2c] sm:$0xf]
      %v2080 = vld [vmem:[%s3 + $0x30] sm:$0xf]
      %v2081 = vld [vmem:[%s3 + $0x34] sm:$0xf]
      %v2082 = vld [vmem:[%s3 + $0x38] sm:$0xf]
      %v2083 = vld [vmem:[%s3 + $0x3c] sm:$0xf]
      %v2084 = vld [vmem:[%s3 + $0x40] sm:$0xf]
      %v2085 = vld [vmem:[%s3 + $0x44] sm:$0xf]
      %v2086 = vld [vmem:[%s3 + $0x48] sm:$0xf]
      %v2087 = vld [vmem:[%s3 + $0x4c] sm:$0xf]
      %v2088 = vld [vmem:[%s3 + $0x50] sm:$0xf]
      %v2089 = vld [vmem:[%s3 + $0x54] sm:$0xf]
      %v2090 = vld [vmem:[%s3 + $0x58] sm:$0xf]
      %v2091 = vld [vmem:[%s3 + $0x5c] sm:$0xf]
      %v2092 = vld [vmem:[%s3 + $0x60] sm:$0xf]
      %v2093 = vld [vmem:[%s3 + $0x64] sm:$0xf]
      %v2094 = vld [vmem:[%s3 + $0x68] sm:$0xf]
      %v2095 = vld [vmem:[%s3 + $0x6c] sm:$0xf]
      %v2096 = vld [vmem:[%s3 + $0x70] sm:$0xf]
      %v2097 = vld [vmem:[%s3 + $0x74] sm:$0xf]
      %v2098 = vld [vmem:[%s3 + $0x78] sm:$0xf]
      %v2099 = vld [vmem:[%s3 + $0x7c] sm:$0xf]
      %v2100 = vld [vmem:[%s3 + $0x80] sm:$0xf]
      %v2101 = vld [vmem:[%s3 + $0x84] sm:$0xf]
      %v2102 = vld [vmem:[%s3 + $0x88] sm:$0xf]
      %v2103 = vld [vmem:[%s3 + $0x8c] sm:$0xf]
      %v2104 = vld [vmem:[%s3 + $0x90] sm:$0xf]
      %v2105 = vld [vmem:[%s3 + $0x94] sm:$0xf]
      %v2106 = vld [vmem:[%s3 + $0x98] sm:$0xf]
      %v2107 = vld [vmem:[%s3 + $0x9c] sm:$0xf]
      %v2108 = vld [vmem:[%s3 + $0xa0] sm:$0xf]
      %v2109 = vld [vmem:[%s3 + $0xa4] sm:$0xf]
      %v2110 = vld [vmem:[%s3 + $0xa8] sm:$0xf]
      %v2111 = vld [vmem:[%s3 + $0xac] sm:$0xf]
      %v2112 = vld [vmem:[%s3 + $0xb0] sm:$0xf]
      %v2113 = vld [vmem:[%s3 + $0xb4] sm:$0xf]
      %v2114 = vld [vmem:[%s3 + $0xb8] sm:$0xf]
      %v2115 = vld [vmem:[%s3 + $0xbc] sm:$0xf]
      %v2116 = vld [vmem:[%s3 + $0xc0] sm:$0xf]
      %v2117 = vld [vmem:[%s3 + $0xc4] sm:$0xf]
      %v2118 = vld [vmem:[%s3 + $0xc8] sm:$0xf]
      %v2119 = vld [vmem:[%s3 + $0xcc] sm:$0xf]
      %v2120 = vld [vmem:[%s3 + $0xd0] sm:$0xf]
      %v2121 = vld [vmem:[%s3 + $0xd4] sm:$0xf]
      %v2122 = vld [vmem:[%s3 + $0xd8] sm:$0xf]
      %v2123 = vld [vmem:[%s3 + $0xdc] sm:$0xf]
      %v2124 = vld [vmem:[%s3 + $0xe0] sm:$0xf]
      %v2125 = vld [vmem:[%s3 + $0xe4] sm:$0xf]
      %v2126 = vld [vmem:[%s3 + $0xe8] sm:$0xf]
      %v2127 = vld [vmem:[%s3 + $0xec] sm:$0xf]
      %v2128 = vld [vmem:[%s3 + $0xf0] sm:$0xf]
      %v2129 = vld [vmem:[%s3 + $0xf4] sm:$0xf]
      %v2130 = vld [vmem:[%s3 + $0xf8] sm:$0xf]
      %v2131 = vld [vmem:[%s3 + $0xfc] sm:$0xf]
      %v2132 = vld [vmem:[%s3 + $0x100] sm:$0xf]
      %v2133 = vld [vmem:[%s3 + $0x104] sm:$0xf]
      %v2134 = vld [vmem:[%s3 + $0x108] sm:$0xf]
      %v2135 = vld [vmem:[%s3 + $0x10c] sm:$0xf]
      %v2136 = vld [vmem:[%s3 + $0x110] sm:$0xf]
      %v2137 = vld [vmem:[%s3 + $0x114] sm:$0xf]
      %v2138 = vld [vmem:[%s3 + $0x118] sm:$0xf]
      %v2139 = vld [vmem:[%s3 + $0x11c] sm:$0xf]
      %v2140 = vld [vmem:[%s3 + $0x120] sm:$0xf]
      %v2141 = vld [vmem:[%s3 + $0x124] sm:$0xf]
      %v2142 = vld [vmem:[%s3 + $0x128] sm:$0xf]
      %v2143 = vld [vmem:[%s3 + $0x12c] sm:$0xf]
      %v2144 = vld [vmem:[%s3 + $0x130] sm:$0xf]
      %v2145 = vld [vmem:[%s3 + $0x134] sm:$0xf]
      %v2146 = vld [vmem:[%s3 + $0x138] sm:$0xf]
      %v2147 = vld [vmem:[%s3 + $0x13c] sm:$0xf]
      %v2148 = vld [vmem:[%s3 + $0x140] sm:$0xf]
      %v2149 = vld [vmem:[%s3 + $0x144] sm:$0xf]
      %v2150 = vld [vmem:[%s3 + $0x148] sm:$0xf]
      %v2151 = vld [vmem:[%s3 + $0x14c] sm:$0xf]
      %v2152 = vld [vmem:[%s3 + $0x150] sm:$0xf]
      %v2153 = vld [vmem:[%s3 + $0x154] sm:$0xf]
      %v2154 = vld [vmem:[%s3 + $0x158] sm:$0xf]
      %v2155 = vld [vmem:[%s3 + $0x15c] sm:$0xf]
      %v2156 = vld [vmem:[%s3 + $0x160] sm:$0xf]
      %v2157 = vld [vmem:[%s3 + $0x164] sm:$0xf]
      %v2158 = vld [vmem:[%s3 + $0x168] sm:$0xf]
      %v2159 = vld [vmem:[%s3 + $0x16c] sm:$0xf]
      %v2160 = vld [vmem:[%s3 + $0x170] sm:$0xf]
      %v2161 = vld [vmem:[%s3 + $0x174] sm:$0xf]
      %v2162 = vld [vmem:[%s3 + $0x178] sm:$0xf]
      %v2163 = vld [vmem:[%s3 + $0x17c] sm:$0xf]
      %v2164 = vld [vmem:[%s3 + $0x180] sm:$0xf]
      %v2165 = vld [vmem:[%s3 + $0x184] sm:$0xf]
      %v2166 = vld [vmem:[%s3 + $0x188] sm:$0xf]
      %v2167 = vld [vmem:[%s3 + $0x18c] sm:$0xf]
      %v2168 = vld [vmem:[%s3 + $0x190] sm:$0xf]
      %v2169 = vld [vmem:[%s3 + $0x194] sm:$0xf]
      %v2170 = vld [vmem:[%s3 + $0x198] sm:$0xf]
      %v2171 = vld [vmem:[%s3 + $0x19c] sm:$0xf]
      %v2172 = vld [vmem:[%s3 + $0x1a0] sm:$0xf]
      %v2173 = vld [vmem:[%s3 + $0x1a4] sm:$0xf]
      %v2174 = vld [vmem:[%s3 + $0x1a8] sm:$0xf]
      %v2175 = vld [vmem:[%s3 + $0x1ac] sm:$0xf]
      %v2176 = vld [vmem:[%s3 + $0x1b0] sm:$0xf]
      %v2177 = vld [vmem:[%s3 + $0x1b4] sm:$0xf]
      %v2178 = vld [vmem:[%s3 + $0x1b8] sm:$0xf]
      %v2179 = vld [vmem:[%s3 + $0x1bc] sm:$0xf]
      %v2180 = vld [vmem:[%s3 + $0x1c0] sm:$0xf]
      %v2181 = vld [vmem:[%s3 + $0x1c4] sm:$0xf]
      %v2182 = vld [vmem:[%s3 + $0x1c8] sm:$0xf]
      %v2183 = vld [vmem:[%s3 + $0x1cc] sm:$0xf]
      %v2184 = vld [vmem:[%s3 + $0x1d0] sm:$0xf]
      %v2185 = vld [vmem:[%s3 + $0x1d4] sm:$0xf]
      %v2186 = vld [vmem:[%s3 + $0x1d8] sm:$0xf]
      %v2187 = vld [vmem:[%s3 + $0x1dc] sm:$0xf]
      %v2188 = vld [vmem:[%s3 + $0x1e0] sm:$0xf]
      %v2189 = vld [vmem:[%s3 + $0x1e4] sm:$0xf]
      %v2190 = vld [vmem:[%s3 + $0x1e8] sm:$0xf]
      %v2191 = vld [vmem:[%s3 + $0x1ec] sm:$0xf]
      %v2192 = vld [vmem:[%s3 + $0x1f0] sm:$0xf]
      %v2193 = vld [vmem:[%s3 + $0x1f4] sm:$0xf]
      %v2194 = vld [vmem:[%s3 + $0x1f8] sm:$0xf]
      %v2195 = vld [vmem:[%s3 + $0x1fc] sm:$0xf]
      %v2196 = vld [vmem:[%s3 + $0x200] sm:$0xf]
      %v2197 = vld [vmem:[%s3 + $0x204] sm:$0xf]
      %v2198 = vld [vmem:[%s3 + $0x208] sm:$0xf]
      %v2199 = vld [vmem:[%s3 + $0x20c] sm:$0xf]
      %v2200 = vld [vmem:[%s3 + $0x210] sm:$0xf]
      %v2201 = vld [vmem:[%s3 + $0x214] sm:$0xf]
      %v2202 = vld [vmem:[%s3 + $0x218] sm:$0xf]
      %v2203 = vld [vmem:[%s3 + $0x21c] sm:$0xf]
      %v2204 = vld [vmem:[%s3 + $0x220] sm:$0xf]
      %v2205 = vld [vmem:[%s3 + $0x224] sm:$0xf]
      %v2206 = vld [vmem:[%s3 + $0x228] sm:$0xf]
      %v2207 = vld [vmem:[%s3 + $0x22c] sm:$0xf]
      %v2208 = vld [vmem:[%s3 + $0x230] sm:$0xf]
      %v2209 = vld [vmem:[%s3 + $0x234] sm:$0xf]
      %v2210 = vld [vmem:[%s3 + $0x238] sm:$0xf]
      %v2211 = vld [vmem:[%s3 + $0x23c] sm:$0xf]
      %v2292 = vunpack.c.l.b16 %v1988
      %v2293 = vunpack.c.h.b16 %v1988
      %v2294 = vunpack.c.l.b16 %v1989
      %v2295 = vunpack.c.h.b16 %v1989
      %v2296 = vunpack.c.l.b16 %v1990
      %v2297 = vunpack.c.h.b16 %v1990
      %v2298 = vunpack.c.l.b16 %v1991
      %v2299 = vunpack.c.h.b16 %v1991
      %v2300 = vunpack.c.l.b16 %v1992
      %v2301 = vunpack.c.l.b16 %v1993
      %v2302 = vunpack.c.h.b16 %v1993
      %v2303 = vunpack.c.l.b16 %v1994
      %v2304 = vunpack.c.h.b16 %v1994
      %v2305 = vunpack.c.l.b16 %v1995
      %v2306 = vunpack.c.h.b16 %v1995
      %v2307 = vunpack.c.l.b16 %v1996
      %v2308 = vunpack.c.h.b16 %v1996
      %v2309 = vunpack.c.l.b16 %v1997
      %v2310 = vunpack.c.l.b16 %v1998
      %v2311 = vunpack.c.h.b16 %v1998
      %v2312 = vunpack.c.l.b16 %v1999
      %v2313 = vunpack.c.h.b16 %v1999
      %v2314 = vunpack.c.l.b16 %v2000
      %v2315 = vunpack.c.h.b16 %v2000
      %v2316 = vunpack.c.l.b16 %v2001
      %v2317 = vunpack.c.h.b16 %v2001
      %v2318 = vunpack.c.l.b16 %v2002
      %v2319 = vunpack.c.l.b16 %v2003
      %v2320 = vunpack.c.h.b16 %v2003
      %v2321 = vunpack.c.l.b16 %v2004
      %v2322 = vunpack.c.h.b16 %v2004
      %v2323 = vunpack.c.l.b16 %v2005
      %v2324 = vunpack.c.h.b16 %v2005
      %v2325 = vunpack.c.l.b16 %v2006
      %v2326 = vunpack.c.h.b16 %v2006
      %v2327 = vunpack.c.l.b16 %v2007
      %v2328 = vunpack.c.l.b16 %v2008
      %v2329 = vunpack.c.h.b16 %v2008
      %v2330 = vunpack.c.l.b16 %v2009
      %v2331 = vunpack.c.h.b16 %v2009
      %v2332 = vunpack.c.l.b16 %v2010
      %v2333 = vunpack.c.h.b16 %v2010
      %v2334 = vunpack.c.l.b16 %v2011
      %v2335 = vunpack.c.h.b16 %v2011
      %v2336 = vunpack.c.l.b16 %v2012
      %v2337 = vunpack.c.l.b16 %v2013
      %v2338 = vunpack.c.h.b16 %v2013
      %v2339 = vunpack.c.l.b16 %v2014
      %v2340 = vunpack.c.h.b16 %v2014
      %v2341 = vunpack.c.l.b16 %v2015
      %v2342 = vunpack.c.h.b16 %v2015
      %v2343 = vunpack.c.l.b16 %v2016
      %v2344 = vunpack.c.h.b16 %v2016
      %v2345 = vunpack.c.l.b16 %v2017
      %v2346 = vunpack.c.l.b16 %v2018
      %v2347 = vunpack.c.h.b16 %v2018
      %v2348 = vunpack.c.l.b16 %v2019
      %v2349 = vunpack.c.h.b16 %v2019
      %v2350 = vunpack.c.l.b16 %v2020
      %v2351 = vunpack.c.h.b16 %v2020
      %v2352 = vunpack.c.l.b16 %v2021
      %v2353 = vunpack.c.h.b16 %v2021
      %v2354 = vunpack.c.l.b16 %v2022
      %v2355 = vunpack.c.l.b16 %v2023
      %v2356 = vunpack.c.h.b16 %v2023
      %v2357 = vunpack.c.l.b16 %v2024
      %v2358 = vunpack.c.h.b16 %v2024
      %v2359 = vunpack.c.l.b16 %v2025
      %v2360 = vunpack.c.h.b16 %v2025
      %v2361 = vunpack.c.l.b16 %v2026
      %v2362 = vunpack.c.h.b16 %v2026
      %v2363 = vunpack.c.l.b16 %v2027
      %v2364 = vunpack.c.l.b16 %v2028
      %v2365 = vunpack.c.h.b16 %v2028
      %v2366 = vunpack.c.l.b16 %v2029
      %v2367 = vunpack.c.h.b16 %v2029
      %v2368 = vunpack.c.l.b16 %v2030
      %v2369 = vunpack.c.h.b16 %v2030
      %v2370 = vunpack.c.l.b16 %v2031
      %v2371 = vunpack.c.h.b16 %v2031
      %v2372 = vunpack.c.l.b16 %v2032
      %v2373 = vunpack.c.l.b16 %v2033
      %v2374 = vunpack.c.h.b16 %v2033
      %v2375 = vunpack.c.l.b16 %v2034
      %v2376 = vunpack.c.h.b16 %v2034
      %v2377 = vunpack.c.l.b16 %v2035
      %v2378 = vunpack.c.h.b16 %v2035
      %v2379 = vunpack.c.l.b16 %v2036
      %v2380 = vunpack.c.h.b16 %v2036
      %v2381 = vunpack.c.l.b16 %v2037
      %v2382 = vunpack.c.l.b16 %v2038
      %v2383 = vunpack.c.h.b16 %v2038
      %v2384 = vunpack.c.l.b16 %v2039
      %v2385 = vunpack.c.h.b16 %v2039
      %v2386 = vunpack.c.l.b16 %v2040
      %v2387 = vunpack.c.h.b16 %v2040
      %v2388 = vunpack.c.l.b16 %v2041
      %v2389 = vunpack.c.h.b16 %v2041
      %v2390 = vunpack.c.l.b16 %v2042
      %v2391 = vunpack.c.l.b16 %v2043
      %v2392 = vunpack.c.h.b16 %v2043
      %v2393 = vunpack.c.l.b16 %v2044
      %v2394 = vunpack.c.h.b16 %v2044
      %v2395 = vunpack.c.l.b16 %v2045
      %v2396 = vunpack.c.h.b16 %v2045
      %v2397 = vunpack.c.l.b16 %v2046
      %v2398 = vunpack.c.h.b16 %v2046
      %v2399 = vunpack.c.l.b16 %v2047
      %v2400 = vunpack.c.l.b16 %v2048
      %v2401 = vunpack.c.h.b16 %v2048
      %v2402 = vunpack.c.l.b16 %v2049
      %v2403 = vunpack.c.h.b16 %v2049
      %v2404 = vunpack.c.l.b16 %v2050
      %v2405 = vunpack.c.h.b16 %v2050
      %v2406 = vunpack.c.l.b16 %v2051
      %v2407 = vunpack.c.h.b16 %v2051
      %v2408 = vunpack.c.l.b16 %v2052
      %v2409 = vunpack.c.l.b16 %v2053
      %v2410 = vunpack.c.h.b16 %v2053
      %v2411 = vunpack.c.l.b16 %v2054
      %v2412 = vunpack.c.h.b16 %v2054
      %v2413 = vunpack.c.l.b16 %v2055
      %v2414 = vunpack.c.h.b16 %v2055
      %v2415 = vunpack.c.l.b16 %v2056
      %v2416 = vunpack.c.h.b16 %v2056
      %v2417 = vunpack.c.l.b16 %v2057
      %v2418 = vunpack.c.l.b16 %v2058
      %v2419 = vunpack.c.h.b16 %v2058
      %v2420 = vunpack.c.l.b16 %v2059
      %v2421 = vunpack.c.h.b16 %v2059
      %v2422 = vunpack.c.l.b16 %v2060
      %v2423 = vunpack.c.h.b16 %v2060
      %v2424 = vunpack.c.l.b16 %v2061
      %v2425 = vunpack.c.h.b16 %v2061
      %v2426 = vunpack.c.l.b16 %v2062
      %v2427 = vunpack.c.l.b16 %v2063
      %v2428 = vunpack.c.h.b16 %v2063
      %v2429 = vunpack.c.l.b16 %v2064
      %v2430 = vunpack.c.h.b16 %v2064
      %v2431 = vunpack.c.l.b16 %v2065
      %v2432 = vunpack.c.h.b16 %v2065
      %v2433 = vunpack.c.l.b16 %v2066
      %v2434 = vunpack.c.h.b16 %v2066
      %v2435 = vunpack.c.l.b16 %v2067
      %v2436 = vpack.c.b16 %v2301, %v2292
      %v2437 = vpack.c.b16 %v2302, %v2293
      %v2438 = vpack.c.b16 %v2303, %v2294
      %v2439 = vpack.c.b16 %v2304, %v2295
      %v2440 = vpack.c.b16 %v2305, %v2296
      %v2441 = vpack.c.b16 %v2306, %v2297
      %v2442 = vpack.c.b16 %v2307, %v2298
      %v2443 = vpack.c.b16 %v2308, %v2299
      %v2444 = vpack.c.b16 %v2309, %v2300
      %v2445 = vpack.c.b16 %v2319, %v2310
      %v2446 = vpack.c.b16 %v2320, %v2311
      %v2447 = vpack.c.b16 %v2321, %v2312
      %v2448 = vpack.c.b16 %v2322, %v2313
      %v2449 = vpack.c.b16 %v2323, %v2314
      %v2450 = vpack.c.b16 %v2324, %v2315
      %v2451 = vpack.c.b16 %v2325, %v2316
      %v2452 = vpack.c.b16 %v2326, %v2317
      %v2453 = vpack.c.b16 %v2327, %v2318
      %v2454 = vpack.c.b16 %v2337, %v2328
      %v2455 = vpack.c.b16 %v2338, %v2329
      %v2456 = vpack.c.b16 %v2339, %v2330
      %v2457 = vpack.c.b16 %v2340, %v2331
      %v2458 = vpack.c.b16 %v2341, %v2332
      %v2459 = vpack.c.b16 %v2342, %v2333
      %v2460 = vpack.c.b16 %v2343, %v2334
      %v2461 = vpack.c.b16 %v2344, %v2335
      %v2462 = vpack.c.b16 %v2345, %v2336
      %v2463 = vpack.c.b16 %v2355, %v2346
      %v2464 = vpack.c.b16 %v2356, %v2347
      %v2465 = vpack.c.b16 %v2357, %v2348
      %v2466 = vpack.c.b16 %v2358, %v2349
      %v2467 = vpack.c.b16 %v2359, %v2350
      %v2468 = vpack.c.b16 %v2360, %v2351
      %v2469 = vpack.c.b16 %v2361, %v2352
      %v2470 = vpack.c.b16 %v2362, %v2353
      %v2471 = vpack.c.b16 %v2363, %v2354
      %v2472 = vpack.c.b16 %v2373, %v2364
      %v2473 = vpack.c.b16 %v2374, %v2365
      %v2474 = vpack.c.b16 %v2375, %v2366
      %v2475 = vpack.c.b16 %v2376, %v2367
      %v2476 = vpack.c.b16 %v2377, %v2368
      %v2477 = vpack.c.b16 %v2378, %v2369
      %v2478 = vpack.c.b16 %v2379, %v2370
      %v2479 = vpack.c.b16 %v2380, %v2371
      %v2480 = vpack.c.b16 %v2381, %v2372
      %v2481 = vpack.c.b16 %v2391, %v2382
      %v2482 = vpack.c.b16 %v2392, %v2383
      %v2483 = vpack.c.b16 %v2393, %v2384
      %v2484 = vpack.c.b16 %v2394, %v2385
      %v2485 = vpack.c.b16 %v2395, %v2386
      %v2486 = vpack.c.b16 %v2396, %v2387
      %v2487 = vpack.c.b16 %v2397, %v2388
      %v2488 = vpack.c.b16 %v2398, %v2389
      %v2489 = vpack.c.b16 %v2399, %v2390
      %v2490 = vpack.c.b16 %v2409, %v2400
      %v2491 = vpack.c.b16 %v2410, %v2401
      %v2492 = vpack.c.b16 %v2411, %v2402
      %v2493 = vpack.c.b16 %v2412, %v2403
      %v2494 = vpack.c.b16 %v2413, %v2404
      %v2495 = vpack.c.b16 %v2414, %v2405
      %v2496 = vpack.c.b16 %v2415, %v2406
      %v2497 = vpack.c.b16 %v2416, %v2407
      %v2498 = vpack.c.b16 %v2417, %v2408
      %v2499 = vpack.c.b16 %v2427, %v2418
      %v2500 = vpack.c.b16 %v2428, %v2419
      %v2501 = vpack.c.b16 %v2429, %v2420
      %v2502 = vpack.c.b16 %v2430, %v2421
      %v2503 = vpack.c.b16 %v2431, %v2422
      %v2504 = vpack.c.b16 %v2432, %v2423
      %v2505 = vpack.c.b16 %v2433, %v2424
      %v2506 = vpack.c.b16 %v2434, %v2425
      %v2507 = vpack.c.b16 %v2435, %v2426
      %v2724 = vunpack.c.l.b16 %v2068
      %v2725 = vunpack.c.l.b16 %v2069
      %v2726 = vunpack.c.l.b16 %v2070
      %v2727 = vunpack.c.l.b16 %v2071
      %v2728 = vunpack.c.l.b16 %v2072
      %v2729 = vunpack.c.l.b16 %v2073
      %v2730 = vunpack.c.l.b16 %v2074
      %v2731 = vunpack.c.l.b16 %v2075
      %v2732 = vunpack.c.l.b16 %v2076
      %v2733 = vunpack.c.l.b16 %v2077
      %v2734 = vunpack.c.l.b16 %v2078
      %v2735 = vunpack.c.l.b16 %v2079
      %v2736 = vunpack.c.l.b16 %v2080
      %v2737 = vunpack.c.l.b16 %v2081
      %v2738 = vunpack.c.l.b16 %v2082
      %v2739 = vunpack.c.l.b16 %v2083
      %v2740 = vunpack.c.l.b16 %v2084
      %v2741 = vunpack.c.l.b16 %v2085
      %v2742 = vunpack.c.l.b16 %v2086
      %v2743 = vunpack.c.l.b16 %v2087
      %v2744 = vunpack.c.l.b16 %v2088
      %v2745 = vunpack.c.l.b16 %v2089
      %v2746 = vunpack.c.l.b16 %v2090
      %v2747 = vunpack.c.l.b16 %v2091
      %v2748 = vunpack.c.l.b16 %v2092
      %v2749 = vunpack.c.l.b16 %v2093
      %v2750 = vunpack.c.l.b16 %v2094
      %v2751 = vunpack.c.l.b16 %v2095
      %v2752 = vunpack.c.l.b16 %v2096
      %v2753 = vunpack.c.l.b16 %v2097
      %v2754 = vunpack.c.l.b16 %v2098
      %v2755 = vunpack.c.l.b16 %v2099
      %v2756 = vunpack.c.l.b16 %v2100
      %v2757 = vunpack.c.l.b16 %v2101
      %v2758 = vunpack.c.l.b16 %v2102
      %v2759 = vunpack.c.l.b16 %v2103
      %v2760 = vunpack.c.l.b16 %v2104
      %v2761 = vunpack.c.l.b16 %v2105
      %v2762 = vunpack.c.l.b16 %v2106
      %v2763 = vunpack.c.l.b16 %v2107
      %v2764 = vunpack.c.l.b16 %v2108
      %v2765 = vunpack.c.l.b16 %v2109
      %v2766 = vunpack.c.l.b16 %v2110
      %v2767 = vunpack.c.l.b16 %v2111
      %v2768 = vunpack.c.l.b16 %v2112
      %v2769 = vunpack.c.l.b16 %v2113
      %v2770 = vunpack.c.l.b16 %v2114
      %v2771 = vunpack.c.l.b16 %v2115
      %v2772 = vunpack.c.l.b16 %v2116
      %v2773 = vunpack.c.l.b16 %v2117
      %v2774 = vunpack.c.l.b16 %v2118
      %v2775 = vunpack.c.l.b16 %v2119
      %v2776 = vunpack.c.l.b16 %v2120
      %v2777 = vunpack.c.l.b16 %v2121
      %v2778 = vunpack.c.l.b16 %v2122
      %v2779 = vunpack.c.l.b16 %v2123
      %v2780 = vunpack.c.l.b16 %v2124
      %v2781 = vunpack.c.l.b16 %v2125
      %v2782 = vunpack.c.l.b16 %v2126
      %v2783 = vunpack.c.l.b16 %v2127
      %v2784 = vunpack.c.l.b16 %v2128
      %v2785 = vunpack.c.l.b16 %v2129
      %v2786 = vunpack.c.l.b16 %v2130
      %v2787 = vunpack.c.l.b16 %v2131
      %v2788 = vunpack.c.l.b16 %v2132
      %v2789 = vunpack.c.l.b16 %v2133
      %v2790 = vunpack.c.l.b16 %v2134
      %v2791 = vunpack.c.l.b16 %v2135
      %v2792 = vunpack.c.l.b16 %v2136
      %v2793 = vunpack.c.l.b16 %v2137
      %v2794 = vunpack.c.l.b16 %v2138
      %v2795 = vunpack.c.l.b16 %v2139
      %v2796 = vunpack.c.l.b16 %v2140
      %v2797 = vunpack.c.l.b16 %v2141
      %v2798 = vunpack.c.l.b16 %v2142
      %v2799 = vunpack.c.l.b16 %v2143
      %v2800 = vunpack.c.l.b16 %v2144
      %v2801 = vunpack.c.l.b16 %v2145
      %v2802 = vunpack.c.l.b16 %v2146
      %v2803 = vunpack.c.l.b16 %v2147
      %v2804 = vunpack.c.l.b16 %v2148
      %v2805 = vunpack.c.l.b16 %v2149
      %v2806 = vunpack.c.l.b16 %v2150
      %v2807 = vunpack.c.l.b16 %v2151
      %v2808 = vunpack.c.l.b16 %v2152
      %v2809 = vunpack.c.l.b16 %v2153
      %v2810 = vunpack.c.l.b16 %v2154
      %v2811 = vunpack.c.l.b16 %v2155
      %v2812 = vunpack.c.l.b16 %v2156
      %v2813 = vunpack.c.l.b16 %v2157
      %v2814 = vunpack.c.l.b16 %v2158
      %v2815 = vunpack.c.l.b16 %v2159
      %v2816 = vunpack.c.l.b16 %v2160
      %v2817 = vunpack.c.l.b16 %v2161
      %v2818 = vunpack.c.l.b16 %v2162
      %v2819 = vunpack.c.l.b16 %v2163
      %v2820 = vunpack.c.l.b16 %v2164
      %v2821 = vunpack.c.l.b16 %v2165
      %v2822 = vunpack.c.l.b16 %v2166
      %v2823 = vunpack.c.l.b16 %v2167
      %v2824 = vunpack.c.l.b16 %v2168
      %v2825 = vunpack.c.l.b16 %v2169
      %v2826 = vunpack.c.l.b16 %v2170
      %v2827 = vunpack.c.l.b16 %v2171
      %v2828 = vunpack.c.l.b16 %v2172
      %v2829 = vunpack.c.l.b16 %v2173
      %v2830 = vunpack.c.l.b16 %v2174
      %v2831 = vunpack.c.l.b16 %v2175
      %v2832 = vunpack.c.l.b16 %v2176
      %v2833 = vunpack.c.l.b16 %v2177
      %v2834 = vunpack.c.l.b16 %v2178
      %v2835 = vunpack.c.l.b16 %v2179
      %v2836 = vunpack.c.l.b16 %v2180
      %v2837 = vunpack.c.l.b16 %v2181
      %v2838 = vunpack.c.l.b16 %v2182
      %v2839 = vunpack.c.l.b16 %v2183
      %v2840 = vunpack.c.l.b16 %v2184
      %v2841 = vunpack.c.l.b16 %v2185
      %v2842 = vunpack.c.l.b16 %v2186
      %v2843 = vunpack.c.l.b16 %v2187
      %v2844 = vunpack.c.l.b16 %v2188
      %v2845 = vunpack.c.l.b16 %v2189
      %v2846 = vunpack.c.l.b16 %v2190
      %v2847 = vunpack.c.l.b16 %v2191
      %v2848 = vunpack.c.l.b16 %v2192
      %v2849 = vunpack.c.l.b16 %v2193
      %v2850 = vunpack.c.l.b16 %v2194
      %v2851 = vunpack.c.l.b16 %v2195
      %v2852 = vunpack.c.l.b16 %v2196
      %v2853 = vunpack.c.l.b16 %v2197
      %v2854 = vunpack.c.l.b16 %v2198
      %v2855 = vunpack.c.l.b16 %v2199
      %v2856 = vunpack.c.l.b16 %v2200
      %v2857 = vunpack.c.l.b16 %v2201
      %v2858 = vunpack.c.l.b16 %v2202
      %v2859 = vunpack.c.l.b16 %v2203
      %v2860 = vunpack.c.l.b16 %v2204
      %v2861 = vunpack.c.l.b16 %v2205
      %v2862 = vunpack.c.l.b16 %v2206
      %v2863 = vunpack.c.l.b16 %v2207
      %v2864 = vunpack.c.l.b16 %v2208
      %v2865 = vunpack.c.l.b16 %v2209
      %v2866 = vunpack.c.l.b16 %v2210
      %v2867 = vunpack.c.l.b16 %v2211
      %v2868 = vpack.c.b16 %v2725, %v2724
      %v2869 = vpack.c.b16 %v2727, %v2726
      %v2870 = vpack.c.b16 %v2729, %v2728
      %v2871 = vpack.c.b16 %v2731, %v2730
      %v2872 = vpack.c.b16 %v2733, %v2732
      %v2873 = vpack.c.b16 %v2735, %v2734
      %v2874 = vpack.c.b16 %v2737, %v2736
      %v2875 = vpack.c.b16 %v2739, %v2738
      %v2876 = vpack.c.b16 %v2741, %v2740
      %v2877 = vpack.c.b16 %v2743, %v2742
      %v2878 = vpack.c.b16 %v2745, %v2744
      %v2879 = vpack.c.b16 %v2747, %v2746
      %v2880 = vpack.c.b16 %v2749, %v2748
      %v2881 = vpack.c.b16 %v2751, %v2750
      %v2882 = vpack.c.b16 %v2753, %v2752
      %v2883 = vpack.c.b16 %v2755, %v2754
      %v2884 = vpack.c.b16 %v2757, %v2756
      %v2885 = vpack.c.b16 %v2759, %v2758
      %v2886 = vpack.c.b16 %v2761, %v2760
      %v2887 = vpack.c.b16 %v2763, %v2762
      %v2888 = vpack.c.b16 %v2765, %v2764
      %v2889 = vpack.c.b16 %v2767, %v2766
      %v2890 = vpack.c.b16 %v2769, %v2768
      %v2891 = vpack.c.b16 %v2771, %v2770
      %v2892 = vpack.c.b16 %v2773, %v2772
      %v2893 = vpack.c.b16 %v2775, %v2774
      %v2894 = vpack.c.b16 %v2777, %v2776
      %v2895 = vpack.c.b16 %v2779, %v2778
      %v2896 = vpack.c.b16 %v2781, %v2780
      %v2897 = vpack.c.b16 %v2783, %v2782
      %v2898 = vpack.c.b16 %v2785, %v2784
      %v2899 = vpack.c.b16 %v2787, %v2786
      %v2900 = vpack.c.b16 %v2789, %v2788
      %v2901 = vpack.c.b16 %v2791, %v2790
      %v2902 = vpack.c.b16 %v2793, %v2792
      %v2903 = vpack.c.b16 %v2795, %v2794
      %v2904 = vpack.c.b16 %v2797, %v2796
      %v2905 = vpack.c.b16 %v2799, %v2798
      %v2906 = vpack.c.b16 %v2801, %v2800
      %v2907 = vpack.c.b16 %v2803, %v2802
      %v2908 = vpack.c.b16 %v2805, %v2804
      %v2909 = vpack.c.b16 %v2807, %v2806
      %v2910 = vpack.c.b16 %v2809, %v2808
      %v2911 = vpack.c.b16 %v2811, %v2810
      %v2912 = vpack.c.b16 %v2813, %v2812
      %v2913 = vpack.c.b16 %v2815, %v2814
      %v2914 = vpack.c.b16 %v2817, %v2816
      %v2915 = vpack.c.b16 %v2819, %v2818
      %v2916 = vpack.c.b16 %v2821, %v2820
      %v2917 = vpack.c.b16 %v2823, %v2822
      %v2918 = vpack.c.b16 %v2825, %v2824
      %v2919 = vpack.c.b16 %v2827, %v2826
      %v2920 = vpack.c.b16 %v2829, %v2828
      %v2921 = vpack.c.b16 %v2831, %v2830
      %v2922 = vpack.c.b16 %v2833, %v2832
      %v2923 = vpack.c.b16 %v2835, %v2834
      %v2924 = vpack.c.b16 %v2837, %v2836
      %v2925 = vpack.c.b16 %v2839, %v2838
      %v2926 = vpack.c.b16 %v2841, %v2840
      %v2927 = vpack.c.b16 %v2843, %v2842
      %v2928 = vpack.c.b16 %v2845, %v2844
      %v2929 = vpack.c.b16 %v2847, %v2846
      %v2930 = vpack.c.b16 %v2849, %v2848
      %v2931 = vpack.c.b16 %v2851, %v2850
      %v2932 = vpack.c.b16 %v2853, %v2852
      %v2933 = vpack.c.b16 %v2855, %v2854
      %v2934 = vpack.c.b16 %v2857, %v2856
      %v2935 = vpack.c.b16 %v2859, %v2858
      %v2936 = vpack.c.b16 %v2861, %v2860
      %v2937 = vpack.c.b16 %v2863, %v2862
      %v2938 = vpack.c.b16 %v2865, %v2864
      %v2939 = vpack.c.b16 %v2867, %v2866
      %3012 = vmatprep.subr.bf16.mxu0 0
      %3013 = vmatpush1.bf16.msra.mxu0 %v2875
      %3014 = vmatprep.subr.bf16.mxu0 0
      %3015 = vmatpush1.bf16.msra.mxu0 %v2874
      %3016 = vmatprep.subr.bf16.mxu0 0
      %3017 = vmatpush1.bf16.msra.mxu0 %v2873
      %3018 = vmatprep.subr.bf16.mxu0 0
      %3019 = vmatpush1.bf16.msra.mxu0 %v2872
      %3020 = vmatprep.subr.bf16.mxu0 0
      %3021 = vmatpush1.bf16.msra.mxu0 %v2871
      %3022 = vmatprep.subr.bf16.mxu0 0
      %3023 = vmatpush1.bf16.msra.mxu0 %v2870
      %3024 = vmatprep.subr.bf16.mxu0 0
      %3025 = vmatpush1.bf16.msra.mxu0 %v2869
      %3026 = vmatprep.subr.bf16.mxu0 0
      %3027 = vmatpush1.bf16.msra.mxu0 %v2868
      %3028 = vmatprep.subr.bf16.mxu0 0
      %3029 = vmatpush2.bf16.msra.mxu0 %v2883
      %3030 = vmatprep.subr.bf16.mxu0 0
      %3031 = vmatpush2.bf16.msra.mxu0 %v2882
      %3032 = vmatprep.subr.bf16.mxu0 0
      %3033 = vmatpush2.bf16.msra.mxu0 %v2881
      %3034 = vmatprep.subr.bf16.mxu0 0
      %3035 = vmatpush2.bf16.msra.mxu0 %v2880
      %3036 = vmatprep.subr.bf16.mxu0 0
      %3037 = vmatpush2.bf16.msra.mxu0 %v2879
      %3038 = vmatprep.subr.bf16.mxu0 0
      %3039 = vmatpush2.bf16.msra.mxu0 %v2878
      %3040 = vmatprep.subr.bf16.mxu0 0
      %3041 = vmatpush2.bf16.msra.mxu0 %v2877
      %3042 = vmatprep.subr.bf16.mxu0 0
      %3043 = vmatpush2.bf16.msra.mxu0 %v2876
      %3044 = vmatprep.mubr.bf16.mxu0 %v2437
      %3045 = vmatmul.mubr.bf16.gmra.mxu0 %v2436
      %v3046 = vpop.f32.mrf.mxu0
      %v3047 = vadd.f32 0.0, %v3046
      %v3048 = vpop.f32.mrf.mxu0
      %v3049 = vpop.f32.mrf.mxu0
      %v3050 = vadd.f32 0.0, %v3049
      %v3051 = vpop.f32.mrf.mxu0
      %3052 = vmatprep.mubr.bf16.mxu0 %v2446
      %3053 = vmatmul.mubr.bf16.gmra.mxu0 %v2445
      %v3054 = vpop.f32.mrf.mxu0
      %v3055 = vadd.f32 0.0, %v3054
      %v3056 = vpop.f32.mrf.mxu0
      %v3057 = vpop.f32.mrf.mxu0
      %v3058 = vadd.f32 0.0, %v3057
      %v3059 = vpop.f32.mrf.mxu0
      %3060 = vmatprep.mubr.bf16.mxu0 %v2455
      %3061 = vmatmul.mubr.bf16.gmra.mxu0 %v2454
      %v3062 = vpop.f32.mrf.mxu0
      %v3063 = vadd.f32 0.0, %v3062
      %v3064 = vpop.f32.mrf.mxu0
      %v3065 = vpop.f32.mrf.mxu0
      %v3066 = vadd.f32 0.0, %v3065
      %v3067 = vpop.f32.mrf.mxu0
      %3068 = vmatprep.mubr.bf16.mxu0 %v2464
      %3069 = vmatmul.mubr.bf16.gmra.mxu0 %v2463
      %v3070 = vpop.f32.mrf.mxu0
      %v3071 = vadd.f32 0.0, %v3070
      %v3072 = vpop.f32.mrf.mxu0
      %v3073 = vpop.f32.mrf.mxu0
      %v3074 = vadd.f32 0.0, %v3073
      %v3075 = vpop.f32.mrf.mxu0
      %3076 = vmatprep.mubr.bf16.mxu0 %v2473
      %3077 = vmatmul.mubr.bf16.gmra.mxu0 %v2472
      %v3078 = vpop.f32.mrf.mxu0
      %v3079 = vadd.f32 0.0, %v3078
      %v3080 = vpop.f32.mrf.mxu0
      %v3081 = vpop.f32.mrf.mxu0
      %v3082 = vadd.f32 0.0, %v3081
      %v3083 = vpop.f32.mrf.mxu0
      %3084 = vmatprep.mubr.bf16.mxu0 %v2482
      %3085 = vmatmul.mubr.bf16.gmra.mxu0 %v2481
      %v3086 = vpop.f32.mrf.mxu0
      %v3087 = vadd.f32 0.0, %v3086
      %v3088 = vpop.f32.mrf.mxu0
      %v3089 = vpop.f32.mrf.mxu0
      %v3090 = vadd.f32 0.0, %v3089
      %v3091 = vpop.f32.mrf.mxu0
      %3092 = vmatprep.mubr.bf16.mxu0 %v2491
      %3093 = vmatmul.mubr.bf16.gmra.mxu0 %v2490
      %v3094 = vpop.f32.mrf.mxu0
      %v3095 = vadd.f32 0.0, %v3094
      %v3096 = vpop.f32.mrf.mxu0
      %v3097 = vpop.f32.mrf.mxu0
      %v3098 = vadd.f32 0.0, %v3097
      %v3099 = vpop.f32.mrf.mxu0
      %3100 = vmatprep.mubr.bf16.mxu0 %v2500
      %3101 = vmatmul.mubr.bf16.gmra.mxu0 %v2499
      %v3102 = vpop.f32.mrf.mxu0
      %v3103 = vadd.f32 0.0, %v3102
      %v3104 = vpop.f32.mrf.mxu0
      %v3105 = vpop.f32.mrf.mxu0
      %v3106 = vadd.f32 0.0, %v3105
      %v3107 = vpop.f32.mrf.mxu0
      %3108 = vdwg.mxu0
      %3109 = vmatprep.subr.bf16.mxu0 0
      %3110 = vmatpush1.bf16.msra.mxu0 %v2891
      %3111 = vmatprep.subr.bf16.mxu0 0
      %3112 = vmatpush1.bf16.msra.mxu0 %v2890
      %3113 = vmatprep.subr.bf16.mxu0 0
      %3114 = vmatpush1.bf16.msra.mxu0 %v2889
      %3115 = vmatprep.subr.bf16.mxu0 0
      %3116 = vmatpush1.bf16.msra.mxu0 %v2888
      %3117 = vmatprep.subr.bf16.mxu0 0
      %3118 = vmatpush1.bf16.msra.mxu0 %v2887
      %3119 = vmatprep.subr.bf16.mxu0 0
      %3120 = vmatpush1.bf16.msra.mxu0 %v2886
      %3121 = vmatprep.subr.bf16.mxu0 0
      %3122 = vmatpush1.bf16.msra.mxu0 %v2885
      %3123 = vmatprep.subr.bf16.mxu0 0
      %3124 = vmatpush1.bf16.msra.mxu0 %v2884
      %3125 = vmatprep.subr.bf16.mxu0 0
      %3126 = vmatpush2.bf16.msra.mxu0 %v2899
      %3127 = vmatprep.subr.bf16.mxu0 0
      %3128 = vmatpush2.bf16.msra.mxu0 %v2898
      %3129 = vmatprep.subr.bf16.mxu0 0
      %3130 = vmatpush2.bf16.msra.mxu0 %v2897
      %3131 = vmatprep.subr.bf16.mxu0 0
      %3132 = vmatpush2.bf16.msra.mxu0 %v2896
      %3133 = vmatprep.subr.bf16.mxu0 0
      %3134 = vmatpush2.bf16.msra.mxu0 %v2895
      %3135 = vmatprep.subr.bf16.mxu0 0
      %3136 = vmatpush2.bf16.msra.mxu0 %v2894
      %3137 = vmatprep.subr.bf16.mxu0 0
      %3138 = vmatpush2.bf16.msra.mxu0 %v2893
      %3139 = vmatprep.subr.bf16.mxu0 0
      %3140 = vmatpush2.bf16.msra.mxu0 %v2892
      %3141 = vmatprep.mubr.bf16.mxu0 %v2439
      %3142 = vmatmul.mubr.bf16.gmra.mxu0 %v2438
      %v3143 = vpop.f32.mrf.mxu0
      %v3144 = vadd.f32 %v3047, %v3143
      %v3145 = vpop.f32.mrf.mxu0
      %v3146 = vpop.f32.mrf.mxu0
      %v3147 = vadd.f32 %v3050, %v3146
      %v3148 = vpop.f32.mrf.mxu0
      %3149 = vmatprep.mubr.bf16.mxu0 %v2448
      %3150 = vmatmul.mubr.bf16.gmra.mxu0 %v2447
      %v3151 = vpop.f32.mrf.mxu0
      %v3152 = vadd.f32 %v3055, %v3151
      %v3153 = vpop.f32.mrf.mxu0
      %v3154 = vpop.f32.mrf.mxu0
      %v3155 = vadd.f32 %v3058, %v3154
      %v3156 = vpop.f32.mrf.mxu0
      %3157 = vmatprep.mubr.bf16.mxu0 %v2457
      %3158 = vmatmul.mubr.bf16.gmra.mxu0 %v2456
      %v3159 = vpop.f32.mrf.mxu0
      %v3160 = vadd.f32 %v3063, %v3159
      %v3161 = vpop.f32.mrf.mxu0
      %v3162 = vpop.f32.mrf.mxu0
      %v3163 = vadd.f32 %v3066, %v3162
      %v3164 = vpop.f32.mrf.mxu0
      %3165 = vmatprep.mubr.bf16.mxu0 %v2466
      %3166 = vmatmul.mubr.bf16.gmra.mxu0 %v2465
      %v3167 = vpop.f32.mrf.mxu0
      %v3168 = vadd.f32 %v3071, %v3167
      %v3169 = vpop.f32.mrf.mxu0
      %v3170 = vpop.f32.mrf.mxu0
      %v3171 = vadd.f32 %v3074, %v3170
      %v3172 = vpop.f32.mrf.mxu0
      %3173 = vmatprep.mubr.bf16.mxu0 %v2475
      %3174 = vmatmul.mubr.bf16.gmra.mxu0 %v2474
      %v3175 = vpop.f32.mrf.mxu0
      %v3176 = vadd.f32 %v3079, %v3175
      %v3177 = vpop.f32.mrf.mxu0
      %v3178 = vpop.f32.mrf.mxu0
      %v3179 = vadd.f32 %v3082, %v3178
      %v3180 = vpop.f32.mrf.mxu0
      %3181 = vmatprep.mubr.bf16.mxu0 %v2484
      %3182 = vmatmul.mubr.bf16.gmra.mxu0 %v2483
      %v3183 = vpop.f32.mrf.mxu0
      %v3184 = vadd.f32 %v3087, %v3183
      %v3185 = vpop.f32.mrf.mxu0
      %v3186 = vpop.f32.mrf.mxu0
      %v3187 = vadd.f32 %v3090, %v3186
      %v3188 = vpop.f32.mrf.mxu0
      %3189 = vmatprep.mubr.bf16.mxu0 %v2493
      %3190 = vmatmul.mubr.bf16.gmra.mxu0 %v2492
      %v3191 = vpop.f32.mrf.mxu0
      %v3192 = vadd.f32 %v3095, %v3191
      %v3193 = vpop.f32.mrf.mxu0
      %v3194 = vpop.f32.mrf.mxu0
      %v3195 = vadd.f32 %v3098, %v3194
      %v3196 = vpop.f32.mrf.mxu0
      %3197 = vmatprep.mubr.bf16.mxu0 %v2502
      %3198 = vmatmul.mubr.bf16.gmra.mxu0 %v2501
      %v3199 = vpop.f32.mrf.mxu0
      %v3200 = vadd.f32 %v3103, %v3199
      %v3201 = vpop.f32.mrf.mxu0
      %v3202 = vpop.f32.mrf.mxu0
      %v3203 = vadd.f32 %v3106, %v3202
      %v3204 = vpop.f32.mrf.mxu0
      %3205 = vdwg.mxu0
      %3206 = vmatprep.subr.bf16.mxu0 0
      %3207 = vmatpush1.bf16.msra.mxu0 %v2907
      %3208 = vmatprep.subr.bf16.mxu0 0
      %3209 = vmatpush1.bf16.msra.mxu0 %v2906
      %3210 = vmatprep.subr.bf16.mxu0 0
      %3211 = vmatpush1.bf16.msra.mxu0 %v2905
      %3212 = vmatprep.subr.bf16.mxu0 0
      %3213 = vmatpush1.bf16.msra.mxu0 %v2904
      %3214 = vmatprep.subr.bf16.mxu0 0
      %3215 = vmatpush1.bf16.msra.mxu0 %v2903
      %3216 = vmatprep.subr.bf16.mxu0 0
      %3217 = vmatpush1.bf16.msra.mxu0 %v2902
      %3218 = vmatprep.subr.bf16.mxu0 0
      %3219 = vmatpush1.bf16.msra.mxu0 %v2901
      %3220 = vmatprep.subr.bf16.mxu0 0
      %3221 = vmatpush1.bf16.msra.mxu0 %v2900
      %3222 = vmatprep.subr.bf16.mxu0 0
      %3223 = vmatpush2.bf16.msra.mxu0 %v2915
      %3224 = vmatprep.subr.bf16.mxu0 0
      %3225 = vmatpush2.bf16.msra.mxu0 %v2914
      %3226 = vmatprep.subr.bf16.mxu0 0
      %3227 = vmatpush2.bf16.msra.mxu0 %v2913
      %3228 = vmatprep.subr.bf16.mxu0 0
      %3229 = vmatpush2.bf16.msra.mxu0 %v2912
      %3230 = vmatprep.subr.bf16.mxu0 0
      %3231 = vmatpush2.bf16.msra.mxu0 %v2911
      %3232 = vmatprep.subr.bf16.mxu0 0
      %3233 = vmatpush2.bf16.msra.mxu0 %v2910
      %3234 = vmatprep.subr.bf16.mxu0 0
      %3235 = vmatpush2.bf16.msra.mxu0 %v2909
      %3236 = vmatprep.subr.bf16.mxu0 0
      %3237 = vmatpush2.bf16.msra.mxu0 %v2908
      %3238 = vmatprep.mubr.bf16.mxu0 %v2441
      %3239 = vmatmul.mubr.bf16.gmra.mxu0 %v2440
      %v3240 = vpop.f32.mrf.mxu0
      %v3241 = vadd.f32 %v3144, %v3240
      %v3242 = vpop.f32.mrf.mxu0
      %v3243 = vpop.f32.mrf.mxu0
      %v3244 = vadd.f32 %v3147, %v3243
      %v3245 = vpop.f32.mrf.mxu0
      %3246 = vmatprep.mubr.bf16.mxu0 %v2450
      %3247 = vmatmul.mubr.bf16.gmra.mxu0 %v2449
      %v3248 = vpop.f32.mrf.mxu0
      %v3249 = vadd.f32 %v3152, %v3248
      %v3250 = vpop.f32.mrf.mxu0
      %v3251 = vpop.f32.mrf.mxu0
      %v3252 = vadd.f32 %v3155, %v3251
      %v3253 = vpop.f32.mrf.mxu0
      %3254 = vmatprep.mubr.bf16.mxu0 %v2459
      %3255 = vmatmul.mubr.bf16.gmra.mxu0 %v2458
      %v3256 = vpop.f32.mrf.mxu0
      %v3257 = vadd.f32 %v3160, %v3256
      %v3258 = vpop.f32.mrf.mxu0
      %v3259 = vpop.f32.mrf.mxu0
      %v3260 = vadd.f32 %v3163, %v3259
      %v3261 = vpop.f32.mrf.mxu0
      %3262 = vmatprep.mubr.bf16.mxu0 %v2468
      %3263 = vmatmul.mubr.bf16.gmra.mxu0 %v2467
      %v3264 = vpop.f32.mrf.mxu0
      %v3265 = vadd.f32 %v3168, %v3264
      %v3266 = vpop.f32.mrf.mxu0
      %v3267 = vpop.f32.mrf.mxu0
      %v3268 = vadd.f32 %v3171, %v3267
      %v3269 = vpop.f32.mrf.mxu0
      %3270 = vmatprep.mubr.bf16.mxu0 %v2477
      %3271 = vmatmul.mubr.bf16.gmra.mxu0 %v2476
      %v3272 = vpop.f32.mrf.mxu0
      %v3273 = vadd.f32 %v3176, %v3272
      %v3274 = vpop.f32.mrf.mxu0
      %v3275 = vpop.f32.mrf.mxu0
      %v3276 = vadd.f32 %v3179, %v3275
      %v3277 = vpop.f32.mrf.mxu0
      %3278 = vmatprep.mubr.bf16.mxu0 %v2486
      %3279 = vmatmul.mubr.bf16.gmra.mxu0 %v2485
      %v3280 = vpop.f32.mrf.mxu0
      %v3281 = vadd.f32 %v3184, %v3280
      %v3282 = vpop.f32.mrf.mxu0
      %v3283 = vpop.f32.mrf.mxu0
      %v3284 = vadd.f32 %v3187, %v3283
      %v3285 = vpop.f32.mrf.mxu0
      %3286 = vmatprep.mubr.bf16.mxu0 %v2495
      %3287 = vmatmul.mubr.bf16.gmra.mxu0 %v2494
      %v3288 = vpop.f32.mrf.mxu0
      %v3289 = vadd.f32 %v3192, %v3288
      %v3290 = vpop.f32.mrf.mxu0
      %v3291 = vpop.f32.mrf.mxu0
      %v3292 = vadd.f32 %v3195, %v3291
      %v3293 = vpop.f32.mrf.mxu0
      %3294 = vmatprep.mubr.bf16.mxu0 %v2504
      %3295 = vmatmul.mubr.bf16.gmra.mxu0 %v2503
      %v3296 = vpop.f32.mrf.mxu0
      %v3297 = vadd.f32 %v3200, %v3296
      %v3298 = vpop.f32.mrf.mxu0
      %v3299 = vpop.f32.mrf.mxu0
      %v3300 = vadd.f32 %v3203, %v3299
      %v3301 = vpop.f32.mrf.mxu0
      %3302 = vdwg.mxu0
      %3303 = vmatprep.subr.bf16.mxu0 0
      %3304 = vmatpush1.bf16.msra.mxu0 %v2923
      %3305 = vmatprep.subr.bf16.mxu0 0
      %3306 = vmatpush1.bf16.msra.mxu0 %v2922
      %3307 = vmatprep.subr.bf16.mxu0 0
      %3308 = vmatpush1.bf16.msra.mxu0 %v2921
      %3309 = vmatprep.subr.bf16.mxu0 0
      %3310 = vmatpush1.bf16.msra.mxu0 %v2920
      %3311 = vmatprep.subr.bf16.mxu0 0
      %3312 = vmatpush1.bf16.msra.mxu0 %v2919
      %3313 = vmatprep.subr.bf16.mxu0 0
      %3314 = vmatpush1.bf16.msra.mxu0 %v2918
      %3315 = vmatprep.subr.bf16.mxu0 0
      %3316 = vmatpush1.bf16.msra.mxu0 %v2917
      %3317 = vmatprep.subr.bf16.mxu0 0
      %3318 = vmatpush1.bf16.msra.mxu0 %v2916
      %3319 = vmatprep.subr.bf16.mxu0 0
      %3320 = vmatpush2.bf16.msra.mxu0 %v2931
      %3321 = vmatprep.subr.bf16.mxu0 0
      %3322 = vmatpush2.bf16.msra.mxu0 %v2930
      %3323 = vmatprep.subr.bf16.mxu0 0
      %3324 = vmatpush2.bf16.msra.mxu0 %v2929
      %3325 = vmatprep.subr.bf16.mxu0 0
      %3326 = vmatpush2.bf16.msra.mxu0 %v2928
      %3327 = vmatprep.subr.bf16.mxu0 0
      %3328 = vmatpush2.bf16.msra.mxu0 %v2927
      %3329 = vmatprep.subr.bf16.mxu0 0
      %3330 = vmatpush2.bf16.msra.mxu0 %v2926
      %3331 = vmatprep.subr.bf16.mxu0 0
      %3332 = vmatpush2.bf16.msra.mxu0 %v2925
      %3333 = vmatprep.subr.bf16.mxu0 0
      %3334 = vmatpush2.bf16.msra.mxu0 %v2924
      %3335 = vmatprep.mubr.bf16.mxu0 %v2443
      %3336 = vmatmul.mubr.bf16.gmra.mxu0 %v2442
      %v3337 = vpop.f32.mrf.mxu0
      %v3338 = vadd.f32 %v3241, %v3337
      %v3339 = vpop.f32.mrf.mxu0
      %v3340 = vpop.f32.mrf.mxu0
      %v3341 = vadd.f32 %v3244, %v3340
      %v3342 = vpop.f32.mrf.mxu0
      %3343 = vmatprep.mubr.bf16.mxu0 %v2452
      %3344 = vmatmul.mubr.bf16.gmra.mxu0 %v2451
      %v3345 = vpop.f32.mrf.mxu0
      %v3346 = vadd.f32 %v3249, %v3345
      %v3347 = vpop.f32.mrf.mxu0
      %v3348 = vpop.f32.mrf.mxu0
      %v3349 = vadd.f32 %v3252, %v3348
      %v3350 = vpop.f32.mrf.mxu0
      %3351 = vmatprep.mubr.bf16.mxu0 %v2461
      %3352 = vmatmul.mubr.bf16.gmra.mxu0 %v2460
      %v3353 = vpop.f32.mrf.mxu0
      %v3354 = vadd.f32 %v3257, %v3353
      %v3355 = vpop.f32.mrf.mxu0
      %v3356 = vpop.f32.mrf.mxu0
      %v3357 = vadd.f32 %v3260, %v3356
      %v3358 = vpop.f32.mrf.mxu0
      %3359 = vmatprep.mubr.bf16.mxu0 %v2470
      %3360 = vmatmul.mubr.bf16.gmra.mxu0 %v2469
      %v3361 = vpop.f32.mrf.mxu0
      %v3362 = vadd.f32 %v3265, %v3361
      %v3363 = vpop.f32.mrf.mxu0
      %v3364 = vpop.f32.mrf.mxu0
      %v3365 = vadd.f32 %v3268, %v3364
      %v3366 = vpop.f32.mrf.mxu0
      %3367 = vmatprep.mubr.bf16.mxu0 %v2479
      %3368 = vmatmul.mubr.bf16.gmra.mxu0 %v2478
      %v3369 = vpop.f32.mrf.mxu0
      %v3370 = vadd.f32 %v3273, %v3369
      %v3371 = vpop.f32.mrf.mxu0
      %v3372 = vpop.f32.mrf.mxu0
      %v3373 = vadd.f32 %v3276, %v3372
      %v3374 = vpop.f32.mrf.mxu0
      %3375 = vmatprep.mubr.bf16.mxu0 %v2488
      %3376 = vmatmul.mubr.bf16.gmra.mxu0 %v2487
      %v3377 = vpop.f32.mrf.mxu0
      %v3378 = vadd.f32 %v3281, %v3377
      %v3379 = vpop.f32.mrf.mxu0
      %v3380 = vpop.f32.mrf.mxu0
      %v3381 = vadd.f32 %v3284, %v3380
      %v3382 = vpop.f32.mrf.mxu0
      %3383 = vmatprep.mubr.bf16.mxu0 %v2497
      %3384 = vmatmul.mubr.bf16.gmra.mxu0 %v2496
      %v3385 = vpop.f32.mrf.mxu0
      %v3386 = vadd.f32 %v3289, %v3385
      %v3387 = vpop.f32.mrf.mxu0
      %v3388 = vpop.f32.mrf.mxu0
      %v3389 = vadd.f32 %v3292, %v3388
      %v3390 = vpop.f32.mrf.mxu0
      %3391 = vmatprep.mubr.bf16.mxu0 %v2506
      %3392 = vmatmul.mubr.bf16.gmra.mxu0 %v2505
      %v3393 = vpop.f32.mrf.mxu0
      %v3394 = vadd.f32 %v3297, %v3393
      %v3395 = vpop.f32.mrf.mxu0
      %v3396 = vpop.f32.mrf.mxu0
      %v3397 = vadd.f32 %v3300, %v3396
      %v3398 = vpop.f32.mrf.mxu0
      %3399 = vdwg.mxu0
      %3400 = vmatprep.subr.bf16.mxu0 0
      %3401 = vmatpush1.bf16.msra.mxu0 %v2939
      %3402 = vmatprep.subr.bf16.mxu0 0
      %3403 = vmatpush1.bf16.msra.mxu0 %v2938
      %3404 = vmatprep.subr.bf16.mxu0 0
      %3405 = vmatpush1.bf16.msra.mxu0 %v2937
      %3406 = vmatprep.subr.bf16.mxu0 0
      %3407 = vmatpush1.bf16.msra.mxu0 %v2936
      %3408 = vmatprep.subr.bf16.mxu0 0
      %3409 = vmatpush1.bf16.msra.mxu0 %v2935
      %3410 = vmatprep.subr.bf16.mxu0 0
      %3411 = vmatpush1.bf16.msra.mxu0 %v2934
      %3412 = vmatprep.subr.bf16.mxu0 0
      %3413 = vmatpush1.bf16.msra.mxu0 %v2933
      %3414 = vmatprep.subr.bf16.mxu0 0
      %3415 = vmatpush1.bf16.msra.mxu0 %v2932
      %3416 = vmatprep.subr.bf16.mxu0 0
      %3417 = vmatpush2.bf16.msra.mxu0 0
      %3418 = vmatprep.subr.bf16.mxu0 0
      %3419 = vmatpush2.bf16.msra.mxu0 0
      %3420 = vmatprep.subr.bf16.mxu0 0
      %3421 = vmatpush2.bf16.msra.mxu0 0
      %3422 = vmatprep.subr.bf16.mxu0 0
      %3423 = vmatpush2.bf16.msra.mxu0 0
      %3424 = vmatprep.subr.bf16.mxu0 0
      %3425 = vmatpush2.bf16.msra.mxu0 0
      %3426 = vmatprep.subr.bf16.mxu0 0
      %3427 = vmatpush2.bf16.msra.mxu0 0
      %3428 = vmatprep.subr.bf16.mxu0 0
      %3429 = vmatpush2.bf16.msra.mxu0 0
      %3430 = vmatprep.subr.bf16.mxu0 0
      %3431 = vmatpush2.bf16.msra.mxu0 0
      %3432 = vmatprep.mubr.bf16.mxu0 0
      %3433 = vmatmul.mubr.bf16.gmra.mxu0 %v2444
      %v3434 = vpop.f32.mrf.mxu0
      %v3435 = vadd.f32 %v3338, %v3434
      %v3436 = vpop.f32.mrf.mxu0
      %v3437 = vpop.f32.mrf.mxu0
      %v3438 = vadd.f32 %v3341, %v3437
      %v3439 = vpop.f32.mrf.mxu0
      %3440 = vmatprep.mubr.bf16.mxu0 0
      %3441 = vmatmul.mubr.bf16.gmra.mxu0 %v2453
      %v3442 = vpop.f32.mrf.mxu0
      %v3443 = vadd.f32 %v3346, %v3442
      %v3444 = vpop.f32.mrf.mxu0
      %v3445 = vpop.f32.mrf.mxu0
      %v3446 = vadd.f32 %v3349, %v3445
      %v3447 = vpop.f32.mrf.mxu0
      %3448 = vmatprep.mubr.bf16.mxu0 0
      %3449 = vmatmul.mubr.bf16.gmra.mxu0 %v2462
      %v3450 = vpop.f32.mrf.mxu0
      %v3451 = vadd.f32 %v3354, %v3450
      %v3452 = vpop.f32.mrf.mxu0
      %v3453 = vpop.f32.mrf.mxu0
      %v3454 = vadd.f32 %v3357, %v3453
      %v3455 = vpop.f32.mrf.mxu0
      %3456 = vmatprep.mubr.bf16.mxu0 0
      %3457 = vmatmul.mubr.bf16.gmra.mxu0 %v2471
      %v3458 = vpop.f32.mrf.mxu0
      %v3459 = vadd.f32 %v3362, %v3458
      %v3460 = vpop.f32.mrf.mxu0
      %v3461 = vpop.f32.mrf.mxu0
      %v3462 = vadd.f32 %v3365, %v3461
      %v3463 = vpop.f32.mrf.mxu0
      %3464 = vmatprep.mubr.bf16.mxu0 0
      %3465 = vmatmul.mubr.bf16.gmra.mxu0 %v2480
      %v3466 = vpop.f32.mrf.mxu0
      %v3467 = vadd.f32 %v3370, %v3466
      %v3468 = vpop.f32.mrf.mxu0
      %v3469 = vpop.f32.mrf.mxu0
      %v3470 = vadd.f32 %v3373, %v3469
      %v3471 = vpop.f32.mrf.mxu0
      %3472 = vmatprep.mubr.bf16.mxu0 0
      %3473 = vmatmul.mubr.bf16.gmra.mxu0 %v2489
      %v3474 = vpop.f32.mrf.mxu0
      %v3475 = vadd.f32 %v3378, %v3474
      %v3476 = vpop.f32.mrf.mxu0
      %v3477 = vpop.f32.mrf.mxu0
      %v3478 = vadd.f32 %v3381, %v3477
      %v3479 = vpop.f32.mrf.mxu0
      %3480 = vmatprep.mubr.bf16.mxu0 0
      %3481 = vmatmul.mubr.bf16.gmra.mxu0 %v2498
      %v3482 = vpop.f32.mrf.mxu0
      %v3483 = vadd.f32 %v3386, %v3482
      %v3484 = vpop.f32.mrf.mxu0
      %v3485 = vpop.f32.mrf.mxu0
      %v3486 = vadd.f32 %v3389, %v3485
      %v3487 = vpop.f32.mrf.mxu0
      %3488 = vmatprep.mubr.bf16.mxu0 0
      %3489 = vmatmul.mubr.bf16.gmra.mxu0 %v2507
      %v3490 = vpop.f32.mrf.mxu0
      %v3491 = vadd.f32 %v3394, %v3490
      %v3492 = vpop.f32.mrf.mxu0
      %v3493 = vpop.f32.mrf.mxu0
      %v3494 = vadd.f32 %v3397, %v3493
      %v3495 = vpop.f32.mrf.mxu0
      %3496 = vdwg.mxu0
      %v3497 = vpack.c.bf16 %v3438, %v3435
      %v3498 = vpack.c.bf16 %v3446, %v3443
      %v3499 = vpack.c.bf16 %v3454, %v3451
      %v3500 = vpack.c.bf16 %v3462, %v3459
      %v3501 = vpack.c.bf16 %v3470, %v3467
      %v3502 = vpack.c.bf16 %v3478, %v3475
      %v3503 = vpack.c.bf16 %v3486, %v3483
      %v3504 = vpack.c.bf16 %v3494, %v3491
      %v3513 = vunpack.c.l.b16 %v3497
      %v3514 = vunpack.c.h.b16 %v3497
      %v3515 = vunpack.c.l.b16 %v3498
      %v3516 = vunpack.c.h.b16 %v3498
      %v3517 = vunpack.c.l.b16 %v3499
      %v3518 = vunpack.c.h.b16 %v3499
      %v3519 = vunpack.c.l.b16 %v3500
      %v3520 = vunpack.c.h.b16 %v3500
      %v3521 = vunpack.c.l.b16 %v3501
      %v3522 = vunpack.c.h.b16 %v3501
      %v3523 = vunpack.c.l.b16 %v3502
      %v3524 = vunpack.c.h.b16 %v3502
      %v3525 = vunpack.c.l.b16 %v3503
      %v3526 = vunpack.c.h.b16 %v3503
      %v3527 = vunpack.c.l.b16 %v3504
      %v3528 = vunpack.c.h.b16 %v3504
      %v3529 = vpack.c.b16 %v3513, %v3513
      %v3530 = vpack.c.b16 %v3514, %v3514
      %v3531 = vpack.c.b16 %v3515, %v3515
      %v3532 = vpack.c.b16 %v3516, %v3516
      %v3533 = vpack.c.b16 %v3517, %v3517
      %v3534 = vpack.c.b16 %v3518, %v3518
      %v3535 = vpack.c.b16 %v3519, %v3519
      %v3536 = vpack.c.b16 %v3520, %v3520
      %v3537 = vpack.c.b16 %v3521, %v3521
      %v3538 = vpack.c.b16 %v3522, %v3522
      %v3539 = vpack.c.b16 %v3523, %v3523
      %v3540 = vpack.c.b16 %v3524, %v3524
      %v3541 = vpack.c.b16 %v3525, %v3525
      %v3542 = vpack.c.b16 %v3526, %v3526
      %v3543 = vpack.c.b16 %v3527, %v3527
      %v3544 = vpack.c.b16 %v3528, %v3528
      %3561 = vst [vmem:[%s261] sm:$0xf] %v3529
      %3562 = vst [vmem:[%s261 + $0x4] sm:$0xf] %v3530
      %3563 = vst [vmem:[%s261 + $0x8] sm:$0xf] %v3531
      %3564 = vst [vmem:[%s261 + $0xc] sm:$0xf] %v3532
      %3565 = vst [vmem:[%s261 + $0x10] sm:$0xf] %v3533
      %3566 = vst [vmem:[%s261 + $0x14] sm:$0xf] %v3534
      %3567 = vst [vmem:[%s261 + $0x18] sm:$0xf] %v3535
      %3568 = vst [vmem:[%s261 + $0x1c] sm:$0xf] %v3536
      %3569 = vst [vmem:[%s261 + $0x20] sm:$0xf] %v3537
      %3570 = vst [vmem:[%s261 + $0x24] sm:$0xf] %v3538
      %3571 = vst [vmem:[%s261 + $0x28] sm:$0xf] %v3539
      %3572 = vst [vmem:[%s261 + $0x2c] sm:$0xf] %v3540
      %3573 = vst [vmem:[%s261 + $0x30] sm:$0xf] %v3541
      %3574 = vst [vmem:[%s261 + $0x34] sm:$0xf] %v3542
      %3575 = vst [vmem:[%s261 + $0x38] sm:$0xf] %v3543
      %3576 = vst [vmem:[%s261 + $0x3c] sm:$0xf] %v3544
      %v3577 = vadd.f32 %v3435, %v3438
      %v3578 = vadd.f32 %v3577, %v3443
      %v3579 = vadd.f32 %v3578, %v3446
      %v3580 = vadd.f32 %v3579, %v3451
      %v3581 = vadd.f32 %v3580, %v3454
      %v3582 = vadd.f32 %v3581, %v3459
      %v3583 = vadd.f32 %v3582, %v3462
      %v3584 = vadd.f32 %v3583, %v3467
      %v3585 = vadd.f32 %v3584, %v3470
      %v3586 = vadd.f32 %v3585, %v3475
      %v3587 = vadd.f32 %v3586, %v3478
      %v3588 = vadd.f32 %v3587, %v3483
      %v3589 = vadd.f32 %v3588, %v3486
      %v3590 = vadd.f32 %v3589, %v3491
      %v3591 = vadd.f32 %v3590, %v3494
      %v3592 = vrot.slane %v3591, 4
      %v3593 = vadd.f32 %v3591, %v3592
      %v3594 = vrot.slane %v3593, 2
      %v3595 = vadd.f32 %v3593, %v3594
      %v3596 = vrot.slane %v3595, 1
      %v3597 = vadd.f32 %v3595, %v3596
      %3598 = vst [vmem:[%s270] sm:$0x1] %v3597
      %v3599 = vmul.f32 %v3435, %v3435
      %v3600 = vmul.f32 %v3438, %v3438
      %v3601 = vmul.f32 %v3443, %v3443
      %v3602 = vmul.f32 %v3446, %v3446
      %v3603 = vmul.f32 %v3451, %v3451
      %v3604 = vmul.f32 %v3454, %v3454
      %v3605 = vmul.f32 %v3459, %v3459
      %v3606 = vmul.f32 %v3462, %v3462
      %v3607 = vmul.f32 %v3467, %v3467
      %v3608 = vmul.f32 %v3470, %v3470
      %v3609 = vmul.f32 %v3475, %v3475
      %v3610 = vmul.f32 %v3478, %v3478
      %v3611 = vmul.f32 %v3483, %v3483
      %v3612 = vmul.f32 %v3486, %v3486
      %v3613 = vmul.f32 %v3491, %v3491
      %v3614 = vmul.f32 %v3494, %v3494
      %v3615 = vadd.f32 %v3599, %v3600
      %v3616 = vadd.f32 %v3615, %v3601
      %v3617 = vadd.f32 %v3616, %v3602
      %v3618 = vadd.f32 %v3617, %v3603
      %v3619 = vadd.f32 %v3618, %v3604
      %v3620 = vadd.f32 %v3619, %v3605
      %v3621 = vadd.f32 %v3620, %v3606
      %v3622 = vadd.f32 %v3621, %v3607
      %v3623 = vadd.f32 %v3622, %v3608
      %v3624 = vadd.f32 %v3623, %v3609
      %v3625 = vadd.f32 %v3624, %v3610
      %v3626 = vadd.f32 %v3625, %v3611
      %v3627 = vadd.f32 %v3626, %v3612
      %v3628 = vadd.f32 %v3627, %v3613
      %v3629 = vadd.f32 %v3628, %v3614
      %v3630 = vrot.slane %v3629, 4
      %v3631 = vadd.f32 %v3629, %v3630
      %v3632 = vrot.slane %v3631, 2
      %v3633 = vadd.f32 %v3631, %v3632
      %v3634 = vrot.slane %v3633, 1
      %v3635 = vadd.f32 %v3633, %v3634
      %3636 = vst [vmem:[%s270 + $0x1] sm:$0x1] %v3635
      %s3637 = smul.u32 8, %s22
      %p3638 = scmp.lt.s32.totalorder %s21, 1
      %s3639 = scalar_select %p3638, %s21, 1
      %p3640 = scmp.lt.s32.totalorder %s3637, 15
      %s3641 = scalar_select %p3640, %s3637, 15
      %s3642 = smul.addr %s3641, 2
      %s3643 = smul.addr %s3639, 32
      %s3644 = sadd.s32 %s3642, %s3643
      %s3645 = smul.addr %s3644, 4
      %s3646 = scalar_lea.vmem %s4, %s3645
      %p3647 = scmp.lt.s32.totalorder %s21, 1
      %s3648 = scalar_select %p3647, %s21, 1
      %p3649 = scmp.lt.s32.totalorder %s22, 1
      %s3650 = scalar_select %p3649, %s22, 1
      %s3651 = smul.addr %s3648, 2
      %s3652 = sadd.s32 %s3650, %s3651
      %s3653 = smul.addr %s3652, 2
      %s3654 = scalar_lea.vmem %s5, %s3653
      // Predicated region
      $region53: #{resblock_forward.3} parent=35 // pred_check
        %p3655 = pneg %p138
      $region54: #{resblock_forward.3} parent=35 // pred_check_branch
        %3657 = sbr.rel (%p3655) target = $region56
      $region55: #{resblock_forward.3} parent=35 // pred_region
        %s3658 = smul.u32 8, %s22
      $region56: #{resblock_forward.3} parent=35 // pred_fallthru
        _
      // Predicated region
      $region57: #{resblock_forward.3} parent=35 // pred_check
        %p3659 = pneg %p166
      $region58: #{resblock_forward.3} parent=35 // pred_check_branch
        %3661 = sbr.rel (%p3659) target = $region60
      $region59: #{resblock_forward.3} parent=35 // pred_region
        _
      $region60: #{resblock_forward.3} parent=35 // pred_fallthru
        _
    $region36: #{resblock_forward.3} parent=5 // pred_fallthru
      _
    %p3662 = scmp.le.s32.totalorder 2, %s12
    // Predicated region
    $region61: #{resblock_forward.3} parent=5 // pred_check
      %p3663 = pneg %p3662
    $region62: #{resblock_forward.3} parent=5 // pred_check_branch
      %3665 = sbr.rel (%p3663) target = $region64
    $region63: #{resblock_forward.3} parent=5 // pred_region
      %s3666 = ssub.s32 %s12, 2
      // Predicated region
      $region65: #{resblock_forward.3} parent=63 // pred_check
        %p3667 = pneg %p144
      $region66: #{resblock_forward.3} parent=63 // pred_check_branch
        %3669 = sbr.rel (%p3667) target = $region68
      $region67: #{resblock_forward.3} parent=63 // pred_region
        %s3670 = smul.u32 8, %s24
        %p3671 = scmp.lt.s32.totalorder %s23, 1
        %s3672 = scalar_select %p3671, %s23, 1
        %p3673 = scmp.lt.s32.totalorder %s3670, 15
        %s3674 = scalar_select %p3673, %s3670, 15
        %s3675 = smul.addr %s3674, 2
        %s3676 = smul.addr %s3672, 32
        %s3677 = sadd.s32 %s3675, %s3676
        %s3678 = smul.addr %s3677, 4
        %s3679 = scalar_lea.vmem %s4, %s3678
      $region68: #{resblock_forward.3} parent=63 // pred_fallthru
        _
      // Predicated region
      $region69: #{resblock_forward.3} parent=63 // pred_check
        %p3680 = pneg %p172
      $region70: #{resblock_forward.3} parent=63 // pred_check_branch
        %3682 = sbr.rel (%p3680) target = $region72
      $region71: #{resblock_forward.3} parent=63 // pred_region
        %p3683 = scmp.lt.s32.totalorder %s23, 1
        %s3684 = scalar_select %p3683, %s23, 1
        %p3685 = scmp.lt.s32.totalorder %s24, 1
        %s3686 = scalar_select %p3685, %s24, 1
        %s3687 = smul.addr %s3684, 2
        %s3688 = sadd.s32 %s3686, %s3687
        %s3689 = smul.addr %s3688, 2
        %s3690 = scalar_lea.vmem %s5, %s3689
      $region72: #{resblock_forward.3} parent=63 // pred_fallthru
        _
    $region64: #{resblock_forward.3} parent=5 // pred_fallthru
      _
  $region6: #{resblock_forward.3} parent=0 // loop_footer
    %s16 = sadd.s32 1, %s12
  $region7: #{resblock_forward.3} parent=0 // loop_footer_branch
    %11 = sbr.rel target = $region3
  $region8: #{resblock_forward.3} parent=0 // loop_exit
    _

// kernel: resblock_forward.4
$region0: #{resblock_forward.4}
  #allocation0 [shape = 'u32[]', space=smem, size = 0x4, offset = 0x4, fixed_abs, tag = 'smem constant byte address 0x4 - core index']
  #allocation1 [shape = 'u32[144,128]{1,0:T(1,128)}', space=vmem, size = 0x12000, scoped, tag = 'internal scratch']
  #allocation2 [shape = 'bf16[10,18,128]{2,1,0:T(8,128)(2,1)}', space=vmem, size = 0xf000, scoped, tag = 'scratch operand']
  #allocation3 [shape = 'bf16[128,1152]{1,0:T(8,128)(2,1)}', space=vmem, size = 0x48000, scoped, tag = 'scratch operand']
  %s0 = inlined_call_operand.vmem [shape: bf16[2,16,16,128], index: 0, kind: input, shape index: {}]
  %s1 = inlined_call_operand.vmem [shape: f32[1,128], index: 1, kind: input, shape index: {}]
  %s2 = inlined_call_operand.vmem [shape: f32[1,128], index: 2, kind: input, shape index: {}]
  %s3 = inlined_call_operand.vmem [shape: bf16[1152,128], index: 3, kind: input, shape index: {}]
  %s4 = inlined_call_operand.vmem [shape: bf16[2,16,16,128], index: 4, kind: output, shape index: {0}]
  %s5 = inlined_call_operand.vmem [shape: f32[2,2,2,128], index: 5, kind: output, shape index: {1}]
  %6 = xla_tuple %s4, %s5
  %s7 = sld [smem:[#allocation0]]
  $region73: #{resblock_forward.4} parent=0
    _
  %s9 = ssub.s32 1, %s7
  %s10 = scalar_select 0, %s9, %s7
  loop: start=0, step=1, limit=6
  $region2: #{resblock_forward.4} parent=0 // loop_pre_header
    _
  $region3: #{resblock_forward.4} parent=0 // loop_header
    %s12 = sphi 0, %s16
    %p13 = scmp.ge.s32.totalorder %s12, 6
    %s19 = sphi 0, %s31
    %s20 = sphi 0, %s27
    %s21 = sphi 0, %s19
    %s22 = sphi 0, %s20
    %s23 = sphi 0, %s21
    %s24 = sphi 0, %s22
    %s34 = sphi 0, %s36
    %s37 = sphi 0, %s34
    %s38 = sphi 0, %s37
    %s54 = sphi 0, %s38
    %s58 = sphi 0, %s58
    %s60 = sphi 0, %s58
    %s61 = sphi 0, %s60
    %s75 = sphi 0, %s61
    %s79 = sphi 0, %s79
    %s81 = sphi 0, %s79
    %s82 = sphi 0, %s81
    %s96 = sphi 0, %s82
    %s100 = sphi 0, %s100
    %s102 = sphi 0, %s100
    %s103 = sphi 0, %s102
    %s117 = sphi 0, %s103
    %s125 = sphi 0, %s127
    %s128 = sphi 0, %s125
    %s129 = sphi 0, %s128
    %s145 = sphi 0, %s129
    %s153 = sphi 0, %s155
    %s156 = sphi 0, %s153
    %s157 = sphi 0, %s156
    %s173 = sphi 0, %s157
  $region4: #{resblock_forward.4} parent=0 // loop_header_branch
    %15 = sbr.rel (%p13) target = $region8
  $region5: #{resblock_forward.4} parent=0 // loop_body
    %s17 = ssub.s32 %s12, 1
    %s18 = ssub.s32 %s12, 2
    %s25 = sadd.s32 1, %s20
    %p26 = scmp.ge.s32.totalorder %s25, 2
    %s27 = scalar_select %p26, 0, %s25
    %s28 = sadd.s32 1, %s19
    %s29 = scalar_select %p26, %s28, %s19
    %p30 = scmp.ge.s32.totalorder %s29, 2
    %s31 = scalar_select %p30, 0, %s29
    %s32 = ssub.s32 %s19, %s31
    %p33 = scmp.eq.s32.totalorder %s32, 0
    %s35 = sadd.s32 %s34, 1
    %s36 = scalar_select %p33, %s34, %s35
    %p39 = pneg %p33
    %p40 = scmp.eq.s32.totalorder %s12, 3
    %p41 = por %p39, %p40
    %p42 = scmp.ne.s32.totalorder %s34, %s37
    %p43 = scmp.eq.s32.totalorder %s12, 0
    %p44 = por %p42, %p43
    %p45 = scmp.ne.s32.totalorder %s34, %s37
    %p46 = scmp.eq.s32.totalorder %s17, 3
    %p47 = por %p45, %p46
    %p48 = scmp.ne.s32.totalorder %s37, %s38
    %p49 = scmp.eq.s32.totalorder %s17, 0
    %p50 = por %p48, %p49
    %p51 = scmp.ne.s32.totalorder %s37, %s38
    %p52 = scmp.eq.s32.totalorder %s18, 3
    %p53 = por %p51, %p52
    %p55 = scmp.ne.s32.totalorder %s38, %s54
    %p56 = scmp.eq.s32.totalorder %s18, 0
    %p57 = por %p55, %p56
    %s59 = sadd.s32 %s58, 1
    %p62 = scmp.eq.s32.totalorder %s12, 3
    %p63 = scmp.ne.s32.totalorder %s58, %s60
    %p64 = scmp.eq.s32.totalorder %s12, 0
    %p65 = por %p63, %p64
    %p66 = scmp.ne.s32.totalorder %s58, %s60
    %p67 = scmp.eq.s32.totalorder %s17, 3
    %p68 = por %p66, %p67
    %p69 = scmp.ne.s32.totalorder %s60, %s61
    %p70 = scmp.eq.s32.totalorder %s17, 0
    %p71 = por %p69, %p70
    %p72 = scmp.ne.s32.totalorder %s60, %s61
    %p73 = scmp.eq.s32.totalorder %s18, 3
    %p74 = por %p72, %p73
    %p76 = scmp.ne.s32.totalorder %s61, %s75
    %p77 = scmp.eq.s32.totalorder %s18, 0
    %p78 = por %p76, %p77
    %s80 = sadd.s32 %s79, 1
    %p83 = scmp.eq.s32.totalorder %s12, 3
    %p84 = scmp.ne.s32.totalorder %s79, %s81
    %p85 = scmp.eq.s32.totalorder %s12, 0
    %p86 = por %p84, %p85
    %p87 = scmp.ne.s32.totalorder %s79, %s81
    %p88 = scmp.eq.s32.totalorder %s17, 3
    %p89 = por %p87, %p88
    %p90 = scmp.ne.s32.totalorder %s81, %s82
    %p91 = scmp.eq.s32.totalorder %s17, 0
    %p92 = por %p90, %p91
    %p93 = scmp.ne.s32.totalorder %s81, %s82
    %p94 = scmp.eq.s32.totalorder %s18, 3
    %p95 = por %p93, %p94
    %p97 = scmp.ne.s32.totalorder %s82, %s96
    %p98 = scmp.eq.s32.totalorder %s18, 0
    %p99 = por %p97, %p98
    %s101 = sadd.s32 %s100, 1
    %p104 = scmp.eq.s32.totalorder %s12, 3
    %p105 = scmp.ne.s32.totalorder %s100, %s102
    %p106 = scmp.eq.s32.totalorder %s12, 0
    %p107 = por %p105, %p106
    %p108 = scmp.ne.s32.totalorder %s100, %s102
    %p109 = scmp.eq.s32.totalorder %s17, 3
    %p110 = por %p108, %p109
    %p111 = scmp.ne.s32.totalorder %s102, %s103
    %p112 = scmp.eq.s32.totalorder %s17, 0
    %p113 = por %p111, %p112
    %p114 = scmp.ne.s32.totalorder %s102, %s103
    %p115 = scmp.eq.s32.totalorder %s18, 3
    %p116 = por %p114, %p115
    %p118 = scmp.ne.s32.totalorder %s103, %s117
    %p119 = scmp.eq.s32.totalorder %s18, 0
    %p120 = por %p118, %p119
    %s121 = ssub.s32 %s19, %s31
    %s122 = ssub.s32 %s20, %s27
    %s123 = sor.u32 %s121, %s122
    %p124 = scmp.eq.s32.totalorder %s123, 0
    %s126 = sadd.s32 %s125, 1
    %s127 = scalar_select %p124, %s125, %s126
    %p130 = pneg %p124
    %p131 = scmp.eq.s32.totalorder %s12, 3
    %p132 = por %p130, %p131
    %p133 = scmp.ne.s32.totalorder %s125, %s128
    %p134 = scmp.eq.s32.totalorder %s12, 0
    %p135 = por %p133, %p134
    %p136 = scmp.ne.s32.totalorder %s125, %s128
    %p137 = scmp.eq.s32.totalorder %s17, 3
    %p138 = por %p136, %p137
    %p139 = scmp.ne.s32.totalorder %s128, %s129
    %p140 = scmp.eq.s32.totalorder %s17, 0
    %p141 = por %p139, %p140
    %p142 = scmp.ne.s32.totalorder %s128, %s129
    %p143 = scmp.eq.s32.totalorder %s18, 3
    %p144 = por %p142, %p143
    %p146 = scmp.ne.s32.totalorder %s129, %s145
    %p147 = scmp.eq.s32.totalorder %s18, 0
    %p148 = por %p146, %p147
    %s149 = ssub.s32 %s19, %s31
    %s150 = ssub.s32 %s20, %s27
    %s151 = sor.u32 %s149, %s150
    %p152 = scmp.eq.s32.totalorder %s151, 0
    %s154 = sadd.s32 %s153, 1
    %s155 = scalar_select %p152, %s153, %s154
    %p158 = pneg %p152
    %p159 = scmp.eq.s32.totalorder %s12, 3
    %p160 = por %p158, %p159
    %p161 = scmp.ne.s32.totalorder %s153, %s156
    %p162 = scmp.eq.s32.totalorder %s12, 0
    %p163 = por %p161, %p162
    %p164 = scmp.ne.s32.totalorder %s153, %s156
    %p165 = scmp.eq.s32.totalorder %s17, 3
    %p166 = por %p164, %p165
    %p167 = scmp.ne.s32.totalorder %s156, %s157
    %p168 = scmp.eq.s32.totalorder %s17, 0
    %p169 = por %p167, %p168
    %p170 = scmp.ne.s32.totalorder %s156, %s157
    %p171 = scmp.eq.s32.totalorder %s18, 3
    %p172 = por %p170, %p171
    %p174 = scmp.ne.s32.totalorder %s157, %s173
    %p175 = scmp.eq.s32.totalorder %s18, 0
    %p176 = por %p174, %p175
    %p177 = scmp.le.s32.totalorder 1, %s12
    %p178 = scmp.lt.s32.totalorder %s12, 5
    %p179 = pnand %p177, %p178
    %p180 = pneg %p179
    // Predicated region
    $region9: #{resblock_forward.4} parent=5 // pred_check
      _
    $region10: #{resblock_forward.4} parent=5 // pred_check_branch
      %182 = sbr.rel (%p179) target = $region12
    $region11: #{resblock_forward.4} parent=5 // pred_region
      %s183 = ssub.s32 %s12, 1
      // Predicated region
      $region13: #{resblock_forward.4} parent=11 // pred_check
        %p184 = pneg %p71
      $region14: #{resblock_forward.4} parent=11 // pred_check_branch
        %186 = sbr.rel (%p184) target = $region16
      $region15: #{resblock_forward.4} parent=11 // pred_region
        _
      $region16: #{resblock_forward.4} parent=11 // pred_fallthru
        _
      // Predicated region
      $region17: #{resblock_forward.4} parent=11 // pred_check
        %p187 = pneg %p92
      $region18: #{resblock_forward.4} parent=11 // pred_check_branch
        %189 = sbr.rel (%p187) target = $region20
      $region19: #{resblock_forward.4} parent=11 // pred_region
        _
      $region20: #{resblock_forward.4} parent=11 // pred_fallthru
        _
      // Predicated region
      $region21: #{resblock_forward.4} parent=11 // pred_check
        %p190 = pneg %p113
      $region22: #{resblock_forward.4} parent=11 // pred_check_branch
        %192 = sbr.rel (%p190) target = $region24
      $region23: #{resblock_forward.4} parent=11 // pred_region
        _
      $region24: #{resblock_forward.4} parent=11 // pred_fallthru
        _
    $region12: #{resblock_forward.4} parent=5 // pred_fallthru
      _
    %p193 = scmp.lt.s32.totalorder %s12, 4
    // Predicated region
    $region25: #{resblock_forward.4} parent=5 // pred_check
      %p194 = pneg %p193
    $region26: #{resblock_forward.4} parent=5 // pred_check_branch
      %196 = sbr.rel (%p194) target = $region28
    $region27: #{resblock_forward.4} parent=5 // pred_region
      // Predicated region
      $region29: #{resblock_forward.4} parent=27 // pred_check
        %p197 = pneg %p44
      $region30: #{resblock_forward.4} parent=27 // pred_check_branch
        %199 = sbr.rel (%p197) target = $region32
      $region31: #{resblock_forward.4} parent=27 // pred_region
        %p200 = scmp.lt.s32.totalorder %s19, 1
        %s201 = scalar_select %p200, %s19, 1
        %s202 = smul.addr %s201, 32
        %s203 = smul.addr %s202, 4
        %s204 = scalar_lea.vmem %s0, %s203
      $region32: #{resblock_forward.4} parent=27 // pred_fallthru
        _
    $region28: #{resblock_forward.4} parent=5 // pred_fallthru
      _
    %p205 = scmp.le.s32.totalorder 1, %s12
    %p206 = scmp.lt.s32.totalorder %s12, 5
    %p207 = pnand %p205, %p206
    %p208 = pneg %p207
    // Predicated region
    $region33: #{resblock_forward.4} parent=5 // pred_check
      _
    $region34: #{resblock_forward.4} parent=5 // pred_check_branch
      %210 = sbr.rel (%p207) target = $region36
    $region35: #{resblock_forward.4} parent=5 // pred_region
      %s211 = ssub.s32 %s12, 1
      %p212 = scmp.lt.s32.totalorder %s21, 1
      %s213 = scalar_select %p212, %s21, 1
      %s214 = smul.addr %s213, 32
      %s215 = smul.addr %s214, 4
      %s216 = scalar_lea.vmem %s0, %s215
      %p217 = pneg %p50
      %p218 = pneg %p47
      %p219 = pneg %p71
      %p220 = pneg %p68
      %p221 = pneg %p92
      %p222 = pneg %p89
      %p223 = pneg %p113
      %p224 = pneg %p110
      %p225 = pneg %p141
      %p226 = pneg %p138
      %s227 = smul.u32 8, %s22
      %p228 = scmp.lt.s32.totalorder %s21, 1
      %s229 = scalar_select %p228, %s21, 1
      %p230 = scmp.lt.s32.totalorder %s227, 15
      %s231 = scalar_select %p230, %s227, 15
      %s232 = smul.addr %s231, 2
      %s233 = smul.addr %s229, 32
      %s234 = sadd.s32 %s232, %s233
      %s235 = smul.addr %s234, 4
      %s236 = scalar_lea.vmem %s4, %s235
      %p237 = pneg %p169
      %p238 = pneg %p166
      %p239 = scmp.lt.s32.totalorder %s21, 1
      %s240 = scalar_select %p239, %s21, 1
      %p241 = scmp.lt.s32.totalorder %s22, 1
      %s242 = scalar_select %p241, %s22, 1
      %s243 = smul.addr %s240, 2
      %s244 = sadd.s32 %s242, %s243
      %s245 = smul.addr %s244, 2
      %s246 = scalar_lea.vmem %s5, %s245
      %p247 = scmp.lt.s32.totalorder %s21, 1
      %s248 = scalar_select %p247, %s21, 1
      %s249 = smul.addr %s248, 32
      %s250 = smul.addr %s249, 4
      %s251 = scalar_lea.vmem %s0, %s250
      %s252 = smul.u32 8, %s22
      %p253 = scmp.lt.s32.totalorder %s21, 1
      %s254 = scalar_select %p253, %s21, 1
      %p255 = scmp.lt.s32.totalorder %s252, 15
      %s256 = scalar_select %p255, %s252, 15
      %s257 = smul.addr %s256, 2
      %s258 = smul.addr %s254, 32
      %s259 = sadd.s32 %s257, %s258
      %s260 = smul.addr %s259, 4
      %s261 = scalar_lea.vmem %s4, %s260
      %s262 = smul.u32 8, %s22
      %p263 = scmp.lt.s32.totalorder %s21, 1
      %s264 = scalar_select %p263, %s21, 1
      %p265 = scmp.lt.s32.totalorder %s22, 1
      %s266 = scalar_select %p265, %s22, 1
      %s267 = smul.addr %s264, 2
      %s268 = sadd.s32 %s266, %s267
      %s269 = smul.addr %s268, 2
      %s270 = scalar_lea.vmem %s5, %s269
      %s272 = smul.u32 %s22, 8
      %vm273 = vcmask 1040384
      %vm274 = vsmask.f32 256
      %vm275 = vmand %vm273, %vm274
      %v276 = vld [vmem:[#allocation2] sm:$0x1]
      %v277 = vsel %vm275, 0, %v276
      %278 = vst [vmem:[#allocation2] sm:$0x1] %v277
      %v279 = vld [vmem:[#allocation2 + $0xc] sm:$0x1]
      %v280 = vsel %vm275, 0, %v279
      %281 = vst [vmem:[#allocation2 + $0xc] sm:$0x1] %v280
      %v282 = vld [vmem:[#allocation2 + $0x18] sm:$0x1]
      %v283 = vsel %vm275, 0, %v282
      %284 = vst [vmem:[#allocation2 + $0x18] sm:$0x1] %v283
      %v285 = vld [vmem:[#allocation2 + $0x24] sm:$0x1]
      %v286 = vsel %vm275, 0, %v285
      %287 = vst [vmem:[#allocation2 + $0x24] sm:$0x1] %v286
      %v288 = vld [vmem:[#allocation2 + $0x30] sm:$0x1]
      %v289 = vsel %vm275, 0, %v288
      %290 = vst [vmem:[#allocation2 + $0x30] sm:$0x1] %v289
      %v291 = vld [vmem:[#allocation2 + $0x3c] sm:$0x1]
      %v292 = vsel %vm275, 0, %v291
      %293 = vst [vmem:[#allocation2 + $0x3c] sm:$0x1] %v292
      %v294 = vld [vmem:[#allocation2 + $0x48] sm:$0x1]
      %v295 = vsel %vm275, 0, %v294
      %296 = vst [vmem:[#allocation2 + $0x48] sm:$0x1] %v295
      %v297 = vld [vmem:[#allocation2 + $0x54] sm:$0x1]
      %v298 = vsel %vm275, 0, %v297
      %299 = vst [vmem:[#allocation2 + $0x54] sm:$0x1] %v298
      %v300 = vld [vmem:[#allocation2 + $0x60] sm:$0x1]
      %v301 = vsel %vm275, 0, %v300
      %302 = vst [vmem:[#allocation2 + $0x60] sm:$0x1] %v301
      %v303 = vld [vmem:[#allocation2 + $0x6c] sm:$0x1]
      %v304 = vsel %vm275, 0, %v303
      %305 = vst [vmem:[#allocation2 + $0x6c] sm:$0x1] %v304
      %vm306 = vsmask.f32 7938
      %vm307 = vmand %vm273, %vm306
      %v308 = vld [vmem:[#allocation2 + $0x8] sm:$0x1]
      %v309 = vsel %vm307, 0, %v308
      %310 = vst [vmem:[#allocation2 + $0x8] sm:$0x1] %v309
      %v311 = vld [vmem:[#allocation2 + $0x14] sm:$0x1]
      %v312 = vsel %vm307, 0, %v311
      %313 = vst [vmem:[#allocation2 + $0x14] sm:$0x1] %v312
      %v314 = vld [vmem:[#allocation2 + $0x20] sm:$0x1]
      %v315 = vsel %vm307, 0, %v314
      %316 = vst [vmem:[#allocation2 + $0x20] sm:$0x1] %v315
      %v317 = vld [vmem:[#allocation2 + $0x2c] sm:$0x1]
      %v318 = vsel %vm307, 0, %v317
      %319 = vst [vmem:[#allocation2 + $0x2c] sm:$0x1] %v318
      %v320 = vld [vmem:[#allocation2 + $0x38] sm:$0x1]
      %v321 = vsel %vm307, 0, %v320
      %322 = vst [vmem:[#allocation2 + $0x38] sm:$0x1] %v321
      %v323 = vld [vmem:[#allocation2 + $0x44] sm:$0x1]
      %v324 = vsel %vm307, 0, %v323
      %325 = vst [vmem:[#allocation2 + $0x44] sm:$0x1] %v324
      %v326 = vld [vmem:[#allocation2 + $0x50] sm:$0x1]
      %v327 = vsel %vm307, 0, %v326
      %328 = vst [vmem:[#allocation2 + $0x50] sm:$0x1] %v327
      %v329 = vld [vmem:[#allocation2 + $0x5c] sm:$0x1]
      %v330 = vsel %vm307, 0, %v329
      %331 = vst [vmem:[#allocation2 + $0x5c] sm:$0x1] %v330
      %v332 = vld [vmem:[#allocation2 + $0x68] sm:$0x1]
      %v333 = vsel %vm307, 0, %v332
      %334 = vst [vmem:[#allocation2 + $0x68] sm:$0x1] %v333
      %v335 = vld [vmem:[#allocation2 + $0x74] sm:$0x1]
      %v336 = vsel %vm307, 0, %v335
      %337 = vst [vmem:[#allocation2 + $0x74] sm:$0x1] %v336
      %s338 = smul.u32 %s272, 2
      %s339 = smul.addr %s338, 4
      %s340 = scalar_lea.vmem %s251, %s339
      %v341 = vld [vmem:[%s340] sm:$0xf]
      %v342 = vld [vmem:[%s340 + $0x4] sm:$0xf]
      %v343 = vld [vmem:[%s340 + $0x8] sm:$0xf]
      %v344 = vld [vmem:[%s340 + $0xc] sm:$0xf]
      %v345 = vld [vmem:[%s340 + $0x10] sm:$0xf]
      %v346 = vld [vmem:[%s340 + $0x14] sm:$0xf]
      %v347 = vld [vmem:[%s340 + $0x18] sm:$0xf]
      %v348 = vld [vmem:[%s340 + $0x1c] sm:$0xf]
      %v349 = vld [vmem:[%s340 + $0x20] sm:$0xf]
      %v350 = vld [vmem:[%s340 + $0x24] sm:$0xf]
      %v351 = vld [vmem:[%s340 + $0x28] sm:$0xf]
      %v352 = vld [vmem:[%s340 + $0x2c] sm:$0xf]
      %v353 = vld [vmem:[%s340 + $0x30] sm:$0xf]
      %v354 = vld [vmem:[%s340 + $0x34] sm:$0xf]
      %v355 = vld [vmem:[%s340 + $0x38] sm:$0xf]
      %v356 = vld [vmem:[%s340 + $0x3c] sm:$0xf]
      %v357 = vunpack.c.l.bf16 %v341
      %v358 = vunpack.c.l.bf16 %v342
      %v359 = vunpack.c.l.bf16 %v343
      %v360 = vunpack.c.l.bf16 %v344
      %v361 = vunpack.c.l.bf16 %v345
      %v362 = vunpack.c.l.bf16 %v346
      %v363 = vunpack.c.l.bf16 %v347
      %v364 = vunpack.c.l.bf16 %v348
      %v365 = vunpack.c.l.bf16 %v349
      %v366 = vunpack.c.l.bf16 %v350
      %v367 = vunpack.c.l.bf16 %v351
      %v368 = vunpack.c.l.bf16 %v352
      %v369 = vunpack.c.l.bf16 %v353
      %v370 = vunpack.c.l.bf16 %v354
      %v371 = vunpack.c.l.bf16 %v355
      %v372 = vunpack.c.l.bf16 %v356
      %v373 = vld [vmem:[%s1] sm:$0x1]
      %v375 = vlaneseq
      %v376 = vshrl.u32 %v375, 7
      %v377 = vsub.s32 0, %v376
      %v378 = vrot.slane %v373, %v377
      %v380 = vmul.f32 %v357, %v378
      %v381 = vmul.f32 %v358, %v378
      %v382 = vmul.f32 %v359, %v378
      %v383 = vmul.f32 %v360, %v378
      %v384 = vmul.f32 %v361, %v378
      %v385 = vmul.f32 %v362, %v378
      %v386 = vmul.f32 %v363, %v378
      %v387 = vmul.f32 %v364, %v378
      %v388 = vmul.f32 %v365, %v378
      %v389 = vmul.f32 %v366, %v378
      %v390 = vmul.f32 %v367, %v378
      %v391 = vmul.f32 %v368, %v378
      %v392 = vmul.f32 %v369, %v378
      %v393 = vmul.f32 %v370, %v378
      %v394 = vmul.f32 %v371, %v378
      %v395 = vmul.f32 %v372, %v378
      %v396 = vld [vmem:[%s2] sm:$0x1]
      %v398 = vlaneseq
      %v399 = vshrl.u32 %v398, 7
      %v400 = vsub.s32 0, %v399
      %v401 = vrot.slane %v396, %v400
      %v403 = vadd.f32 %v380, %v401
      %v404 = vadd.f32 %v381, %v401
      %v405 = vadd.f32 %v382, %v401
      %v406 = vadd.f32 %v383, %v401
      %v407 = vadd.f32 %v384, %v401
      %v408 = vadd.f32 %v385, %v401
      %v409 = vadd.f32 %v386, %v401
      %v410 = vadd.f32 %v387, %v401
      %v411 = vadd.f32 %v388, %v401
      %v412 = vadd.f32 %v389, %v401
      %v413 = vadd.f32 %v390, %v401
      %v414 = vadd.f32 %v391, %v401
      %v415 = vadd.f32 %v392, %v401
      %v416 = vadd.f32 %v393, %v401
      %v417 = vadd.f32 %v394, %v401
      %v418 = vadd.f32 %v395, %v401
      %v419 = vmax.f32 %v403, 0.0
      %v420 = vmax.f32 %v404, 0.0
      %v421 = vmax.f32 %v405, 0.0
      %v422 = vmax.f32 %v406, 0.0
      %v423 = vmax.f32 %v407, 0.0
      %v424 = vmax.f32 %v408, 0.0
      %v425 = vmax.f32 %v409, 0.0
      %v426 = vmax.f32 %v410, 0.0
      %v427 = vmax.f32 %v411, 0.0
      %v428 = vmax.f32 %v412, 0.0
      %v429 = vmax.f32 %v413, 0.0
      %v430 = vmax.f32 %v414, 0.0
      %v431 = vmax.f32 %v415, 0.0
      %v432 = vmax.f32 %v416, 0.0
      %v433 = vmax.f32 %v417, 0.0
      %v434 = vmax.f32 %v418, 0.0
      %v435 = vpack.c.bf16 %v420, %v419
      %v436 = vpack.c.bf16 %v422, %v421
      %v437 = vpack.c.bf16 %v424, %v423
      %v438 = vpack.c.bf16 %v426, %v425
      %v439 = vpack.c.bf16 %v428, %v427
      %v440 = vpack.c.bf16 %v430, %v429
      %v441 = vpack.c.bf16 %v432, %v431
      %v442 = vpack.c.bf16 %v434, %v433
      %v451 = vunpack.c.l.b16 %v435
      %v452 = vunpack.c.h.b16 %v435
      %v453 = vunpack.c.l.b16 %v436
      %v454 = vunpack.c.h.b16 %v436
      %v455 = vunpack.c.l.b16 %v437
      %v456 = vunpack.c.h.b16 %v437
      %v457 = vunpack.c.l.b16 %v438
      %v458 = vunpack.c.h.b16 %v438
      %v459 = vunpack.c.l.b16 %v439
      %v460 = vunpack.c.h.b16 %v439
      %v461 = vunpack.c.l.b16 %v440
      %v462 = vunpack.c.h.b16 %v440
      %v463 = vunpack.c.l.b16 %v441
      %v464 = vunpack.c.h.b16 %v441
      %v465 = vunpack.c.l.b16 %v442
      %v466 = vunpack.c.h.b16 %v442
      %v467 = vpack.c.b16 %v451, %v451
      %v468 = vpack.c.b16 %v452, %v452
      %v469 = vpack.c.b16 %v453, %v453
      %v470 = vpack.c.b16 %v454, %v454
      %v471 = vpack.c.b16 %v455, %v455
      %v472 = vpack.c.b16 %v456, %v456
      %v473 = vpack.c.b16 %v457, %v457
      %v474 = vpack.c.b16 %v458, %v458
      %v475 = vpack.c.b16 %v459, %v459
      %v476 = vpack.c.b16 %v460, %v460
      %v477 = vpack.c.b16 %v461, %v461
      %v478 = vpack.c.b16 %v462, %v462
      %v479 = vpack.c.b16 %v463, %v463
      %v480 = vpack.c.b16 %v464, %v464
      %v481 = vpack.c.b16 %v465, %v465
      %v482 = vpack.c.b16 %v466, %v466
      %vm483 = vsmask.f32 4368
      %vm484 = vmor %vm274, %vm483
      %v486 = vshrl.u32 %v467, 16
      %v488 = vrot.slane %v486, 7
      %v489 = vshll.u32 %v467, 16
      %v491 = vor.u32 %v488, %v489
      %v492 = vrot.slane %v488, 4
      %v494 = vshrl.u32 %v468, 16
      %v496 = vrot.slane %v494, 7
      %v497 = vshll.u32 %v468, 16
      %v499 = vor.u32 %v496, %v497
      %v500 = vsel %vm484, %v492, %v499
      %v501 = vrot.slane %v496, 4
      %v503 = vshrl.u32 %v469, 16
      %v505 = vrot.slane %v503, 7
      %v506 = vshll.u32 %v469, 16
      %v508 = vor.u32 %v505, %v506
      %v509 = vrot.slane %v505, 4
      %v511 = vshrl.u32 %v470, 16
      %v513 = vrot.slane %v511, 7
      %v514 = vshll.u32 %v470, 16
      %v516 = vor.u32 %v513, %v514
      %v517 = vsel %vm484, %v509, %v516
      %v518 = vrot.slane %v513, 4
      %v520 = vshrl.u32 %v471, 16
      %v522 = vrot.slane %v520, 7
      %v523 = vshll.u32 %v471, 16
      %v525 = vor.u32 %v522, %v523
      %v526 = vrot.slane %v522, 4
      %v528 = vshrl.u32 %v472, 16
      %v530 = vrot.slane %v528, 7
      %v531 = vshll.u32 %v472, 16
      %v533 = vor.u32 %v530, %v531
      %v534 = vsel %vm484, %v526, %v533
      %v535 = vrot.slane %v530, 4
      %v537 = vshrl.u32 %v473, 16
      %v539 = vrot.slane %v537, 7
      %v540 = vshll.u32 %v473, 16
      %v542 = vor.u32 %v539, %v540
      %v543 = vrot.slane %v539, 4
      %v545 = vshrl.u32 %v474, 16
      %v547 = vrot.slane %v545, 7
      %v548 = vshll.u32 %v474, 16
      %v550 = vor.u32 %v547, %v548
      %v551 = vsel %vm484, %v543, %v550
      %v552 = vrot.slane %v547, 4
      %v554 = vshrl.u32 %v475, 16
      %v556 = vrot.slane %v554, 7
      %v557 = vshll.u32 %v475, 16
      %v559 = vor.u32 %v556, %v557
      %v560 = vrot.slane %v556, 4
      %v562 = vshrl.u32 %v476, 16
      %v564 = vrot.slane %v562, 7
      %v565 = vshll.u32 %v476, 16
      %v567 = vor.u32 %v564, %v565
      %v568 = vsel %vm484, %v560, %v567
      %v569 = vrot.slane %v564, 4
      %v571 = vshrl.u32 %v477, 16
      %v573 = vrot.slane %v571, 7
      %v574 = vshll.u32 %v477, 16
      %v576 = vor.u32 %v573, %v574
      %v577 = vrot.slane %v573, 4
      %v579 = vshrl.u32 %v478, 16
      %v581 = vrot.slane %v579, 7
      %v582 = vshll.u32 %v478, 16
      %v584 = vor.u32 %v581, %v582
      %v585 = vsel %vm484, %v577, %v584
      %v586 = vrot.slane %v581, 4
      %v588 = vshrl.u32 %v479, 16
      %v590 = vrot.slane %v588, 7
      %v591 = vshll.u32 %v479, 16
      %v593 = vor.u32 %v590, %v591
      %v594 = vrot.slane %v590, 4
      %v596 = vshrl.u32 %v480, 16
      %v598 = vrot.slane %v596, 7
      %v599 = vshll.u32 %v480, 16
      %v601 = vor.u32 %v598, %v599
      %v602 = vsel %vm484, %v594, %v601
      %v603 = vrot.slane %v598, 4
      %v605 = vshrl.u32 %v481, 16
      %v607 = vrot.slane %v605, 7
      %v608 = vshll.u32 %v481, 16
      %v610 = vor.u32 %v607, %v608
      %v611 = vrot.slane %v607, 4
      %v613 = vshrl.u32 %v482, 16
      %v615 = vrot.slane %v613, 7
      %v616 = vshll.u32 %v482, 16
      %v618 = vor.u32 %v615, %v616
      %v619 = vsel %vm484, %v611, %v618
      %v620 = vrot.slane %v615, 4
      %s645 = scalar_lea.vmem [#allocation2], 12
      %vm646 = vcmask 1043456
      %vm647 = vmand %vm646, %vm306
      %v648 = vld [vmem:[%s645] sm:$0xf]
      %v649 = vsel %vm647, %v491, %v648
      %650 = vst [vmem:[%s645] sm:$0xf] %v649
      %651 = vst [vmem:[%s645 + $0x4] sm:$0xf] %v500
      %v652 = vld [vmem:[%s645 + $0x8] sm:$0x1]
      %v653 = vsel %vm275, %v501, %v652
      %654 = vst [vmem:[%s645 + $0x8] sm:$0x1] %v653
      %v655 = vld [vmem:[%s645 + $0xc] sm:$0xf]
      %v656 = vsel %vm647, %v508, %v655
      %657 = vst [vmem:[%s645 + $0xc] sm:$0xf] %v656
      %658 = vst [vmem:[%s645 + $0x10] sm:$0xf] %v517
      %v659 = vld [vmem:[%s645 + $0x14] sm:$0x1]
      %v660 = vsel %vm275, %v518, %v659
      %661 = vst [vmem:[%s645 + $0x14] sm:$0x1] %v660
      %v662 = vld [vmem:[%s645 + $0x18] sm:$0xf]
      %v663 = vsel %vm647, %v525, %v662
      %664 = vst [vmem:[%s645 + $0x18] sm:$0xf] %v663
      %665 = vst [vmem:[%s645 + $0x1c] sm:$0xf] %v534
      %v666 = vld [vmem:[%s645 + $0x20] sm:$0x1]
      %v667 = vsel %vm275, %v535, %v666
      %668 = vst [vmem:[%s645 + $0x20] sm:$0x1] %v667
      %v669 = vld [vmem:[%s645 + $0x24] sm:$0xf]
      %v670 = vsel %vm647, %v542, %v669
      %671 = vst [vmem:[%s645 + $0x24] sm:$0xf] %v670
      %672 = vst [vmem:[%s645 + $0x28] sm:$0xf] %v551
      %v673 = vld [vmem:[%s645 + $0x2c] sm:$0x1]
      %v674 = vsel %vm275, %v552, %v673
      %675 = vst [vmem:[%s645 + $0x2c] sm:$0x1] %v674
      %v676 = vld [vmem:[%s645 + $0x30] sm:$0xf]
      %v677 = vsel %vm647, %v559, %v676
      %678 = vst [vmem:[%s645 + $0x30] sm:$0xf] %v677
      %679 = vst [vmem:[%s645 + $0x34] sm:$0xf] %v568
      %v680 = vld [vmem:[%s645 + $0x38] sm:$0x1]
      %v681 = vsel %vm275, %v569, %v680
      %682 = vst [vmem:[%s645 + $0x38] sm:$0x1] %v681
      %v683 = vld [vmem:[%s645 + $0x3c] sm:$0xf]
      %v684 = vsel %vm647, %v576, %v683
      %685 = vst [vmem:[%s645 + $0x3c] sm:$0xf] %v684
      %686 = vst [vmem:[%s645 + $0x40] sm:$0xf] %v585
      %v687 = vld [vmem:[%s645 + $0x44] sm:$0x1]
      %v688 = vsel %vm275, %v586, %v687
      %689 = vst [vmem:[%s645 + $0x44] sm:$0x1] %v688
      %v690 = vld [vmem:[%s645 + $0x48] sm:$0xf]
      %v691 = vsel %vm647, %v593, %v690
      %692 = vst [vmem:[%s645 + $0x48] sm:$0xf] %v691
      %693 = vst [vmem:[%s645 + $0x4c] sm:$0xf] %v602
      %v694 = vld [vmem:[%s645 + $0x50] sm:$0x1]
      %v695 = vsel %vm275, %v603, %v694
      %696 = vst [vmem:[%s645 + $0x50] sm:$0x1] %v695
      %v697 = vld [vmem:[%s645 + $0x54] sm:$0xf]
      %v698 = vsel %vm647, %v610, %v697
      %699 = vst [vmem:[%s645 + $0x54] sm:$0xf] %v698
      %700 = vst [vmem:[%s645 + $0x58] sm:$0xf] %v619
      %v701 = vld [vmem:[%s645 + $0x5c] sm:$0x1]
      %v702 = vsel %vm275, %v620, %v701
      %703 = vst [vmem:[%s645 + $0x5c] sm:$0x1] %v702
      %p704 = scmp.eq.s32.totalorder %s22, 0
      // Predicated region
      $region37: #{resblock_forward.4} parent=35 // pred_check
        %p705 = pneg %p704
      $region38: #{resblock_forward.4} parent=35 // pred_check_branch
        %707 = sbr.rel (%p705) target = $region40
      $region39: #{resblock_forward.4} parent=35 // pred_region
        %v708 = vld [vmem:[#allocation2] sm:$0xf]
        %v709 = vsel %vm647, 0, %v708
        %710 = vst [vmem:[#allocation2] sm:$0xf] %v709
        %711 = vst [vmem:[#allocation2 + $0x4] sm:$0xf] 0
        %v712 = vld [vmem:[#allocation2 + $0x8] sm:$0x1]
        %v713 = vsel %vm275, 0, %v712
        %714 = vst [vmem:[#allocation2 + $0x8] sm:$0x1] %v713
      $region40: #{resblock_forward.4} parent=35 // pred_fallthru
        _
      %p715 = scmp.gt.s32.totalorder %s22, 0
      // Predicated region
      $region41: #{resblock_forward.4} parent=35 // pred_check
        %p716 = pneg %p715
      $region42: #{resblock_forward.4} parent=35 // pred_check_branch
        %718 = sbr.rel (%p716) target = $region44
      $region43: #{resblock_forward.4} parent=35 // pred_region
        %s719 = ssub.s32 %s272, 1
        %s720 = smul.u32 %s719, 2
        %s721 = smul.addr %s720, 4
        %s722 = scalar_lea.vmem %s251, %s721
        %v723 = vld [vmem:[%s722] sm:$0xf]
        %v724 = vld [vmem:[%s722 + $0x4] sm:$0xf]
        %v725 = vunpack.c.l.bf16 %v723
        %v726 = vunpack.c.l.bf16 %v724
        %v727 = vld [vmem:[%s1] sm:$0x1]
        %v729 = vlaneseq
        %v730 = vshrl.u32 %v729, 7
        %v731 = vsub.s32 0, %v730
        %v732 = vrot.slane %v727, %v731
        %v734 = vmul.f32 %v725, %v732
        %v735 = vmul.f32 %v726, %v732
        %v736 = vld [vmem:[%s2] sm:$0x1]
        %v738 = vlaneseq
        %v739 = vshrl.u32 %v738, 7
        %v740 = vsub.s32 0, %v739
        %v741 = vrot.slane %v736, %v740
        %v743 = vadd.f32 %v734, %v741
        %v744 = vadd.f32 %v735, %v741
        %v745 = vmax.f32 %v743, 0.0
        %v746 = vmax.f32 %v744, 0.0
        %v747 = vpack.c.bf16 %v746, %v745
        %v749 = vunpack.c.l.b16 %v747
        %v750 = vunpack.c.h.b16 %v747
        %v751 = vpack.c.b16 %v749, %v749
        %v752 = vpack.c.b16 %v750, %v750
        %v754 = vshrl.u32 %v751, 16
        %v756 = vrot.slane %v754, 7
        %v757 = vshll.u32 %v751, 16
        %v759 = vor.u32 %v756, %v757
        %v760 = vrot.slane %v756, 4
        %v762 = vshrl.u32 %v752, 16
        %v764 = vrot.slane %v762, 7
        %v765 = vshll.u32 %v752, 16
        %v767 = vor.u32 %v764, %v765
        %v768 = vsel %vm484, %v760, %v767
        %v769 = vrot.slane %v764, 4
        %v773 = vld [vmem:[#allocation2] sm:$0xf]
        %v774 = vsel %vm647, %v759, %v773
        %775 = vst [vmem:[#allocation2] sm:$0xf] %v774
        %776 = vst [vmem:[#allocation2 + $0x4] sm:$0xf] %v768
        %v777 = vld [vmem:[#allocation2 + $0x8] sm:$0x1]
        %v778 = vsel %vm275, %v769, %v777
        %779 = vst [vmem:[#allocation2 + $0x8] sm:$0x1] %v778
      $region44: #{resblock_forward.4} parent=35 // pred_fallthru
        _
      %p780 = scmp.eq.s32.totalorder %s22, 1
      // Predicated region
      $region45: #{resblock_forward.4} parent=35 // pred_check
        %p781 = pneg %p780
      $region46: #{resblock_forward.4} parent=35 // pred_check_branch
        %783 = sbr.rel (%p781) target = $region48
      $region47: #{resblock_forward.4} parent=35 // pred_region
        %s784 = scalar_lea.vmem [#allocation2], 108
        %v785 = vld [vmem:[%s784] sm:$0xf]
        %v786 = vsel %vm647, 0, %v785
        %787 = vst [vmem:[%s784] sm:$0xf] %v786
        %788 = vst [vmem:[%s784 + $0x4] sm:$0xf] 0
        %v789 = vld [vmem:[%s784 + $0x8] sm:$0x1]
        %v790 = vsel %vm275, 0, %v789
        %791 = vst [vmem:[%s784 + $0x8] sm:$0x1] %v790
      $region48: #{resblock_forward.4} parent=35 // pred_fallthru
        _
      %p792 = scmp.lt.s32.totalorder %s22, 1
      // Predicated region
      $region49: #{resblock_forward.4} parent=35 // pred_check
        %p793 = pneg %p792
      $region50: #{resblock_forward.4} parent=35 // pred_check_branch
        %795 = sbr.rel (%p793) target = $region52
      $region51: #{resblock_forward.4} parent=35 // pred_region
        %s796 = sadd.s32 %s272, 8
        %s797 = smul.u32 %s796, 2
        %s798 = smul.addr %s797, 4
        %s799 = scalar_lea.vmem %s251, %s798
        %v800 = vld [vmem:[%s799] sm:$0xf]
        %v801 = vld [vmem:[%s799 + $0x4] sm:$0xf]
        %v802 = vunpack.c.l.bf16 %v800
        %v803 = vunpack.c.l.bf16 %v801
        %v804 = vld [vmem:[%s1] sm:$0x1]
        %v806 = vlaneseq
        %v807 = vshrl.u32 %v806, 7
        %v808 = vsub.s32 0, %v807
        %v809 = vrot.slane %v804, %v808
        %v811 = vmul.f32 %v802, %v809
        %v812 = vmul.f32 %v803, %v809
        %v813 = vld [vmem:[%s2] sm:$0x1]
        %v815 = vlaneseq
        %v816 = vshrl.u32 %v815, 7
        %v817 = vsub.s32 0, %v816
        %v818 = vrot.slane %v813, %v817
        %v820 = vadd.f32 %v811, %v818
        %v821 = vadd.f32 %v812, %v818
        %v822 = vmax.f32 %v820, 0.0
        %v823 = vmax.f32 %v821, 0.0
        %v824 = vpack.c.bf16 %v823, %v822
        %v826 = vunpack.c.l.b16 %v824
        %v827 = vunpack.c.h.b16 %v824
        %v828 = vpack.c.b16 %v826, %v826
        %v829 = vpack.c.b16 %v827, %v827
        %v831 = vshrl.u32 %v828, 16
        %v833 = vrot.slane %v831, 7
        %v834 = vshll.u32 %v828, 16
        %v836 = vor.u32 %v833, %v834
        %v837 = vrot.slane %v833, 4
        %v839 = vshrl.u32 %v829, 16
        %v841 = vrot.slane %v839, 7
        %v842 = vshll.u32 %v829, 16
        %v844 = vor.u32 %v841, %v842
        %v845 = vsel %vm484, %v837, %v844
        %v846 = vrot.slane %v841, 4
        %s850 = scalar_lea.vmem [#allocation2], 108
        %v851 = vld [vmem:[%s850] sm:$0xf]
        %v852 = vsel %vm647, %v836, %v851
        %853 = vst [vmem:[%s850] sm:$0xf] %v852
        %854 = vst [vmem:[%s850 + $0x4] sm:$0xf] %v845
        %v855 = vld [vmem:[%s850 + $0x8] sm:$0x1]
        %v856 = vsel %vm275, %v846, %v855
        %857 = vst [vmem:[%s850 + $0x8] sm:$0x1] %v856
      $region52: #{resblock_forward.4} parent=35 // pred_fallthru
        _
      %v858 = vld [vmem:[#allocation2] sm:$0xf]
      %v859 = vld [vmem:[#allocation2 + $0x4] sm:$0xf]
      %v860 = vld [vmem:[#allocation2 + $0xc] sm:$0xf]
      %v861 = vld [vmem:[#allocation2 + $0x10] sm:$0xf]
      %v862 = vld [vmem:[#allocation2 + $0x18] sm:$0xf]
      %v863 = vld [vmem:[#allocation2 + $0x1c] sm:$0xf]
      %v864 = vld [vmem:[#allocation2 + $0x24] sm:$0xf]
      %v865 = vld [vmem:[#allocation2 + $0x28] sm:$0xf]
      %v866 = vld [vmem:[#allocation2 + $0x30] sm:$0xf]
      %v867 = vld [vmem:[#allocation2 + $0x34] sm:$0xf]
      %v868 = vld [vmem:[#allocation2 + $0x3c] sm:$0xf]
      %v869 = vld [vmem:[#allocation2 + $0x40] sm:$0xf]
      %v870 = vld [vmem:[#allocation2 + $0x48] sm:$0xf]
      %v871 = vld [vmem:[#allocation2 + $0x4c] sm:$0xf]
      %v872 = vld [vmem:[#allocation2 + $0x54] sm:$0xf]
      %v873 = vld [vmem:[#allocation2 + $0x58] sm:$0xf]
      %874 = vst [vmem:[#allocation3] sm:$0xf] %v858
      %875 = vst [vmem:[#allocation3 + $0x24] sm:$0xf] %v859
      %876 = vst [vmem:[#allocation3 + $0x48] sm:$0xf] %v860
      %877 = vst [vmem:[#allocation3 + $0x6c] sm:$0xf] %v861
      %878 = vst [vmem:[#allocation3 + $0x90] sm:$0xf] %v862
      %879 = vst [vmem:[#allocation3 + $0xb4] sm:$0xf] %v863
      %880 = vst [vmem:[#allocation3 + $0xd8] sm:$0xf] %v864
      %881 = vst [vmem:[#allocation3 + $0xfc] sm:$0xf] %v865
      %882 = vst [vmem:[#allocation3 + $0x120] sm:$0xf] %v866
      %883 = vst [vmem:[#allocation3 + $0x144] sm:$0xf] %v867
      %884 = vst [vmem:[#allocation3 + $0x168] sm:$0xf] %v868
      %885 = vst [vmem:[#allocation3 + $0x18c] sm:$0xf] %v869
      %886 = vst [vmem:[#allocation3 + $0x1b0] sm:$0xf] %v870
      %887 = vst [vmem:[#allocation3 + $0x1d4] sm:$0xf] %v871
      %888 = vst [vmem:[#allocation3 + $0x1f8] sm:$0xf] %v872
      %889 = vst [vmem:[#allocation3 + $0x21c] sm:$0xf] %v873
      %v890 = vld [vmem:[#allocation2] sm:$0xf]
      %v891 = vld [vmem:[#allocation2 + $0x4] sm:$0xf]
      %v892 = vld [vmem:[#allocation2 + $0x8] sm:$0x1]
      %v893 = vld [vmem:[#allocation2 + $0xc] sm:$0xf]
      %v894 = vld [vmem:[#allocation2 + $0x10] sm:$0xf]
      %v895 = vld [vmem:[#allocation2 + $0x14] sm:$0x1]
      %v896 = vld [vmem:[#allocation2 + $0x18] sm:$0xf]
      %v897 = vld [vmem:[#allocation2 + $0x1c] sm:$0xf]
      %v898 = vld [vmem:[#allocation2 + $0x20] sm:$0x1]
      %v899 = vld [vmem:[#allocation2 + $0x24] sm:$0xf]
      %v900 = vld [vmem:[#allocation2 + $0x28] sm:$0xf]
      %v901 = vld [vmem:[#allocation2 + $0x2c] sm:$0x1]
      %v902 = vld [vmem:[#allocation2 + $0x30] sm:$0xf]
      %v903 = vld [vmem:[#allocation2 + $0x34] sm:$0xf]
      %v904 = vld [vmem:[#allocation2 + $0x38] sm:$0x1]
      %v905 = vld [vmem:[#allocation2 + $0x3c] sm:$0xf]
      %v906 = vld [vmem:[#allocation2 + $0x40] sm:$0xf]
      %v907 = vld [vmem:[#allocation2 + $0x44] sm:$0x1]
      %v908 = vld [vmem:[#allocation2 + $0x48] sm:$0xf]
      %v909 = vld [vmem:[#allocation2 + $0x4c] sm:$0xf]
      %v910 = vld [vmem:[#allocation2 + $0x50] sm:$0x1]
      %v911 = vld [vmem:[#allocation2 + $0x54] sm:$0xf]
      %v912 = vld [vmem:[#allocation2 + $0x58] sm:$0xf]
      %v913 = vld [vmem:[#allocation2 + $0x5c] sm:$0x1]
      %vm914 = vsmask.f32 3328
      %vm915 = vsmask.f32 7440
      %vm916 = vmor %vm914, %vm915
      %v918 = vshrl.u32 %v890, 16
      %v920 = vrot.slane %v918, 4
      %v921 = vshll.u32 %v890, 16
      %v923 = vrot.slane %v921, 5
      %v924 = vor.u32 %v920, %v923
      %v925 = vrot.slane %v924, 4
      %v927 = vshll.u32 %v891, 16
      %v929 = vrot.slane %v927, 5
      %v930 = vsel %vm916, %v925, %v929
      %v931 = vshrl.u32 %v891, 16
      %v933 = vrot.slane %v931, 4
      %v934 = vor.u32 %v933, %v929
      %v935 = vrot.slane %v934, 4
      %v937 = vshll.u32 %v892, 16
      %v939 = vrot.slane %v937, 5
      %v940 = vsel %vm916, %v935, %v939
      %v942 = vshrl.u32 %v893, 16
      %v944 = vrot.slane %v942, 4
      %v945 = vshll.u32 %v893, 16
      %v947 = vrot.slane %v945, 5
      %v948 = vor.u32 %v944, %v947
      %v949 = vrot.slane %v948, 4
      %v951 = vshll.u32 %v894, 16
      %v953 = vrot.slane %v951, 5
      %v954 = vsel %vm916, %v949, %v953
      %v955 = vshrl.u32 %v894, 16
      %v957 = vrot.slane %v955, 4
      %v958 = vor.u32 %v957, %v953
      %v959 = vrot.slane %v958, 4
      %v961 = vshll.u32 %v895, 16
      %v963 = vrot.slane %v961, 5
      %v964 = vsel %vm916, %v959, %v963
      %v966 = vshrl.u32 %v896, 16
      %v968 = vrot.slane %v966, 4
      %v969 = vshll.u32 %v896, 16
      %v971 = vrot.slane %v969, 5
      %v972 = vor.u32 %v968, %v971
      %v973 = vrot.slane %v972, 4
      %v975 = vshll.u32 %v897, 16
      %v977 = vrot.slane %v975, 5
      %v978 = vsel %vm916, %v973, %v977
      %v979 = vshrl.u32 %v897, 16
      %v981 = vrot.slane %v979, 4
      %v982 = vor.u32 %v981, %v977
      %v983 = vrot.slane %v982, 4
      %v985 = vshll.u32 %v898, 16
      %v987 = vrot.slane %v985, 5
      %v988 = vsel %vm916, %v983, %v987
      %v990 = vshrl.u32 %v899, 16
      %v992 = vrot.slane %v990, 4
      %v993 = vshll.u32 %v899, 16
      %v995 = vrot.slane %v993, 5
      %v996 = vor.u32 %v992, %v995
      %v997 = vrot.slane %v996, 4
      %v999 = vshll.u32 %v900, 16
      %v1001 = vrot.slane %v999, 5
      %v1002 = vsel %vm916, %v997, %v1001
      %v1003 = vshrl.u32 %v900, 16
      %v1005 = vrot.slane %v1003, 4
      %v1006 = vor.u32 %v1005, %v1001
      %v1007 = vrot.slane %v1006, 4
      %v1009 = vshll.u32 %v901, 16
      %v1011 = vrot.slane %v1009, 5
      %v1012 = vsel %vm916, %v1007, %v1011
      %v1014 = vshrl.u32 %v902, 16
      %v1016 = vrot.slane %v1014, 4
      %v1017 = vshll.u32 %v902, 16
      %v1019 = vrot.slane %v1017, 5
      %v1020 = vor.u32 %v1016, %v1019
      %v1021 = vrot.slane %v1020, 4
      %v1023 = vshll.u32 %v903, 16
      %v1025 = vrot.slane %v1023, 5
      %v1026 = vsel %vm916, %v1021, %v1025
      %v1027 = vshrl.u32 %v903, 16
      %v1029 = vrot.slane %v1027, 4
      %v1030 = vor.u32 %v1029, %v1025
      %v1031 = vrot.slane %v1030, 4
      %v1033 = vshll.u32 %v904, 16
      %v1035 = vrot.slane %v1033, 5
      %v1036 = vsel %vm916, %v1031, %v1035
      %v1038 = vshrl.u32 %v905, 16
      %v1040 = vrot.slane %v1038, 4
      %v1041 = vshll.u32 %v905, 16
      %v1043 = vrot.slane %v1041, 5
      %v1044 = vor.u32 %v1040, %v1043
      %v1045 = vrot.slane %v1044, 4
      %v1047 = vshll.u32 %v906, 16
      %v1049 = vrot.slane %v1047, 5
      %v1050 = vsel %vm916, %v1045, %v1049
      %v1051 = vshrl.u32 %v906, 16
      %v1053 = vrot.slane %v1051, 4
      %v1054 = vor.u32 %v1053, %v1049
      %v1055 = vrot.slane %v1054, 4
      %v1057 = vshll.u32 %v907, 16
      %v1059 = vrot.slane %v1057, 5
      %v1060 = vsel %vm916, %v1055, %v1059
      %v1062 = vshrl.u32 %v908, 16
      %v1064 = vrot.slane %v1062, 4
      %v1065 = vshll.u32 %v908, 16
      %v1067 = vrot.slane %v1065, 5
      %v1068 = vor.u32 %v1064, %v1067
      %v1069 = vrot.slane %v1068, 4
      %v1071 = vshll.u32 %v909, 16
      %v1073 = vrot.slane %v1071, 5
      %v1074 = vsel %vm916, %v1069, %v1073
      %v1075 = vshrl.u32 %v909, 16
      %v1077 = vrot.slane %v1075, 4
      %v1078 = vor.u32 %v1077, %v1073
      %v1079 = vrot.slane %v1078, 4
      %v1081 = vshll.u32 %v910, 16
      %v1083 = vrot.slane %v1081, 5
      %v1084 = vsel %vm916, %v1079, %v1083
      %v1086 = vshrl.u32 %v911, 16
      %v1088 = vrot.slane %v1086, 4
      %v1089 = vshll.u32 %v911, 16
      %v1091 = vrot.slane %v1089, 5
      %v1092 = vor.u32 %v1088, %v1091
      %v1093 = vrot.slane %v1092, 4
      %v1095 = vshll.u32 %v912, 16
      %v1097 = vrot.slane %v1095, 5
      %v1098 = vsel %vm916, %v1093, %v1097
      %v1099 = vshrl.u32 %v912, 16
      %v1101 = vrot.slane %v1099, 4
      %v1102 = vor.u32 %v1101, %v1097
      %v1103 = vrot.slane %v1102, 4
      %v1105 = vshll.u32 %v913, 16
      %v1107 = vrot.slane %v1105, 5
      %v1108 = vsel %vm916, %v1103, %v1107
      %1125 = vst [vmem:[#allocation3 + $0x4] sm:$0xf] %v930
      %1126 = vst [vmem:[#allocation3 + $0x28] sm:$0xf] %v940
      %1127 = vst [vmem:[#allocation3 + $0x4c] sm:$0xf] %v954
      %1128 = vst [vmem:[#allocation3 + $0x70] sm:$0xf] %v964
      %1129 = vst [vmem:[#allocation3 + $0x94] sm:$0xf] %v978
      %1130 = vst [vmem:[#allocation3 + $0xb8] sm:$0xf] %v988
      %1131 = vst [vmem:[#allocation3 + $0xdc] sm:$0xf] %v1002
      %1132 = vst [vmem:[#allocation3 + $0x100] sm:$0xf] %v1012
      %1133 = vst [vmem:[#allocation3 + $0x124] sm:$0xf] %v1026
      %1134 = vst [vmem:[#allocation3 + $0x148] sm:$0xf] %v1036
      %1135 = vst [vmem:[#allocation3 + $0x16c] sm:$0xf] %v1050
      %1136 = vst [vmem:[#allocation3 + $0x190] sm:$0xf] %v1060
      %1137 = vst [vmem:[#allocation3 + $0x1b4] sm:$0xf] %v1074
      %1138 = vst [vmem:[#allocation3 + $0x1d8] sm:$0xf] %v1084
      %1139 = vst [vmem:[#allocation3 + $0x1fc] sm:$0xf] %v1098
      %1140 = vst [vmem:[#allocation3 + $0x220] sm:$0xf] %v1108
      %v1141 = vld [vmem:[#allocation2] sm:$0xe]
      %v1142 = vld [vmem:[#allocation2 + $0x4] sm:$0xf]
      %v1143 = vld [vmem:[#allocation2 + $0x8] sm:$0x1]
      %v1144 = vld [vmem:[#allocation2 + $0xc] sm:$0xe]
      %v1145 = vld [vmem:[#allocation2 + $0x10] sm:$0xf]
      %v1146 = vld [vmem:[#allocation2 + $0x14] sm:$0x1]
      %v1147 = vld [vmem:[#allocation2 + $0x18] sm:$0xe]
      %v1148 = vld [vmem:[#allocation2 + $0x1c] sm:$0xf]
      %v1149 = vld [vmem:[#allocation2 + $0x20] sm:$0x1]
      %v1150 = vld [vmem:[#allocation2 + $0x24] sm:$0xe]
      %v1151 = vld [vmem:[#allocation2 + $0x28] sm:$0xf]
      %v1152 = vld [vmem:[#allocation2 + $0x2c] sm:$0x1]
      %v1153 = vld [vmem:[#allocation2 + $0x30] sm:$0xe]
      %v1154 = vld [vmem:[#allocation2 + $0x34] sm:$0xf]
      %v1155 = vld [vmem:[#allocation2 + $0x38] sm:$0x1]
      %v1156 = vld [vmem:[#allocation2 + $0x3c] sm:$0xe]
      %v1157 = vld [vmem:[#allocation2 + $0x40] sm:$0xf]
      %v1158 = vld [vmem:[#allocation2 + $0x44] sm:$0x1]
      %v1159 = vld [vmem:[#allocation2 + $0x48] sm:$0xe]
      %v1160 = vld [vmem:[#allocation2 + $0x4c] sm:$0xf]
      %v1161 = vld [vmem:[#allocation2 + $0x50] sm:$0x1]
      %v1162 = vld [vmem:[#allocation2 + $0x54] sm:$0xe]
      %v1163 = vld [vmem:[#allocation2 + $0x58] sm:$0xf]
      %v1164 = vld [vmem:[#allocation2 + $0x5c] sm:$0x1]
      %vm1189 = vcmask 1042432
      %vm1190 = vcmask 1046532
      %vm1191 = vmor %vm1189, %vm1190
      %v1192 = vrot.slane %v1141, 5
      %v1193 = vrot.slane %v1192, 4
      %v1194 = vrot.slane %v1142, 5
      %v1195 = vsel %vm1191, %v1193, %v1194
      %v1196 = vrot.slane %v1194, 4
      %v1197 = vrot.slane %v1143, 5
      %v1198 = vsel %vm1191, %v1196, %v1197
      %v1199 = vrot.slane %v1144, 5
      %v1200 = vrot.slane %v1199, 4
      %v1201 = vrot.slane %v1145, 5
      %v1202 = vsel %vm1191, %v1200, %v1201
      %v1203 = vrot.slane %v1201, 4
      %v1204 = vrot.slane %v1146, 5
      %v1205 = vsel %vm1191, %v1203, %v1204
      %v1206 = vrot.slane %v1147, 5
      %v1207 = vrot.slane %v1206, 4
      %v1208 = vrot.slane %v1148, 5
      %v1209 = vsel %vm1191, %v1207, %v1208
      %v1210 = vrot.slane %v1208, 4
      %v1211 = vrot.slane %v1149, 5
      %v1212 = vsel %vm1191, %v1210, %v1211
      %v1213 = vrot.slane %v1150, 5
      %v1214 = vrot.slane %v1213, 4
      %v1215 = vrot.slane %v1151, 5
      %v1216 = vsel %vm1191, %v1214, %v1215
      %v1217 = vrot.slane %v1215, 4
      %v1218 = vrot.slane %v1152, 5
      %v1219 = vsel %vm1191, %v1217, %v1218
      %v1220 = vrot.slane %v1153, 5
      %v1221 = vrot.slane %v1220, 4
      %v1222 = vrot.slane %v1154, 5
      %v1223 = vsel %vm1191, %v1221, %v1222
      %v1224 = vrot.slane %v1222, 4
      %v1225 = vrot.slane %v1155, 5
      %v1226 = vsel %vm1191, %v1224, %v1225
      %v1227 = vrot.slane %v1156, 5
      %v1228 = vrot.slane %v1227, 4
      %v1229 = vrot.slane %v1157, 5
      %v1230 = vsel %vm1191, %v1228, %v1229
      %v1231 = vrot.slane %v1229, 4
      %v1232 = vrot.slane %v1158, 5
      %v1233 = vsel %vm1191, %v1231, %v1232
      %v1234 = vrot.slane %v1159, 5
      %v1235 = vrot.slane %v1234, 4
      %v1236 = vrot.slane %v1160, 5
      %v1237 = vsel %vm1191, %v1235, %v1236
      %v1238 = vrot.slane %v1236, 4
      %v1239 = vrot.slane %v1161, 5
      %v1240 = vsel %vm1191, %v1238, %v1239
      %v1241 = vrot.slane %v1162, 5
      %v1242 = vrot.slane %v1241, 4
      %v1243 = vrot.slane %v1163, 5
      %v1244 = vsel %vm1191, %v1242, %v1243
      %v1245 = vrot.slane %v1243, 4
      %v1246 = vrot.slane %v1164, 5
      %v1247 = vsel %vm1191, %v1245, %v1246
      %1264 = vst [vmem:[#allocation3 + $0x8] sm:$0xf] %v1195
      %1265 = vst [vmem:[#allocation3 + $0x2c] sm:$0xf] %v1198
      %1266 = vst [vmem:[#allocation3 + $0x50] sm:$0xf] %v1202
      %1267 = vst [vmem:[#allocation3 + $0x74] sm:$0xf] %v1205
      %1268 = vst [vmem:[#allocation3 + $0x98] sm:$0xf] %v1209
      %1269 = vst [vmem:[#allocation3 + $0xbc] sm:$0xf] %v1212
      %1270 = vst [vmem:[#allocation3 + $0xe0] sm:$0xf] %v1216
      %1271 = vst [vmem:[#allocation3 + $0x104] sm:$0xf] %v1219
      %1272 = vst [vmem:[#allocation3 + $0x128] sm:$0xf] %v1223
      %1273 = vst [vmem:[#allocation3 + $0x14c] sm:$0xf] %v1226
      %1274 = vst [vmem:[#allocation3 + $0x170] sm:$0xf] %v1230
      %1275 = vst [vmem:[#allocation3 + $0x194] sm:$0xf] %v1233
      %1276 = vst [vmem:[#allocation3 + $0x1b8] sm:$0xf] %v1237
      %1277 = vst [vmem:[#allocation3 + $0x1dc] sm:$0xf] %v1240
      %1278 = vst [vmem:[#allocation3 + $0x200] sm:$0xf] %v1244
      %1279 = vst [vmem:[#allocation3 + $0x224] sm:$0xf] %v1247
      %v1280 = vld [vmem:[%s645] sm:$0xf]
      %v1281 = vld [vmem:[%s645 + $0x4] sm:$0xf]
      %v1282 = vld [vmem:[%s645 + $0xc] sm:$0xf]
      %v1283 = vld [vmem:[%s645 + $0x10] sm:$0xf]
      %v1284 = vld [vmem:[%s645 + $0x18] sm:$0xf]
      %v1285 = vld [vmem:[%s645 + $0x1c] sm:$0xf]
      %v1286 = vld [vmem:[%s645 + $0x24] sm:$0xf]
      %v1287 = vld [vmem:[%s645 + $0x28] sm:$0xf]
      %v1288 = vld [vmem:[%s645 + $0x30] sm:$0xf]
      %v1289 = vld [vmem:[%s645 + $0x34] sm:$0xf]
      %v1290 = vld [vmem:[%s645 + $0x3c] sm:$0xf]
      %v1291 = vld [vmem:[%s645 + $0x40] sm:$0xf]
      %v1292 = vld [vmem:[%s645 + $0x48] sm:$0xf]
      %v1293 = vld [vmem:[%s645 + $0x4c] sm:$0xf]
      %v1294 = vld [vmem:[%s645 + $0x54] sm:$0xf]
      %v1295 = vld [vmem:[%s645 + $0x58] sm:$0xf]
      %1296 = vst [vmem:[#allocation3 + $0xc] sm:$0xf] %v1280
      %1297 = vst [vmem:[#allocation3 + $0x30] sm:$0xf] %v1281
      %1298 = vst [vmem:[#allocation3 + $0x54] sm:$0xf] %v1282
      %1299 = vst [vmem:[#allocation3 + $0x78] sm:$0xf] %v1283
      %1300 = vst [vmem:[#allocation3 + $0x9c] sm:$0xf] %v1284
      %1301 = vst [vmem:[#allocation3 + $0xc0] sm:$0xf] %v1285
      %1302 = vst [vmem:[#allocation3 + $0xe4] sm:$0xf] %v1286
      %1303 = vst [vmem:[#allocation3 + $0x108] sm:$0xf] %v1287
      %1304 = vst [vmem:[#allocation3 + $0x12c] sm:$0xf] %v1288
      %1305 = vst [vmem:[#allocation3 + $0x150] sm:$0xf] %v1289
      %1306 = vst [vmem:[#allocation3 + $0x174] sm:$0xf] %v1290
      %1307 = vst [vmem:[#allocation3 + $0x198] sm:$0xf] %v1291
      %1308 = vst [vmem:[#allocation3 + $0x1bc] sm:$0xf] %v1292
      %1309 = vst [vmem:[#allocation3 + $0x1e0] sm:$0xf] %v1293
      %1310 = vst [vmem:[#allocation3 + $0x204] sm:$0xf] %v1294
      %1311 = vst [vmem:[#allocation3 + $0x228] sm:$0xf] %v1295
      %v1312 = vld [vmem:[%s645] sm:$0xf]
      %v1313 = vld [vmem:[%s645 + $0x4] sm:$0xf]
      %v1314 = vld [vmem:[%s645 + $0x8] sm:$0x1]
      %v1315 = vld [vmem:[%s645 + $0xc] sm:$0xf]
      %v1316 = vld [vmem:[%s645 + $0x10] sm:$0xf]
      %v1317 = vld [vmem:[%s645 + $0x14] sm:$0x1]
      %v1318 = vld [vmem:[%s645 + $0x18] sm:$0xf]
      %v1319 = vld [vmem:[%s645 + $0x1c] sm:$0xf]
      %v1320 = vld [vmem:[%s645 + $0x20] sm:$0x1]
      %v1321 = vld [vmem:[%s645 + $0x24] sm:$0xf]
      %v1322 = vld [vmem:[%s645 + $0x28] sm:$0xf]
      %v1323 = vld [vmem:[%s645 + $0x2c] sm:$0x1]
      %v1324 = vld [vmem:[%s645 + $0x30] sm:$0xf]
      %v1325 = vld [vmem:[%s645 + $0x34] sm:$0xf]
      %v1326 = vld [vmem:[%s645 + $0x38] sm:$0x1]
      %v1327 = vld [vmem:[%s645 + $0x3c] sm:$0xf]
      %v1328 = vld [vmem:[%s645 + $0x40] sm:$0xf]
      %v1329 = vld [vmem:[%s645 + $0x44] sm:$0x1]
      %v1330 = vld [vmem:[%s645 + $0x48] sm:$0xf]
      %v1331 = vld [vmem:[%s645 + $0x4c] sm:$0xf]
      %v1332 = vld [vmem:[%s645 + $0x50] sm:$0x1]
      %v1333 = vld [vmem:[%s645 + $0x54] sm:$0xf]
      %v1334 = vld [vmem:[%s645 + $0x58] sm:$0xf]
      %v1335 = vld [vmem:[%s645 + $0x5c] sm:$0x1]
      %v1337 = vshrl.u32 %v1312, 16
      %v1339 = vrot.slane %v1337, 4
      %v1340 = vshll.u32 %v1312, 16
      %v1342 = vrot.slane %v1340, 5
      %v1343 = vor.u32 %v1339, %v1342
      %v1344 = vrot.slane %v1343, 4
      %v1346 = vshll.u32 %v1313, 16
      %v1348 = vrot.slane %v1346, 5
      %v1349 = vsel %vm916, %v1344, %v1348
      %v1350 = vshrl.u32 %v1313, 16
      %v1352 = vrot.slane %v1350, 4
      %v1353 = vor.u32 %v1352, %v1348
      %v1354 = vrot.slane %v1353, 4
      %v1356 = vshll.u32 %v1314, 16
      %v1358 = vrot.slane %v1356, 5
      %v1359 = vsel %vm916, %v1354, %v1358
      %v1361 = vshrl.u32 %v1315, 16
      %v1363 = vrot.slane %v1361, 4
      %v1364 = vshll.u32 %v1315, 16
      %v1366 = vrot.slane %v1364, 5
      %v1367 = vor.u32 %v1363, %v1366
      %v1368 = vrot.slane %v1367, 4
      %v1370 = vshll.u32 %v1316, 16
      %v1372 = vrot.slane %v1370, 5
      %v1373 = vsel %vm916, %v1368, %v1372
      %v1374 = vshrl.u32 %v1316, 16
      %v1376 = vrot.slane %v1374, 4
      %v1377 = vor.u32 %v1376, %v1372
      %v1378 = vrot.slane %v1377, 4
      %v1380 = vshll.u32 %v1317, 16
      %v1382 = vrot.slane %v1380, 5
      %v1383 = vsel %vm916, %v1378, %v1382
      %v1385 = vshrl.u32 %v1318, 16
      %v1387 = vrot.slane %v1385, 4
      %v1388 = vshll.u32 %v1318, 16
      %v1390 = vrot.slane %v1388, 5
      %v1391 = vor.u32 %v1387, %v1390
      %v1392 = vrot.slane %v1391, 4
      %v1394 = vshll.u32 %v1319, 16
      %v1396 = vrot.slane %v1394, 5
      %v1397 = vsel %vm916, %v1392, %v1396
      %v1398 = vshrl.u32 %v1319, 16
      %v1400 = vrot.slane %v1398, 4
      %v1401 = vor.u32 %v1400, %v1396
      %v1402 = vrot.slane %v1401, 4
      %v1404 = vshll.u32 %v1320, 16
      %v1406 = vrot.slane %v1404, 5
      %v1407 = vsel %vm916, %v1402, %v1406
      %v1409 = vshrl.u32 %v1321, 16
      %v1411 = vrot.slane %v1409, 4
      %v1412 = vshll.u32 %v1321, 16
      %v1414 = vrot.slane %v1412, 5
      %v1415 = vor.u32 %v1411, %v1414
      %v1416 = vrot.slane %v1415, 4
      %v1418 = vshll.u32 %v1322, 16
      %v1420 = vrot.slane %v1418, 5
      %v1421 = vsel %vm916, %v1416, %v1420
      %v1422 = vshrl.u32 %v1322, 16
      %v1424 = vrot.slane %v1422, 4
      %v1425 = vor.u32 %v1424, %v1420
      %v1426 = vrot.slane %v1425, 4
      %v1428 = vshll.u32 %v1323, 16
      %v1430 = vrot.slane %v1428, 5
      %v1431 = vsel %vm916, %v1426, %v1430
      %v1433 = vshrl.u32 %v1324, 16
      %v1435 = vrot.slane %v1433, 4
      %v1436 = vshll.u32 %v1324, 16
      %v1438 = vrot.slane %v1436, 5
      %v1439 = vor.u32 %v1435, %v1438
      %v1440 = vrot.slane %v1439, 4
      %v1442 = vshll.u32 %v1325, 16
      %v1444 = vrot.slane %v1442, 5
      %v1445 = vsel %vm916, %v1440, %v1444
      %v1446 = vshrl.u32 %v1325, 16
      %v1448 = vrot.slane %v1446, 4
      %v1449 = vor.u32 %v1448, %v1444
      %v1450 = vrot.slane %v1449, 4
      %v1452 = vshll.u32 %v1326, 16
      %v1454 = vrot.slane %v1452, 5
      %v1455 = vsel %vm916, %v1450, %v1454
      %v1457 = vshrl.u32 %v1327, 16
      %v1459 = vrot.slane %v1457, 4
      %v1460 = vshll.u32 %v1327, 16
      %v1462 = vrot.slane %v1460, 5
      %v1463 = vor.u32 %v1459, %v1462
      %v1464 = vrot.slane %v1463, 4
      %v1466 = vshll.u32 %v1328, 16
      %v1468 = vrot.slane %v1466, 5
      %v1469 = vsel %vm916, %v1464, %v1468
      %v1470 = vshrl.u32 %v1328, 16
      %v1472 = vrot.slane %v1470, 4
      %v1473 = vor.u32 %v1472, %v1468
      %v1474 = vrot.slane %v1473, 4
      %v1476 = vshll.u32 %v1329, 16
      %v1478 = vrot.slane %v1476, 5
      %v1479 = vsel %vm916, %v1474, %v1478
      %v1481 = vshrl.u32 %v1330, 16
      %v1483 = vrot.slane %v1481, 4
      %v1484 = vshll.u32 %v1330, 16
      %v1486 = vrot.slane %v1484, 5
      %v1487 = vor.u32 %v1483, %v1486
      %v1488 = vrot.slane %v1487, 4
      %v1490 = vshll.u32 %v1331, 16
      %v1492 = vrot.slane %v1490, 5
      %v1493 = vsel %vm916, %v1488, %v1492
      %v1494 = vshrl.u32 %v1331, 16
      %v1496 = vrot.slane %v1494, 4
      %v1497 = vor.u32 %v1496, %v1492
      %v1498 = vrot.slane %v1497, 4
      %v1500 = vshll.u32 %v1332, 16
      %v1502 = vrot.slane %v1500, 5
      %v1503 = vsel %vm916, %v1498, %v1502
      %v1505 = vshrl.u32 %v1333, 16
      %v1507 = vrot.slane %v1505, 4
      %v1508 = vshll.u32 %v1333, 16
      %v1510 = vrot.slane %v1508, 5
      %v1511 = vor.u32 %v1507, %v1510
      %v1512 = vrot.slane %v1511, 4
      %v1514 = vshll.u32 %v1334, 16
      %v1516 = vrot.slane %v1514, 5
      %v1517 = vsel %vm916, %v1512, %v1516
      %v1518 = vshrl.u32 %v1334, 16
      %v1520 = vrot.slane %v1518, 4
      %v1521 = vor.u32 %v1520, %v1516
      %v1522 = vrot.slane %v1521, 4
      %v1524 = vshll.u32 %v1335, 16
      %v1526 = vrot.slane %v1524, 5
      %v1527 = vsel %vm916, %v1522, %v1526
      %1544 = vst [vmem:[#allocation3 + $0x10] sm:$0xf] %v1349
      %1545 = vst [vmem:[#allocation3 + $0x34] sm:$0xf] %v1359
      %1546 = vst [vmem:[#allocation3 + $0x58] sm:$0xf] %v1373
      %1547 = vst [vmem:[#allocation3 + $0x7c] sm:$0xf] %v1383
      %1548 = vst [vmem:[#allocation3 + $0xa0] sm:$0xf] %v1397
      %1549 = vst [vmem:[#allocation3 + $0xc4] sm:$0xf] %v1407
      %1550 = vst [vmem:[#allocation3 + $0xe8] sm:$0xf] %v1421
      %1551 = vst [vmem:[#allocation3 + $0x10c] sm:$0xf] %v1431
      %1552 = vst [vmem:[#allocation3 + $0x130] sm:$0xf] %v1445
      %1553 = vst [vmem:[#allocation3 + $0x154] sm:$0xf] %v1455
      %1554 = vst [vmem:[#allocation3 + $0x178] sm:$0xf] %v1469
      %1555 = vst [vmem:[#allocation3 + $0x19c] sm:$0xf] %v1479
      %1556 = vst [vmem:[#allocation3 + $0x1c0] sm:$0xf] %v1493
      %1557 = vst [vmem:[#allocation3 + $0x1e4] sm:$0xf] %v1503
      %1558 = vst [vmem:[#allocation3 + $0x208] sm:$0xf] %v1517
      %1559 = vst [vmem:[#allocation3 + $0x22c] sm:$0xf] %v1527
      %v1560 = vld [vmem:[%s645] sm:$0xe]
      %v1561 = vld [vmem:[%s645 + $0x4] sm:$0xf]
      %v1562 = vld [vmem:[%s645 + $0x8] sm:$0x1]
      %v1563 = vld [vmem:[%s645 + $0xc] sm:$0xe]
      %v1564 = vld [vmem:[%s645 + $0x10] sm:$0xf]
      %v1565 = vld [vmem:[%s645 + $0x14] sm:$0x1]
      %v1566 = vld [vmem:[%s645 + $0x18] sm:$0xe]
      %v1567 = vld [vmem:[%s645 + $0x1c] sm:$0xf]
      %v1568 = vld [vmem:[%s645 + $0x20] sm:$0x1]
      %v1569 = vld [vmem:[%s645 + $0x24] sm:$0xe]
      %v1570 = vld [vmem:[%s645 + $0x28] sm:$0xf]
      %v1571 = vld [vmem:[%s645 + $0x2c] sm:$0x1]
      %v1572 = vld [vmem:[%s645 + $0x30] sm:$0xe]
      %v1573 = vld [vmem:[%s645 + $0x34] sm:$0xf]
      %v1574 = vld [vmem:[%s645 + $0x38] sm:$0x1]
      %v1575 = vld [vmem:[%s645 + $0x3c] sm:$0xe]
      %v1576 = vld [vmem:[%s645 + $0x40] sm:$0xf]
      %v1577 = vld [vmem:[%s645 + $0x44] sm:$0x1]
      %v1578 = vld [vmem:[%s645 + $0x48] sm:$0xe]
      %v1579 = vld [vmem:[%s645 + $0x4c] sm:$0xf]
      %v1580 = vld [vmem:[%s645 + $0x50] sm:$0x1]
      %v1581 = vld [vmem:[%s645 + $0x54] sm:$0xe]
      %v1582 = vld [vmem:[%s645 + $0x58] sm:$0xf]
      %v1583 = vld [vmem:[%s645 + $0x5c] sm:$0x1]
      %v1608 = vrot.slane %v1560, 5
      %v1609 = vrot.slane %v1608, 4
      %v1610 = vrot.slane %v1561, 5
      %v1611 = vsel %vm1191, %v1609, %v1610
      %v1612 = vrot.slane %v1610, 4
      %v1613 = vrot.slane %v1562, 5
      %v1614 = vsel %vm1191, %v1612, %v1613
      %v1615 = vrot.slane %v1563, 5
      %v1616 = vrot.slane %v1615, 4
      %v1617 = vrot.slane %v1564, 5
      %v1618 = vsel %vm1191, %v1616, %v1617
      %v1619 = vrot.slane %v1617, 4
      %v1620 = vrot.slane %v1565, 5
      %v1621 = vsel %vm1191, %v1619, %v1620
      %v1622 = vrot.slane %v1566, 5
      %v1623 = vrot.slane %v1622, 4
      %v1624 = vrot.slane %v1567, 5
      %v1625 = vsel %vm1191, %v1623, %v1624
      %v1626 = vrot.slane %v1624, 4
      %v1627 = vrot.slane %v1568, 5
      %v1628 = vsel %vm1191, %v1626, %v1627
      %v1629 = vrot.slane %v1569, 5
      %v1630 = vrot.slane %v1629, 4
      %v1631 = vrot.slane %v1570, 5
      %v1632 = vsel %vm1191, %v1630, %v1631
      %v1633 = vrot.slane %v1631, 4
      %v1634 = vrot.slane %v1571, 5
      %v1635 = vsel %vm1191, %v1633, %v1634
      %v1636 = vrot.slane %v1572, 5
      %v1637 = vrot.slane %v1636, 4
      %v1638 = vrot.slane %v1573, 5
      %v1639 = vsel %vm1191, %v1637, %v1638
      %v1640 = vrot.slane %v1638, 4
      %v1641 = vrot.slane %v1574, 5
      %v1642 = vsel %vm1191, %v1640, %v1641
      %v1643 = vrot.slane %v1575, 5
      %v1644 = vrot.slane %v1643, 4
      %v1645 = vrot.slane %v1576, 5
      %v1646 = vsel %vm1191, %v1644, %v1645
      %v1647 = vrot.slane %v1645, 4
      %v1648 = vrot.slane %v1577, 5
      %v1649 = vsel %vm1191, %v1647, %v1648
      %v1650 = vrot.slane %v1578, 5
      %v1651 = vrot.slane %v1650, 4
      %v1652 = vrot.slane %v1579, 5
      %v1653 = vsel %vm1191, %v1651, %v1652
      %v1654 = vrot.slane %v1652, 4
      %v1655 = vrot.slane %v1580, 5
      %v1656 = vsel %vm1191, %v1654, %v1655
      %v1657 = vrot.slane %v1581, 5
      %v1658 = vrot.slane %v1657, 4
      %v1659 = vrot.slane %v1582, 5
      %v1660 = vsel %vm1191, %v1658, %v1659
      %v1661 = vrot.slane %v1659, 4
      %v1662 = vrot.slane %v1583, 5
      %v1663 = vsel %vm1191, %v1661, %v1662
      %1680 = vst [vmem:[#allocation3 + $0x14] sm:$0xf] %v1611
      %1681 = vst [vmem:[#allocation3 + $0x38] sm:$0xf] %v1614
      %1682 = vst [vmem:[#allocation3 + $0x5c] sm:$0xf] %v1618
      %1683 = vst [vmem:[#allocation3 + $0x80] sm:$0xf] %v1621
      %1684 = vst [vmem:[#allocation3 + $0xa4] sm:$0xf] %v1625
      %1685 = vst [vmem:[#allocation3 + $0xc8] sm:$0xf] %v1628
      %1686 = vst [vmem:[#allocation3 + $0xec] sm:$0xf] %v1632
      %1687 = vst [vmem:[#allocation3 + $0x110] sm:$0xf] %v1635
      %1688 = vst [vmem:[#allocation3 + $0x134] sm:$0xf] %v1639
      %1689 = vst [vmem:[#allocation3 + $0x158] sm:$0xf] %v1642
      %1690 = vst [vmem:[#allocation3 + $0x17c] sm:$0xf] %v1646
      %1691 = vst [vmem:[#allocation3 + $0x1a0] sm:$0xf] %v1649
      %1692 = vst [vmem:[#allocation3 + $0x1c4] sm:$0xf] %v1653
      %1693 = vst [vmem:[#allocation3 + $0x1e8] sm:$0xf] %v1656
      %1694 = vst [vmem:[#allocation3 + $0x20c] sm:$0xf] %v1660
      %1695 = vst [vmem:[#allocation3 + $0x230] sm:$0xf] %v1663
      %s1696 = scalar_lea.vmem [#allocation2], 24
      %v1697 = vld [vmem:[%s1696] sm:$0xf]
      %v1698 = vld [vmem:[%s1696 + $0x4] sm:$0xf]
      %v1699 = vld [vmem:[%s1696 + $0xc] sm:$0xf]
      %v1700 = vld [vmem:[%s1696 + $0x10] sm:$0xf]
      %v1701 = vld [vmem:[%s1696 + $0x18] sm:$0xf]
      %v1702 = vld [vmem:[%s1696 + $0x1c] sm:$0xf]
      %v1703 = vld [vmem:[%s1696 + $0x24] sm:$0xf]
      %v1704 = vld [vmem:[%s1696 + $0x28] sm:$0xf]
      %v1705 = vld [vmem:[%s1696 + $0x30] sm:$0xf]
      %v1706 = vld [vmem:[%s1696 + $0x34] sm:$0xf]
      %v1707 = vld [vmem:[%s1696 + $0x3c] sm:$0xf]
      %v1708 = vld [vmem:[%s1696 + $0x40] sm:$0xf]
      %v1709 = vld [vmem:[%s1696 + $0x48] sm:$0xf]
      %v1710 = vld [vmem:[%s1696 + $0x4c] sm:$0xf]
      %v1711 = vld [vmem:[%s1696 + $0x54] sm:$0xf]
      %v1712 = vld [vmem:[%s1696 + $0x58] sm:$0xf]
      %1713 = vst [vmem:[#allocation3 + $0x18] sm:$0xf] %v1697
      %1714 = vst [vmem:[#allocation3 + $0x3c] sm:$0xf] %v1698
      %1715 = vst [vmem:[#allocation3 + $0x60] sm:$0xf] %v1699
      %1716 = vst [vmem:[#allocation3 + $0x84] sm:$0xf] %v1700
      %1717 = vst [vmem:[#allocation3 + $0xa8] sm:$0xf] %v1701
      %1718 = vst [vmem:[#allocation3 + $0xcc] sm:$0xf] %v1702
      %1719 = vst [vmem:[#allocation3 + $0xf0] sm:$0xf] %v1703
      %1720 = vst [vmem:[#allocation3 + $0x114] sm:$0xf] %v1704
      %1721 = vst [vmem:[#allocation3 + $0x138] sm:$0xf] %v1705
      %1722 = vst [vmem:[#allocation3 + $0x15c] sm:$0xf] %v1706
      %1723 = vst [vmem:[#allocation3 + $0x180] sm:$0xf] %v1707
      %1724 = vst [vmem:[#allocation3 + $0x1a4] sm:$0xf] %v1708
      %1725 = vst [vmem:[#allocation3 + $0x1c8] sm:$0xf] %v1709
      %1726 = vst [vmem:[#allocation3 + $0x1ec] sm:$0xf] %v1710
      %1727 = vst [vmem:[#allocation3 + $0x210] sm:$0xf] %v1711
      %1728 = vst [vmem:[#allocation3 + $0x234] sm:$0xf] %v1712
      %v1729 = vld [vmem:[%s1696] sm:$0xf]
      %v1730 = vld [vmem:[%s1696 + $0x4] sm:$0xf]
      %v1731 = vld [vmem:[%s1696 + $0x8] sm:$0x1]
      %v1732 = vld [vmem:[%s1696 + $0xc] sm:$0xf]
      %v1733 = vld [vmem:[%s1696 + $0x10] sm:$0xf]
      %v1734 = vld [vmem:[%s1696 + $0x14] sm:$0x1]
      %v1735 = vld [vmem:[%s1696 + $0x18] sm:$0xf]
      %v1736 = vld [vmem:[%s1696 + $0x1c] sm:$0xf]
      %v1737 = vld [vmem:[%s1696 + $0x20] sm:$0x1]
      %v1738 = vld [vmem:[%s1696 + $0x24] sm:$0xf]
      %v1739 = vld [vmem:[%s1696 + $0x28] sm:$0xf]
      %v1740 = vld [vmem:[%s1696 + $0x2c] sm:$0x1]
      %v1741 = vld [vmem:[%s1696 + $0x30] sm:$0xf]
      %v1742 = vld [vmem:[%s1696 + $0x34] sm:$0xf]
      %v1743 = vld [vmem:[%s1696 + $0x38] sm:$0x1]
      %v1744 = vld [vmem:[%s1696 + $0x3c] sm:$0xf]
      %v1745 = vld [vmem:[%s1696 + $0x40] sm:$0xf]
      %v1746 = vld [vmem:[%s1696 + $0x44] sm:$0x1]
      %v1747 = vld [vmem:[%s1696 + $0x48] sm:$0xf]
      %v1748 = vld [vmem:[%s1696 + $0x4c] sm:$0xf]
      %v1749 = vld [vmem:[%s1696 + $0x50] sm:$0x1]
      %v1750 = vld [vmem:[%s1696 + $0x54] sm:$0xf]
      %v1751 = vld [vmem:[%s1696 + $0x58] sm:$0xf]
      %v1752 = vld [vmem:[%s1696 + $0x5c] sm:$0x1]
      %v1754 = vshrl.u32 %v1729, 16
      %v1756 = vrot.slane %v1754, 4
      %v1757 = vshll.u32 %v1729, 16
      %v1759 = vrot.slane %v1757, 5
      %v1760 = vor.u32 %v1756, %v1759
      %v1761 = vrot.slane %v1760, 4
      %v1763 = vshll.u32 %v1730, 16
      %v1765 = vrot.slane %v1763, 5
      %v1766 = vsel %vm916, %v1761, %v1765
      %v1767 = vshrl.u32 %v1730, 16
      %v1769 = vrot.slane %v1767, 4
      %v1770 = vor.u32 %v1769, %v1765
      %v1771 = vrot.slane %v1770, 4
      %v1773 = vshll.u32 %v1731, 16
      %v1775 = vrot.slane %v1773, 5
      %v1776 = vsel %vm916, %v1771, %v1775
      %v1778 = vshrl.u32 %v1732, 16
      %v1780 = vrot.slane %v1778, 4
      %v1781 = vshll.u32 %v1732, 16
      %v1783 = vrot.slane %v1781, 5
      %v1784 = vor.u32 %v1780, %v1783
      %v1785 = vrot.slane %v1784, 4
      %v1787 = vshll.u32 %v1733, 16
      %v1789 = vrot.slane %v1787, 5
      %v1790 = vsel %vm916, %v1785, %v1789
      %v1791 = vshrl.u32 %v1733, 16
      %v1793 = vrot.slane %v1791, 4
      %v1794 = vor.u32 %v1793, %v1789
      %v1795 = vrot.slane %v1794, 4
      %v1797 = vshll.u32 %v1734, 16
      %v1799 = vrot.slane %v1797, 5
      %v1800 = vsel %vm916, %v1795, %v1799
      %v1802 = vshrl.u32 %v1735, 16
      %v1804 = vrot.slane %v1802, 4
      %v1805 = vshll.u32 %v1735, 16
      %v1807 = vrot.slane %v1805, 5
      %v1808 = vor.u32 %v1804, %v1807
      %v1809 = vrot.slane %v1808, 4
      %v1811 = vshll.u32 %v1736, 16
      %v1813 = vrot.slane %v1811, 5
      %v1814 = vsel %vm916, %v1809, %v1813
      %v1815 = vshrl.u32 %v1736, 16
      %v1817 = vrot.slane %v1815, 4
      %v1818 = vor.u32 %v1817, %v1813
      %v1819 = vrot.slane %v1818, 4
      %v1821 = vshll.u32 %v1737, 16
      %v1823 = vrot.slane %v1821, 5
      %v1824 = vsel %vm916, %v1819, %v1823
      %v1826 = vshrl.u32 %v1738, 16
      %v1828 = vrot.slane %v1826, 4
      %v1829 = vshll.u32 %v1738, 16
      %v1831 = vrot.slane %v1829, 5
      %v1832 = vor.u32 %v1828, %v1831
      %v1833 = vrot.slane %v1832, 4
      %v1835 = vshll.u32 %v1739, 16
      %v1837 = vrot.slane %v1835, 5
      %v1838 = vsel %vm916, %v1833, %v1837
      %v1839 = vshrl.u32 %v1739, 16
      %v1841 = vrot.slane %v1839, 4
      %v1842 = vor.u32 %v1841, %v1837
      %v1843 = vrot.slane %v1842, 4
      %v1845 = vshll.u32 %v1740, 16
      %v1847 = vrot.slane %v1845, 5
      %v1848 = vsel %vm916, %v1843, %v1847
      %v1850 = vshrl.u32 %v1741, 16
      %v1852 = vrot.slane %v1850, 4
      %v1853 = vshll.u32 %v1741, 16
      %v1855 = vrot.slane %v1853, 5
      %v1856 = vor.u32 %v1852, %v1855
      %v1857 = vrot.slane %v1856, 4
      %v1859 = vshll.u32 %v1742, 16
      %v1861 = vrot.slane %v1859, 5
      %v1862 = vsel %vm916, %v1857, %v1861
      %v1863 = vshrl.u32 %v1742, 16
      %v1865 = vrot.slane %v1863, 4
      %v1866 = vor.u32 %v1865, %v1861
      %v1867 = vrot.slane %v1866, 4
      %v1869 = vshll.u32 %v1743, 16
      %v1871 = vrot.slane %v1869, 5
      %v1872 = vsel %vm916, %v1867, %v1871
      %v1874 = vshrl.u32 %v1744, 16
      %v1876 = vrot.slane %v1874, 4
      %v1877 = vshll.u32 %v1744, 16
      %v1879 = vrot.slane %v1877, 5
      %v1880 = vor.u32 %v1876, %v1879
      %v1881 = vrot.slane %v1880, 4
      %v1883 = vshll.u32 %v1745, 16
      %v1885 = vrot.slane %v1883, 5
      %v1886 = vsel %vm916, %v1881, %v1885
      %v1887 = vshrl.u32 %v1745, 16
      %v1889 = vrot.slane %v1887, 4
      %v1890 = vor.u32 %v1889, %v1885
      %v1891 = vrot.slane %v1890, 4
      %v1893 = vshll.u32 %v1746, 16
      %v1895 = vrot.slane %v1893, 5
      %v1896 = vsel %vm916, %v1891, %v1895
      %v1898 = vshrl.u32 %v1747, 16
      %v1900 = vrot.slane %v1898, 4
      %v1901 = vshll.u32 %v1747, 16
      %v1903 = vrot.slane %v1901, 5
      %v1904 = vor.u32 %v1900, %v1903
      %v1905 = vrot.slane %v1904, 4
      %v1907 = vshll.u32 %v1748, 16
      %v1909 = vrot.slane %v1907, 5
      %v1910 = vsel %vm916, %v1905, %v1909
      %v1911 = vshrl.u32 %v1748, 16
      %v1913 = vrot.slane %v1911, 4
      %v1914 = vor.u32 %v1913, %v1909
      %v1915 = vrot.slane %v1914, 4
      %v1917 = vshll.u32 %v1749, 16
      %v1919 = vrot.slane %v1917, 5
      %v1920 = vsel %vm916, %v1915, %v1919
      %v1922 = vshrl.u32 %v1750, 16
      %v1924 = vrot.slane %v1922, 4
      %v1925 = vshll.u32 %v1750, 16
      %v1927 = vrot.slane %v1925, 5
      %v1928 = vor.u32 %v1924, %v1927
      %v1929 = vrot.slane %v1928, 4
      %v1931 = vshll.u32 %v1751, 16
      %v1933 = vrot.slane %v1931, 5
      %v1934 = vsel %vm916, %v1929, %v1933
      %v1935 = vshrl.u32 %v1751, 16
      %v1937 = vrot.slane %v1935, 4
      %v1938 = vor.u32 %v1937, %v1933
      %v1939 = vrot.slane %v1938, 4
      %v1941 = vshll.u32 %v1752, 16
      %v1943 = vrot.slane %v1941, 5
      %v1944 = vsel %vm916, %v1939, %v1943
      %1961 = vst [vmem:[#allocation3 + $0x1c] sm:$0xf] %v1766
      %1962 = vst [vmem:[#allocation3 + $0x40] sm:$0xf] %v1776
      %1963 = vst [vmem:[#allocation3 + $0x64] sm:$0xf] %v1790
      %1964 = vst [vmem:[#allocation3 + $0x88] sm:$0xf] %v1800
      %1965 = vst [vmem:[#allocation3 + $0xac] sm:$0xf] %v1814
      %1966 = vst [vmem:[#allocation3 + $0xd0] sm:$0xf] %v1824
      %1967 = vst [vmem:[#allocation3 + $0xf4] sm:$0xf] %v1838
      %1968 = vst [vmem:[#allocation3 + $0x118] sm:$0xf] %v1848
      %1969 = vst [vmem:[#allocation3 + $0x13c] sm:$0xf] %v1862
      %1970 = vst [vmem:[#allocation3 + $0x160] sm:$0xf] %v1872
      %1971 = vst [vmem:[#allocation3 + $0x184] sm:$0xf] %v1886
      %1972 = vst [vmem:[#allocation3 + $0x1a8] sm:$0xf] %v1896
      %1973 = vst [vmem:[#allocation3 + $0x1cc] sm:$0xf] %v1910
      %1974 = vst [vmem:[#allocation3 + $0x1f0] sm:$0xf] %v1920
      %1975 = vst [vmem:[#allocation3 + $0x214] sm:$0xf] %v1934
      %1976 = vst [vmem:[#allocation3 + $0x238] sm:$0xf] %v1944
      %v1977 = vld [vmem:[%s1696] sm:$0xe]
      %v1978 = vld [vmem:[%s1696 + $0x4] sm:$0xf]
      %v1979 = vld [vmem:[%s1696 + $0x8] sm:$0x1]
      %v1980 = vld [vmem:[%s1696 + $0xc] sm:$0xe]
      %v1981 = vld [vmem:[%s1696 + $0x10] sm:$0xf]
      %v1982 = vld [vmem:[%s1696 + $0x14] sm:$0x1]
      %v1983 = vld [vmem:[%s1696 + $0x18] sm:$0xe]
      %v1984 = vld [vmem:[%s1696 + $0x1c] sm:$0xf]
      %v1985 = vld [vmem:[%s1696 + $0x20] sm:$0x1]
      %v1986 = vld [vmem:[%s1696 + $0x24] sm:$0xe]
      %v1987 = vld [vmem:[%s1696 + $0x28] sm:$0xf]
      %v1988 = vld [vmem:[%s1696 + $0x2c] sm:$0x1]
      %v1989 = vld [vmem:[%s1696 + $0x30] sm:$0xe]
      %v1990 = vld [vmem:[%s1696 + $0x34] sm:$0xf]
      %v1991 = vld [vmem:[%s1696 + $0x38] sm:$0x1]
      %v1992 = vld [vmem:[%s1696 + $0x3c] sm:$0xe]
      %v1993 = vld [vmem:[%s1696 + $0x40] sm:$0xf]
      %v1994 = vld [vmem:[%s1696 + $0x44] sm:$0x1]
      %v1995 = vld [vmem:[%s1696 + $0x48] sm:$0xe]
      %v1996 = vld [vmem:[%s1696 + $0x4c] sm:$0xf]
      %v1997 = vld [vmem:[%s1696 + $0x50] sm:$0x1]
      %v1998 = vld [vmem:[%s1696 + $0x54] sm:$0xe]
      %v1999 = vld [vmem:[%s1696 + $0x58] sm:$0xf]
      %v2000 = vld [vmem:[%s1696 + $0x5c] sm:$0x1]
      %v2025 = vrot.slane %v1977, 5
      %v2026 = vrot.slane %v2025, 4
      %v2027 = vrot.slane %v1978, 5
      %v2028 = vsel %vm1191, %v2026, %v2027
      %v2029 = vrot.slane %v2027, 4
      %v2030 = vrot.slane %v1979, 5
      %v2031 = vsel %vm1191, %v2029, %v2030
      %v2032 = vrot.slane %v1980, 5
      %v2033 = vrot.slane %v2032, 4
      %v2034 = vrot.slane %v1981, 5
      %v2035 = vsel %vm1191, %v2033, %v2034
      %v2036 = vrot.slane %v2034, 4
      %v2037 = vrot.slane %v1982, 5
      %v2038 = vsel %vm1191, %v2036, %v2037
      %v2039 = vrot.slane %v1983, 5
      %v2040 = vrot.slane %v2039, 4
      %v2041 = vrot.slane %v1984, 5
      %v2042 = vsel %vm1191, %v2040, %v2041
      %v2043 = vrot.slane %v2041, 4
      %v2044 = vrot.slane %v1985, 5
      %v2045 = vsel %vm1191, %v2043, %v2044
      %v2046 = vrot.slane %v1986, 5
      %v2047 = vrot.slane %v2046, 4
      %v2048 = vrot.slane %v1987, 5
      %v2049 = vsel %vm1191, %v2047, %v2048
      %v2050 = vrot.slane %v2048, 4
      %v2051 = vrot.slane %v1988, 5
      %v2052 = vsel %vm1191, %v2050, %v2051
      %v2053 = vrot.slane %v1989, 5
      %v2054 = vrot.slane %v2053, 4
      %v2055 = vrot.slane %v1990, 5
      %v2056 = vsel %vm1191, %v2054, %v2055
      %v2057 = vrot.slane %v2055, 4
      %v2058 = vrot.slane %v1991, 5
      %v2059 = vsel %vm1191, %v2057, %v2058
      %v2060 = vrot.slane %v1992, 5
      %v2061 = vrot.slane %v2060, 4
      %v2062 = vrot.slane %v1993, 5
      %v2063 = vsel %vm1191, %v2061, %v2062
      %v2064 = vrot.slane %v2062, 4
      %v2065 = vrot.slane %v1994, 5
      %v2066 = vsel %vm1191, %v2064, %v2065
      %v2067 = vrot.slane %v1995, 5
      %v2068 = vrot.slane %v2067, 4
      %v2069 = vrot.slane %v1996, 5
      %v2070 = vsel %vm1191, %v2068, %v2069
      %v2071 = vrot.slane %v2069, 4
      %v2072 = vrot.slane %v1997, 5
      %v2073 = vsel %vm1191, %v2071, %v2072
      %v2074 = vrot.slane %v1998, 5
      %v2075 = vrot.slane %v2074, 4
      %v2076 = vrot.slane %v1999, 5
      %v2077 = vsel %vm1191, %v2075, %v2076
      %v2078 = vrot.slane %v2076, 4
      %v2079 = vrot.slane %v2000, 5
      %v2080 = vsel %vm1191, %v2078, %v2079
      %2097 = vst [vmem:[#allocation3 + $0x20] sm:$0xf] %v2028
      %2098 = vst [vmem:[#allocation3 + $0x44] sm:$0xf] %v2031
      %2099 = vst [vmem:[#allocation3 + $0x68] sm:$0xf] %v2035
      %2100 = vst [vmem:[#allocation3 + $0x8c] sm:$0xf] %v2038
      %2101 = vst [vmem:[#allocation3 + $0xb0] sm:$0xf] %v2042
      %2102 = vst [vmem:[#allocation3 + $0xd4] sm:$0xf] %v2045
      %2103 = vst [vmem:[#allocation3 + $0xf8] sm:$0xf] %v2049
      %2104 = vst [vmem:[#allocation3 + $0x11c] sm:$0xf] %v2052
      %2105 = vst [vmem:[#allocation3 + $0x140] sm:$0xf] %v2056
      %2106 = vst [vmem:[#allocation3 + $0x164] sm:$0xf] %v2059
      %2107 = vst [vmem:[#allocation3 + $0x188] sm:$0xf] %v2063
      %2108 = vst [vmem:[#allocation3 + $0x1ac] sm:$0xf] %v2066
      %2109 = vst [vmem:[#allocation3 + $0x1d0] sm:$0xf] %v2070
      %2110 = vst [vmem:[#allocation3 + $0x1f4] sm:$0xf] %v2073
      %2111 = vst [vmem:[#allocation3 + $0x218] sm:$0xf] %v2077
      %2112 = vst [vmem:[#allocation3 + $0x23c] sm:$0xf] %v2080
      %v2113 = vld [vmem:[#allocation3] sm:$0xff]
      %v2114 = vld [vmem:[#allocation3 + $0x8] sm:$0xff]
      %v2115 = vld [vmem:[#allocation3 + $0x10] sm:$0xff]
      %v2116 = vld [vmem:[#allocation3 + $0x18] sm:$0xff]
      %v2117 = vld [vmem:[#allocation3 + $0x20] sm:$0xf]
      %v2118 = vld [vmem:[#allocation3 + $0x24] sm:$0xff]
      %v2119 = vld [vmem:[#allocation3 + $0x2c] sm:$0xff]
      %v2120 = vld [vmem:[#allocation3 + $0x34] sm:$0xff]
      %v2121 = vld [vmem:[#allocation3 + $0x3c] sm:$0xff]
      %v2122 = vld [vmem:[#allocation3 + $0x44] sm:$0xf]
      %v2123 = vld [vmem:[#allocation3 + $0x48] sm:$0xff]
      %v2124 = vld [vmem:[#allocation3 + $0x50] sm:$0xff]
      %v2125 = vld [vmem:[#allocation3 + $0x58] sm:$0xff]
      %v2126 = vld [vmem:[#allocation3 + $0x60] sm:$0xff]
      %v2127 = vld [vmem:[#allocation3 + $0x68] sm:$0xf]
      %v2128 = vld [vmem:[#allocation3 + $0x6c] sm:$0xff]
      %v2129 = vld [vmem:[#allocation3 + $0x74] sm:$0xff]
      %v2130 = vld [vmem:[#allocation3 + $0x7c] sm:$0xff]
      %v2131 = vld [vmem:[#allocation3 + $0x84] sm:$0xff]
      %v2132 = vld [vmem:[#allocation3 + $0x8c] sm:$0xf]
      %v2133 = vld [vmem:[#allocation3 + $0x90] sm:$0xff]
      %v2134 = vld [vmem:[#allocation3 + $0x98] sm:$0xff]
      %v2135 = vld [vmem:[#allocation3 + $0xa0] sm:$0xff]
      %v2136 = vld [vmem:[#allocation3 + $0xa8] sm:$0xff]
      %v2137 = vld [vmem:[#allocation3 + $0xb0] sm:$0xf]
      %v2138 = vld [vmem:[#allocation3 + $0xb4] sm:$0xff]
      %v2139 = vld [vmem:[#allocation3 + $0xbc] sm:$0xff]
      %v2140 = vld [vmem:[#allocation3 + $0xc4] sm:$0xff]
      %v2141 = vld [vmem:[#allocation3 + $0xcc] sm:$0xff]
      %v2142 = vld [vmem:[#allocation3 + $0xd4] sm:$0xf]
      %v2143 = vld [vmem:[#allocation3 + $0xd8] sm:$0xff]
      %v2144 = vld [vmem:[#allocation3 + $0xe0] sm:$0xff]
      %v2145 = vld [vmem:[#allocation3 + $0xe8] sm:$0xff]
      %v2146 = vld [vmem:[#allocation3 + $0xf0] sm:$0xff]
      %v2147 = vld [vmem:[#allocation3 + $0xf8] sm:$0xf]
      %v2148 = vld [vmem:[#allocation3 + $0xfc] sm:$0xff]
      %v2149 = vld [vmem:[#allocation3 + $0x104] sm:$0xff]
      %v2150 = vld [vmem:[#allocation3 + $0x10c] sm:$0xff]
      %v2151 = vld [vmem:[#allocation3 + $0x114] sm:$0xff]
      %v2152 = vld [vmem:[#allocation3 + $0x11c] sm:$0xf]
      %v2153 = vld [vmem:[#allocation3 + $0x120] sm:$0xff]
      %v2154 = vld [vmem:[#allocation3 + $0x128] sm:$0xff]
      %v2155 = vld [vmem:[#allocation3 + $0x130] sm:$0xff]
      %v2156 = vld [vmem:[#allocation3 + $0x138] sm:$0xff]
      %v2157 = vld [vmem:[#allocation3 + $0x140] sm:$0xf]
      %v2158 = vld [vmem:[#allocation3 + $0x144] sm:$0xff]
      %v2159 = vld [vmem:[#allocation3 + $0x14c] sm:$0xff]
      %v2160 = vld [vmem:[#allocation3 + $0x154] sm:$0xff]
      %v2161 = vld [vmem:[#allocation3 + $0x15c] sm:$0xff]
      %v2162 = vld [vmem:[#allocation3 + $0x164] sm:$0xf]
      %v2163 = vld [vmem:[#allocation3 + $0x168] sm:$0xff]
      %v2164 = vld [vmem:[#allocation3 + $0x170] sm:$0xff]
      %v2165 = vld [vmem:[#allocation3 + $0x178] sm:$0xff]
      %v2166 = vld [vmem:[#allocation3 + $0x180] sm:$0xff]
      %v2167 = vld [vmem:[#allocation3 + $0x188] sm:$0xf]
      %v2168 = vld [vmem:[#allocation3 + $0x18c] sm:$0xff]
      %v2169 = vld [vmem:[#allocation3 + $0x194] sm:$0xff]
      %v2170 = vld [vmem:[#allocation3 + $0x19c] sm:$0xff]
      %v2171 = vld [vmem:[#allocation3 + $0x1a4] sm:$0xff]
      %v2172 = vld [vmem:[#allocation3 + $0x1ac] sm:$0xf]
      %v2173 = vld [vmem:[#allocation3 + $0x1b0] sm:$0xff]
      %v2174 = vld [vmem:[#allocation3 + $0x1b8] sm:$0xff]
      %v2175 = vld [vmem:[#allocation3 + $0x1c0] sm:$0xff]
      %v2176 = vld [vmem:[#allocation3 + $0x1c8] sm:$0xff]
      %v2177 = vld [vmem:[#allocation3 + $0x1d0] sm:$0xf]
      %v2178 = vld [vmem:[#allocation3 + $0x1d4] sm:$0xff]
      %v2179 = vld [vmem:[#allocation3 + $0x1dc] sm:$0xff]
      %v2180 = vld [vmem:[#allocation3 + $0x1e4] sm:$0xff]
      %v2181 = vld [vmem:[#allocation3 + $0x1ec] sm:$0xff]
      %v2182 = vld [vmem:[#allocation3 + $0x1f4] sm:$0xf]
      %v2183 = vld [vmem:[#allocation3 + $0x1f8] sm:$0xff]
      %v2184 = vld [vmem:[#allocation3 + $0x200] sm:$0xff]
      %v2185 = vld [vmem:[#allocation3 + $0x208] sm:$0xff]
      %v2186 = vld [vmem:[#allocation3 + $0x210] sm:$0xff]
      %v2187 = vld [vmem:[#allocation3 + $0x218] sm:$0xf]
      %v2188 = vld [vmem:[#allocation3 + $0x21c] sm:$0xff]
      %v2189 = vld [vmem:[#allocation3 + $0x224] sm:$0xff]
      %v2190 = vld [vmem:[#allocation3 + $0x22c] sm:$0xff]
      %v2191 = vld [vmem:[#allocation3 + $0x234] sm:$0xff]
      %v2192 = vld [vmem:[#allocation3 + $0x23c] sm:$0xf]
      %v2193 = vld [vmem:[%s3] sm:$0xf]
      %v2194 = vld [vmem:[%s3 + $0x4] sm:$0xf]
      %v2195 = vld [vmem:[%s3 + $0x8] sm:$0xf]
      %v2196 = vld [vmem:[%s3 + $0xc] sm:$0xf]
      %v2197 = vld [vmem:[%s3 + $0x10] sm:$0xf]
      %v2198 = vld [vmem:[%s3 + $0x14] sm:$0xf]
      %v2199 = vld [vmem:[%s3 + $0x18] sm:$0xf]
      %v2200 = vld [vmem:[%s3 + $0x1c] sm:$0xf]
      %v2201 = vld [vmem:[%s3 + $0x20] sm:$0xf]
      %v2202 = vld [vmem:[%s3 + $0x24] sm:$0xf]
      %v2203 = vld [vmem:[%s3 + $0x28] sm:$0xf]
      %v2204 = vld [vmem:[%s3 + $0x2c] sm:$0xf]
      %v2205 = vld [vmem:[%s3 + $0x30] sm:$0xf]
      %v2206 = vld [vmem:[%s3 + $0x34] sm:$0xf]
      %v2207 = vld [vmem:[%s3 + $0x38] sm:$0xf]
      %v2208 = vld [vmem:[%s3 + $0x3c] sm:$0xf]
      %v2209 = vld [vmem:[%s3 + $0x40] sm:$0xf]
      %v2210 = vld [vmem:[%s3 + $0x44] sm:$0xf]
      %v2211 = vld [vmem:[%s3 + $0x48] sm:$0xf]
      %v2212 = vld [vmem:[%s3 + $0x4c] sm:$0xf]
      %v2213 = vld [vmem:[%s3 + $0x50] sm:$0xf]
      %v2214 = vld [vmem:[%s3 + $0x54] sm:$0xf]
      %v2215 = vld [vmem:[%s3 + $0x58] sm:$0xf]
      %v2216 = vld [vmem:[%s3 + $0x5c] sm:$0xf]
      %v2217 = vld [vmem:[%s3 + $0x60] sm:$0xf]
      %v2218 = vld [vmem:[%s3 + $0x64] sm:$0xf]
      %v2219 = vld [vmem:[%s3 + $0x68] sm:$0xf]
      %v2220 = vld [vmem:[%s3 + $0x6c] sm:$0xf]
      %v2221 = vld [vmem:[%s3 + $0x70] sm:$0xf]
      %v2222 = vld [vmem:[%s3 + $0x74] sm:$0xf]
      %v2223 = vld [vmem:[%s3 + $0x78] sm:$0xf]
      %v2224 = vld [vmem:[%s3 + $0x7c] sm:$0xf]
      %v2225 = vld [vmem:[%s3 + $0x80] sm:$0xf]
      %v2226 = vld [vmem:[%s3 + $0x84] sm:$0xf]
      %v2227 = vld [vmem:[%s3 + $0x88] sm:$0xf]
      %v2228 = vld [vmem:[%s3 + $0x8c] sm:$0xf]
      %v2229 = vld [vmem:[%s3 + $0x90] sm:$0xf]
      %v2230 = vld [vmem:[%s3 + $0x94] sm:$0xf]
      %v2231 = vld [vmem:[%s3 + $0x98] sm:$0xf]
      %v2232 = vld [vmem:[%s3 + $0x9c] sm:$0xf]
      %v2233 = vld [vmem:[%s3 + $0xa0] sm:$0xf]
      %v2234 = vld [vmem:[%s3 + $0xa4] sm:$0xf]
      %v2235 = vld [vmem:[%s3 + $0xa8] sm:$0xf]
      %v2236 = vld [vmem:[%s3 + $0xac] sm:$0xf]
      %v2237 = vld [vmem:[%s3 + $0xb0] sm:$0xf]
      %v2238 = vld [vmem:[%s3 + $0xb4] sm:$0xf]
      %v2239 = vld [vmem:[%s3 + $0xb8] sm:$0xf]
      %v2240 = vld [vmem:[%s3 + $0xbc] sm:$0xf]
      %v2241 = vld [vmem:[%s3 + $0xc0] sm:$0xf]
      %v2242 = vld [vmem:[%s3 + $0xc4] sm:$0xf]
      %v2243 = vld [vmem:[%s3 + $0xc8] sm:$0xf]
      %v2244 = vld [vmem:[%s3 + $0xcc] sm:$0xf]
      %v2245 = vld [vmem:[%s3 + $0xd0] sm:$0xf]
      %v2246 = vld [vmem:[%s3 + $0xd4] sm:$0xf]
      %v2247 = vld [vmem:[%s3 + $0xd8] sm:$0xf]
      %v2248 = vld [vmem:[%s3 + $0xdc] sm:$0xf]
      %v2249 = vld [vmem:[%s3 + $0xe0] sm:$0xf]
      %v2250 = vld [vmem:[%s3 + $0xe4] sm:$0xf]
      %v2251 = vld [vmem:[%s3 + $0xe8] sm:$0xf]
      %v2252 = vld [vmem:[%s3 + $0xec] sm:$0xf]
      %v2253 = vld [vmem:[%s3 + $0xf0] sm:$0xf]
      %v2254 = vld [vmem:[%s3 + $0xf4] sm:$0xf]
      %v2255 = vld [vmem:[%s3 + $0xf8] sm:$0xf]
      %v2256 = vld [vmem:[%s3 + $0xfc] sm:$0xf]
      %v2257 = vld [vmem:[%s3 + $0x100] sm:$0xf]
      %v2258 = vld [vmem:[%s3 + $0x104] sm:$0xf]
      %v2259 = vld [vmem:[%s3 + $0x108] sm:$0xf]
      %v2260 = vld [vmem:[%s3 + $0x10c] sm:$0xf]
      %v2261 = vld [vmem:[%s3 + $0x110] sm:$0xf]
      %v2262 = vld [vmem:[%s3 + $0x114] sm:$0xf]
      %v2263 = vld [vmem:[%s3 + $0x118] sm:$0xf]
      %v2264 = vld [vmem:[%s3 + $0x11c] sm:$0xf]
      %v2265 = vld [vmem:[%s3 + $0x120] sm:$0xf]
      %v2266 = vld [vmem:[%s3 + $0x124] sm:$0xf]
      %v2267 = vld [vmem:[%s3 + $0x128] sm:$0xf]
      %v2268 = vld [vmem:[%s3 + $0x12c] sm:$0xf]
      %v2269 = vld [vmem:[%s3 + $0x130] sm:$0xf]
      %v2270 = vld [vmem:[%s3 + $0x134] sm:$0xf]
      %v2271 = vld [vmem:[%s3 + $0x138] sm:$0xf]
      %v2272 = vld [vmem:[%s3 + $0x13c] sm:$0xf]
      %v2273 = vld [vmem:[%s3 + $0x140] sm:$0xf]
      %v2274 = vld [vmem:[%s3 + $0x144] sm:$0xf]
      %v2275 = vld [vmem:[%s3 + $0x148] sm:$0xf]
      %v2276 = vld [vmem:[%s3 + $0x14c] sm:$0xf]
      %v2277 = vld [vmem:[%s3 + $0x150] sm:$0xf]
      %v2278 = vld [vmem:[%s3 + $0x154] sm:$0xf]
      %v2279 = vld [vmem:[%s3 + $0x158] sm:$0xf]
      %v2280 = vld [vmem:[%s3 + $0x15c] sm:$0xf]
      %v2281 = vld [vmem:[%s3 + $0x160] sm:$0xf]
      %v2282 = vld [vmem:[%s3 + $0x164] sm:$0xf]
      %v2283 = vld [vmem:[%s3 + $0x168] sm:$0xf]
      %v2284 = vld [vmem:[%s3 + $0x16c] sm:$0xf]
      %v2285 = vld [vmem:[%s3 + $0x170] sm:$0xf]
      %v2286 = vld [vmem:[%s3 + $0x174] sm:$0xf]
      %v2287 = vld [vmem:[%s3 + $0x178] sm:$0xf]
      %v2288 = vld [vmem:[%s3 + $0x17c] sm:$0xf]
      %v2289 = vld [vmem:[%s3 + $0x180] sm:$0xf]
      %v2290 = vld [vmem:[%s3 + $0x184] sm:$0xf]
      %v2291 = vld [vmem:[%s3 + $0x188] sm:$0xf]
      %v2292 = vld [vmem:[%s3 + $0x18c] sm:$0xf]
      %v2293 = vld [vmem:[%s3 + $0x190] sm:$0xf]
      %v2294 = vld [vmem:[%s3 + $0x194] sm:$0xf]
      %v2295 = vld [vmem:[%s3 + $0x198] sm:$0xf]
      %v2296 = vld [vmem:[%s3 + $0x19c] sm:$0xf]
      %v2297 = vld [vmem:[%s3 + $0x1a0] sm:$0xf]
      %v2298 = vld [vmem:[%s3 + $0x1a4] sm:$0xf]
      %v2299 = vld [vmem:[%s3 + $0x1a8] sm:$0xf]
      %v2300 = vld [vmem:[%s3 + $0x1ac] sm:$0xf]
      %v2301 = vld [vmem:[%s3 + $0x1b0] sm:$0xf]
      %v2302 = vld [vmem:[%s3 + $0x1b4] sm:$0xf]
      %v2303 = vld [vmem:[%s3 + $0x1b8] sm:$0xf]
      %v2304 = vld [vmem:[%s3 + $0x1bc] sm:$0xf]
      %v2305 = vld [vmem:[%s3 + $0x1c0] sm:$0xf]
      %v2306 = vld [vmem:[%s3 + $0x1c4] sm:$0xf]
      %v2307 = vld [vmem:[%s3 + $0x1c8] sm:$0xf]
      %v2308 = vld [vmem:[%s3 + $0x1cc] sm:$0xf]
      %v2309 = vld [vmem:[%s3 + $0x1d0] sm:$0xf]
      %v2310 = vld [vmem:[%s3 + $0x1d4] sm:$0xf]
      %v2311 = vld [vmem:[%s3 + $0x1d8] sm:$0xf]
      %v2312 = vld [vmem:[%s3 + $0x1dc] sm:$0xf]
      %v2313 = vld [vmem:[%s3 + $0x1e0] sm:$0xf]
      %v2314 = vld [vmem:[%s3 + $0x1e4] sm:$0xf]
      %v2315 = vld [vmem:[%s3 + $0x1e8] sm:$0xf]
      %v2316 = vld [vmem:[%s3 + $0x1ec] sm:$0xf]
      %v2317 = vld [vmem:[%s3 + $0x1f0] sm:$0xf]
      %v2318 = vld [vmem:[%s3 + $0x1f4] sm:$0xf]
      %v2319 = vld [vmem:[%s3 + $0x1f8] sm:$0xf]
      %v2320 = vld [vmem:[%s3 + $0x1fc] sm:$0xf]
      %v2321 = vld [vmem:[%s3 + $0x200] sm:$0xf]
      %v2322 = vld [vmem:[%s3 + $0x204] sm:$0xf]
      %v2323 = vld [vmem:[%s3 + $0x208] sm:$0xf]
      %v2324 = vld [vmem:[%s3 + $0x20c] sm:$0xf]
      %v2325 = vld [vmem:[%s3 + $0x210] sm:$0xf]
      %v2326 = vld [vmem:[%s3 + $0x214] sm:$0xf]
      %v2327 = vld [vmem:[%s3 + $0x218] sm:$0xf]
      %v2328 = vld [vmem:[%s3 + $0x21c] sm:$0xf]
      %v2329 = vld [vmem:[%s3 + $0x220] sm:$0xf]
      %v2330 = vld [vmem:[%s3 + $0x224] sm:$0xf]
      %v2331 = vld [vmem:[%s3 + $0x228] sm:$0xf]
      %v2332 = vld [vmem:[%s3 + $0x22c] sm:$0xf]
      %v2333 = vld [vmem:[%s3 + $0x230] sm:$0xf]
      %v2334 = vld [vmem:[%s3 + $0x234] sm:$0xf]
      %v2335 = vld [vmem:[%s3 + $0x238] sm:$0xf]
      %v2336 = vld [vmem:[%s3 + $0x23c] sm:$0xf]
      %v2417 = vunpack.c.l.b16 %v2113
      %v2418 = vunpack.c.h.b16 %v2113
      %v2419 = vunpack.c.l.b16 %v2114
      %v2420 = vunpack.c.h.b16 %v2114
      %v2421 = vunpack.c.l.b16 %v2115
      %v2422 = vunpack.c.h.b16 %v2115
      %v2423 = vunpack.c.l.b16 %v2116
      %v2424 = vunpack.c.h.b16 %v2116
      %v2425 = vunpack.c.l.b16 %v2117
      %v2426 = vunpack.c.l.b16 %v2118
      %v2427 = vunpack.c.h.b16 %v2118
      %v2428 = vunpack.c.l.b16 %v2119
      %v2429 = vunpack.c.h.b16 %v2119
      %v2430 = vunpack.c.l.b16 %v2120
      %v2431 = vunpack.c.h.b16 %v2120
      %v2432 = vunpack.c.l.b16 %v2121
      %v2433 = vunpack.c.h.b16 %v2121
      %v2434 = vunpack.c.l.b16 %v2122
      %v2435 = vunpack.c.l.b16 %v2123
      %v2436 = vunpack.c.h.b16 %v2123
      %v2437 = vunpack.c.l.b16 %v2124
      %v2438 = vunpack.c.h.b16 %v2124
      %v2439 = vunpack.c.l.b16 %v2125
      %v2440 = vunpack.c.h.b16 %v2125
      %v2441 = vunpack.c.l.b16 %v2126
      %v2442 = vunpack.c.h.b16 %v2126
      %v2443 = vunpack.c.l.b16 %v2127
      %v2444 = vunpack.c.l.b16 %v2128
      %v2445 = vunpack.c.h.b16 %v2128
      %v2446 = vunpack.c.l.b16 %v2129
      %v2447 = vunpack.c.h.b16 %v2129
      %v2448 = vunpack.c.l.b16 %v2130
      %v2449 = vunpack.c.h.b16 %v2130
      %v2450 = vunpack.c.l.b16 %v2131
      %v2451 = vunpack.c.h.b16 %v2131
      %v2452 = vunpack.c.l.b16 %v2132
      %v2453 = vunpack.c.l.b16 %v2133
      %v2454 = vunpack.c.h.b16 %v2133
      %v2455 = vunpack.c.l.b16 %v2134
      %v2456 = vunpack.c.h.b16 %v2134
      %v2457 = vunpack.c.l.b16 %v2135
      %v2458 = vunpack.c.h.b16 %v2135
      %v2459 = vunpack.c.l.b16 %v2136
      %v2460 = vunpack.c.h.b16 %v2136
      %v2461 = vunpack.c.l.b16 %v2137
      %v2462 = vunpack.c.l.b16 %v2138
      %v2463 = vunpack.c.h.b16 %v2138
      %v2464 = vunpack.c.l.b16 %v2139
      %v2465 = vunpack.c.h.b16 %v2139
      %v2466 = vunpack.c.l.b16 %v2140
      %v2467 = vunpack.c.h.b16 %v2140
      %v2468 = vunpack.c.l.b16 %v2141
      %v2469 = vunpack.c.h.b16 %v2141
      %v2470 = vunpack.c.l.b16 %v2142
      %v2471 = vunpack.c.l.b16 %v2143
      %v2472 = vunpack.c.h.b16 %v2143
      %v2473 = vunpack.c.l.b16 %v2144
      %v2474 = vunpack.c.h.b16 %v2144
      %v2475 = vunpack.c.l.b16 %v2145
      %v2476 = vunpack.c.h.b16 %v2145
      %v2477 = vunpack.c.l.b16 %v2146
      %v2478 = vunpack.c.h.b16 %v2146
      %v2479 = vunpack.c.l.b16 %v2147
      %v2480 = vunpack.c.l.b16 %v2148
      %v2481 = vunpack.c.h.b16 %v2148
      %v2482 = vunpack.c.l.b16 %v2149
      %v2483 = vunpack.c.h.b16 %v2149
      %v2484 = vunpack.c.l.b16 %v2150
      %v2485 = vunpack.c.h.b16 %v2150
      %v2486 = vunpack.c.l.b16 %v2151
      %v2487 = vunpack.c.h.b16 %v2151
      %v2488 = vunpack.c.l.b16 %v2152
      %v2489 = vunpack.c.l.b16 %v2153
      %v2490 = vunpack.c.h.b16 %v2153
      %v2491 = vunpack.c.l.b16 %v2154
      %v2492 = vunpack.c.h.b16 %v2154
      %v2493 = vunpack.c.l.b16 %v2155
      %v2494 = vunpack.c.h.b16 %v2155
      %v2495 = vunpack.c.l.b16 %v2156
      %v2496 = vunpack.c.h.b16 %v2156
      %v2497 = vunpack.c.l.b16 %v2157
      %v2498 = vunpack.c.l.b16 %v2158
      %v2499 = vunpack.c.h.b16 %v2158
      %v2500 = vunpack.c.l.b16 %v2159
      %v2501 = vunpack.c.h.b16 %v2159
      %v2502 = vunpack.c.l.b16 %v2160
      %v2503 = vunpack.c.h.b16 %v2160
      %v2504 = vunpack.c.l.b16 %v2161
      %v2505 = vunpack.c.h.b16 %v2161
      %v2506 = vunpack.c.l.b16 %v2162
      %v2507 = vunpack.c.l.b16 %v2163
      %v2508 = vunpack.c.h.b16 %v2163
      %v2509 = vunpack.c.l.b16 %v2164
      %v2510 = vunpack.c.h.b16 %v2164
      %v2511 = vunpack.c.l.b16 %v2165
      %v2512 = vunpack.c.h.b16 %v2165
      %v2513 = vunpack.c.l.b16 %v2166
      %v2514 = vunpack.c.h.b16 %v2166
      %v2515 = vunpack.c.l.b16 %v2167
      %v2516 = vunpack.c.l.b16 %v2168
      %v2517 = vunpack.c.h.b16 %v2168
      %v2518 = vunpack.c.l.b16 %v2169
      %v2519 = vunpack.c.h.b16 %v2169
      %v2520 = vunpack.c.l.b16 %v2170
      %v2521 = vunpack.c.h.b16 %v2170
      %v2522 = vunpack.c.l.b16 %v2171
      %v2523 = vunpack.c.h.b16 %v2171
      %v2524 = vunpack.c.l.b16 %v2172
      %v2525 = vunpack.c.l.b16 %v2173
      %v2526 = vunpack.c.h.b16 %v2173
      %v2527 = vunpack.c.l.b16 %v2174
      %v2528 = vunpack.c.h.b16 %v2174
      %v2529 = vunpack.c.l.b16 %v2175
      %v2530 = vunpack.c.h.b16 %v2175
      %v2531 = vunpack.c.l.b16 %v2176
      %v2532 = vunpack.c.h.b16 %v2176
      %v2533 = vunpack.c.l.b16 %v2177
      %v2534 = vunpack.c.l.b16 %v2178
      %v2535 = vunpack.c.h.b16 %v2178
      %v2536 = vunpack.c.l.b16 %v2179
      %v2537 = vunpack.c.h.b16 %v2179
      %v2538 = vunpack.c.l.b16 %v2180
      %v2539 = vunpack.c.h.b16 %v2180
      %v2540 = vunpack.c.l.b16 %v2181
      %v2541 = vunpack.c.h.b16 %v2181
      %v2542 = vunpack.c.l.b16 %v2182
      %v2543 = vunpack.c.l.b16 %v2183
      %v2544 = vunpack.c.h.b16 %v2183
      %v2545 = vunpack.c.l.b16 %v2184
      %v2546 = vunpack.c.h.b16 %v2184
      %v2547 = vunpack.c.l.b16 %v2185
      %v2548 = vunpack.c.h.b16 %v2185
      %v2549 = vunpack.c.l.b16 %v2186
      %v2550 = vunpack.c.h.b16 %v2186
      %v2551 = vunpack.c.l.b16 %v2187
      %v2552 = vunpack.c.l.b16 %v2188
      %v2553 = vunpack.c.h.b16 %v2188
      %v2554 = vunpack.c.l.b16 %v2189
      %v2555 = vunpack.c.h.b16 %v2189
      %v2556 = vunpack.c.l.b16 %v2190
      %v2557 = vunpack.c.h.b16 %v2190
      %v2558 = vunpack.c.l.b16 %v2191
      %v2559 = vunpack.c.h.b16 %v2191
      %v2560 = vunpack.c.l.b16 %v2192
      %v2561 = vpack.c.b16 %v2426, %v2417
      %v2562 = vpack.c.b16 %v2427, %v2418
      %v2563 = vpack.c.b16 %v2428, %v2419
      %v2564 = vpack.c.b16 %v2429, %v2420
      %v2565 = vpack.c.b16 %v2430, %v2421
      %v2566 = vpack.c.b16 %v2431, %v2422
      %v2567 = vpack.c.b16 %v2432, %v2423
      %v2568 = vpack.c.b16 %v2433, %v2424
      %v2569 = vpack.c.b16 %v2434, %v2425
      %v2570 = vpack.c.b16 %v2444, %v2435
      %v2571 = vpack.c.b16 %v2445, %v2436
      %v2572 = vpack.c.b16 %v2446, %v2437
      %v2573 = vpack.c.b16 %v2447, %v2438
      %v2574 = vpack.c.b16 %v2448, %v2439
      %v2575 = vpack.c.b16 %v2449, %v2440
      %v2576 = vpack.c.b16 %v2450, %v2441
      %v2577 = vpack.c.b16 %v2451, %v2442
      %v2578 = vpack.c.b16 %v2452, %v2443
      %v2579 = vpack.c.b16 %v2462, %v2453
      %v2580 = vpack.c.b16 %v2463, %v2454
      %v2581 = vpack.c.b16 %v2464, %v2455
      %v2582 = vpack.c.b16 %v2465, %v2456
      %v2583 = vpack.c.b16 %v2466, %v2457
      %v2584 = vpack.c.b16 %v2467, %v2458
      %v2585 = vpack.c.b16 %v2468, %v2459
      %v2586 = vpack.c.b16 %v2469, %v2460
      %v2587 = vpack.c.b16 %v2470, %v2461
      %v2588 = vpack.c.b16 %v2480, %v2471
      %v2589 = vpack.c.b16 %v2481, %v2472
      %v2590 = vpack.c.b16 %v2482, %v2473
      %v2591 = vpack.c.b16 %v2483, %v2474
      %v2592 = vpack.c.b16 %v2484, %v2475
      %v2593 = vpack.c.b16 %v2485, %v2476
      %v2594 = vpack.c.b16 %v2486, %v2477
      %v2595 = vpack.c.b16 %v2487, %v2478
      %v2596 = vpack.c.b16 %v2488, %v2479
      %v2597 = vpack.c.b16 %v2498, %v2489
      %v2598 = vpack.c.b16 %v2499, %v2490
      %v2599 = vpack.c.b16 %v2500, %v2491
      %v2600 = vpack.c.b16 %v2501, %v2492
      %v2601 = vpack.c.b16 %v2502, %v2493
      %v2602 = vpack.c.b16 %v2503, %v2494
      %v2603 = vpack.c.b16 %v2504, %v2495
      %v2604 = vpack.c.b16 %v2505, %v2496
      %v2605 = vpack.c.b16 %v2506, %v2497
      %v2606 = vpack.c.b16 %v2516, %v2507
      %v2607 = vpack.c.b16 %v2517, %v2508
      %v2608 = vpack.c.b16 %v2518, %v2509
      %v2609 = vpack.c.b16 %v2519, %v2510
      %v2610 = vpack.c.b16 %v2520, %v2511
      %v2611 = vpack.c.b16 %v2521, %v2512
      %v2612 = vpack.c.b16 %v2522, %v2513
      %v2613 = vpack.c.b16 %v2523, %v2514
      %v2614 = vpack.c.b16 %v2524, %v2515
      %v2615 = vpack.c.b16 %v2534, %v2525
      %v2616 = vpack.c.b16 %v2535, %v2526
      %v2617 = vpack.c.b16 %v2536, %v2527
      %v2618 = vpack.c.b16 %v2537, %v2528
      %v2619 = vpack.c.b16 %v2538, %v2529
      %v2620 = vpack.c.b16 %v2539, %v2530
      %v2621 = vpack.c.b16 %v2540, %v2531
      %v2622 = vpack.c.b16 %v2541, %v2532
      %v2623 = vpack.c.b16 %v2542, %v2533
      %v2624 = vpack.c.b16 %v2552, %v2543
      %v2625 = vpack.c.b16 %v2553, %v2544
      %v2626 = vpack.c.b16 %v2554, %v2545
      %v2627 = vpack.c.b16 %v2555, %v2546
      %v2628 = vpack.c.b16 %v2556, %v2547
      %v2629 = vpack.c.b16 %v2557, %v2548
      %v2630 = vpack.c.b16 %v2558, %v2549
      %v2631 = vpack.c.b16 %v2559, %v2550
      %v2632 = vpack.c.b16 %v2560, %v2551
      %v2849 = vunpack.c.l.b16 %v2193
      %v2850 = vunpack.c.l.b16 %v2194
      %v2851 = vunpack.c.l.b16 %v2195
      %v2852 = vunpack.c.l.b16 %v2196
      %v2853 = vunpack.c.l.b16 %v2197
      %v2854 = vunpack.c.l.b16 %v2198
      %v2855 = vunpack.c.l.b16 %v2199
      %v2856 = vunpack.c.l.b16 %v2200
      %v2857 = vunpack.c.l.b16 %v2201
      %v2858 = vunpack.c.l.b16 %v2202
      %v2859 = vunpack.c.l.b16 %v2203
      %v2860 = vunpack.c.l.b16 %v2204
      %v2861 = vunpack.c.l.b16 %v2205
      %v2862 = vunpack.c.l.b16 %v2206
      %v2863 = vunpack.c.l.b16 %v2207
      %v2864 = vunpack.c.l.b16 %v2208
      %v2865 = vunpack.c.l.b16 %v2209
      %v2866 = vunpack.c.l.b16 %v2210
      %v2867 = vunpack.c.l.b16 %v2211
      %v2868 = vunpack.c.l.b16 %v2212
      %v2869 = vunpack.c.l.b16 %v2213
      %v2870 = vunpack.c.l.b16 %v2214
      %v2871 = vunpack.c.l.b16 %v2215
      %v2872 = vunpack.c.l.b16 %v2216
      %v2873 = vunpack.c.l.b16 %v2217
      %v2874 = vunpack.c.l.b16 %v2218
      %v2875 = vunpack.c.l.b16 %v2219
      %v2876 = vunpack.c.l.b16 %v2220
      %v2877 = vunpack.c.l.b16 %v2221
      %v2878 = vunpack.c.l.b16 %v2222
      %v2879 = vunpack.c.l.b16 %v2223
      %v2880 = vunpack.c.l.b16 %v2224
      %v2881 = vunpack.c.l.b16 %v2225
      %v2882 = vunpack.c.l.b16 %v2226
      %v2883 = vunpack.c.l.b16 %v2227
      %v2884 = vunpack.c.l.b16 %v2228
      %v2885 = vunpack.c.l.b16 %v2229
      %v2886 = vunpack.c.l.b16 %v2230
      %v2887 = vunpack.c.l.b16 %v2231
      %v2888 = vunpack.c.l.b16 %v2232
      %v2889 = vunpack.c.l.b16 %v2233
      %v2890 = vunpack.c.l.b16 %v2234
      %v2891 = vunpack.c.l.b16 %v2235
      %v2892 = vunpack.c.l.b16 %v2236
      %v2893 = vunpack.c.l.b16 %v2237
      %v2894 = vunpack.c.l.b16 %v2238
      %v2895 = vunpack.c.l.b16 %v2239
      %v2896 = vunpack.c.l.b16 %v2240
      %v2897 = vunpack.c.l.b16 %v2241
      %v2898 = vunpack.c.l.b16 %v2242
      %v2899 = vunpack.c.l.b16 %v2243
      %v2900 = vunpack.c.l.b16 %v2244
      %v2901 = vunpack.c.l.b16 %v2245
      %v2902 = vunpack.c.l.b16 %v2246
      %v2903 = vunpack.c.l.b16 %v2247
      %v2904 = vunpack.c.l.b16 %v2248
      %v2905 = vunpack.c.l.b16 %v2249
      %v2906 = vunpack.c.l.b16 %v2250
      %v2907 = vunpack.c.l.b16 %v2251
      %v2908 = vunpack.c.l.b16 %v2252
      %v2909 = vunpack.c.l.b16 %v2253
      %v2910 = vunpack.c.l.b16 %v2254
      %v2911 = vunpack.c.l.b16 %v2255
      %v2912 = vunpack.c.l.b16 %v2256
      %v2913 = vunpack.c.l.b16 %v2257
      %v2914 = vunpack.c.l.b16 %v2258
      %v2915 = vunpack.c.l.b16 %v2259
      %v2916 = vunpack.c.l.b16 %v2260
      %v2917 = vunpack.c.l.b16 %v2261
      %v2918 = vunpack.c.l.b16 %v2262
      %v2919 = vunpack.c.l.b16 %v2263
      %v2920 = vunpack.c.l.b16 %v2264
      %v2921 = vunpack.c.l.b16 %v2265
      %v2922 = vunpack.c.l.b16 %v2266
      %v2923 = vunpack.c.l.b16 %v2267
      %v2924 = vunpack.c.l.b16 %v2268
      %v2925 = vunpack.c.l.b16 %v2269
      %v2926 = vunpack.c.l.b16 %v2270
      %v2927 = vunpack.c.l.b16 %v2271
      %v2928 = vunpack.c.l.b16 %v2272
      %v2929 = vunpack.c.l.b16 %v2273
      %v2930 = vunpack.c.l.b16 %v2274
      %v2931 = vunpack.c.l.b16 %v2275
      %v2932 = vunpack.c.l.b16 %v2276
      %v2933 = vunpack.c.l.b16 %v2277
      %v2934 = vunpack.c.l.b16 %v2278
      %v2935 = vunpack.c.l.b16 %v2279
      %v2936 = vunpack.c.l.b16 %v2280
      %v2937 = vunpack.c.l.b16 %v2281
      %v2938 = vunpack.c.l.b16 %v2282
      %v2939 = vunpack.c.l.b16 %v2283
      %v2940 = vunpack.c.l.b16 %v2284
      %v2941 = vunpack.c.l.b16 %v2285
      %v2942 = vunpack.c.l.b16 %v2286
      %v2943 = vunpack.c.l.b16 %v2287
      %v2944 = vunpack.c.l.b16 %v2288
      %v2945 = vunpack.c.l.b16 %v2289
      %v2946 = vunpack.c.l.b16 %v2290
      %v2947 = vunpack.c.l.b16 %v2291
      %v2948 = vunpack.c.l.b16 %v2292
      %v2949 = vunpack.c.l.b16 %v2293
      %v2950 = vunpack.c.l.b16 %v2294
      %v2951 = vunpack.c.l.b16 %v2295
      %v2952 = vunpack.c.l.b16 %v2296
      %v2953 = vunpack.c.l.b16 %v2297
      %v2954 = vunpack.c.l.b16 %v2298
      %v2955 = vunpack.c.l.b16 %v2299
      %v2956 = vunpack.c.l.b16 %v2300
      %v2957 = vunpack.c.l.b16 %v2301
      %v2958 = vunpack.c.l.b16 %v2302
      %v2959 = vunpack.c.l.b16 %v2303
      %v2960 = vunpack.c.l.b16 %v2304
      %v2961 = vunpack.c.l.b16 %v2305
      %v2962 = vunpack.c.l.b16 %v2306
      %v2963 = vunpack.c.l.b16 %v2307
      %v2964 = vunpack.c.l.b16 %v2308
      %v2965 = vunpack.c.l.b16 %v2309
      %v2966 = vunpack.c.l.b16 %v2310
      %v2967 = vunpack.c.l.b16 %v2311
      %v2968 = vunpack.c.l.b16 %v2312
      %v2969 = vunpack.c.l.b16 %v2313
      %v2970 = vunpack.c.l.b16 %v2314
      %v2971 = vunpack.c.l.b16 %v2315
      %v2972 = vunpack.c.l.b16 %v2316
      %v2973 = vunpack.c.l.b16 %v2317
      %v2974 = vunpack.c.l.b16 %v2318
      %v2975 = vunpack.c.l.b16 %v2319
      %v2976 = vunpack.c.l.b16 %v2320
      %v2977 = vunpack.c.l.b16 %v2321
      %v2978 = vunpack.c.l.b16 %v2322
      %v2979 = vunpack.c.l.b16 %v2323
      %v2980 = vunpack.c.l.b16 %v2324
      %v2981 = vunpack.c.l.b16 %v2325
      %v2982 = vunpack.c.l.b16 %v2326
      %v2983 = vunpack.c.l.b16 %v2327
      %v2984 = vunpack.c.l.b16 %v2328
      %v2985 = vunpack.c.l.b16 %v2329
      %v2986 = vunpack.c.l.b16 %v2330
      %v2987 = vunpack.c.l.b16 %v2331
      %v2988 = vunpack.c.l.b16 %v2332
      %v2989 = vunpack.c.l.b16 %v2333
      %v2990 = vunpack.c.l.b16 %v2334
      %v2991 = vunpack.c.l.b16 %v2335
      %v2992 = vunpack.c.l.b16 %v2336
      %v2993 = vpack.c.b16 %v2850, %v2849
      %v2994 = vpack.c.b16 %v2852, %v2851
      %v2995 = vpack.c.b16 %v2854, %v2853
      %v2996 = vpack.c.b16 %v2856, %v2855
      %v2997 = vpack.c.b16 %v2858, %v2857
      %v2998 = vpack.c.b16 %v2860, %v2859
      %v2999 = vpack.c.b16 %v2862, %v2861
      %v3000 = vpack.c.b16 %v2864, %v2863
      %v3001 = vpack.c.b16 %v2866, %v2865
      %v3002 = vpack.c.b16 %v2868, %v2867
      %v3003 = vpack.c.b16 %v2870, %v2869
      %v3004 = vpack.c.b16 %v2872, %v2871
      %v3005 = vpack.c.b16 %v2874, %v2873
      %v3006 = vpack.c.b16 %v2876, %v2875
      %v3007 = vpack.c.b16 %v2878, %v2877
      %v3008 = vpack.c.b16 %v2880, %v2879
      %v3009 = vpack.c.b16 %v2882, %v2881
      %v3010 = vpack.c.b16 %v2884, %v2883
      %v3011 = vpack.c.b16 %v2886, %v2885
      %v3012 = vpack.c.b16 %v2888, %v2887
      %v3013 = vpack.c.b16 %v2890, %v2889
      %v3014 = vpack.c.b16 %v2892, %v2891
      %v3015 = vpack.c.b16 %v2894, %v2893
      %v3016 = vpack.c.b16 %v2896, %v2895
      %v3017 = vpack.c.b16 %v2898, %v2897
      %v3018 = vpack.c.b16 %v2900, %v2899
      %v3019 = vpack.c.b16 %v2902, %v2901
      %v3020 = vpack.c.b16 %v2904, %v2903
      %v3021 = vpack.c.b16 %v2906, %v2905
      %v3022 = vpack.c.b16 %v2908, %v2907
      %v3023 = vpack.c.b16 %v2910, %v2909
      %v3024 = vpack.c.b16 %v2912, %v2911
      %v3025 = vpack.c.b16 %v2914, %v2913
      %v3026 = vpack.c.b16 %v2916, %v2915
      %v3027 = vpack.c.b16 %v2918, %v2917
      %v3028 = vpack.c.b16 %v2920, %v2919
      %v3029 = vpack.c.b16 %v2922, %v2921
      %v3030 = vpack.c.b16 %v2924, %v2923
      %v3031 = vpack.c.b16 %v2926, %v2925
      %v3032 = vpack.c.b16 %v2928, %v2927
      %v3033 = vpack.c.b16 %v2930, %v2929
      %v3034 = vpack.c.b16 %v2932, %v2931
      %v3035 = vpack.c.b16 %v2934, %v2933
      %v3036 = vpack.c.b16 %v2936, %v2935
      %v3037 = vpack.c.b16 %v2938, %v2937
      %v3038 = vpack.c.b16 %v2940, %v2939
      %v3039 = vpack.c.b16 %v2942, %v2941
      %v3040 = vpack.c.b16 %v2944, %v2943
      %v3041 = vpack.c.b16 %v2946, %v2945
      %v3042 = vpack.c.b16 %v2948, %v2947
      %v3043 = vpack.c.b16 %v2950, %v2949
      %v3044 = vpack.c.b16 %v2952, %v2951
      %v3045 = vpack.c.b16 %v2954, %v2953
      %v3046 = vpack.c.b16 %v2956, %v2955
      %v3047 = vpack.c.b16 %v2958, %v2957
      %v3048 = vpack.c.b16 %v2960, %v2959
      %v3049 = vpack.c.b16 %v2962, %v2961
      %v3050 = vpack.c.b16 %v2964, %v2963
      %v3051 = vpack.c.b16 %v2966, %v2965
      %v3052 = vpack.c.b16 %v2968, %v2967
      %v3053 = vpack.c.b16 %v2970, %v2969
      %v3054 = vpack.c.b16 %v2972, %v2971
      %v3055 = vpack.c.b16 %v2974, %v2973
      %v3056 = vpack.c.b16 %v2976, %v2975
      %v3057 = vpack.c.b16 %v2978, %v2977
      %v3058 = vpack.c.b16 %v2980, %v2979
      %v3059 = vpack.c.b16 %v2982, %v2981
      %v3060 = vpack.c.b16 %v2984, %v2983
      %v3061 = vpack.c.b16 %v2986, %v2985
      %v3062 = vpack.c.b16 %v2988, %v2987
      %v3063 = vpack.c.b16 %v2990, %v2989
      %v3064 = vpack.c.b16 %v2992, %v2991
      %3137 = vmatprep.subr.bf16.mxu0 0
      %3138 = vmatpush1.bf16.msra.mxu0 %v3000
      %3139 = vmatprep.subr.bf16.mxu0 0
      %3140 = vmatpush1.bf16.msra.mxu0 %v2999
      %3141 = vmatprep.subr.bf16.mxu0 0
      %3142 = vmatpush1.bf16.msra.mxu0 %v2998
      %3143 = vmatprep.subr.bf16.mxu0 0
      %3144 = vmatpush1.bf16.msra.mxu0 %v2997
      %3145 = vmatprep.subr.bf16.mxu0 0
      %3146 = vmatpush1.bf16.msra.mxu0 %v2996
      %3147 = vmatprep.subr.bf16.mxu0 0
      %3148 = vmatpush1.bf16.msra.mxu0 %v2995
      %3149 = vmatprep.subr.bf16.mxu0 0
      %3150 = vmatpush1.bf16.msra.mxu0 %v2994
      %3151 = vmatprep.subr.bf16.mxu0 0
      %3152 = vmatpush1.bf16.msra.mxu0 %v2993
      %3153 = vmatprep.subr.bf16.mxu0 0
      %3154 = vmatpush2.bf16.msra.mxu0 %v3008
      %3155 = vmatprep.subr.bf16.mxu0 0
      %3156 = vmatpush2.bf16.msra.mxu0 %v3007
      %3157 = vmatprep.subr.bf16.mxu0 0
      %3158 = vmatpush2.bf16.msra.mxu0 %v3006
      %3159 = vmatprep.subr.bf16.mxu0 0
      %3160 = vmatpush2.bf16.msra.mxu0 %v3005
      %3161 = vmatprep.subr.bf16.mxu0 0
      %3162 = vmatpush2.bf16.msra.mxu0 %v3004
      %3163 = vmatprep.subr.bf16.mxu0 0
      %3164 = vmatpush2.bf16.msra.mxu0 %v3003
      %3165 = vmatprep.subr.bf16.mxu0 0
      %3166 = vmatpush2.bf16.msra.mxu0 %v3002
      %3167 = vmatprep.subr.bf16.mxu0 0
      %3168 = vmatpush2.bf16.msra.mxu0 %v3001
      %3169 = vmatprep.mubr.bf16.mxu0 %v2562
      %3170 = vmatmul.mubr.bf16.gmra.mxu0 %v2561
      %v3171 = vpop.f32.mrf.mxu0
      %v3172 = vadd.f32 0.0, %v3171
      %v3173 = vpop.f32.mrf.mxu0
      %v3174 = vpop.f32.mrf.mxu0
      %v3175 = vadd.f32 0.0, %v3174
      %v3176 = vpop.f32.mrf.mxu0
      %3177 = vmatprep.mubr.bf16.mxu0 %v2571
      %3178 = vmatmul.mubr.bf16.gmra.mxu0 %v2570
      %v3179 = vpop.f32.mrf.mxu0
      %v3180 = vadd.f32 0.0, %v3179
      %v3181 = vpop.f32.mrf.mxu0
      %v3182 = vpop.f32.mrf.mxu0
      %v3183 = vadd.f32 0.0, %v3182
      %v3184 = vpop.f32.mrf.mxu0
      %3185 = vmatprep.mubr.bf16.mxu0 %v2580
      %3186 = vmatmul.mubr.bf16.gmra.mxu0 %v2579
      %v3187 = vpop.f32.mrf.mxu0
      %v3188 = vadd.f32 0.0, %v3187
      %v3189 = vpop.f32.mrf.mxu0
      %v3190 = vpop.f32.mrf.mxu0
      %v3191 = vadd.f32 0.0, %v3190
      %v3192 = vpop.f32.mrf.mxu0
      %3193 = vmatprep.mubr.bf16.mxu0 %v2589
      %3194 = vmatmul.mubr.bf16.gmra.mxu0 %v2588
      %v3195 = vpop.f32.mrf.mxu0
      %v3196 = vadd.f32 0.0, %v3195
      %v3197 = vpop.f32.mrf.mxu0
      %v3198 = vpop.f32.mrf.mxu0
      %v3199 = vadd.f32 0.0, %v3198
      %v3200 = vpop.f32.mrf.mxu0
      %3201 = vmatprep.mubr.bf16.mxu0 %v2598
      %3202 = vmatmul.mubr.bf16.gmra.mxu0 %v2597
      %v3203 = vpop.f32.mrf.mxu0
      %v3204 = vadd.f32 0.0, %v3203
      %v3205 = vpop.f32.mrf.mxu0
      %v3206 = vpop.f32.mrf.mxu0
      %v3207 = vadd.f32 0.0, %v3206
      %v3208 = vpop.f32.mrf.mxu0
      %3209 = vmatprep.mubr.bf16.mxu0 %v2607
      %3210 = vmatmul.mubr.bf16.gmra.mxu0 %v2606
      %v3211 = vpop.f32.mrf.mxu0
      %v3212 = vadd.f32 0.0, %v3211
      %v3213 = vpop.f32.mrf.mxu0
      %v3214 = vpop.f32.mrf.mxu0
      %v3215 = vadd.f32 0.0, %v3214
      %v3216 = vpop.f32.mrf.mxu0
      %3217 = vmatprep.mubr.bf16.mxu0 %v2616
      %3218 = vmatmul.mubr.bf16.gmra.mxu0 %v2615
      %v3219 = vpop.f32.mrf.mxu0
      %v3220 = vadd.f32 0.0, %v3219
      %v3221 = vpop.f32.mrf.mxu0
      %v3222 = vpop.f32.mrf.mxu0
      %v3223 = vadd.f32 0.0, %v3222
      %v3224 = vpop.f32.mrf.mxu0
      %3225 = vmatprep.mubr.bf16.mxu0 %v2625
      %3226 = vmatmul.mubr.bf16.gmra.mxu0 %v2624
      %v3227 = vpop.f32.mrf.mxu0
      %v3228 = vadd.f32 0.0, %v3227
      %v3229 = vpop.f32.mrf.mxu0
      %v3230 = vpop.f32.mrf.mxu0
      %v3231 = vadd.f32 0.0, %v3230
      %v3232 = vpop.f32.mrf.mxu0
      %3233 = vdwg.mxu0
      %3234 = vmatprep.subr.bf16.mxu0 0
      %3235 = vmatpush1.bf16.msra.mxu0 %v3016
      %3236 = vmatprep.subr.bf16.mxu0 0
      %3237 = vmatpush1.bf16.msra.mxu0 %v3015
      %3238 = vmatprep.subr.bf16.mxu0 0
      %3239 = vmatpush1.bf16.msra.mxu0 %v3014
      %3240 = vmatprep.subr.bf16.mxu0 0
      %3241 = vmatpush1.bf16.msra.mxu0 %v3013
      %3242 = vmatprep.subr.bf16.mxu0 0
      %3243 = vmatpush1.bf16.msra.mxu0 %v3012
      %3244 = vmatprep.subr.bf16.mxu0 0
      %3245 = vmatpush1.bf16.msra.mxu0 %v3011
      %3246 = vmatprep.subr.bf16.mxu0 0
      %3247 = vmatpush1.bf16.msra.mxu0 %v3010
      %3248 = vmatprep.subr.bf16.mxu0 0
      %3249 = vmatpush1.bf16.msra.mxu0 %v3009
      %3250 = vmatprep.subr.bf16.mxu0 0
      %3251 = vmatpush2.bf16.msra.mxu0 %v3024
      %3252 = vmatprep.subr.bf16.mxu0 0
      %3253 = vmatpush2.bf16.msra.mxu0 %v3023
      %3254 = vmatprep.subr.bf16.mxu0 0
      %3255 = vmatpush2.bf16.msra.mxu0 %v3022
      %3256 = vmatprep.subr.bf16.mxu0 0
      %3257 = vmatpush2.bf16.msra.mxu0 %v3021
      %3258 = vmatprep.subr.bf16.mxu0 0
      %3259 = vmatpush2.bf16.msra.mxu0 %v3020
      %3260 = vmatprep.subr.bf16.mxu0 0
      %3261 = vmatpush2.bf16.msra.mxu0 %v3019
      %3262 = vmatprep.subr.bf16.mxu0 0
      %3263 = vmatpush2.bf16.msra.mxu0 %v3018
      %3264 = vmatprep.subr.bf16.mxu0 0
      %3265 = vmatpush2.bf16.msra.mxu0 %v3017
      %3266 = vmatprep.mubr.bf16.mxu0 %v2564
      %3267 = vmatmul.mubr.bf16.gmra.mxu0 %v2563
      %v3268 = vpop.f32.mrf.mxu0
      %v3269 = vadd.f32 %v3172, %v3268
      %v3270 = vpop.f32.mrf.mxu0
      %v3271 = vpop.f32.mrf.mxu0
      %v3272 = vadd.f32 %v3175, %v3271
      %v3273 = vpop.f32.mrf.mxu0
      %3274 = vmatprep.mubr.bf16.mxu0 %v2573
      %3275 = vmatmul.mubr.bf16.gmra.mxu0 %v2572
      %v3276 = vpop.f32.mrf.mxu0
      %v3277 = vadd.f32 %v3180, %v3276
      %v3278 = vpop.f32.mrf.mxu0
      %v3279 = vpop.f32.mrf.mxu0
      %v3280 = vadd.f32 %v3183, %v3279
      %v3281 = vpop.f32.mrf.mxu0
      %3282 = vmatprep.mubr.bf16.mxu0 %v2582
      %3283 = vmatmul.mubr.bf16.gmra.mxu0 %v2581
      %v3284 = vpop.f32.mrf.mxu0
      %v3285 = vadd.f32 %v3188, %v3284
      %v3286 = vpop.f32.mrf.mxu0
      %v3287 = vpop.f32.mrf.mxu0
      %v3288 = vadd.f32 %v3191, %v3287
      %v3289 = vpop.f32.mrf.mxu0
      %3290 = vmatprep.mubr.bf16.mxu0 %v2591
      %3291 = vmatmul.mubr.bf16.gmra.mxu0 %v2590
      %v3292 = vpop.f32.mrf.mxu0
      %v3293 = vadd.f32 %v3196, %v3292
      %v3294 = vpop.f32.mrf.mxu0
      %v3295 = vpop.f32.mrf.mxu0
      %v3296 = vadd.f32 %v3199, %v3295
      %v3297 = vpop.f32.mrf.mxu0
      %3298 = vmatprep.mubr.bf16.mxu0 %v2600
      %3299 = vmatmul.mubr.bf16.gmra.mxu0 %v2599
      %v3300 = vpop.f32.mrf.mxu0
      %v3301 = vadd.f32 %v3204, %v3300
      %v3302 = vpop.f32.mrf.mxu0
      %v3303 = vpop.f32.mrf.mxu0
      %v3304 = vadd.f32 %v3207, %v3303
      %v3305 = vpop.f32.mrf.mxu0
      %3306 = vmatprep.mubr.bf16.mxu0 %v2609
      %3307 = vmatmul.mubr.bf16.gmra.mxu0 %v2608
      %v3308 = vpop.f32.mrf.mxu0
      %v3309 = vadd.f32 %v3212, %v3308
      %v3310 = vpop.f32.mrf.mxu0
      %v3311 = vpop.f32.mrf.mxu0
      %v3312 = vadd.f32 %v3215, %v3311
      %v3313 = vpop.f32.mrf.mxu0
      %3314 = vmatprep.mubr.bf16.mxu0 %v2618
      %3315 = vmatmul.mubr.bf16.gmra.mxu0 %v2617
      %v3316 = vpop.f32.mrf.mxu0
      %v3317 = vadd.f32 %v3220, %v3316
      %v3318 = vpop.f32.mrf.mxu0
      %v3319 = vpop.f32.mrf.mxu0
      %v3320 = vadd.f32 %v3223, %v3319
      %v3321 = vpop.f32.mrf.mxu0
      %3322 = vmatprep.mubr.bf16.mxu0 %v2627
      %3323 = vmatmul.mubr.bf16.gmra.mxu0 %v2626
      %v3324 = vpop.f32.mrf.mxu0
      %v3325 = vadd.f32 %v3228, %v3324
      %v3326 = vpop.f32.mrf.mxu0
      %v3327 = vpop.f32.mrf.mxu0
      %v3328 = vadd.f32 %v3231, %v3327
      %v3329 = vpop.f32.mrf.mxu0
      %3330 = vdwg.mxu0
      %3331 = vmatprep.subr.bf16.mxu0 0
      %3332 = vmatpush1.bf16.msra.mxu0 %v3032
      %3333 = vmatprep.subr.bf16.mxu0 0
      %3334 = vmatpush1.bf16.msra.mxu0 %v3031
      %3335 = vmatprep.subr.bf16.mxu0 0
      %3336 = vmatpush1.bf16.msra.mxu0 %v3030
      %3337 = vmatprep.subr.bf16.mxu0 0
      %3338 = vmatpush1.bf16.msra.mxu0 %v3029
      %3339 = vmatprep.subr.bf16.mxu0 0
      %3340 = vmatpush1.bf16.msra.mxu0 %v3028
      %3341 = vmatprep.subr.bf16.mxu0 0
      %3342 = vmatpush1.bf16.msra.mxu0 %v3027
      %3343 = vmatprep.subr.bf16.mxu0 0
      %3344 = vmatpush1.bf16.msra.mxu0 %v3026
      %3345 = vmatprep.subr.bf16.mxu0 0
      %3346 = vmatpush1.bf16.msra.mxu0 %v3025
      %3347 = vmatprep.subr.bf16.mxu0 0
      %3348 = vmatpush2.bf16.msra.mxu0 %v3040
      %3349 = vmatprep.subr.bf16.mxu0 0
      %3350 = vmatpush2.bf16.msra.mxu0 %v3039
      %3351 = vmatprep.subr.bf16.mxu0 0
      %3352 = vmatpush2.bf16.msra.mxu0 %v3038
      %3353 = vmatprep.subr.bf16.mxu0 0
      %3354 = vmatpush2.bf16.msra.mxu0 %v3037
      %3355 = vmatprep.subr.bf16.mxu0 0
      %3356 = vmatpush2.bf16.msra.mxu0 %v3036
      %3357 = vmatprep.subr.bf16.mxu0 0
      %3358 = vmatpush2.bf16.msra.mxu0 %v3035
      %3359 = vmatprep.subr.bf16.mxu0 0
      %3360 = vmatpush2.bf16.msra.mxu0 %v3034
      %3361 = vmatprep.subr.bf16.mxu0 0
      %3362 = vmatpush2.bf16.msra.mxu0 %v3033
      %3363 = vmatprep.mubr.bf16.mxu0 %v2566
      %3364 = vmatmul.mubr.bf16.gmra.mxu0 %v2565
      %v3365 = vpop.f32.mrf.mxu0
      %v3366 = vadd.f32 %v3269, %v3365
      %v3367 = vpop.f32.mrf.mxu0
      %v3368 = vpop.f32.mrf.mxu0
      %v3369 = vadd.f32 %v3272, %v3368
      %v3370 = vpop.f32.mrf.mxu0
      %3371 = vmatprep.mubr.bf16.mxu0 %v2575
      %3372 = vmatmul.mubr.bf16.gmra.mxu0 %v2574
      %v3373 = vpop.f32.mrf.mxu0
      %v3374 = vadd.f32 %v3277, %v3373
      %v3375 = vpop.f32.mrf.mxu0
      %v3376 = vpop.f32.mrf.mxu0
      %v3377 = vadd.f32 %v3280, %v3376
      %v3378 = vpop.f32.mrf.mxu0
      %3379 = vmatprep.mubr.bf16.mxu0 %v2584
      %3380 = vmatmul.mubr.bf16.gmra.mxu0 %v2583
      %v3381 = vpop.f32.mrf.mxu0
      %v3382 = vadd.f32 %v3285, %v3381
      %v3383 = vpop.f32.mrf.mxu0
      %v3384 = vpop.f32.mrf.mxu0
      %v3385 = vadd.f32 %v3288, %v3384
      %v3386 = vpop.f32.mrf.mxu0
      %3387 = vmatprep.mubr.bf16.mxu0 %v2593
      %3388 = vmatmul.mubr.bf16.gmra.mxu0 %v2592
      %v3389 = vpop.f32.mrf.mxu0
      %v3390 = vadd.f32 %v3293, %v3389
      %v3391 = vpop.f32.mrf.mxu0
      %v3392 = vpop.f32.mrf.mxu0
      %v3393 = vadd.f32 %v3296, %v3392
      %v3394 = vpop.f32.mrf.mxu0
      %3395 = vmatprep.mubr.bf16.mxu0 %v2602
      %3396 = vmatmul.mubr.bf16.gmra.mxu0 %v2601
      %v3397 = vpop.f32.mrf.mxu0
      %v3398 = vadd.f32 %v3301, %v3397
      %v3399 = vpop.f32.mrf.mxu0
      %v3400 = vpop.f32.mrf.mxu0
      %v3401 = vadd.f32 %v3304, %v3400
      %v3402 = vpop.f32.mrf.mxu0
      %3403 = vmatprep.mubr.bf16.mxu0 %v2611
      %3404 = vmatmul.mubr.bf16.gmra.mxu0 %v2610
      %v3405 = vpop.f32.mrf.mxu0
      %v3406 = vadd.f32 %v3309, %v3405
      %v3407 = vpop.f32.mrf.mxu0
      %v3408 = vpop.f32.mrf.mxu0
      %v3409 = vadd.f32 %v3312, %v3408
      %v3410 = vpop.f32.mrf.mxu0
      %3411 = vmatprep.mubr.bf16.mxu0 %v2620
      %3412 = vmatmul.mubr.bf16.gmra.mxu0 %v2619
      %v3413 = vpop.f32.mrf.mxu0
      %v3414 = vadd.f32 %v3317, %v3413
      %v3415 = vpop.f32.mrf.mxu0
      %v3416 = vpop.f32.mrf.mxu0
      %v3417 = vadd.f32 %v3320, %v3416
      %v3418 = vpop.f32.mrf.mxu0
      %3419 = vmatprep.mubr.bf16.mxu0 %v2629
      %3420 = vmatmul.mubr.bf16.gmra.mxu0 %v2628
      %v3421 = vpop.f32.mrf.mxu0
      %v3422 = vadd.f32 %v3325, %v3421
      %v3423 = vpop.f32.mrf.mxu0
      %v3424 = vpop.f32.mrf.mxu0
      %v3425 = vadd.f32 %v3328, %v3424
      %v3426 = vpop.f32.mrf.mxu0
      %3427 = vdwg.mxu0
      %3428 = vmatprep.subr.bf16.mxu0 0
      %3429 = vmatpush1.bf16.msra.mxu0 %v3048
      %3430 = vmatprep.subr.bf16.mxu0 0
      %3431 = vmatpush1.bf16.msra.mxu0 %v3047
      %3432 = vmatprep.subr.bf16.mxu0 0
      %3433 = vmatpush1.bf16.msra.mxu0 %v3046
      %3434 = vmatprep.subr.bf16.mxu0 0
      %3435 = vmatpush1.bf16.msra.mxu0 %v3045
      %3436 = vmatprep.subr.bf16.mxu0 0
      %3437 = vmatpush1.bf16.msra.mxu0 %v3044
      %3438 = vmatprep.subr.bf16.mxu0 0
      %3439 = vmatpush1.bf16.msra.mxu0 %v3043
      %3440 = vmatprep.subr.bf16.mxu0 0
      %3441 = vmatpush1.bf16.msra.mxu0 %v3042
      %3442 = vmatprep.subr.bf16.mxu0 0
      %3443 = vmatpush1.bf16.msra.mxu0 %v3041
      %3444 = vmatprep.subr.bf16.mxu0 0
      %3445 = vmatpush2.bf16.msra.mxu0 %v3056
      %3446 = vmatprep.subr.bf16.mxu0 0
      %3447 = vmatpush2.bf16.msra.mxu0 %v3055
      %3448 = vmatprep.subr.bf16.mxu0 0
      %3449 = vmatpush2.bf16.msra.mxu0 %v3054
      %3450 = vmatprep.subr.bf16.mxu0 0
      %3451 = vmatpush2.bf16.msra.mxu0 %v3053
      %3452 = vmatprep.subr.bf16.mxu0 0
      %3453 = vmatpush2.bf16.msra.mxu0 %v3052
      %3454 = vmatprep.subr.bf16.mxu0 0
      %3455 = vmatpush2.bf16.msra.mxu0 %v3051
      %3456 = vmatprep.subr.bf16.mxu0 0
      %3457 = vmatpush2.bf16.msra.mxu0 %v3050
      %3458 = vmatprep.subr.bf16.mxu0 0
      %3459 = vmatpush2.bf16.msra.mxu0 %v3049
      %3460 = vmatprep.mubr.bf16.mxu0 %v2568
      %3461 = vmatmul.mubr.bf16.gmra.mxu0 %v2567
      %v3462 = vpop.f32.mrf.mxu0
      %v3463 = vadd.f32 %v3366, %v3462
      %v3464 = vpop.f32.mrf.mxu0
      %v3465 = vpop.f32.mrf.mxu0
      %v3466 = vadd.f32 %v3369, %v3465
      %v3467 = vpop.f32.mrf.mxu0
      %3468 = vmatprep.mubr.bf16.mxu0 %v2577
      %3469 = vmatmul.mubr.bf16.gmra.mxu0 %v2576
      %v3470 = vpop.f32.mrf.mxu0
      %v3471 = vadd.f32 %v3374, %v3470
      %v3472 = vpop.f32.mrf.mxu0
      %v3473 = vpop.f32.mrf.mxu0
      %v3474 = vadd.f32 %v3377, %v3473
      %v3475 = vpop.f32.mrf.mxu0
      %3476 = vmatprep.mubr.bf16.mxu0 %v2586
      %3477 = vmatmul.mubr.bf16.gmra.mxu0 %v2585
      %v3478 = vpop.f32.mrf.mxu0
      %v3479 = vadd.f32 %v3382, %v3478
      %v3480 = vpop.f32.mrf.mxu0
      %v3481 = vpop.f32.mrf.mxu0
      %v3482 = vadd.f32 %v3385, %v3481
      %v3483 = vpop.f32.mrf.mxu0
      %3484 = vmatprep.mubr.bf16.mxu0 %v2595
      %3485 = vmatmul.mubr.bf16.gmra.mxu0 %v2594
      %v3486 = vpop.f32.mrf.mxu0
      %v3487 = vadd.f32 %v3390, %v3486
      %v3488 = vpop.f32.mrf.mxu0
      %v3489 = vpop.f32.mrf.mxu0
      %v3490 = vadd.f32 %v3393, %v3489
      %v3491 = vpop.f32.mrf.mxu0
      %3492 = vmatprep.mubr.bf16.mxu0 %v2604
      %3493 = vmatmul.mubr.bf16.gmra.mxu0 %v2603
      %v3494 = vpop.f32.mrf.mxu0
      %v3495 = vadd.f32 %v3398, %v3494
      %v3496 = vpop.f32.mrf.mxu0
      %v3497 = vpop.f32.mrf.mxu0
      %v3498 = vadd.f32 %v3401, %v3497
      %v3499 = vpop.f32.mrf.mxu0
      %3500 = vmatprep.mubr.bf16.mxu0 %v2613
      %3501 = vmatmul.mubr.bf16.gmra.mxu0 %v2612
      %v3502 = vpop.f32.mrf.mxu0
      %v3503 = vadd.f32 %v3406, %v3502
      %v3504 = vpop.f32.mrf.mxu0
      %v3505 = vpop.f32.mrf.mxu0
      %v3506 = vadd.f32 %v3409, %v3505
      %v3507 = vpop.f32.mrf.mxu0
      %3508 = vmatprep.mubr.bf16.mxu0 %v2622
      %3509 = vmatmul.mubr.bf16.gmra.mxu0 %v2621
      %v3510 = vpop.f32.mrf.mxu0
      %v3511 = vadd.f32 %v3414, %v3510
      %v3512 = vpop.f32.mrf.mxu0
      %v3513 = vpop.f32.mrf.mxu0
      %v3514 = vadd.f32 %v3417, %v3513
      %v3515 = vpop.f32.mrf.mxu0
      %3516 = vmatprep.mubr.bf16.mxu0 %v2631
      %3517 = vmatmul.mubr.bf16.gmra.mxu0 %v2630
      %v3518 = vpop.f32.mrf.mxu0
      %v3519 = vadd.f32 %v3422, %v3518
      %v3520 = vpop.f32.mrf.mxu0
      %v3521 = vpop.f32.mrf.mxu0
      %v3522 = vadd.f32 %v3425, %v3521
      %v3523 = vpop.f32.mrf.mxu0
      %3524 = vdwg.mxu0
      %3525 = vmatprep.subr.bf16.mxu0 0
      %3526 = vmatpush1.bf16.msra.mxu0 %v3064
      %3527 = vmatprep.subr.bf16.mxu0 0
      %3528 = vmatpush1.bf16.msra.mxu0 %v3063
      %3529 = vmatprep.subr.bf16.mxu0 0
      %3530 = vmatpush1.bf16.msra.mxu0 %v3062
      %3531 = vmatprep.subr.bf16.mxu0 0
      %3532 = vmatpush1.bf16.msra.mxu0 %v3061
      %3533 = vmatprep.subr.bf16.mxu0 0
      %3534 = vmatpush1.bf16.msra.mxu0 %v3060
      %3535 = vmatprep.subr.bf16.mxu0 0
      %3536 = vmatpush1.bf16.msra.mxu0 %v3059
      %3537 = vmatprep.subr.bf16.mxu0 0
      %3538 = vmatpush1.bf16.msra.mxu0 %v3058
      %3539 = vmatprep.subr.bf16.mxu0 0
      %3540 = vmatpush1.bf16.msra.mxu0 %v3057
      %3541 = vmatprep.subr.bf16.mxu0 0
      %3542 = vmatpush2.bf16.msra.mxu0 0
      %3543 = vmatprep.subr.bf16.mxu0 0
      %3544 = vmatpush2.bf16.msra.mxu0 0
      %3545 = vmatprep.subr.bf16.mxu0 0
      %3546 = vmatpush2.bf16.msra.mxu0 0
      %3547 = vmatprep.subr.bf16.mxu0 0
      %3548 = vmatpush2.bf16.msra.mxu0 0
      %3549 = vmatprep.subr.bf16.mxu0 0
      %3550 = vmatpush2.bf16.msra.mxu0 0
      %3551 = vmatprep.subr.bf16.mxu0 0
      %3552 = vmatpush2.bf16.msra.mxu0 0
      %3553 = vmatprep.subr.bf16.mxu0 0
      %3554 = vmatpush2.bf16.msra.mxu0 0
      %3555 = vmatprep.subr.bf16.mxu0 0
      %3556 = vmatpush2.bf16.msra.mxu0 0
      %3557 = vmatprep.mubr.bf16.mxu0 0
      %3558 = vmatmul.mubr.bf16.gmra.mxu0 %v2569
      %v3559 = vpop.f32.mrf.mxu0
      %v3560 = vadd.f32 %v3463, %v3559
      %v3561 = vpop.f32.mrf.mxu0
      %v3562 = vpop.f32.mrf.mxu0
      %v3563 = vadd.f32 %v3466, %v3562
      %v3564 = vpop.f32.mrf.mxu0
      %3565 = vmatprep.mubr.bf16.mxu0 0
      %3566 = vmatmul.mubr.bf16.gmra.mxu0 %v2578
      %v3567 = vpop.f32.mrf.mxu0
      %v3568 = vadd.f32 %v3471, %v3567
      %v3569 = vpop.f32.mrf.mxu0
      %v3570 = vpop.f32.mrf.mxu0
      %v3571 = vadd.f32 %v3474, %v3570
      %v3572 = vpop.f32.mrf.mxu0
      %3573 = vmatprep.mubr.bf16.mxu0 0
      %3574 = vmatmul.mubr.bf16.gmra.mxu0 %v2587
      %v3575 = vpop.f32.mrf.mxu0
      %v3576 = vadd.f32 %v3479, %v3575
      %v3577 = vpop.f32.mrf.mxu0
      %v3578 = vpop.f32.mrf.mxu0
      %v3579 = vadd.f32 %v3482, %v3578
      %v3580 = vpop.f32.mrf.mxu0
      %3581 = vmatprep.mubr.bf16.mxu0 0
      %3582 = vmatmul.mubr.bf16.gmra.mxu0 %v2596
      %v3583 = vpop.f32.mrf.mxu0
      %v3584 = vadd.f32 %v3487, %v3583
      %v3585 = vpop.f32.mrf.mxu0
      %v3586 = vpop.f32.mrf.mxu0
      %v3587 = vadd.f32 %v3490, %v3586
      %v3588 = vpop.f32.mrf.mxu0
      %3589 = vmatprep.mubr.bf16.mxu0 0
      %3590 = vmatmul.mubr.bf16.gmra.mxu0 %v2605
      %v3591 = vpop.f32.mrf.mxu0
      %v3592 = vadd.f32 %v3495, %v3591
      %v3593 = vpop.f32.mrf.mxu0
      %v3594 = vpop.f32.mrf.mxu0
      %v3595 = vadd.f32 %v3498, %v3594
      %v3596 = vpop.f32.mrf.mxu0
      %3597 = vmatprep.mubr.bf16.mxu0 0
      %3598 = vmatmul.mubr.bf16.gmra.mxu0 %v2614
      %v3599 = vpop.f32.mrf.mxu0
      %v3600 = vadd.f32 %v3503, %v3599
      %v3601 = vpop.f32.mrf.mxu0
      %v3602 = vpop.f32.mrf.mxu0
      %v3603 = vadd.f32 %v3506, %v3602
      %v3604 = vpop.f32.mrf.mxu0
      %3605 = vmatprep.mubr.bf16.mxu0 0
      %3606 = vmatmul.mubr.bf16.gmra.mxu0 %v2623
      %v3607 = vpop.f32.mrf.mxu0
      %v3608 = vadd.f32 %v3511, %v3607
      %v3609 = vpop.f32.mrf.mxu0
      %v3610 = vpop.f32.mrf.mxu0
      %v3611 = vadd.f32 %v3514, %v3610
      %v3612 = vpop.f32.mrf.mxu0
      %3613 = vmatprep.mubr.bf16.mxu0 0
      %3614 = vmatmul.mubr.bf16.gmra.mxu0 %v2632
      %v3615 = vpop.f32.mrf.mxu0
      %v3616 = vadd.f32 %v3519, %v3615
      %v3617 = vpop.f32.mrf.mxu0
      %v3618 = vpop.f32.mrf.mxu0
      %v3619 = vadd.f32 %v3522, %v3618
      %v3620 = vpop.f32.mrf.mxu0
      %3621 = vdwg.mxu0
      %v3622 = vpack.c.bf16 %v3563, %v3560
      %v3623 = vpack.c.bf16 %v3571, %v3568
      %v3624 = vpack.c.bf16 %v3579, %v3576
      %v3625 = vpack.c.bf16 %v3587, %v3584
      %v3626 = vpack.c.bf16 %v3595, %v3592
      %v3627 = vpack.c.bf16 %v3603, %v3600
      %v3628 = vpack.c.bf16 %v3611, %v3608
      %v3629 = vpack.c.bf16 %v3619, %v3616
      %v3638 = vunpack.c.l.b16 %v3622
      %v3639 = vunpack.c.h.b16 %v3622
      %v3640 = vunpack.c.l.b16 %v3623
      %v3641 = vunpack.c.h.b16 %v3623
      %v3642 = vunpack.c.l.b16 %v3624
      %v3643 = vunpack.c.h.b16 %v3624
      %v3644 = vunpack.c.l.b16 %v3625
      %v3645 = vunpack.c.h.b16 %v3625
      %v3646 = vunpack.c.l.b16 %v3626
      %v3647 = vunpack.c.h.b16 %v3626
      %v3648 = vunpack.c.l.b16 %v3627
      %v3649 = vunpack.c.h.b16 %v3627
      %v3650 = vunpack.c.l.b16 %v3628
      %v3651 = vunpack.c.h.b16 %v3628
      %v3652 = vunpack.c.l.b16 %v3629
      %v3653 = vunpack.c.h.b16 %v3629
      %v3654 = vpack.c.b16 %v3638, %v3638
      %v3655 = vpack.c.b16 %v3639, %v3639
      %v3656 = vpack.c.b16 %v3640, %v3640
      %v3657 = vpack.c.b16 %v3641, %v3641
      %v3658 = vpack.c.b16 %v3642, %v3642
      %v3659 = vpack.c.b16 %v3643, %v3643
      %v3660 = vpack.c.b16 %v3644, %v3644
      %v3661 = vpack.c.b16 %v3645, %v3645
      %v3662 = vpack.c.b16 %v3646, %v3646
      %v3663 = vpack.c.b16 %v3647, %v3647
      %v3664 = vpack.c.b16 %v3648, %v3648
      %v3665 = vpack.c.b16 %v3649, %v3649
      %v3666 = vpack.c.b16 %v3650, %v3650
      %v3667 = vpack.c.b16 %v3651, %v3651
      %v3668 = vpack.c.b16 %v3652, %v3652
      %v3669 = vpack.c.b16 %v3653, %v3653
      %3686 = vst [vmem:[%s261] sm:$0xf] %v3654
      %3687 = vst [vmem:[%s261 + $0x4] sm:$0xf] %v3655
      %3688 = vst [vmem:[%s261 + $0x8] sm:$0xf] %v3656
      %3689 = vst [vmem:[%s261 + $0xc] sm:$0xf] %v3657
      %3690 = vst [vmem:[%s261 + $0x10] sm:$0xf] %v3658
      %3691 = vst [vmem:[%s261 + $0x14] sm:$0xf] %v3659
      %3692 = vst [vmem:[%s261 + $0x18] sm:$0xf] %v3660
      %3693 = vst [vmem:[%s261 + $0x1c] sm:$0xf] %v3661
      %3694 = vst [vmem:[%s261 + $0x20] sm:$0xf] %v3662
      %3695 = vst [vmem:[%s261 + $0x24] sm:$0xf] %v3663
      %3696 = vst [vmem:[%s261 + $0x28] sm:$0xf] %v3664
      %3697 = vst [vmem:[%s261 + $0x2c] sm:$0xf] %v3665
      %3698 = vst [vmem:[%s261 + $0x30] sm:$0xf] %v3666
      %3699 = vst [vmem:[%s261 + $0x34] sm:$0xf] %v3667
      %3700 = vst [vmem:[%s261 + $0x38] sm:$0xf] %v3668
      %3701 = vst [vmem:[%s261 + $0x3c] sm:$0xf] %v3669
      %v3702 = vadd.f32 %v3560, %v3563
      %v3703 = vadd.f32 %v3702, %v3568
      %v3704 = vadd.f32 %v3703, %v3571
      %v3705 = vadd.f32 %v3704, %v3576
      %v3706 = vadd.f32 %v3705, %v3579
      %v3707 = vadd.f32 %v3706, %v3584
      %v3708 = vadd.f32 %v3707, %v3587
      %v3709 = vadd.f32 %v3708, %v3592
      %v3710 = vadd.f32 %v3709, %v3595
      %v3711 = vadd.f32 %v3710, %v3600
      %v3712 = vadd.f32 %v3711, %v3603
      %v3713 = vadd.f32 %v3712, %v3608
      %v3714 = vadd.f32 %v3713, %v3611
      %v3715 = vadd.f32 %v3714, %v3616
      %v3716 = vadd.f32 %v3715, %v3619
      %v3717 = vrot.slane %v3716, 4
      %v3718 = vadd.f32 %v3716, %v3717
      %v3719 = vrot.slane %v3718, 2
      %v3720 = vadd.f32 %v3718, %v3719
      %v3721 = vrot.slane %v3720, 1
      %v3722 = vadd.f32 %v3720, %v3721
      %3723 = vst [vmem:[%s270] sm:$0x1] %v3722
      %v3724 = vmul.f32 %v3560, %v3560
      %v3725 = vmul.f32 %v3563, %v3563
      %v3726 = vmul.f32 %v3568, %v3568
      %v3727 = vmul.f32 %v3571, %v3571
      %v3728 = vmul.f32 %v3576, %v3576
      %v3729 = vmul.f32 %v3579, %v3579
      %v3730 = vmul.f32 %v3584, %v3584
      %v3731 = vmul.f32 %v3587, %v3587
      %v3732 = vmul.f32 %v3592, %v3592
      %v3733 = vmul.f32 %v3595, %v3595
      %v3734 = vmul.f32 %v3600, %v3600
      %v3735 = vmul.f32 %v3603, %v3603
      %v3736 = vmul.f32 %v3608, %v3608
      %v3737 = vmul.f32 %v3611, %v3611
      %v3738 = vmul.f32 %v3616, %v3616
      %v3739 = vmul.f32 %v3619, %v3619
      %v3740 = vadd.f32 %v3724, %v3725
      %v3741 = vadd.f32 %v3740, %v3726
      %v3742 = vadd.f32 %v3741, %v3727
      %v3743 = vadd.f32 %v3742, %v3728
      %v3744 = vadd.f32 %v3743, %v3729
      %v3745 = vadd.f32 %v3744, %v3730
      %v3746 = vadd.f32 %v3745, %v3731
      %v3747 = vadd.f32 %v3746, %v3732
      %v3748 = vadd.f32 %v3747, %v3733
      %v3749 = vadd.f32 %v3748, %v3734
      %v3750 = vadd.f32 %v3749, %v3735
      %v3751 = vadd.f32 %v3750, %v3736
      %v3752 = vadd.f32 %v3751, %v3737
      %v3753 = vadd.f32 %v3752, %v3738
      %v3754 = vadd.f32 %v3753, %v3739
      %v3755 = vrot.slane %v3754, 4
      %v3756 = vadd.f32 %v3754, %v3755
      %v3757 = vrot.slane %v3756, 2
      %v3758 = vadd.f32 %v3756, %v3757
      %v3759 = vrot.slane %v3758, 1
      %v3760 = vadd.f32 %v3758, %v3759
      %3761 = vst [vmem:[%s270 + $0x1] sm:$0x1] %v3760
      %s3762 = smul.u32 8, %s22
      %p3763 = scmp.lt.s32.totalorder %s21, 1
      %s3764 = scalar_select %p3763, %s21, 1
      %p3765 = scmp.lt.s32.totalorder %s3762, 15
      %s3766 = scalar_select %p3765, %s3762, 15
      %s3767 = smul.addr %s3766, 2
      %s3768 = smul.addr %s3764, 32
      %s3769 = sadd.s32 %s3767, %s3768
      %s3770 = smul.addr %s3769, 4
      %s3771 = scalar_lea.vmem %s4, %s3770
      %p3772 = scmp.lt.s32.totalorder %s21, 1
      %s3773 = scalar_select %p3772, %s21, 1
      %p3774 = scmp.lt.s32.totalorder %s22, 1
      %s3775 = scalar_select %p3774, %s22, 1
      %s3776 = smul.addr %s3773, 2
      %s3777 = sadd.s32 %s3775, %s3776
      %s3778 = smul.addr %s3777, 2
      %s3779 = scalar_lea.vmem %s5, %s3778
      // Predicated region
      $region53: #{resblock_forward.4} parent=35 // pred_check
        %p3780 = pneg %p138
      $region54: #{resblock_forward.4} parent=35 // pred_check_branch
        %3782 = sbr.rel (%p3780) target = $region56
      $region55: #{resblock_forward.4} parent=35 // pred_region
        %s3783 = smul.u32 8, %s22
      $region56: #{resblock_forward.4} parent=35 // pred_fallthru
        _
      // Predicated region
      $region57: #{resblock_forward.4} parent=35 // pred_check
        %p3784 = pneg %p166
      $region58: #{resblock_forward.4} parent=35 // pred_check_branch
        %3786 = sbr.rel (%p3784) target = $region60
      $region59: #{resblock_forward.4} parent=35 // pred_region
        _
      $region60: #{resblock_forward.4} parent=35 // pred_fallthru
        _
    $region36: #{resblock_forward.4} parent=5 // pred_fallthru
      _
    %p3787 = scmp.le.s32.totalorder 2, %s12
    // Predicated region
    $region61: #{resblock_forward.4} parent=5 // pred_check
      %p3788 = pneg %p3787
    $region62: #{resblock_forward.4} parent=5 // pred_check_branch
      %3790 = sbr.rel (%p3788) target = $region64
    $region63: #{resblock_forward.4} parent=5 // pred_region
      %s3791 = ssub.s32 %s12, 2
      // Predicated region
      $region65: #{resblock_forward.4} parent=63 // pred_check
        %p3792 = pneg %p144
      $region66: #{resblock_forward.4} parent=63 // pred_check_branch
        %3794 = sbr.rel (%p3792) target = $region68
      $region67: #{resblock_forward.4} parent=63 // pred_region
        %s3795 = smul.u32 8, %s24
        %p3796 = scmp.lt.s32.totalorder %s23, 1
        %s3797 = scalar_select %p3796, %s23, 1
        %p3798 = scmp.lt.s32.totalorder %s3795, 15
        %s3799 = scalar_select %p3798, %s3795, 15
        %s3800 = smul.addr %s3799, 2
        %s3801 = smul.addr %s3797, 32
        %s3802 = sadd.s32 %s3800, %s3801
        %s3803 = smul.addr %s3802, 4
        %s3804 = scalar_lea.vmem %s4, %s3803
      $region68: #{resblock_forward.4} parent=63 // pred_fallthru
        _
      // Predicated region
      $region69: #{resblock_forward.4} parent=63 // pred_check
        %p3805 = pneg %p172
      $region70: #{resblock_forward.4} parent=63 // pred_check_branch
        %3807 = sbr.rel (%p3805) target = $region72
      $region71: #{resblock_forward.4} parent=63 // pred_region
        %p3808 = scmp.lt.s32.totalorder %s23, 1
        %s3809 = scalar_select %p3808, %s23, 1
        %p3810 = scmp.lt.s32.totalorder %s24, 1
        %s3811 = scalar_select %p3810, %s24, 1
        %s3812 = smul.addr %s3809, 2
        %s3813 = sadd.s32 %s3811, %s3812
        %s3814 = smul.addr %s3813, 2
        %s3815 = scalar_lea.vmem %s5, %s3814
      $region72: #{resblock_forward.4} parent=63 // pred_fallthru
        _
    $region64: #{resblock_forward.4} parent=5 // pred_fallthru
      _
  $region6: #{resblock_forward.4} parent=0 // loop_footer
    %s16 = sadd.s32 1, %s12
  $region7: #{resblock_forward.4} parent=0 // loop_footer_branch
    %11 = sbr.rel target = $region3
  $region8: #{resblock_forward.4} parent=0 // loop_exit
    _

</llo_original>
